<compile_context>
chip_gen: v7x
topology: tpu7x:2x2x1
jax: 0.10.0
libtpu: 0.0.40
codegen_flags: <defaults>
</compile_context>

<pallas_src>
import functools

import jax
import jax.numpy as jnp
from jax.experimental import pallas as pl
from jax.experimental.pallas import tpu as pltpu


# ----------------------------------------------------------------------------
# Shared in-kernel helper: weighted dimension-wise median aggregation.
#
# For target node i and feature dim d, the weighted median over sources j with
# weights A[i, j] is the smallest candidate value v_k = h[k, d] such that
#     sum_j A[i, j] * [h[j, d] <= v_k]  >=  row_sum(A)[i] / 2.
# The counting sum is an MXU matmul: for a group of dims the per-dim masks
# LE_d^T[k, j] = [h[j, d] <= h[k, d]] are stacked into one (DG*N, N) bf16 LHS
# and multiplied by the (N, TI) bf16 A^T tile in a single jnp.dot, so the RHS
# weights stay resident in the MXU across the whole group. The min-reduce runs
# over sublanes and every result row is a lane-dense (1, TI) vector.
# ----------------------------------------------------------------------------
def _weighted_dim_median(ht, a_bf, total, thresh, *, row_normalize, apply_relu,
                         max_stack=8):
    """ht: (DG, N) f32 transformed features; a_bf: (N, TI) bf16 A^T tile.

    total, thresh: (1, TI) f32. Returns (DG, TI) f32 aggregated rows.
    """
    dims, n = ht.shape
    ti = a_bf.shape[1]
    hcols = jnp.transpose(ht)                       # (N, DG): candidates on sublanes (one XLU pass)

    rows = []
    for d0 in range(0, dims, max_stack):            # bounded dim chunks (<= 8) keep VMEM flat
        dd = min(max_stack, dims - d0)
        masks, cands = [], []
        for d in range(d0, d0 + dd):
            hd_row = ht[d:d + 1, :]                  # (1, N)  h[:, d] on lanes   (source axis j)
            hd_col = hcols[:, d:d + 1]               # (N, 1)  h[:, d] on sublanes (candidate axis k)
            # Materialize the lane-splat of the candidate column once per dim;
            # reuse it in both the compare (when TI == N) and the median select.
            cand = jnp.broadcast_to(hd_col, (n, ti))
            cands.append(cand)
            cmp_rhs = cand if ti == n else hd_col
            # le[k, j] = [h[j, d] <= h[k, d]]  -- exact 0/1 in bf16, no f32 select.
            masks.append((hd_row <= cmp_rhs).astype(jnp.bfloat16))      # (N, N)

        le_all = jnp.concatenate(masks, axis=0) if dd > 1 else masks[0]  # (dd*N, N)
        # One MXU pass per chunk: the (N, TI) RHS weight tile stays resident.
        c_all = jnp.dot(le_all, a_bf, preferred_element_type=jnp.float32)  # (dd*N, TI)

        for k in range(dd):
            c = c_all[k * n:(k + 1) * n, :]          # (N, TI) cumulative weights per candidate
            med = jnp.min(jnp.where(c >= thresh, cands[k], jnp.inf),
                          axis=0, keepdims=True)     # (1, TI) weighted median
            row = med if row_normalize else med * total   # paper scaling by row weight sum
            if apply_relu:
                row = jnp.maximum(row, 0.0)
            rows.append(row)

    return jnp.concatenate(rows, axis=0) if len(rows) > 1 else rows[0]   # (DG, TI)


# ----------------------------------------------------------------------------
# Kernel 1 (general path): one dim group x one target-node tile of one layer.
# ----------------------------------------------------------------------------
def _dimmedian_layer_kernel(abf_ref, total_ref, thresh_ref, xt_ref, wt_ref,
                            bt_ref, ot_ref, *, apply_relu, row_normalize):
    """abf_ref:(N,TI) bf16 A^T tile; total/thresh:(1,TI) f32; xt:(F,N) f32;
    wt:(DG,F) f32; bt:(DG,1) f32; ot:(DG,TI) f32 transposed output tile."""
    # linear: h^T = (x @ W + b)^T for the DG dims of this group (MXU)
    ht = jnp.dot(wt_ref[...], xt_ref[...],
                 preferred_element_type=jnp.float32) + bt_ref[...]      # (DG, N)
    out = _weighted_dim_median(ht, abf_ref[...], total_ref[...], thresh_ref[...],
                               row_normalize=row_normalize, apply_relu=apply_relu)
    ot_ref[...] = out.astype(ot_ref.dtype)           # unmasked lane-dense stores


# ----------------------------------------------------------------------------
# Kernel 2 (small/medium N): both DimwiseMedianConv layers fused in one call.
# ----------------------------------------------------------------------------
def _fused_two_layer_kernel(abf_ref, total_ref, thresh_ref, xt_ref,
                            w1t_ref, b1t_ref, w2t_ref, b2t_ref, ot_ref, *,
                            row_normalize):
    a_bf = abf_ref[...]
    total = total_ref[...]
    thresh = thresh_ref[...]
    # layer 1: linear -> weighted dim-median -> ReLU (Dropout is identity at eval)
    h1t = jnp.dot(w1t_ref[...], xt_ref[...],
                  preferred_element_type=jnp.float32) + b1t_ref[...]    # (HID, N)
    z1t = _weighted_dim_median(h1t, a_bf, total, thresh,
                               row_normalize=row_normalize, apply_relu=True)
    # TODO(synk): Dropout(p=0.5) is identity at inference; training-mode RNG dropout not implemented.
    # layer 2: linear -> weighted dim-median (layer-1 activations never leave VMEM)
    h2t = jnp.dot(w2t_ref[...], z1t,
                  preferred_element_type=jnp.float32) + b2t_ref[...]    # (OUT, N)
    out = _weighted_dim_median(h2t, a_bf, total, thresh,
                               row_normalize=row_normalize, apply_relu=False)
    ot_ref[...] = out.astype(ot_ref.dtype)


# ----------------------------------------------------------------------------
# Wrappers
# ----------------------------------------------------------------------------
def _vmem_budget():
    """Scoped-VMEM limit derived from the chip (96 MiB v5e/v6e, 48 MiB v7x)."""
    cap = 64 * 1024 * 1024
    try:
        info = pltpu.get_tpu_info()
        cap = int(getattr(info, "vmem_capacity_bytes", cap))
    except Exception:
        pass
    return max(32 * 1024 * 1024, min((cap * 3) // 4, 96 * 1024 * 1024))


def _fused_vmem_estimate(n, f, hid, out_d, max_stack=8):
    """Rough upper bound on live VMEM bytes of the fused kernel."""
    s = min(max(hid, out_d), max_stack)
    per_chunk = s * n * n * (2 + 4 + 4)         # stacked bf16 LE + f32 counts + f32 cand bcasts
    persistent = 2 * n * n + 4 * n * (f + 2 * hid + 2 * out_d) + 4 * n * out_d
    return 2 * (per_chunk + persistent)         # 2x headroom for compiler temporaries


def dimwise_median_conv_t(a_bf, total, thresh, xt, w, b, *, apply_relu,
                          row_normalize=False, vmem_limit=48 * 1024 * 1024):
    """One tiled DimwiseMedianConv layer (general path), transposed in / out.

    a_bf : (N, N) bf16  A^T (a_bf[j, i] = weight of edge j -> i)
    total, thresh : (1, N) f32 per-target row sums / half-weight thresholds
    xt : (F, N) f32 node features, transposed
    w  : (F, D), b : (1, D)
    returns (D, N) aggregated features, transposed.
    """
    n = a_bf.shape[0]
    f, n2 = xt.shape
    d = w.shape[1]
    assert a_bf.shape == (n, n) and n2 == n and w.shape[0] == f

    # Target-node lane tile: 256 fills a 256-wide MXU (v6e/v7x) when N allows
    # at least two node tiles; otherwise 128 (v5e-native) or the full width.
    if n % 256 == 0 and n >= 512:
        row_tile = 256
    elif n % 128 == 0:
        row_tile = 128
    else:
        row_tile = n
    # Feature-dim groups of <= 8 as a parallel grid axis (bounded in-kernel
    # stack, v7x TensorCore sharding).
    if d <= 8:
        dim_group = d
    elif d % 8 == 0:
        dim_group = 8
    else:
        dim_group = d            # keep whole axis (BlockSpec-safe for odd sizes)
    assert n % row_tile == 0 and d % dim_group == 0
    # TODO(synk): very large N also needs candidate/source-axis tiling of the
    # stacked (DG*N, N) LE block to stay inside v7x's 64 MiB VMEM.

    wt = jnp.transpose(w)              # (D, F)
    bt = jnp.reshape(b, (d, 1))        # (D, 1)

    kernel = functools.partial(_dimmedian_layer_kernel,
                               apply_relu=apply_relu, row_normalize=row_normalize)
    return pl.pallas_call(
        kernel,
        out_shape=jax.ShapeDtypeStruct((d, n), jnp.float32),
        grid=(n // row_tile, d // dim_group),
        in_specs=[
            pl.BlockSpec((n, row_tile), lambda i, g: (0, i)),     # bf16 A^T columns = target tile
            pl.BlockSpec((1, row_tile), lambda i, g: (0, i)),     # exact row sums of this tile
            pl.BlockSpec((1, row_tile), lambda i, g: (0, i)),     # half-weight thresholds
            pl.BlockSpec((f, n), lambda i, g: (0, 0)),            # all source features
            pl.BlockSpec((dim_group, f), lambda i, g: (g, 0)),    # W^T rows of this dim group
            pl.BlockSpec((dim_group, 1), lambda i, g: (g, 0)),    # bias of this dim group
        ],
        out_specs=pl.BlockSpec((dim_group, row_tile), lambda i, g: (g, i)),
        compiler_params=pltpu.CompilerParams(
            dimension_semantics=("parallel", "parallel"),
            vmem_limit_bytes=vmem_limit),
    )(a_bf, total, thresh, xt, wt, bt)


def _fused_two_layer_call(a_bf, total, thresh, xt, params, *, row_normalize,
                          vmem_limit):
    n = a_bf.shape[0]
    hid = params["w1"].shape[1]
    out_d = params["w2"].shape[1]
    w1t = jnp.transpose(params["w1"])            # (HID, F)
    b1t = jnp.reshape(params["b1"], (hid, 1))
    w2t = jnp.transpose(params["w2"])            # (OUT, HID)
    b2t = jnp.reshape(params["b2"], (out_d, 1))
    kernel = functools.partial(_fused_two_layer_kernel, row_normalize=row_normalize)
    return pl.pallas_call(
        kernel,
        out_shape=jax.ShapeDtypeStruct((out_d, n), jnp.float32),
        compiler_params=pltpu.CompilerParams(vmem_limit_bytes=vmem_limit),
    )(a_bf, total, thresh, xt, w1t, b1t, w2t, b2t)


def reliable_gnn_forward(a, feat, params, *, row_normalize=False, force_layered=False):
    """ReliableGNN(in, out, hids=[hid], acts=['relu']) inference forward.

    a : (N, N) dense weighted adjacency, a[i, j] = weight of edge j -> i,
        self-loops included.  feat : (N, in_feats).
    """
    n = a.shape[0]
    at = jnp.transpose(a)                                   # (N, N) [source, target]
    # Precomputed once for BOTH layers (was recomputed per dim group / layer):
    a_bf = at.astype(jnp.bfloat16)                          # MXU operand, half the DMA bytes
    total = jnp.sum(at, axis=0, keepdims=True)              # exact f32 row sums (output scaling)
    total_q = jnp.sum(a_bf.astype(jnp.float32), axis=0, keepdims=True)  # sums of quantized weights
    thresh = (0.5 - 1e-4) * total_q     # tiny slack guards bf16/f32 rounding at half-weight ties
    xt = jnp.transpose(feat)                                # (in_feats, N)

    budget = _vmem_budget()
    hid = params["w1"].shape[1]
    out_d = params["w2"].shape[1]
    fits = _fused_vmem_estimate(n, xt.shape[0], hid, out_d) <= budget // 2

    if fits and not force_layered:
        # Single fused pallas_call: layer-1 activations stay in VMEM.
        o_t = _fused_two_layer_call(a_bf, total, thresh, xt, params,
                                    row_normalize=row_normalize, vmem_limit=budget)
    else:
        # General tiled path (one call per layer).
        h_t = dimwise_median_conv_t(a_bf, total, thresh, xt,
                                    params["w1"], params["b1"],
                                    apply_relu=True, row_normalize=row_normalize,
                                    vmem_limit=budget)
        o_t = dimwise_median_conv_t(a_bf, total, thresh, h_t,
                                    params["w2"], params["b2"],
                                    apply_relu=False, row_normalize=row_normalize,
                                    vmem_limit=budget)
    return jnp.transpose(o_t)                               # (N, out_feats)


def glorot(key, shape):
    fan_in, fan_out = shape
    lim = (6.0 / (fan_in + fan_out)) ** 0.5
    return jax.random.uniform(key, shape, jnp.float32, minval=-lim, maxval=lim)


if __name__ == "__main__":
    N_NODES, IN_FEATS, HID, OUT_FEATS = 128, 32, 16, 8

    key = jax.random.PRNGKey(0)
    k_feat, k_mask, k_wts, k_w1, k_w2 = jax.random.split(key, 5)

    # node features
    feat = jax.random.normal(k_feat, (N_NODES, IN_FEATS), dtype=jnp.float32)

    # dense weighted adjacency (edge_weight baked in) + self-loops
    mask = (jax.random.uniform(k_mask, (N_NODES, N_NODES)) < 0.05).astype(jnp.float32)
    wts = jax.random.uniform(k_wts, (N_NODES, N_NODES), minval=0.1, maxval=1.0)
    adj = mask * wts + jnp.eye(N_NODES, dtype=jnp.float32)

    # deterministic parameters (ReliableGNN(32, 8, hids=[16], acts=['relu']))
    params = {
        "w1": glorot(k_w1, (IN_FEATS, HID)),
        "b1": jnp.zeros((1, HID), jnp.float32),
        "w2": glorot(k_w2, (HID, OUT_FEATS)),
        "b2": jnp.zeros((1, OUT_FEATS), jnp.float32),
    }

    # fused two-layer kernel (the path used at this size)
    out = reliable_gnn_forward(adj, feat, params)
    out = jax.block_until_ready(out)
    assert out.shape == (N_NODES, OUT_FEATS)
    assert bool(jnp.all(jnp.isfinite(out)))

    # cross-check against the general tiled per-layer path (identical math)
    out_layered = jax.block_until_ready(
        reliable_gnn_forward(adj, feat, params, force_layered=True))
    assert bool(jnp.allclose(out, out_layered, rtol=1e-3, atol=1e-3)), \
        float(jnp.max(jnp.abs(out - out_layered)))

    print("KERNEL_OK")
</pallas_src>

<mosaic_0001>
module attributes {stable_mosaic.version = 11 : i64} {
  func.func @_fused_two_layer_kernel(%arg0: memref<128x128xbf16, #tpu.memory_space<vmem>>, %arg1: memref<1x128xf32, #tpu.memory_space<vmem>>, %arg2: memref<1x128xf32, #tpu.memory_space<vmem>>, %arg3: memref<32x128xf32, #tpu.memory_space<vmem>>, %arg4: memref<16x32xf32, #tpu.memory_space<vmem>>, %arg5: memref<16x1xf32, #tpu.memory_space<vmem>>, %arg6: memref<8x16xf32, #tpu.memory_space<vmem>>, %arg7: memref<8x1xf32, #tpu.memory_space<vmem>>, %arg8: memref<8x128xf32, #tpu.memory_space<vmem>>) attributes {dimension_semantics = [], scalar_prefetch = 0 : i64, scratch_operands = 0 : i64, tpu.core_type = #tpu.core_type<tc>} {
    %c0 = arith.constant 0 : index
    %c0_0 = arith.constant 0 : index
    %0 = vector.load %arg0[%c0, %c0_0] : memref<128x128xbf16, #tpu.memory_space<vmem>>, vector<128x128xbf16>
    %c0_1 = arith.constant 0 : index
    %c0_2 = arith.constant 0 : index
    %1 = vector.load %arg1[%c0_1, %c0_2] : memref<1x128xf32, #tpu.memory_space<vmem>>, vector<1x128xf32>
    %c0_3 = arith.constant 0 : index
    %c0_4 = arith.constant 0 : index
    %2 = vector.load %arg2[%c0_3, %c0_4] : memref<1x128xf32, #tpu.memory_space<vmem>>, vector<1x128xf32>
    %c0_5 = arith.constant 0 : index
    %c0_6 = arith.constant 0 : index
    %3 = vector.load %arg4[%c0_5, %c0_6] : memref<16x32xf32, #tpu.memory_space<vmem>>, vector<16x32xf32>
    %c0_7 = arith.constant 0 : index
    %c0_8 = arith.constant 0 : index
    %4 = vector.load %arg3[%c0_7, %c0_8] : memref<32x128xf32, #tpu.memory_space<vmem>>, vector<32x128xf32>
    %cst = arith.constant dense<0.000000e+00> : vector<16x128xf32>
    %5 = tpu.matmul %3, %4, %cst {dimension_numbers = #tpu.dot_dimension_numbers<[1], [0], [0], [1], [0, 0, 1, 1], [], []>} : vector<16x32xf32>, vector<32x128xf32>, vector<16x128xf32> -> vector<16x128xf32>
    %c0_9 = arith.constant 0 : index
    %c0_10 = arith.constant 0 : index
    %6 = vector.load %arg5[%c0_9, %c0_10] : memref<16x1xf32, #tpu.memory_space<vmem>>, vector<16x1xf32>
    %7 = vector.broadcast %6 : vector<16x1xf32> to vector<16x128xf32>
    %8 = arith.addf %5, %7 : vector<16x128xf32>
    %9 = tpu.transpose %8, [1, 0] : vector<16x128xf32> -> vector<128x16xf32>
    %10 = vector.extract_strided_slice %8 {offsets = [0, 0], sizes = [1, 128], strides = [1, 1]} : vector<16x128xf32> to vector<1x128xf32>
    %11 = vector.extract_strided_slice %9 {offsets = [0, 0], sizes = [128, 1], strides = [1, 1]} : vector<128x16xf32> to vector<128x1xf32>
    %12 = vector.shape_cast %11 : vector<128x1xf32> to vector<128x1xf32>
    %13 = vector.broadcast %12 : vector<128x1xf32> to vector<128x128xf32>
    %14 = vector.broadcast %10 : vector<1x128xf32> to vector<128x128xf32>
    %15 = arith.cmpf ole, %14, %13 : vector<128x128xf32>
    %16 = arith.extui %15 : vector<128x128xi1> to vector<128x128xi32>
    %17 = arith.sitofp %16 : vector<128x128xi32> to vector<128x128xf32>
    %18 = arith.truncf %17 : vector<128x128xf32> to vector<128x128xbf16>
    %19 = vector.extract_strided_slice %8 {offsets = [1, 0], sizes = [1, 128], strides = [1, 1]} : vector<16x128xf32> to vector<1x128xf32>
    %20 = vector.extract_strided_slice %9 {offsets = [0, 1], sizes = [128, 1], strides = [1, 1]} : vector<128x16xf32> to vector<128x1xf32>
    %21 = vector.shape_cast %20 : vector<128x1xf32> to vector<128x1xf32>
    %22 = vector.broadcast %21 : vector<128x1xf32> to vector<128x128xf32>
    %23 = vector.broadcast %19 : vector<1x128xf32> to vector<128x128xf32>
    %24 = arith.cmpf ole, %23, %22 : vector<128x128xf32>
    %25 = arith.extui %24 : vector<128x128xi1> to vector<128x128xi32>
    %26 = arith.sitofp %25 : vector<128x128xi32> to vector<128x128xf32>
    %27 = arith.truncf %26 : vector<128x128xf32> to vector<128x128xbf16>
    %28 = vector.extract_strided_slice %8 {offsets = [2, 0], sizes = [1, 128], strides = [1, 1]} : vector<16x128xf32> to vector<1x128xf32>
    %29 = vector.extract_strided_slice %9 {offsets = [0, 2], sizes = [128, 1], strides = [1, 1]} : vector<128x16xf32> to vector<128x1xf32>
    %30 = vector.shape_cast %29 : vector<128x1xf32> to vector<128x1xf32>
    %31 = vector.broadcast %30 : vector<128x1xf32> to vector<128x128xf32>
    %32 = vector.broadcast %28 : vector<1x128xf32> to vector<128x128xf32>
    %33 = arith.cmpf ole, %32, %31 : vector<128x128xf32>
    %34 = arith.extui %33 : vector<128x128xi1> to vector<128x128xi32>
    %35 = arith.sitofp %34 : vector<128x128xi32> to vector<128x128xf32>
    %36 = arith.truncf %35 : vector<128x128xf32> to vector<128x128xbf16>
    %37 = vector.extract_strided_slice %8 {offsets = [3, 0], sizes = [1, 128], strides = [1, 1]} : vector<16x128xf32> to vector<1x128xf32>
    %38 = vector.extract_strided_slice %9 {offsets = [0, 3], sizes = [128, 1], strides = [1, 1]} : vector<128x16xf32> to vector<128x1xf32>
    %39 = vector.shape_cast %38 : vector<128x1xf32> to vector<128x1xf32>
    %40 = vector.broadcast %39 : vector<128x1xf32> to vector<128x128xf32>
    %41 = vector.broadcast %37 : vector<1x128xf32> to vector<128x128xf32>
    %42 = arith.cmpf ole, %41, %40 : vector<128x128xf32>
    %43 = arith.extui %42 : vector<128x128xi1> to vector<128x128xi32>
    %44 = arith.sitofp %43 : vector<128x128xi32> to vector<128x128xf32>
    %45 = arith.truncf %44 : vector<128x128xf32> to vector<128x128xbf16>
    %46 = vector.extract_strided_slice %8 {offsets = [4, 0], sizes = [1, 128], strides = [1, 1]} : vector<16x128xf32> to vector<1x128xf32>
    %47 = vector.extract_strided_slice %9 {offsets = [0, 4], sizes = [128, 1], strides = [1, 1]} : vector<128x16xf32> to vector<128x1xf32>
    %48 = vector.shape_cast %47 : vector<128x1xf32> to vector<128x1xf32>
    %49 = vector.broadcast %48 : vector<128x1xf32> to vector<128x128xf32>
    %50 = vector.broadcast %46 : vector<1x128xf32> to vector<128x128xf32>
    %51 = arith.cmpf ole, %50, %49 : vector<128x128xf32>
    %52 = arith.extui %51 : vector<128x128xi1> to vector<128x128xi32>
    %53 = arith.sitofp %52 : vector<128x128xi32> to vector<128x128xf32>
    %54 = arith.truncf %53 : vector<128x128xf32> to vector<128x128xbf16>
    %55 = vector.extract_strided_slice %8 {offsets = [5, 0], sizes = [1, 128], strides = [1, 1]} : vector<16x128xf32> to vector<1x128xf32>
    %56 = vector.extract_strided_slice %9 {offsets = [0, 5], sizes = [128, 1], strides = [1, 1]} : vector<128x16xf32> to vector<128x1xf32>
    %57 = vector.shape_cast %56 : vector<128x1xf32> to vector<128x1xf32>
    %58 = vector.broadcast %57 : vector<128x1xf32> to vector<128x128xf32>
    %59 = vector.broadcast %55 : vector<1x128xf32> to vector<128x128xf32>
    %60 = arith.cmpf ole, %59, %58 : vector<128x128xf32>
    %61 = arith.extui %60 : vector<128x128xi1> to vector<128x128xi32>
    %62 = arith.sitofp %61 : vector<128x128xi32> to vector<128x128xf32>
    %63 = arith.truncf %62 : vector<128x128xf32> to vector<128x128xbf16>
    %64 = vector.extract_strided_slice %8 {offsets = [6, 0], sizes = [1, 128], strides = [1, 1]} : vector<16x128xf32> to vector<1x128xf32>
    %65 = vector.extract_strided_slice %9 {offsets = [0, 6], sizes = [128, 1], strides = [1, 1]} : vector<128x16xf32> to vector<128x1xf32>
    %66 = vector.shape_cast %65 : vector<128x1xf32> to vector<128x1xf32>
    %67 = vector.broadcast %66 : vector<128x1xf32> to vector<128x128xf32>
    %68 = vector.broadcast %64 : vector<1x128xf32> to vector<128x128xf32>
    %69 = arith.cmpf ole, %68, %67 : vector<128x128xf32>
    %70 = arith.extui %69 : vector<128x128xi1> to vector<128x128xi32>
    %71 = arith.sitofp %70 : vector<128x128xi32> to vector<128x128xf32>
    %72 = arith.truncf %71 : vector<128x128xf32> to vector<128x128xbf16>
    %73 = vector.extract_strided_slice %8 {offsets = [7, 0], sizes = [1, 128], strides = [1, 1]} : vector<16x128xf32> to vector<1x128xf32>
    %74 = vector.extract_strided_slice %9 {offsets = [0, 7], sizes = [128, 1], strides = [1, 1]} : vector<128x16xf32> to vector<128x1xf32>
    %75 = vector.shape_cast %74 : vector<128x1xf32> to vector<128x1xf32>
    %76 = vector.broadcast %75 : vector<128x1xf32> to vector<128x128xf32>
    %77 = vector.broadcast %73 : vector<1x128xf32> to vector<128x128xf32>
    %78 = arith.cmpf ole, %77, %76 : vector<128x128xf32>
    %79 = arith.extui %78 : vector<128x128xi1> to vector<128x128xi32>
    %80 = arith.sitofp %79 : vector<128x128xi32> to vector<128x128xf32>
    %81 = arith.truncf %80 : vector<128x128xf32> to vector<128x128xbf16>
    %82 = tpu.concatenate %18, %27, %36, %45, %54, %63, %72, %81 in 0 : vector<128x128xbf16>, vector<128x128xbf16>, vector<128x128xbf16>, vector<128x128xbf16>, vector<128x128xbf16>, vector<128x128xbf16>, vector<128x128xbf16>, vector<128x128xbf16> -> vector<1024x128xbf16>
    %cst_11 = arith.constant dense<0.000000e+00> : vector<1024x128xf32>
    %83 = tpu.matmul %82, %0, %cst_11 {dimension_numbers = #tpu.dot_dimension_numbers<[1], [0], [0], [1], [0, 0, 1, 1], [], []>} : vector<1024x128xbf16>, vector<128x128xbf16>, vector<1024x128xf32> -> vector<1024x128xf32>
    %84 = vector.extract_strided_slice %83 {offsets = [0, 0], sizes = [128, 128], strides = [1, 1]} : vector<1024x128xf32> to vector<128x128xf32>
    %85 = vector.broadcast %2 : vector<1x128xf32> to vector<128x128xf32>
    %86 = arith.cmpf oge, %84, %85 : vector<128x128xf32>
    %cst_12 = arith.constant 0x7F800000 : f32
    %87 = vector.broadcast %cst_12 : f32 to vector<128x128xf32>
    %88 = arith.select %86, %13, %87 : vector<128x128xi1>, vector<128x128xf32>
    %cst_13 = arith.constant dense<0x7F800000> : vector<128xf32>
    %89 = vector.multi_reduction <minimumf>, %88, %cst_13 [0] : vector<128x128xf32> to vector<128xf32>
    %90 = vector.shape_cast %89 : vector<128xf32> to vector<1x128xf32>
    %91 = arith.mulf %90, %1 : vector<1x128xf32>
    %cst_14 = arith.constant 0.000000e+00 : f32
    %92 = vector.broadcast %cst_14 : f32 to vector<1x128xf32>
    %93 = arith.maximumf %91, %92 : vector<1x128xf32>
    %94 = vector.extract_strided_slice %83 {offsets = [128, 0], sizes = [128, 128], strides = [1, 1]} : vector<1024x128xf32> to vector<128x128xf32>
    %95 = vector.broadcast %2 : vector<1x128xf32> to vector<128x128xf32>
    %96 = arith.cmpf oge, %94, %95 : vector<128x128xf32>
    %cst_15 = arith.constant 0x7F800000 : f32
    %97 = vector.broadcast %cst_15 : f32 to vector<128x128xf32>
    %98 = arith.select %96, %22, %97 : vector<128x128xi1>, vector<128x128xf32>
    %cst_16 = arith.constant dense<0x7F800000> : vector<128xf32>
    %99 = vector.multi_reduction <minimumf>, %98, %cst_16 [0] : vector<128x128xf32> to vector<128xf32>
    %100 = vector.shape_cast %99 : vector<128xf32> to vector<1x128xf32>
    %101 = arith.mulf %100, %1 : vector<1x128xf32>
    %cst_17 = arith.constant 0.000000e+00 : f32
    %102 = vector.broadcast %cst_17 : f32 to vector<1x128xf32>
    %103 = arith.maximumf %101, %102 : vector<1x128xf32>
    %104 = vector.extract_strided_slice %83 {offsets = [256, 0], sizes = [128, 128], strides = [1, 1]} : vector<1024x128xf32> to vector<128x128xf32>
    %105 = vector.broadcast %2 : vector<1x128xf32> to vector<128x128xf32>
    %106 = arith.cmpf oge, %104, %105 : vector<128x128xf32>
    %cst_18 = arith.constant 0x7F800000 : f32
    %107 = vector.broadcast %cst_18 : f32 to vector<128x128xf32>
    %108 = arith.select %106, %31, %107 : vector<128x128xi1>, vector<128x128xf32>
    %cst_19 = arith.constant dense<0x7F800000> : vector<128xf32>
    %109 = vector.multi_reduction <minimumf>, %108, %cst_19 [0] : vector<128x128xf32> to vector<128xf32>
    %110 = vector.shape_cast %109 : vector<128xf32> to vector<1x128xf32>
    %111 = arith.mulf %110, %1 : vector<1x128xf32>
    %cst_20 = arith.constant 0.000000e+00 : f32
    %112 = vector.broadcast %cst_20 : f32 to vector<1x128xf32>
    %113 = arith.maximumf %111, %112 : vector<1x128xf32>
    %114 = vector.extract_strided_slice %83 {offsets = [384, 0], sizes = [128, 128], strides = [1, 1]} : vector<1024x128xf32> to vector<128x128xf32>
    %115 = vector.broadcast %2 : vector<1x128xf32> to vector<128x128xf32>
    %116 = arith.cmpf oge, %114, %115 : vector<128x128xf32>
    %cst_21 = arith.constant 0x7F800000 : f32
    %117 = vector.broadcast %cst_21 : f32 to vector<128x128xf32>
    %118 = arith.select %116, %40, %117 : vector<128x128xi1>, vector<128x128xf32>
    %cst_22 = arith.constant dense<0x7F800000> : vector<128xf32>
    %119 = vector.multi_reduction <minimumf>, %118, %cst_22 [0] : vector<128x128xf32> to vector<128xf32>
    %120 = vector.shape_cast %119 : vector<128xf32> to vector<1x128xf32>
    %121 = arith.mulf %120, %1 : vector<1x128xf32>
    %cst_23 = arith.constant 0.000000e+00 : f32
    %122 = vector.broadcast %cst_23 : f32 to vector<1x128xf32>
    %123 = arith.maximumf %121, %122 : vector<1x128xf32>
    %124 = vector.extract_strided_slice %83 {offsets = [512, 0], sizes = [128, 128], strides = [1, 1]} : vector<1024x128xf32> to vector<128x128xf32>
    %125 = vector.broadcast %2 : vector<1x128xf32> to vector<128x128xf32>
    %126 = arith.cmpf oge, %124, %125 : vector<128x128xf32>
    %cst_24 = arith.constant 0x7F800000 : f32
    %127 = vector.broadcast %cst_24 : f32 to vector<128x128xf32>
    %128 = arith.select %126, %49, %127 : vector<128x128xi1>, vector<128x128xf32>
    %cst_25 = arith.constant dense<0x7F800000> : vector<128xf32>
    %129 = vector.multi_reduction <minimumf>, %128, %cst_25 [0] : vector<128x128xf32> to vector<128xf32>
    %130 = vector.shape_cast %129 : vector<128xf32> to vector<1x128xf32>
    %131 = arith.mulf %130, %1 : vector<1x128xf32>
    %cst_26 = arith.constant 0.000000e+00 : f32
    %132 = vector.broadcast %cst_26 : f32 to vector<1x128xf32>
    %133 = arith.maximumf %131, %132 : vector<1x128xf32>
    %134 = vector.extract_strided_slice %83 {offsets = [640, 0], sizes = [128, 128], strides = [1, 1]} : vector<1024x128xf32> to vector<128x128xf32>
    %135 = vector.broadcast %2 : vector<1x128xf32> to vector<128x128xf32>
    %136 = arith.cmpf oge, %134, %135 : vector<128x128xf32>
    %cst_27 = arith.constant 0x7F800000 : f32
    %137 = vector.broadcast %cst_27 : f32 to vector<128x128xf32>
    %138 = arith.select %136, %58, %137 : vector<128x128xi1>, vector<128x128xf32>
    %cst_28 = arith.constant dense<0x7F800000> : vector<128xf32>
    %139 = vector.multi_reduction <minimumf>, %138, %cst_28 [0] : vector<128x128xf32> to vector<128xf32>
    %140 = vector.shape_cast %139 : vector<128xf32> to vector<1x128xf32>
    %141 = arith.mulf %140, %1 : vector<1x128xf32>
    %cst_29 = arith.constant 0.000000e+00 : f32
    %142 = vector.broadcast %cst_29 : f32 to vector<1x128xf32>
    %143 = arith.maximumf %141, %142 : vector<1x128xf32>
    %144 = vector.extract_strided_slice %83 {offsets = [768, 0], sizes = [128, 128], strides = [1, 1]} : vector<1024x128xf32> to vector<128x128xf32>
    %145 = vector.broadcast %2 : vector<1x128xf32> to vector<128x128xf32>
    %146 = arith.cmpf oge, %144, %145 : vector<128x128xf32>
    %cst_30 = arith.constant 0x7F800000 : f32
    %147 = vector.broadcast %cst_30 : f32 to vector<128x128xf32>
    %148 = arith.select %146, %67, %147 : vector<128x128xi1>, vector<128x128xf32>
    %cst_31 = arith.constant dense<0x7F800000> : vector<128xf32>
    %149 = vector.multi_reduction <minimumf>, %148, %cst_31 [0] : vector<128x128xf32> to vector<128xf32>
    %150 = vector.shape_cast %149 : vector<128xf32> to vector<1x128xf32>
    %151 = arith.mulf %150, %1 : vector<1x128xf32>
    %cst_32 = arith.constant 0.000000e+00 : f32
    %152 = vector.broadcast %cst_32 : f32 to vector<1x128xf32>
    %153 = arith.maximumf %151, %152 : vector<1x128xf32>
    %154 = vector.extract_strided_slice %83 {offsets = [896, 0], sizes = [128, 128], strides = [1, 1]} : vector<1024x128xf32> to vector<128x128xf32>
    %155 = vector.broadcast %2 : vector<1x128xf32> to vector<128x128xf32>
    %156 = arith.cmpf oge, %154, %155 : vector<128x128xf32>
    %cst_33 = arith.constant 0x7F800000 : f32
    %157 = vector.broadcast %cst_33 : f32 to vector<128x128xf32>
    %158 = arith.select %156, %76, %157 : vector<128x128xi1>, vector<128x128xf32>
    %cst_34 = arith.constant dense<0x7F800000> : vector<128xf32>
    %159 = vector.multi_reduction <minimumf>, %158, %cst_34 [0] : vector<128x128xf32> to vector<128xf32>
    %160 = vector.shape_cast %159 : vector<128xf32> to vector<1x128xf32>
    %161 = arith.mulf %160, %1 : vector<1x128xf32>
    %cst_35 = arith.constant 0.000000e+00 : f32
    %162 = vector.broadcast %cst_35 : f32 to vector<1x128xf32>
    %163 = arith.maximumf %161, %162 : vector<1x128xf32>
    %164 = vector.extract_strided_slice %8 {offsets = [8, 0], sizes = [1, 128], strides = [1, 1]} : vector<16x128xf32> to vector<1x128xf32>
    %165 = vector.extract_strided_slice %9 {offsets = [0, 8], sizes = [128, 1], strides = [1, 1]} : vector<128x16xf32> to vector<128x1xf32>
    %166 = vector.shape_cast %165 : vector<128x1xf32> to vector<128x1xf32>
    %167 = vector.broadcast %166 : vector<128x1xf32> to vector<128x128xf32>
    %168 = vector.broadcast %164 : vector<1x128xf32> to vector<128x128xf32>
    %169 = arith.cmpf ole, %168, %167 : vector<128x128xf32>
    %170 = arith.extui %169 : vector<128x128xi1> to vector<128x128xi32>
    %171 = arith.sitofp %170 : vector<128x128xi32> to vector<128x128xf32>
    %172 = arith.truncf %171 : vector<128x128xf32> to vector<128x128xbf16>
    %173 = vector.extract_strided_slice %8 {offsets = [9, 0], sizes = [1, 128], strides = [1, 1]} : vector<16x128xf32> to vector<1x128xf32>
    %174 = vector.extract_strided_slice %9 {offsets = [0, 9], sizes = [128, 1], strides = [1, 1]} : vector<128x16xf32> to vector<128x1xf32>
    %175 = vector.shape_cast %174 : vector<128x1xf32> to vector<128x1xf32>
    %176 = vector.broadcast %175 : vector<128x1xf32> to vector<128x128xf32>
    %177 = vector.broadcast %173 : vector<1x128xf32> to vector<128x128xf32>
    %178 = arith.cmpf ole, %177, %176 : vector<128x128xf32>
    %179 = arith.extui %178 : vector<128x128xi1> to vector<128x128xi32>
    %180 = arith.sitofp %179 : vector<128x128xi32> to vector<128x128xf32>
    %181 = arith.truncf %180 : vector<128x128xf32> to vector<128x128xbf16>
    %182 = vector.extract_strided_slice %8 {offsets = [10, 0], sizes = [1, 128], strides = [1, 1]} : vector<16x128xf32> to vector<1x128xf32>
    %183 = vector.extract_strided_slice %9 {offsets = [0, 10], sizes = [128, 1], strides = [1, 1]} : vector<128x16xf32> to vector<128x1xf32>
    %184 = vector.shape_cast %183 : vector<128x1xf32> to vector<128x1xf32>
    %185 = vector.broadcast %184 : vector<128x1xf32> to vector<128x128xf32>
    %186 = vector.broadcast %182 : vector<1x128xf32> to vector<128x128xf32>
    %187 = arith.cmpf ole, %186, %185 : vector<128x128xf32>
    %188 = arith.extui %187 : vector<128x128xi1> to vector<128x128xi32>
    %189 = arith.sitofp %188 : vector<128x128xi32> to vector<128x128xf32>
    %190 = arith.truncf %189 : vector<128x128xf32> to vector<128x128xbf16>
    %191 = vector.extract_strided_slice %8 {offsets = [11, 0], sizes = [1, 128], strides = [1, 1]} : vector<16x128xf32> to vector<1x128xf32>
    %192 = vector.extract_strided_slice %9 {offsets = [0, 11], sizes = [128, 1], strides = [1, 1]} : vector<128x16xf32> to vector<128x1xf32>
    %193 = vector.shape_cast %192 : vector<128x1xf32> to vector<128x1xf32>
    %194 = vector.broadcast %193 : vector<128x1xf32> to vector<128x128xf32>
    %195 = vector.broadcast %191 : vector<1x128xf32> to vector<128x128xf32>
    %196 = arith.cmpf ole, %195, %194 : vector<128x128xf32>
    %197 = arith.extui %196 : vector<128x128xi1> to vector<128x128xi32>
    %198 = arith.sitofp %197 : vector<128x128xi32> to vector<128x128xf32>
    %199 = arith.truncf %198 : vector<128x128xf32> to vector<128x128xbf16>
    %200 = vector.extract_strided_slice %8 {offsets = [12, 0], sizes = [1, 128], strides = [1, 1]} : vector<16x128xf32> to vector<1x128xf32>
    %201 = vector.extract_strided_slice %9 {offsets = [0, 12], sizes = [128, 1], strides = [1, 1]} : vector<128x16xf32> to vector<128x1xf32>
    %202 = vector.shape_cast %201 : vector<128x1xf32> to vector<128x1xf32>
    %203 = vector.broadcast %202 : vector<128x1xf32> to vector<128x128xf32>
    %204 = vector.broadcast %200 : vector<1x128xf32> to vector<128x128xf32>
    %205 = arith.cmpf ole, %204, %203 : vector<128x128xf32>
    %206 = arith.extui %205 : vector<128x128xi1> to vector<128x128xi32>
    %207 = arith.sitofp %206 : vector<128x128xi32> to vector<128x128xf32>
    %208 = arith.truncf %207 : vector<128x128xf32> to vector<128x128xbf16>
    %209 = vector.extract_strided_slice %8 {offsets = [13, 0], sizes = [1, 128], strides = [1, 1]} : vector<16x128xf32> to vector<1x128xf32>
    %210 = vector.extract_strided_slice %9 {offsets = [0, 13], sizes = [128, 1], strides = [1, 1]} : vector<128x16xf32> to vector<128x1xf32>
    %211 = vector.shape_cast %210 : vector<128x1xf32> to vector<128x1xf32>
    %212 = vector.broadcast %211 : vector<128x1xf32> to vector<128x128xf32>
    %213 = vector.broadcast %209 : vector<1x128xf32> to vector<128x128xf32>
    %214 = arith.cmpf ole, %213, %212 : vector<128x128xf32>
    %215 = arith.extui %214 : vector<128x128xi1> to vector<128x128xi32>
    %216 = arith.sitofp %215 : vector<128x128xi32> to vector<128x128xf32>
    %217 = arith.truncf %216 : vector<128x128xf32> to vector<128x128xbf16>
    %218 = vector.extract_strided_slice %8 {offsets = [14, 0], sizes = [1, 128], strides = [1, 1]} : vector<16x128xf32> to vector<1x128xf32>
    %219 = vector.extract_strided_slice %9 {offsets = [0, 14], sizes = [128, 1], strides = [1, 1]} : vector<128x16xf32> to vector<128x1xf32>
    %220 = vector.shape_cast %219 : vector<128x1xf32> to vector<128x1xf32>
    %221 = vector.broadcast %220 : vector<128x1xf32> to vector<128x128xf32>
    %222 = vector.broadcast %218 : vector<1x128xf32> to vector<128x128xf32>
    %223 = arith.cmpf ole, %222, %221 : vector<128x128xf32>
    %224 = arith.extui %223 : vector<128x128xi1> to vector<128x128xi32>
    %225 = arith.sitofp %224 : vector<128x128xi32> to vector<128x128xf32>
    %226 = arith.truncf %225 : vector<128x128xf32> to vector<128x128xbf16>
    %227 = vector.extract_strided_slice %8 {offsets = [15, 0], sizes = [1, 128], strides = [1, 1]} : vector<16x128xf32> to vector<1x128xf32>
    %228 = vector.extract_strided_slice %9 {offsets = [0, 15], sizes = [128, 1], strides = [1, 1]} : vector<128x16xf32> to vector<128x1xf32>
    %229 = vector.shape_cast %228 : vector<128x1xf32> to vector<128x1xf32>
    %230 = vector.broadcast %229 : vector<128x1xf32> to vector<128x128xf32>
    %231 = vector.broadcast %227 : vector<1x128xf32> to vector<128x128xf32>
    %232 = arith.cmpf ole, %231, %230 : vector<128x128xf32>
    %233 = arith.extui %232 : vector<128x128xi1> to vector<128x128xi32>
    %234 = arith.sitofp %233 : vector<128x128xi32> to vector<128x128xf32>
    %235 = arith.truncf %234 : vector<128x128xf32> to vector<128x128xbf16>
    %236 = tpu.concatenate %172, %181, %190, %199, %208, %217, %226, %235 in 0 : vector<128x128xbf16>, vector<128x128xbf16>, vector<128x128xbf16>, vector<128x128xbf16>, vector<128x128xbf16>, vector<128x128xbf16>, vector<128x128xbf16>, vector<128x128xbf16> -> vector<1024x128xbf16>
    %cst_36 = arith.constant dense<0.000000e+00> : vector<1024x128xf32>
    %237 = tpu.matmul %236, %0, %cst_36 {dimension_numbers = #tpu.dot_dimension_numbers<[1], [0], [0], [1], [0, 0, 1, 1], [], []>} : vector<1024x128xbf16>, vector<128x128xbf16>, vector<1024x128xf32> -> vector<1024x128xf32>
    %238 = vector.extract_strided_slice %237 {offsets = [0, 0], sizes = [128, 128], strides = [1, 1]} : vector<1024x128xf32> to vector<128x128xf32>
    %239 = vector.broadcast %2 : vector<1x128xf32> to vector<128x128xf32>
    %240 = arith.cmpf oge, %238, %239 : vector<128x128xf32>
    %cst_37 = arith.constant 0x7F800000 : f32
    %241 = vector.broadcast %cst_37 : f32 to vector<128x128xf32>
    %242 = arith.select %240, %167, %241 : vector<128x128xi1>, vector<128x128xf32>
    %cst_38 = arith.constant dense<0x7F800000> : vector<128xf32>
    %243 = vector.multi_reduction <minimumf>, %242, %cst_38 [0] : vector<128x128xf32> to vector<128xf32>
    %244 = vector.shape_cast %243 : vector<128xf32> to vector<1x128xf32>
    %245 = arith.mulf %244, %1 : vector<1x128xf32>
    %cst_39 = arith.constant 0.000000e+00 : f32
    %246 = vector.broadcast %cst_39 : f32 to vector<1x128xf32>
    %247 = arith.maximumf %245, %246 : vector<1x128xf32>
    %248 = vector.extract_strided_slice %237 {offsets = [128, 0], sizes = [128, 128], strides = [1, 1]} : vector<1024x128xf32> to vector<128x128xf32>
    %249 = vector.broadcast %2 : vector<1x128xf32> to vector<128x128xf32>
    %250 = arith.cmpf oge, %248, %249 : vector<128x128xf32>
    %cst_40 = arith.constant 0x7F800000 : f32
    %251 = vector.broadcast %cst_40 : f32 to vector<128x128xf32>
    %252 = arith.select %250, %176, %251 : vector<128x128xi1>, vector<128x128xf32>
    %cst_41 = arith.constant dense<0x7F800000> : vector<128xf32>
    %253 = vector.multi_reduction <minimumf>, %252, %cst_41 [0] : vector<128x128xf32> to vector<128xf32>
    %254 = vector.shape_cast %253 : vector<128xf32> to vector<1x128xf32>
    %255 = arith.mulf %254, %1 : vector<1x128xf32>
    %cst_42 = arith.constant 0.000000e+00 : f32
    %256 = vector.broadcast %cst_42 : f32 to vector<1x128xf32>
    %257 = arith.maximumf %255, %256 : vector<1x128xf32>
    %258 = vector.extract_strided_slice %237 {offsets = [256, 0], sizes = [128, 128], strides = [1, 1]} : vector<1024x128xf32> to vector<128x128xf32>
    %259 = vector.broadcast %2 : vector<1x128xf32> to vector<128x128xf32>
    %260 = arith.cmpf oge, %258, %259 : vector<128x128xf32>
    %cst_43 = arith.constant 0x7F800000 : f32
    %261 = vector.broadcast %cst_43 : f32 to vector<128x128xf32>
    %262 = arith.select %260, %185, %261 : vector<128x128xi1>, vector<128x128xf32>
    %cst_44 = arith.constant dense<0x7F800000> : vector<128xf32>
    %263 = vector.multi_reduction <minimumf>, %262, %cst_44 [0] : vector<128x128xf32> to vector<128xf32>
    %264 = vector.shape_cast %263 : vector<128xf32> to vector<1x128xf32>
    %265 = arith.mulf %264, %1 : vector<1x128xf32>
    %cst_45 = arith.constant 0.000000e+00 : f32
    %266 = vector.broadcast %cst_45 : f32 to vector<1x128xf32>
    %267 = arith.maximumf %265, %266 : vector<1x128xf32>
    %268 = vector.extract_strided_slice %237 {offsets = [384, 0], sizes = [128, 128], strides = [1, 1]} : vector<1024x128xf32> to vector<128x128xf32>
    %269 = vector.broadcast %2 : vector<1x128xf32> to vector<128x128xf32>
    %270 = arith.cmpf oge, %268, %269 : vector<128x128xf32>
    %cst_46 = arith.constant 0x7F800000 : f32
    %271 = vector.broadcast %cst_46 : f32 to vector<128x128xf32>
    %272 = arith.select %270, %194, %271 : vector<128x128xi1>, vector<128x128xf32>
    %cst_47 = arith.constant dense<0x7F800000> : vector<128xf32>
    %273 = vector.multi_reduction <minimumf>, %272, %cst_47 [0] : vector<128x128xf32> to vector<128xf32>
    %274 = vector.shape_cast %273 : vector<128xf32> to vector<1x128xf32>
    %275 = arith.mulf %274, %1 : vector<1x128xf32>
    %cst_48 = arith.constant 0.000000e+00 : f32
    %276 = vector.broadcast %cst_48 : f32 to vector<1x128xf32>
    %277 = arith.maximumf %275, %276 : vector<1x128xf32>
    %278 = vector.extract_strided_slice %237 {offsets = [512, 0], sizes = [128, 128], strides = [1, 1]} : vector<1024x128xf32> to vector<128x128xf32>
    %279 = vector.broadcast %2 : vector<1x128xf32> to vector<128x128xf32>
    %280 = arith.cmpf oge, %278, %279 : vector<128x128xf32>
    %cst_49 = arith.constant 0x7F800000 : f32
    %281 = vector.broadcast %cst_49 : f32 to vector<128x128xf32>
    %282 = arith.select %280, %203, %281 : vector<128x128xi1>, vector<128x128xf32>
    %cst_50 = arith.constant dense<0x7F800000> : vector<128xf32>
    %283 = vector.multi_reduction <minimumf>, %282, %cst_50 [0] : vector<128x128xf32> to vector<128xf32>
    %284 = vector.shape_cast %283 : vector<128xf32> to vector<1x128xf32>
    %285 = arith.mulf %284, %1 : vector<1x128xf32>
    %cst_51 = arith.constant 0.000000e+00 : f32
    %286 = vector.broadcast %cst_51 : f32 to vector<1x128xf32>
    %287 = arith.maximumf %285, %286 : vector<1x128xf32>
    %288 = vector.extract_strided_slice %237 {offsets = [640, 0], sizes = [128, 128], strides = [1, 1]} : vector<1024x128xf32> to vector<128x128xf32>
    %289 = vector.broadcast %2 : vector<1x128xf32> to vector<128x128xf32>
    %290 = arith.cmpf oge, %288, %289 : vector<128x128xf32>
    %cst_52 = arith.constant 0x7F800000 : f32
    %291 = vector.broadcast %cst_52 : f32 to vector<128x128xf32>
    %292 = arith.select %290, %212, %291 : vector<128x128xi1>, vector<128x128xf32>
    %cst_53 = arith.constant dense<0x7F800000> : vector<128xf32>
    %293 = vector.multi_reduction <minimumf>, %292, %cst_53 [0] : vector<128x128xf32> to vector<128xf32>
    %294 = vector.shape_cast %293 : vector<128xf32> to vector<1x128xf32>
    %295 = arith.mulf %294, %1 : vector<1x128xf32>
    %cst_54 = arith.constant 0.000000e+00 : f32
    %296 = vector.broadcast %cst_54 : f32 to vector<1x128xf32>
    %297 = arith.maximumf %295, %296 : vector<1x128xf32>
    %298 = vector.extract_strided_slice %237 {offsets = [768, 0], sizes = [128, 128], strides = [1, 1]} : vector<1024x128xf32> to vector<128x128xf32>
    %299 = vector.broadcast %2 : vector<1x128xf32> to vector<128x128xf32>
    %300 = arith.cmpf oge, %298, %299 : vector<128x128xf32>
    %cst_55 = arith.constant 0x7F800000 : f32
    %301 = vector.broadcast %cst_55 : f32 to vector<128x128xf32>
    %302 = arith.select %300, %221, %301 : vector<128x128xi1>, vector<128x128xf32>
    %cst_56 = arith.constant dense<0x7F800000> : vector<128xf32>
    %303 = vector.multi_reduction <minimumf>, %302, %cst_56 [0] : vector<128x128xf32> to vector<128xf32>
    %304 = vector.shape_cast %303 : vector<128xf32> to vector<1x128xf32>
    %305 = arith.mulf %304, %1 : vector<1x128xf32>
    %cst_57 = arith.constant 0.000000e+00 : f32
    %306 = vector.broadcast %cst_57 : f32 to vector<1x128xf32>
    %307 = arith.maximumf %305, %306 : vector<1x128xf32>
    %308 = vector.extract_strided_slice %237 {offsets = [896, 0], sizes = [128, 128], strides = [1, 1]} : vector<1024x128xf32> to vector<128x128xf32>
    %309 = vector.broadcast %2 : vector<1x128xf32> to vector<128x128xf32>
    %310 = arith.cmpf oge, %308, %309 : vector<128x128xf32>
    %cst_58 = arith.constant 0x7F800000 : f32
    %311 = vector.broadcast %cst_58 : f32 to vector<128x128xf32>
    %312 = arith.select %310, %230, %311 : vector<128x128xi1>, vector<128x128xf32>
    %cst_59 = arith.constant dense<0x7F800000> : vector<128xf32>
    %313 = vector.multi_reduction <minimumf>, %312, %cst_59 [0] : vector<128x128xf32> to vector<128xf32>
    %314 = vector.shape_cast %313 : vector<128xf32> to vector<1x128xf32>
    %315 = arith.mulf %314, %1 : vector<1x128xf32>
    %cst_60 = arith.constant 0.000000e+00 : f32
    %316 = vector.broadcast %cst_60 : f32 to vector<1x128xf32>
    %317 = arith.maximumf %315, %316 : vector<1x128xf32>
    %318 = tpu.concatenate %93, %103, %113, %123, %133, %143, %153, %163, %247, %257, %267, %277, %287, %297, %307, %317 in 0 : vector<1x128xf32>, vector<1x128xf32>, vector<1x128xf32>, vector<1x128xf32>, vector<1x128xf32>, vector<1x128xf32>, vector<1x128xf32>, vector<1x128xf32>, vector<1x128xf32>, vector<1x128xf32>, vector<1x128xf32>, vector<1x128xf32>, vector<1x128xf32>, vector<1x128xf32>, vector<1x128xf32>, vector<1x128xf32> -> vector<16x128xf32>
    %c0_61 = arith.constant 0 : index
    %c0_62 = arith.constant 0 : index
    %319 = vector.load %arg6[%c0_61, %c0_62] : memref<8x16xf32, #tpu.memory_space<vmem>>, vector<8x16xf32>
    %cst_63 = arith.constant dense<0.000000e+00> : vector<8x128xf32>
    %320 = tpu.matmul %319, %318, %cst_63 {dimension_numbers = #tpu.dot_dimension_numbers<[1], [0], [0], [1], [0, 0, 1, 1], [], []>} : vector<8x16xf32>, vector<16x128xf32>, vector<8x128xf32> -> vector<8x128xf32>
    %c0_64 = arith.constant 0 : index
    %c0_65 = arith.constant 0 : index
    %321 = vector.load %arg7[%c0_64, %c0_65] : memref<8x1xf32, #tpu.memory_space<vmem>>, vector<8x1xf32>
    %322 = vector.broadcast %321 : vector<8x1xf32> to vector<8x128xf32>
    %323 = arith.addf %320, %322 : vector<8x128xf32>
    %324 = tpu.transpose %323, [1, 0] : vector<8x128xf32> -> vector<128x8xf32>
    %325 = vector.extract_strided_slice %323 {offsets = [0, 0], sizes = [1, 128], strides = [1, 1]} : vector<8x128xf32> to vector<1x128xf32>
    %326 = vector.extract_strided_slice %324 {offsets = [0, 0], sizes = [128, 1], strides = [1, 1]} : vector<128x8xf32> to vector<128x1xf32>
    %327 = vector.shape_cast %326 : vector<128x1xf32> to vector<128x1xf32>
    %328 = vector.broadcast %327 : vector<128x1xf32> to vector<128x128xf32>
    %329 = vector.broadcast %325 : vector<1x128xf32> to vector<128x128xf32>
    %330 = arith.cmpf ole, %329, %328 : vector<128x128xf32>
    %331 = arith.extui %330 : vector<128x128xi1> to vector<128x128xi32>
    %332 = arith.sitofp %331 : vector<128x128xi32> to vector<128x128xf32>
    %333 = arith.truncf %332 : vector<128x128xf32> to vector<128x128xbf16>
    %334 = vector.extract_strided_slice %323 {offsets = [1, 0], sizes = [1, 128], strides = [1, 1]} : vector<8x128xf32> to vector<1x128xf32>
    %335 = vector.extract_strided_slice %324 {offsets = [0, 1], sizes = [128, 1], strides = [1, 1]} : vector<128x8xf32> to vector<128x1xf32>
    %336 = vector.shape_cast %335 : vector<128x1xf32> to vector<128x1xf32>
    %337 = vector.broadcast %336 : vector<128x1xf32> to vector<128x128xf32>
    %338 = vector.broadcast %334 : vector<1x128xf32> to vector<128x128xf32>
    %339 = arith.cmpf ole, %338, %337 : vector<128x128xf32>
    %340 = arith.extui %339 : vector<128x128xi1> to vector<128x128xi32>
    %341 = arith.sitofp %340 : vector<128x128xi32> to vector<128x128xf32>
    %342 = arith.truncf %341 : vector<128x128xf32> to vector<128x128xbf16>
    %343 = vector.extract_strided_slice %323 {offsets = [2, 0], sizes = [1, 128], strides = [1, 1]} : vector<8x128xf32> to vector<1x128xf32>
    %344 = vector.extract_strided_slice %324 {offsets = [0, 2], sizes = [128, 1], strides = [1, 1]} : vector<128x8xf32> to vector<128x1xf32>
    %345 = vector.shape_cast %344 : vector<128x1xf32> to vector<128x1xf32>
    %346 = vector.broadcast %345 : vector<128x1xf32> to vector<128x128xf32>
    %347 = vector.broadcast %343 : vector<1x128xf32> to vector<128x128xf32>
    %348 = arith.cmpf ole, %347, %346 : vector<128x128xf32>
    %349 = arith.extui %348 : vector<128x128xi1> to vector<128x128xi32>
    %350 = arith.sitofp %349 : vector<128x128xi32> to vector<128x128xf32>
    %351 = arith.truncf %350 : vector<128x128xf32> to vector<128x128xbf16>
    %352 = vector.extract_strided_slice %323 {offsets = [3, 0], sizes = [1, 128], strides = [1, 1]} : vector<8x128xf32> to vector<1x128xf32>
    %353 = vector.extract_strided_slice %324 {offsets = [0, 3], sizes = [128, 1], strides = [1, 1]} : vector<128x8xf32> to vector<128x1xf32>
    %354 = vector.shape_cast %353 : vector<128x1xf32> to vector<128x1xf32>
    %355 = vector.broadcast %354 : vector<128x1xf32> to vector<128x128xf32>
    %356 = vector.broadcast %352 : vector<1x128xf32> to vector<128x128xf32>
    %357 = arith.cmpf ole, %356, %355 : vector<128x128xf32>
    %358 = arith.extui %357 : vector<128x128xi1> to vector<128x128xi32>
    %359 = arith.sitofp %358 : vector<128x128xi32> to vector<128x128xf32>
    %360 = arith.truncf %359 : vector<128x128xf32> to vector<128x128xbf16>
    %361 = vector.extract_strided_slice %323 {offsets = [4, 0], sizes = [1, 128], strides = [1, 1]} : vector<8x128xf32> to vector<1x128xf32>
    %362 = vector.extract_strided_slice %324 {offsets = [0, 4], sizes = [128, 1], strides = [1, 1]} : vector<128x8xf32> to vector<128x1xf32>
    %363 = vector.shape_cast %362 : vector<128x1xf32> to vector<128x1xf32>
    %364 = vector.broadcast %363 : vector<128x1xf32> to vector<128x128xf32>
    %365 = vector.broadcast %361 : vector<1x128xf32> to vector<128x128xf32>
    %366 = arith.cmpf ole, %365, %364 : vector<128x128xf32>
    %367 = arith.extui %366 : vector<128x128xi1> to vector<128x128xi32>
    %368 = arith.sitofp %367 : vector<128x128xi32> to vector<128x128xf32>
    %369 = arith.truncf %368 : vector<128x128xf32> to vector<128x128xbf16>
    %370 = vector.extract_strided_slice %323 {offsets = [5, 0], sizes = [1, 128], strides = [1, 1]} : vector<8x128xf32> to vector<1x128xf32>
    %371 = vector.extract_strided_slice %324 {offsets = [0, 5], sizes = [128, 1], strides = [1, 1]} : vector<128x8xf32> to vector<128x1xf32>
    %372 = vector.shape_cast %371 : vector<128x1xf32> to vector<128x1xf32>
    %373 = vector.broadcast %372 : vector<128x1xf32> to vector<128x128xf32>
    %374 = vector.broadcast %370 : vector<1x128xf32> to vector<128x128xf32>
    %375 = arith.cmpf ole, %374, %373 : vector<128x128xf32>
    %376 = arith.extui %375 : vector<128x128xi1> to vector<128x128xi32>
    %377 = arith.sitofp %376 : vector<128x128xi32> to vector<128x128xf32>
    %378 = arith.truncf %377 : vector<128x128xf32> to vector<128x128xbf16>
    %379 = vector.extract_strided_slice %323 {offsets = [6, 0], sizes = [1, 128], strides = [1, 1]} : vector<8x128xf32> to vector<1x128xf32>
    %380 = vector.extract_strided_slice %324 {offsets = [0, 6], sizes = [128, 1], strides = [1, 1]} : vector<128x8xf32> to vector<128x1xf32>
    %381 = vector.shape_cast %380 : vector<128x1xf32> to vector<128x1xf32>
    %382 = vector.broadcast %381 : vector<128x1xf32> to vector<128x128xf32>
    %383 = vector.broadcast %379 : vector<1x128xf32> to vector<128x128xf32>
    %384 = arith.cmpf ole, %383, %382 : vector<128x128xf32>
    %385 = arith.extui %384 : vector<128x128xi1> to vector<128x128xi32>
    %386 = arith.sitofp %385 : vector<128x128xi32> to vector<128x128xf32>
    %387 = arith.truncf %386 : vector<128x128xf32> to vector<128x128xbf16>
    %388 = vector.extract_strided_slice %323 {offsets = [7, 0], sizes = [1, 128], strides = [1, 1]} : vector<8x128xf32> to vector<1x128xf32>
    %389 = vector.extract_strided_slice %324 {offsets = [0, 7], sizes = [128, 1], strides = [1, 1]} : vector<128x8xf32> to vector<128x1xf32>
    %390 = vector.shape_cast %389 : vector<128x1xf32> to vector<128x1xf32>
    %391 = vector.broadcast %390 : vector<128x1xf32> to vector<128x128xf32>
    %392 = vector.broadcast %388 : vector<1x128xf32> to vector<128x128xf32>
    %393 = arith.cmpf ole, %392, %391 : vector<128x128xf32>
    %394 = arith.extui %393 : vector<128x128xi1> to vector<128x128xi32>
    %395 = arith.sitofp %394 : vector<128x128xi32> to vector<128x128xf32>
    %396 = arith.truncf %395 : vector<128x128xf32> to vector<128x128xbf16>
    %397 = tpu.concatenate %333, %342, %351, %360, %369, %378, %387, %396 in 0 : vector<128x128xbf16>, vector<128x128xbf16>, vector<128x128xbf16>, vector<128x128xbf16>, vector<128x128xbf16>, vector<128x128xbf16>, vector<128x128xbf16>, vector<128x128xbf16> -> vector<1024x128xbf16>
    %cst_66 = arith.constant dense<0.000000e+00> : vector<1024x128xf32>
    %398 = tpu.matmul %397, %0, %cst_66 {dimension_numbers = #tpu.dot_dimension_numbers<[1], [0], [0], [1], [0, 0, 1, 1], [], []>} : vector<1024x128xbf16>, vector<128x128xbf16>, vector<1024x128xf32> -> vector<1024x128xf32>
    %399 = vector.extract_strided_slice %398 {offsets = [0, 0], sizes = [128, 128], strides = [1, 1]} : vector<1024x128xf32> to vector<128x128xf32>
    %400 = vector.broadcast %2 : vector<1x128xf32> to vector<128x128xf32>
    %401 = arith.cmpf oge, %399, %400 : vector<128x128xf32>
    %cst_67 = arith.constant 0x7F800000 : f32
    %402 = vector.broadcast %cst_67 : f32 to vector<128x128xf32>
    %403 = arith.select %401, %328, %402 : vector<128x128xi1>, vector<128x128xf32>
    %cst_68 = arith.constant dense<0x7F800000> : vector<128xf32>
    %404 = vector.multi_reduction <minimumf>, %403, %cst_68 [0] : vector<128x128xf32> to vector<128xf32>
    %405 = vector.shape_cast %404 : vector<128xf32> to vector<1x128xf32>
    %406 = arith.mulf %405, %1 : vector<1x128xf32>
    %407 = vector.extract_strided_slice %398 {offsets = [128, 0], sizes = [128, 128], strides = [1, 1]} : vector<1024x128xf32> to vector<128x128xf32>
    %408 = vector.broadcast %2 : vector<1x128xf32> to vector<128x128xf32>
    %409 = arith.cmpf oge, %407, %408 : vector<128x128xf32>
    %cst_69 = arith.constant 0x7F800000 : f32
    %410 = vector.broadcast %cst_69 : f32 to vector<128x128xf32>
    %411 = arith.select %409, %337, %410 : vector<128x128xi1>, vector<128x128xf32>
    %cst_70 = arith.constant dense<0x7F800000> : vector<128xf32>
    %412 = vector.multi_reduction <minimumf>, %411, %cst_70 [0] : vector<128x128xf32> to vector<128xf32>
    %413 = vector.shape_cast %412 : vector<128xf32> to vector<1x128xf32>
    %414 = arith.mulf %413, %1 : vector<1x128xf32>
    %415 = vector.extract_strided_slice %398 {offsets = [256, 0], sizes = [128, 128], strides = [1, 1]} : vector<1024x128xf32> to vector<128x128xf32>
    %416 = vector.broadcast %2 : vector<1x128xf32> to vector<128x128xf32>
    %417 = arith.cmpf oge, %415, %416 : vector<128x128xf32>
    %cst_71 = arith.constant 0x7F800000 : f32
    %418 = vector.broadcast %cst_71 : f32 to vector<128x128xf32>
    %419 = arith.select %417, %346, %418 : vector<128x128xi1>, vector<128x128xf32>
    %cst_72 = arith.constant dense<0x7F800000> : vector<128xf32>
    %420 = vector.multi_reduction <minimumf>, %419, %cst_72 [0] : vector<128x128xf32> to vector<128xf32>
    %421 = vector.shape_cast %420 : vector<128xf32> to vector<1x128xf32>
    %422 = arith.mulf %421, %1 : vector<1x128xf32>
    %423 = vector.extract_strided_slice %398 {offsets = [384, 0], sizes = [128, 128], strides = [1, 1]} : vector<1024x128xf32> to vector<128x128xf32>
    %424 = vector.broadcast %2 : vector<1x128xf32> to vector<128x128xf32>
    %425 = arith.cmpf oge, %423, %424 : vector<128x128xf32>
    %cst_73 = arith.constant 0x7F800000 : f32
    %426 = vector.broadcast %cst_73 : f32 to vector<128x128xf32>
    %427 = arith.select %425, %355, %426 : vector<128x128xi1>, vector<128x128xf32>
    %cst_74 = arith.constant dense<0x7F800000> : vector<128xf32>
    %428 = vector.multi_reduction <minimumf>, %427, %cst_74 [0] : vector<128x128xf32> to vector<128xf32>
    %429 = vector.shape_cast %428 : vector<128xf32> to vector<1x128xf32>
    %430 = arith.mulf %429, %1 : vector<1x128xf32>
    %431 = vector.extract_strided_slice %398 {offsets = [512, 0], sizes = [128, 128], strides = [1, 1]} : vector<1024x128xf32> to vector<128x128xf32>
    %432 = vector.broadcast %2 : vector<1x128xf32> to vector<128x128xf32>
    %433 = arith.cmpf oge, %431, %432 : vector<128x128xf32>
    %cst_75 = arith.constant 0x7F800000 : f32
    %434 = vector.broadcast %cst_75 : f32 to vector<128x128xf32>
    %435 = arith.select %433, %364, %434 : vector<128x128xi1>, vector<128x128xf32>
    %cst_76 = arith.constant dense<0x7F800000> : vector<128xf32>
    %436 = vector.multi_reduction <minimumf>, %435, %cst_76 [0] : vector<128x128xf32> to vector<128xf32>
    %437 = vector.shape_cast %436 : vector<128xf32> to vector<1x128xf32>
    %438 = arith.mulf %437, %1 : vector<1x128xf32>
    %439 = vector.extract_strided_slice %398 {offsets = [640, 0], sizes = [128, 128], strides = [1, 1]} : vector<1024x128xf32> to vector<128x128xf32>
    %440 = vector.broadcast %2 : vector<1x128xf32> to vector<128x128xf32>
    %441 = arith.cmpf oge, %439, %440 : vector<128x128xf32>
    %cst_77 = arith.constant 0x7F800000 : f32
    %442 = vector.broadcast %cst_77 : f32 to vector<128x128xf32>
    %443 = arith.select %441, %373, %442 : vector<128x128xi1>, vector<128x128xf32>
    %cst_78 = arith.constant dense<0x7F800000> : vector<128xf32>
    %444 = vector.multi_reduction <minimumf>, %443, %cst_78 [0] : vector<128x128xf32> to vector<128xf32>
    %445 = vector.shape_cast %444 : vector<128xf32> to vector<1x128xf32>
    %446 = arith.mulf %445, %1 : vector<1x128xf32>
    %447 = vector.extract_strided_slice %398 {offsets = [768, 0], sizes = [128, 128], strides = [1, 1]} : vector<1024x128xf32> to vector<128x128xf32>
    %448 = vector.broadcast %2 : vector<1x128xf32> to vector<128x128xf32>
    %449 = arith.cmpf oge, %447, %448 : vector<128x128xf32>
    %cst_79 = arith.constant 0x7F800000 : f32
    %450 = vector.broadcast %cst_79 : f32 to vector<128x128xf32>
    %451 = arith.select %449, %382, %450 : vector<128x128xi1>, vector<128x128xf32>
    %cst_80 = arith.constant dense<0x7F800000> : vector<128xf32>
    %452 = vector.multi_reduction <minimumf>, %451, %cst_80 [0] : vector<128x128xf32> to vector<128xf32>
    %453 = vector.shape_cast %452 : vector<128xf32> to vector<1x128xf32>
    %454 = arith.mulf %453, %1 : vector<1x128xf32>
    %455 = vector.extract_strided_slice %398 {offsets = [896, 0], sizes = [128, 128], strides = [1, 1]} : vector<1024x128xf32> to vector<128x128xf32>
    %456 = vector.broadcast %2 : vector<1x128xf32> to vector<128x128xf32>
    %457 = arith.cmpf oge, %455, %456 : vector<128x128xf32>
    %cst_81 = arith.constant 0x7F800000 : f32
    %458 = vector.broadcast %cst_81 : f32 to vector<128x128xf32>
    %459 = arith.select %457, %391, %458 : vector<128x128xi1>, vector<128x128xf32>
    %cst_82 = arith.constant dense<0x7F800000> : vector<128xf32>
    %460 = vector.multi_reduction <minimumf>, %459, %cst_82 [0] : vector<128x128xf32> to vector<128xf32>
    %461 = vector.shape_cast %460 : vector<128xf32> to vector<1x128xf32>
    %462 = arith.mulf %461, %1 : vector<1x128xf32>
    %463 = tpu.concatenate %406, %414, %422, %430, %438, %446, %454, %462 in 0 : vector<1x128xf32>, vector<1x128xf32>, vector<1x128xf32>, vector<1x128xf32>, vector<1x128xf32>, vector<1x128xf32>, vector<1x128xf32>, vector<1x128xf32> -> vector<8x128xf32>
    %c0_83 = arith.constant 0 : index
    %c0_84 = arith.constant 0 : index
    %464 = vector.load %arg8[%c0_83, %c0_84] : memref<8x128xf32, #tpu.memory_space<vmem>>, vector<8x128xf32>
    tpu.vector_store %arg8[%c0_83, %c0_84], %463 {strides = array<i32>} : memref<8x128xf32, #tpu.memory_space<vmem>>, vector<8x128xf32>,
    return
  }
}

</mosaic_0001>

<llo_original>
// kernel: tpu_custom_call.1
$region0: #{tpu_custom_call.1}
  #allocation0 [shape = 'u32[]', space=smem, size = 0x4, offset = 0x4, fixed_abs, tag = 'smem constant byte address 0x4 - core index']
  #allocation1 [shape = 'u32[144,128]{1,0:T(1,128)}', space=vmem, size = 0x12000, scoped, tag = 'internal scratch']
  %s0 = inlined_call_operand.hbm [shape: bf16[128,128], index: 0, kind: input, shape index: {}]
  %s1 = inlined_call_operand.vmem [shape: f32[1,128], index: 1, kind: input, shape index: {}]
  %s2 = inlined_call_operand.hbm [shape: f32[1,128], index: 2, kind: input, shape index: {}]
  %s3 = inlined_call_operand.vmem [shape: f32[32,128], index: 3, kind: input, shape index: {}]
  %s4 = inlined_call_operand.hbm [shape: f32[16,32], index: 4, kind: input, shape index: {}]
  %s5 = inlined_call_operand.vmem [shape: f32[16,1], index: 5, kind: input, shape index: {}]
  %s6 = inlined_call_operand.vmem [shape: f32[8,16], index: 6, kind: input, shape index: {}]
  %s7 = inlined_call_operand.vmem [shape: f32[8,1], index: 7, kind: input, shape index: {}]
  %s8 = inlined_call_operand.hbm [shape: f32[8,128], index: 8, kind: output, shape index: {}]
  %s9 = sld [smem:[#allocation0]]
  $region54: #{tpu_custom_call.1} parent=0
    _
  %s11 = ssub.s32 1, %s9
  %s12 = scalar_select 0, %s11, %s9
  $region1: #{tpu_custom_call.1} parent=0
    #allocation2 [shape = 'u8[32768]{0}', space=vmem, size = 0x8000, scoped, tag = 'input window, operand 0, single buffered']
    #allocation3 [shape = 's32[1]{0}', space=sflag, size = 0x4, scoped, tag = 'scoped memory for tpu_custom_call.1']
    #allocation4 [shape = 's32[1]{0}', space=sflag, size = 0x4, scoped, tag = 'scoped memory for tpu_custom_call.1']
    #allocation5 [shape = 'u8[512]{0}', space=vmem, size = 0x400, scoped, tag = 'input window, operand 2, single buffered']
    #allocation6 [shape = 's32[1]{0}', space=sflag, size = 0x4, scoped, tag = 'scoped memory for tpu_custom_call.1']
    #allocation7 [shape = 'u8[8192]{0}', space=vmem, size = 0x2000, scoped, tag = 'input window, operand 4, single buffered']
    #allocation8 [shape = 'u8[4096]{0}', space=vmem, size = 0x1000, scoped, tag = 'output window, operand 0, single buffered']
    %13 = vsyncpa [#allocation3], 0
    %14 = vsyncpa [#allocation6], 0
    %15 = vsyncpa [#allocation4], 0
    // Predicated region
    $region2: #{tpu_custom_call.1} parent=1 // pred_check
      _
    $region3: #{tpu_custom_call.1} parent=1 // pred_check_branch
      %17 = sbr.rel (0) target = $region5
    $region4: #{tpu_custom_call.1} parent=1 // pred_region
      %s19 = ssub.s32 1024, 1024
      %20 = vsyncadd [#allocation3], %s19
      %s21 = sshll.u32 [#allocation2], 4
      %s22 = int_to_ptr.vmem [resolvable:$true] %s21
      %27 = dma.hbm_to_vmem [thread:$0]  %s0, 1024, %s22, [#allocation3], 64, 64, 4
    $region5: #{tpu_custom_call.1} parent=1 // pred_fallthru
      _
    // Predicated region
    $region6: #{tpu_custom_call.1} parent=1 // pred_check
      _
    $region7: #{tpu_custom_call.1} parent=1 // pred_check_branch
      %29 = sbr.rel (0) target = $region9
    $region8: #{tpu_custom_call.1} parent=1 // pred_region
      _
    $region9: #{tpu_custom_call.1} parent=1 // pred_fallthru
      _
    // Predicated region
    $region10: #{tpu_custom_call.1} parent=1 // pred_check
      _
    $region11: #{tpu_custom_call.1} parent=1 // pred_check_branch
      %31 = sbr.rel (0) target = $region13
    $region12: #{tpu_custom_call.1} parent=1 // pred_region
      %s33 = ssub.s32 16, 16
      %34 = vsyncadd [#allocation6], %s33
      %s36 = sshll.u32 [#allocation5], 4
      %s37 = int_to_ptr.vmem [resolvable:$true] %s36
      %39 = dma.hbm_to_vmem [thread:$0]  %s2, 16, %s37, [#allocation6]
    $region13: #{tpu_custom_call.1} parent=1 // pred_fallthru
      _
    // Predicated region
    $region14: #{tpu_custom_call.1} parent=1 // pred_check
      _
    $region15: #{tpu_custom_call.1} parent=1 // pred_check_branch
      %41 = sbr.rel (0) target = $region17
    $region16: #{tpu_custom_call.1} parent=1 // pred_region
      _
    $region17: #{tpu_custom_call.1} parent=1 // pred_fallthru
      _
    // Predicated region
    $region18: #{tpu_custom_call.1} parent=1 // pred_check
      _
    $region19: #{tpu_custom_call.1} parent=1 // pred_check_branch
      %43 = sbr.rel (0) target = $region21
    $region20: #{tpu_custom_call.1} parent=1 // pred_region
      %s45 = ssub.s32 256, 256
      %46 = vsyncadd [#allocation6], %s45
      %s47 = sshll.u32 [#allocation7], 4
      %s48 = int_to_ptr.vmem [resolvable:$true] %s47
      %53 = dma.hbm_to_vmem [thread:$0]  %s4, 256, %s48, [#allocation6], 128, 128, 8
    $region21: #{tpu_custom_call.1} parent=1 // pred_fallthru
      _
    // Predicated region
    $region22: #{tpu_custom_call.1} parent=1 // pred_check
      _
    $region23: #{tpu_custom_call.1} parent=1 // pred_check_branch
      %55 = sbr.rel (0) target = $region25
    $region24: #{tpu_custom_call.1} parent=1 // pred_region
      _
    $region25: #{tpu_custom_call.1} parent=1 // pred_fallthru
      _
    // Predicated region
    $region26: #{tpu_custom_call.1} parent=1 // pred_check
      _
    $region27: #{tpu_custom_call.1} parent=1 // pred_check_branch
      %57 = sbr.rel (0) target = $region29
    $region28: #{tpu_custom_call.1} parent=1 // pred_region
      _
    $region29: #{tpu_custom_call.1} parent=1 // pred_fallthru
      _
    // Predicated region
    $region30: #{tpu_custom_call.1} parent=1 // pred_check
      _
    $region31: #{tpu_custom_call.1} parent=1 // pred_check_branch
      %59 = sbr.rel (0) target = $region33
    $region32: #{tpu_custom_call.1} parent=1 // pred_region
      _
    $region33: #{tpu_custom_call.1} parent=1 // pred_fallthru
      _
    // Predicated region
    $region34: #{tpu_custom_call.1} parent=1 // pred_check
      _
    $region35: #{tpu_custom_call.1} parent=1 // pred_check_branch
      %61 = sbr.rel (0) target = $region37
    $region36: #{tpu_custom_call.1} parent=1 // pred_region
      %62 = dma.done [#allocation3], 1024
    $region37: #{tpu_custom_call.1} parent=1 // pred_fallthru
      _
    // Predicated region
    $region38: #{tpu_custom_call.1} parent=1 // pred_check
      _
    $region39: #{tpu_custom_call.1} parent=1 // pred_check_branch
      %64 = sbr.rel (0) target = $region41
    $region40: #{tpu_custom_call.1} parent=1 // pred_region
      %65 = dma.done [#allocation6], 16
    $region41: #{tpu_custom_call.1} parent=1 // pred_fallthru
      _
    // Predicated region
    $region42: #{tpu_custom_call.1} parent=1 // pred_check
      _
    $region43: #{tpu_custom_call.1} parent=1 // pred_check_branch
      %67 = sbr.rel (0) target = $region45
    $region44: #{tpu_custom_call.1} parent=1 // pred_region
      %68 = dma.done [#allocation6], 256
    $region45: #{tpu_custom_call.1} parent=1 // pred_fallthru
      _
    %v70 = vld [vmem:[#allocation2] sm:$0xf]
    %v71 = vld [vmem:[#allocation2 + $0x4] sm:$0xf]
    %v72 = vld [vmem:[#allocation2 + $0x8] sm:$0xf]
    %v73 = vld [vmem:[#allocation2 + $0xc] sm:$0xf]
    %v74 = vld [vmem:[#allocation2 + $0x10] sm:$0xf]
    %v75 = vld [vmem:[#allocation2 + $0x14] sm:$0xf]
    %v76 = vld [vmem:[#allocation2 + $0x18] sm:$0xf]
    %v77 = vld [vmem:[#allocation2 + $0x1c] sm:$0xf]
    %v78 = vld [vmem:[#allocation2 + $0x20] sm:$0xf]
    %v79 = vld [vmem:[#allocation2 + $0x24] sm:$0xf]
    %v80 = vld [vmem:[#allocation2 + $0x28] sm:$0xf]
    %v81 = vld [vmem:[#allocation2 + $0x2c] sm:$0xf]
    %v82 = vld [vmem:[#allocation2 + $0x30] sm:$0xf]
    %v83 = vld [vmem:[#allocation2 + $0x34] sm:$0xf]
    %v84 = vld [vmem:[#allocation2 + $0x38] sm:$0xf]
    %v85 = vld [vmem:[#allocation2 + $0x3c] sm:$0xf]
    %v86 = vld [vmem:[%s1] sm:$0x1]
    %v87 = vld [vmem:[#allocation5] sm:$0x1]
    %v88 = vld [vmem:[#allocation7] sm:$0xff]
    %v89 = vld [vmem:[#allocation7 + $0x8] sm:$0xff]
    %v90 = vld [vmem:[%s3] sm:$0xff]
    %v91 = vld [vmem:[%s3 + $0x8] sm:$0xff]
    %v92 = vld [vmem:[%s3 + $0x10] sm:$0xff]
    %v93 = vld [vmem:[%s3 + $0x18] sm:$0xff]
    %v94 = vld [vmem:[%s5] sm:$0xff]
    %v95 = vld [vmem:[%s5 + $0x8] sm:$0xff]
    %97 = vset.pattern.permute.xlu0 0
    %98 = vperm.xlu0 %97, %v94
    %v99 = vpop.permute.xlu0 %98
    %102 = vset.pattern.permute.xlu0 0
    %103 = vperm.xlu0 %102, %v95
    %v104 = vpop.permute.xlu0 %103
    %vm106 = vcmask 261120
    %v108 = vsel %vm106, %v88, 0
    %v111 = vsel %vm106, %v89, 0
    %113 = vmatprep.subr.mxu0 0.0
    %114 = vmatpush1.msra.mxu0 %v90
    %115 = vmatprep.subr.mxu0 0.0
    %116 = vmatpush1.msra.mxu0 %v91
    %117 = vmatprep.subr.mxu0 0.0
    %118 = vmatpush1.msra.mxu0 %v92
    %119 = vmatprep.subr.mxu0 0.0
    %120 = vmatpush1.msra.mxu0 %v93
    %121 = vmatprep.subr.mxu0 0.0
    %122 = vmatpush1.msra.mxu0 0.0
    %123 = vmatprep.subr.mxu0 0.0
    %124 = vmatpush1.msra.mxu0 0.0
    %125 = vmatprep.subr.mxu0 0.0
    %126 = vmatpush1.msra.mxu0 0.0
    %127 = vmatprep.subr.mxu0 0.0
    %128 = vmatpush1.msra.mxu0 0.0
    %129 = vmatprep.subr.mxu0 0.0
    %130 = vmatpush1.msra.mxu0 0.0
    %131 = vmatprep.subr.mxu0 0.0
    %132 = vmatpush1.msra.mxu0 0.0
    %133 = vmatprep.subr.mxu0 0.0
    %134 = vmatpush1.msra.mxu0 0.0
    %135 = vmatprep.subr.mxu0 0.0
    %136 = vmatpush1.msra.mxu0 0.0
    %137 = vmatprep.subr.mxu0 0.0
    %138 = vmatpush1.msra.mxu0 0.0
    %139 = vmatprep.subr.mxu0 0.0
    %140 = vmatpush1.msra.mxu0 0.0
    %141 = vmatprep.subr.mxu0 0.0
    %142 = vmatpush1.msra.mxu0 0.0
    %143 = vmatprep.subr.mxu0 0.0
    %144 = vmatpush1.msra.mxu0 0.0
    %145 = vmatprep.subr.mxu0 0.0
    %146 = vmatpush1.msra.mxu0 0.0
    %147 = vmatprep.subr.mxu0 0.0
    %148 = vmatpush1.msra.mxu0 0.0
    %149 = vmatprep.subr.mxu0 0.0
    %150 = vmatpush1.msra.mxu0 0.0
    %151 = vmatprep.subr.mxu0 0.0
    %152 = vmatpush1.msra.mxu0 0.0
    %153 = vmatprep.subr.mxu0 0.0
    %154 = vmatpush1.msra.mxu0 0.0
    %155 = vmatprep.subr.mxu0 0.0
    %156 = vmatpush1.msra.mxu0 0.0
    %157 = vmatprep.subr.mxu0 0.0
    %158 = vmatpush1.msra.mxu0 0.0
    %159 = vmatprep.subr.mxu0 0.0
    %160 = vmatpush1.msra.mxu0 0.0
    %161 = vmatprep.subr.mxu0 0.0
    %162 = vmatpush1.msra.mxu0 0.0
    %163 = vmatprep.subr.mxu0 0.0
    %164 = vmatpush1.msra.mxu0 0.0
    %165 = vmatprep.subr.mxu0 0.0
    %166 = vmatpush1.msra.mxu0 0.0
    %167 = vmatprep.subr.mxu0 0.0
    %168 = vmatpush1.msra.mxu0 0.0
    %169 = vmatprep.subr.mxu0 0.0
    %170 = vmatpush1.msra.mxu0 0.0
    %171 = vmatprep.subr.mxu0 0.0
    %172 = vmatpush1.msra.mxu0 0.0
    %173 = vmatprep.subr.mxu0 0.0
    %174 = vmatpush1.msra.mxu0 0.0
    %175 = vmatprep.subr.mxu0 0.0
    %176 = vmatpush1.msra.mxu0 0.0
    %177 = vmatprep.mubr.f32.mxu0 0.0
    %178 = vmatmul.mubr.f32.gmra.mrb[0].mxu0 %v108
    %v179 = vpop.f32.mrb[0].mxu0
    %v180 = vadd.f32 %v99, %v179
    %v181 = vpop.f32.mrb[0].mxu0
    %182 = vmatprep.mubr.f32.mxu0 0.0
    %183 = vmatmul.mubr.f32.gmra.mrb[0].mxu0 %v111
    %v184 = vpop.f32.mrb[0].mxu0
    %v185 = vadd.f32 %v104, %v184
    %v186 = vpop.f32.mrb[0].mxu0
    %187 = vdwg.mxu0
    %188 = vxpose.xlu0.b32.start [1/16] %v180, 128
    %189 = vxpose.xlu0.b32.cont [2/16] %v185, 128
    %190 = vxpose.xlu0.b32.cont [3/16] 0.0, 128
    %191 = vxpose.xlu0.b32.cont [4/16] 0.0, 128
    %192 = vxpose.xlu0.b32.cont [5/16] 0.0, 128
    %193 = vxpose.xlu0.b32.cont [6/16] 0.0, 128
    %194 = vxpose.xlu0.b32.cont [7/16] 0.0, 128
    %195 = vxpose.xlu0.b32.cont [8/16] 0.0, 128
    %196 = vxpose.xlu0.b32.cont [9/16] 0.0, 128
    %197 = vxpose.xlu0.b32.cont [10/16] 0.0, 128
    %198 = vxpose.xlu0.b32.cont [11/16] 0.0, 128
    %199 = vxpose.xlu0.b32.cont [12/16] 0.0, 128
    %200 = vxpose.xlu0.b32.cont [13/16] 0.0, 128
    %201 = vxpose.xlu0.b32.cont [14/16] 0.0, 128
    %202 = vxpose.xlu0.b32.cont [15/16] 0.0, 128
    %203 = vxpose.xlu0.b32.end [16/16] 0.0, 128
    %v204 = vpop.trf.xlu0
    %v205 = vpop.trf.xlu0
    %v206 = vpop.trf.xlu0
    %v207 = vpop.trf.xlu0
    %v208 = vpop.trf.xlu0
    %v209 = vpop.trf.xlu0
    %v210 = vpop.trf.xlu0
    %v211 = vpop.trf.xlu0
    %v212 = vpop.trf.xlu0
    %v213 = vpop.trf.xlu0
    %v214 = vpop.trf.xlu0
    %v215 = vpop.trf.xlu0
    %v216 = vpop.trf.xlu0
    %v217 = vpop.trf.xlu0
    %v218 = vpop.trf.xlu0
    %v219 = vpop.trf.xlu0
    %221 = vset.pattern.permute.xlu0 0
    %222 = vperm.xlu0 %221, %v204
    %v223 = vpop.permute.xlu0 %222
    %226 = vset.pattern.permute.xlu0 0
    %227 = vperm.xlu0 %226, %v205
    %v228 = vpop.permute.xlu0 %227
    %231 = vset.pattern.permute.xlu0 0
    %232 = vperm.xlu0 %231, %v206
    %v233 = vpop.permute.xlu0 %232
    %236 = vset.pattern.permute.xlu0 0
    %237 = vperm.xlu0 %236, %v207
    %v238 = vpop.permute.xlu0 %237
    %241 = vset.pattern.permute.xlu0 0
    %242 = vperm.xlu0 %241, %v208
    %v243 = vpop.permute.xlu0 %242
    %246 = vset.pattern.permute.xlu0 0
    %247 = vperm.xlu0 %246, %v209
    %v248 = vpop.permute.xlu0 %247
    %251 = vset.pattern.permute.xlu0 0
    %252 = vperm.xlu0 %251, %v210
    %v253 = vpop.permute.xlu0 %252
    %256 = vset.pattern.permute.xlu0 0
    %257 = vperm.xlu0 %256, %v211
    %v258 = vpop.permute.xlu0 %257
    %261 = vset.pattern.permute.xlu0 0
    %262 = vperm.xlu0 %261, %v212
    %v263 = vpop.permute.xlu0 %262
    %266 = vset.pattern.permute.xlu0 0
    %267 = vperm.xlu0 %266, %v213
    %v268 = vpop.permute.xlu0 %267
    %271 = vset.pattern.permute.xlu0 0
    %272 = vperm.xlu0 %271, %v214
    %v273 = vpop.permute.xlu0 %272
    %276 = vset.pattern.permute.xlu0 0
    %277 = vperm.xlu0 %276, %v215
    %v278 = vpop.permute.xlu0 %277
    %281 = vset.pattern.permute.xlu0 0
    %282 = vperm.xlu0 %281, %v216
    %v283 = vpop.permute.xlu0 %282
    %286 = vset.pattern.permute.xlu0 0
    %287 = vperm.xlu0 %286, %v217
    %v288 = vpop.permute.xlu0 %287
    %291 = vset.pattern.permute.xlu0 0
    %292 = vperm.xlu0 %291, %v218
    %v293 = vpop.permute.xlu0 %292
    %296 = vset.pattern.permute.xlu0 0
    %297 = vperm.xlu0 %296, %v219
    %v298 = vpop.permute.xlu0 %297
    %v300 = vlaneseq
    %v301 = vshrl.u32 %v300, 7
    %v302 = vsub.s32 0, %v301
    %v303 = vrot.slane %v180, %v302
    %vm304 = vcmp.le.f32.partialorder %v303, %v223
    %vm305 = vcmp.le.f32.partialorder %v303, %v228
    %vm306 = vcmp.le.f32.partialorder %v303, %v233
    %vm307 = vcmp.le.f32.partialorder %v303, %v238
    %vm308 = vcmp.le.f32.partialorder %v303, %v243
    %vm309 = vcmp.le.f32.partialorder %v303, %v248
    %vm310 = vcmp.le.f32.partialorder %v303, %v253
    %vm311 = vcmp.le.f32.partialorder %v303, %v258
    %vm312 = vcmp.le.f32.partialorder %v303, %v263
    %vm313 = vcmp.le.f32.partialorder %v303, %v268
    %vm314 = vcmp.le.f32.partialorder %v303, %v273
    %vm315 = vcmp.le.f32.partialorder %v303, %v278
    %vm316 = vcmp.le.f32.partialorder %v303, %v283
    %vm317 = vcmp.le.f32.partialorder %v303, %v288
    %vm318 = vcmp.le.f32.partialorder %v303, %v293
    %vm319 = vcmp.le.f32.partialorder %v303, %v298
    %v320 = vsel %vm304, 1, 0
    %v321 = vsel %vm305, 1, 0
    %v322 = vsel %vm306, 1, 0
    %v323 = vsel %vm307, 1, 0
    %v324 = vsel %vm308, 1, 0
    %v325 = vsel %vm309, 1, 0
    %v326 = vsel %vm310, 1, 0
    %v327 = vsel %vm311, 1, 0
    %v328 = vsel %vm312, 1, 0
    %v329 = vsel %vm313, 1, 0
    %v330 = vsel %vm314, 1, 0
    %v331 = vsel %vm315, 1, 0
    %v332 = vsel %vm316, 1, 0
    %v333 = vsel %vm317, 1, 0
    %v334 = vsel %vm318, 1, 0
    %v335 = vsel %vm319, 1, 0
    %v336 = vcvt.s32.f32 %v320
    %v337 = vcvt.s32.f32 %v321
    %v338 = vcvt.s32.f32 %v322
    %v339 = vcvt.s32.f32 %v323
    %v340 = vcvt.s32.f32 %v324
    %v341 = vcvt.s32.f32 %v325
    %v342 = vcvt.s32.f32 %v326
    %v343 = vcvt.s32.f32 %v327
    %v344 = vcvt.s32.f32 %v328
    %v345 = vcvt.s32.f32 %v329
    %v346 = vcvt.s32.f32 %v330
    %v347 = vcvt.s32.f32 %v331
    %v348 = vcvt.s32.f32 %v332
    %v349 = vcvt.s32.f32 %v333
    %v350 = vcvt.s32.f32 %v334
    %v351 = vcvt.s32.f32 %v335
    %v352 = vpack.c.bf16 %v337, %v336
    %v353 = vpack.c.bf16 %v339, %v338
    %v354 = vpack.c.bf16 %v341, %v340
    %v355 = vpack.c.bf16 %v343, %v342
    %v356 = vpack.c.bf16 %v345, %v344
    %v357 = vpack.c.bf16 %v347, %v346
    %v358 = vpack.c.bf16 %v349, %v348
    %v359 = vpack.c.bf16 %v351, %v350
    %360 = vset.pattern.permute.xlu0 1
    %361 = vperm.xlu0 %360, %v204
    %v362 = vpop.permute.xlu0 %361
    %364 = vset.pattern.permute.xlu0 1
    %365 = vperm.xlu0 %364, %v205
    %v366 = vpop.permute.xlu0 %365
    %368 = vset.pattern.permute.xlu0 1
    %369 = vperm.xlu0 %368, %v206
    %v370 = vpop.permute.xlu0 %369
    %372 = vset.pattern.permute.xlu0 1
    %373 = vperm.xlu0 %372, %v207
    %v374 = vpop.permute.xlu0 %373
    %376 = vset.pattern.permute.xlu0 1
    %377 = vperm.xlu0 %376, %v208
    %v378 = vpop.permute.xlu0 %377
    %380 = vset.pattern.permute.xlu0 1
    %381 = vperm.xlu0 %380, %v209
    %v382 = vpop.permute.xlu0 %381
    %384 = vset.pattern.permute.xlu0 1
    %385 = vperm.xlu0 %384, %v210
    %v386 = vpop.permute.xlu0 %385
    %388 = vset.pattern.permute.xlu0 1
    %389 = vperm.xlu0 %388, %v211
    %v390 = vpop.permute.xlu0 %389
    %392 = vset.pattern.permute.xlu0 1
    %393 = vperm.xlu0 %392, %v212
    %v394 = vpop.permute.xlu0 %393
    %396 = vset.pattern.permute.xlu0 1
    %397 = vperm.xlu0 %396, %v213
    %v398 = vpop.permute.xlu0 %397
    %400 = vset.pattern.permute.xlu0 1
    %401 = vperm.xlu0 %400, %v214
    %v402 = vpop.permute.xlu0 %401
    %404 = vset.pattern.permute.xlu0 1
    %405 = vperm.xlu0 %404, %v215
    %v406 = vpop.permute.xlu0 %405
    %408 = vset.pattern.permute.xlu0 1
    %409 = vperm.xlu0 %408, %v216
    %v410 = vpop.permute.xlu0 %409
    %412 = vset.pattern.permute.xlu0 1
    %413 = vperm.xlu0 %412, %v217
    %v414 = vpop.permute.xlu0 %413
    %416 = vset.pattern.permute.xlu0 1
    %417 = vperm.xlu0 %416, %v218
    %v418 = vpop.permute.xlu0 %417
    %420 = vset.pattern.permute.xlu0 1
    %421 = vperm.xlu0 %420, %v219
    %v422 = vpop.permute.xlu0 %421
    %v424 = vlaneseq
    %v425 = vshrl.u32 %v424, 7
    %v426 = vsub.s32 1, %v425
    %v427 = vrot.slane %v180, %v426
    %vm428 = vcmp.le.f32.partialorder %v427, %v362
    %vm429 = vcmp.le.f32.partialorder %v427, %v366
    %vm430 = vcmp.le.f32.partialorder %v427, %v370
    %vm431 = vcmp.le.f32.partialorder %v427, %v374
    %vm432 = vcmp.le.f32.partialorder %v427, %v378
    %vm433 = vcmp.le.f32.partialorder %v427, %v382
    %vm434 = vcmp.le.f32.partialorder %v427, %v386
    %vm435 = vcmp.le.f32.partialorder %v427, %v390
    %vm436 = vcmp.le.f32.partialorder %v427, %v394
    %vm437 = vcmp.le.f32.partialorder %v427, %v398
    %vm438 = vcmp.le.f32.partialorder %v427, %v402
    %vm439 = vcmp.le.f32.partialorder %v427, %v406
    %vm440 = vcmp.le.f32.partialorder %v427, %v410
    %vm441 = vcmp.le.f32.partialorder %v427, %v414
    %vm442 = vcmp.le.f32.partialorder %v427, %v418
    %vm443 = vcmp.le.f32.partialorder %v427, %v422
    %v444 = vsel %vm428, 1, 0
    %v445 = vsel %vm429, 1, 0
    %v446 = vsel %vm430, 1, 0
    %v447 = vsel %vm431, 1, 0
    %v448 = vsel %vm432, 1, 0
    %v449 = vsel %vm433, 1, 0
    %v450 = vsel %vm434, 1, 0
    %v451 = vsel %vm435, 1, 0
    %v452 = vsel %vm436, 1, 0
    %v453 = vsel %vm437, 1, 0
    %v454 = vsel %vm438, 1, 0
    %v455 = vsel %vm439, 1, 0
    %v456 = vsel %vm440, 1, 0
    %v457 = vsel %vm441, 1, 0
    %v458 = vsel %vm442, 1, 0
    %v459 = vsel %vm443, 1, 0
    %v460 = vcvt.s32.f32 %v444
    %v461 = vcvt.s32.f32 %v445
    %v462 = vcvt.s32.f32 %v446
    %v463 = vcvt.s32.f32 %v447
    %v464 = vcvt.s32.f32 %v448
    %v465 = vcvt.s32.f32 %v449
    %v466 = vcvt.s32.f32 %v450
    %v467 = vcvt.s32.f32 %v451
    %v468 = vcvt.s32.f32 %v452
    %v469 = vcvt.s32.f32 %v453
    %v470 = vcvt.s32.f32 %v454
    %v471 = vcvt.s32.f32 %v455
    %v472 = vcvt.s32.f32 %v456
    %v473 = vcvt.s32.f32 %v457
    %v474 = vcvt.s32.f32 %v458
    %v475 = vcvt.s32.f32 %v459
    %v476 = vpack.c.bf16 %v461, %v460
    %v477 = vpack.c.bf16 %v463, %v462
    %v478 = vpack.c.bf16 %v465, %v464
    %v479 = vpack.c.bf16 %v467, %v466
    %v480 = vpack.c.bf16 %v469, %v468
    %v481 = vpack.c.bf16 %v471, %v470
    %v482 = vpack.c.bf16 %v473, %v472
    %v483 = vpack.c.bf16 %v475, %v474
    %484 = vset.pattern.permute.xlu0 2
    %485 = vperm.xlu0 %484, %v204
    %v486 = vpop.permute.xlu0 %485
    %488 = vset.pattern.permute.xlu0 2
    %489 = vperm.xlu0 %488, %v205
    %v490 = vpop.permute.xlu0 %489
    %492 = vset.pattern.permute.xlu0 2
    %493 = vperm.xlu0 %492, %v206
    %v494 = vpop.permute.xlu0 %493
    %496 = vset.pattern.permute.xlu0 2
    %497 = vperm.xlu0 %496, %v207
    %v498 = vpop.permute.xlu0 %497
    %500 = vset.pattern.permute.xlu0 2
    %501 = vperm.xlu0 %500, %v208
    %v502 = vpop.permute.xlu0 %501
    %504 = vset.pattern.permute.xlu0 2
    %505 = vperm.xlu0 %504, %v209
    %v506 = vpop.permute.xlu0 %505
    %508 = vset.pattern.permute.xlu0 2
    %509 = vperm.xlu0 %508, %v210
    %v510 = vpop.permute.xlu0 %509
    %512 = vset.pattern.permute.xlu0 2
    %513 = vperm.xlu0 %512, %v211
    %v514 = vpop.permute.xlu0 %513
    %516 = vset.pattern.permute.xlu0 2
    %517 = vperm.xlu0 %516, %v212
    %v518 = vpop.permute.xlu0 %517
    %520 = vset.pattern.permute.xlu0 2
    %521 = vperm.xlu0 %520, %v213
    %v522 = vpop.permute.xlu0 %521
    %524 = vset.pattern.permute.xlu0 2
    %525 = vperm.xlu0 %524, %v214
    %v526 = vpop.permute.xlu0 %525
    %528 = vset.pattern.permute.xlu0 2
    %529 = vperm.xlu0 %528, %v215
    %v530 = vpop.permute.xlu0 %529
    %532 = vset.pattern.permute.xlu0 2
    %533 = vperm.xlu0 %532, %v216
    %v534 = vpop.permute.xlu0 %533
    %536 = vset.pattern.permute.xlu0 2
    %537 = vperm.xlu0 %536, %v217
    %v538 = vpop.permute.xlu0 %537
    %540 = vset.pattern.permute.xlu0 2
    %541 = vperm.xlu0 %540, %v218
    %v542 = vpop.permute.xlu0 %541
    %544 = vset.pattern.permute.xlu0 2
    %545 = vperm.xlu0 %544, %v219
    %v546 = vpop.permute.xlu0 %545
    %v548 = vlaneseq
    %v549 = vshrl.u32 %v548, 7
    %v550 = vsub.s32 2, %v549
    %v551 = vrot.slane %v180, %v550
    %vm552 = vcmp.le.f32.partialorder %v551, %v486
    %vm553 = vcmp.le.f32.partialorder %v551, %v490
    %vm554 = vcmp.le.f32.partialorder %v551, %v494
    %vm555 = vcmp.le.f32.partialorder %v551, %v498
    %vm556 = vcmp.le.f32.partialorder %v551, %v502
    %vm557 = vcmp.le.f32.partialorder %v551, %v506
    %vm558 = vcmp.le.f32.partialorder %v551, %v510
    %vm559 = vcmp.le.f32.partialorder %v551, %v514
    %vm560 = vcmp.le.f32.partialorder %v551, %v518
    %vm561 = vcmp.le.f32.partialorder %v551, %v522
    %vm562 = vcmp.le.f32.partialorder %v551, %v526
    %vm563 = vcmp.le.f32.partialorder %v551, %v530
    %vm564 = vcmp.le.f32.partialorder %v551, %v534
    %vm565 = vcmp.le.f32.partialorder %v551, %v538
    %vm566 = vcmp.le.f32.partialorder %v551, %v542
    %vm567 = vcmp.le.f32.partialorder %v551, %v546
    %v568 = vsel %vm552, 1, 0
    %v569 = vsel %vm553, 1, 0
    %v570 = vsel %vm554, 1, 0
    %v571 = vsel %vm555, 1, 0
    %v572 = vsel %vm556, 1, 0
    %v573 = vsel %vm557, 1, 0
    %v574 = vsel %vm558, 1, 0
    %v575 = vsel %vm559, 1, 0
    %v576 = vsel %vm560, 1, 0
    %v577 = vsel %vm561, 1, 0
    %v578 = vsel %vm562, 1, 0
    %v579 = vsel %vm563, 1, 0
    %v580 = vsel %vm564, 1, 0
    %v581 = vsel %vm565, 1, 0
    %v582 = vsel %vm566, 1, 0
    %v583 = vsel %vm567, 1, 0
    %v584 = vcvt.s32.f32 %v568
    %v585 = vcvt.s32.f32 %v569
    %v586 = vcvt.s32.f32 %v570
    %v587 = vcvt.s32.f32 %v571
    %v588 = vcvt.s32.f32 %v572
    %v589 = vcvt.s32.f32 %v573
    %v590 = vcvt.s32.f32 %v574
    %v591 = vcvt.s32.f32 %v575
    %v592 = vcvt.s32.f32 %v576
    %v593 = vcvt.s32.f32 %v577
    %v594 = vcvt.s32.f32 %v578
    %v595 = vcvt.s32.f32 %v579
    %v596 = vcvt.s32.f32 %v580
    %v597 = vcvt.s32.f32 %v581
    %v598 = vcvt.s32.f32 %v582
    %v599 = vcvt.s32.f32 %v583
    %v600 = vpack.c.bf16 %v585, %v584
    %v601 = vpack.c.bf16 %v587, %v586
    %v602 = vpack.c.bf16 %v589, %v588
    %v603 = vpack.c.bf16 %v591, %v590
    %v604 = vpack.c.bf16 %v593, %v592
    %v605 = vpack.c.bf16 %v595, %v594
    %v606 = vpack.c.bf16 %v597, %v596
    %v607 = vpack.c.bf16 %v599, %v598
    %608 = vset.pattern.permute.xlu0 3
    %609 = vperm.xlu0 %608, %v204
    %v610 = vpop.permute.xlu0 %609
    %612 = vset.pattern.permute.xlu0 3
    %613 = vperm.xlu0 %612, %v205
    %v614 = vpop.permute.xlu0 %613
    %616 = vset.pattern.permute.xlu0 3
    %617 = vperm.xlu0 %616, %v206
    %v618 = vpop.permute.xlu0 %617
    %620 = vset.pattern.permute.xlu0 3
    %621 = vperm.xlu0 %620, %v207
    %v622 = vpop.permute.xlu0 %621
    %624 = vset.pattern.permute.xlu0 3
    %625 = vperm.xlu0 %624, %v208
    %v626 = vpop.permute.xlu0 %625
    %628 = vset.pattern.permute.xlu0 3
    %629 = vperm.xlu0 %628, %v209
    %v630 = vpop.permute.xlu0 %629
    %632 = vset.pattern.permute.xlu0 3
    %633 = vperm.xlu0 %632, %v210
    %v634 = vpop.permute.xlu0 %633
    %636 = vset.pattern.permute.xlu0 3
    %637 = vperm.xlu0 %636, %v211
    %v638 = vpop.permute.xlu0 %637
    %640 = vset.pattern.permute.xlu0 3
    %641 = vperm.xlu0 %640, %v212
    %v642 = vpop.permute.xlu0 %641
    %644 = vset.pattern.permute.xlu0 3
    %645 = vperm.xlu0 %644, %v213
    %v646 = vpop.permute.xlu0 %645
    %648 = vset.pattern.permute.xlu0 3
    %649 = vperm.xlu0 %648, %v214
    %v650 = vpop.permute.xlu0 %649
    %652 = vset.pattern.permute.xlu0 3
    %653 = vperm.xlu0 %652, %v215
    %v654 = vpop.permute.xlu0 %653
    %656 = vset.pattern.permute.xlu0 3
    %657 = vperm.xlu0 %656, %v216
    %v658 = vpop.permute.xlu0 %657
    %660 = vset.pattern.permute.xlu0 3
    %661 = vperm.xlu0 %660, %v217
    %v662 = vpop.permute.xlu0 %661
    %664 = vset.pattern.permute.xlu0 3
    %665 = vperm.xlu0 %664, %v218
    %v666 = vpop.permute.xlu0 %665
    %668 = vset.pattern.permute.xlu0 3
    %669 = vperm.xlu0 %668, %v219
    %v670 = vpop.permute.xlu0 %669
    %v672 = vlaneseq
    %v673 = vshrl.u32 %v672, 7
    %v674 = vsub.s32 3, %v673
    %v675 = vrot.slane %v180, %v674
    %vm676 = vcmp.le.f32.partialorder %v675, %v610
    %vm677 = vcmp.le.f32.partialorder %v675, %v614
    %vm678 = vcmp.le.f32.partialorder %v675, %v618
    %vm679 = vcmp.le.f32.partialorder %v675, %v622
    %vm680 = vcmp.le.f32.partialorder %v675, %v626
    %vm681 = vcmp.le.f32.partialorder %v675, %v630
    %vm682 = vcmp.le.f32.partialorder %v675, %v634
    %vm683 = vcmp.le.f32.partialorder %v675, %v638
    %vm684 = vcmp.le.f32.partialorder %v675, %v642
    %vm685 = vcmp.le.f32.partialorder %v675, %v646
    %vm686 = vcmp.le.f32.partialorder %v675, %v650
    %vm687 = vcmp.le.f32.partialorder %v675, %v654
    %vm688 = vcmp.le.f32.partialorder %v675, %v658
    %vm689 = vcmp.le.f32.partialorder %v675, %v662
    %vm690 = vcmp.le.f32.partialorder %v675, %v666
    %vm691 = vcmp.le.f32.partialorder %v675, %v670
    %v692 = vsel %vm676, 1, 0
    %v693 = vsel %vm677, 1, 0
    %v694 = vsel %vm678, 1, 0
    %v695 = vsel %vm679, 1, 0
    %v696 = vsel %vm680, 1, 0
    %v697 = vsel %vm681, 1, 0
    %v698 = vsel %vm682, 1, 0
    %v699 = vsel %vm683, 1, 0
    %v700 = vsel %vm684, 1, 0
    %v701 = vsel %vm685, 1, 0
    %v702 = vsel %vm686, 1, 0
    %v703 = vsel %vm687, 1, 0
    %v704 = vsel %vm688, 1, 0
    %v705 = vsel %vm689, 1, 0
    %v706 = vsel %vm690, 1, 0
    %v707 = vsel %vm691, 1, 0
    %v708 = vcvt.s32.f32 %v692
    %v709 = vcvt.s32.f32 %v693
    %v710 = vcvt.s32.f32 %v694
    %v711 = vcvt.s32.f32 %v695
    %v712 = vcvt.s32.f32 %v696
    %v713 = vcvt.s32.f32 %v697
    %v714 = vcvt.s32.f32 %v698
    %v715 = vcvt.s32.f32 %v699
    %v716 = vcvt.s32.f32 %v700
    %v717 = vcvt.s32.f32 %v701
    %v718 = vcvt.s32.f32 %v702
    %v719 = vcvt.s32.f32 %v703
    %v720 = vcvt.s32.f32 %v704
    %v721 = vcvt.s32.f32 %v705
    %v722 = vcvt.s32.f32 %v706
    %v723 = vcvt.s32.f32 %v707
    %v724 = vpack.c.bf16 %v709, %v708
    %v725 = vpack.c.bf16 %v711, %v710
    %v726 = vpack.c.bf16 %v713, %v712
    %v727 = vpack.c.bf16 %v715, %v714
    %v728 = vpack.c.bf16 %v717, %v716
    %v729 = vpack.c.bf16 %v719, %v718
    %v730 = vpack.c.bf16 %v721, %v720
    %v731 = vpack.c.bf16 %v723, %v722
    %732 = vset.pattern.permute.xlu0 4
    %733 = vperm.xlu0 %732, %v204
    %v734 = vpop.permute.xlu0 %733
    %736 = vset.pattern.permute.xlu0 4
    %737 = vperm.xlu0 %736, %v205
    %v738 = vpop.permute.xlu0 %737
    %740 = vset.pattern.permute.xlu0 4
    %741 = vperm.xlu0 %740, %v206
    %v742 = vpop.permute.xlu0 %741
    %744 = vset.pattern.permute.xlu0 4
    %745 = vperm.xlu0 %744, %v207
    %v746 = vpop.permute.xlu0 %745
    %748 = vset.pattern.permute.xlu0 4
    %749 = vperm.xlu0 %748, %v208
    %v750 = vpop.permute.xlu0 %749
    %752 = vset.pattern.permute.xlu0 4
    %753 = vperm.xlu0 %752, %v209
    %v754 = vpop.permute.xlu0 %753
    %756 = vset.pattern.permute.xlu0 4
    %757 = vperm.xlu0 %756, %v210
    %v758 = vpop.permute.xlu0 %757
    %760 = vset.pattern.permute.xlu0 4
    %761 = vperm.xlu0 %760, %v211
    %v762 = vpop.permute.xlu0 %761
    %764 = vset.pattern.permute.xlu0 4
    %765 = vperm.xlu0 %764, %v212
    %v766 = vpop.permute.xlu0 %765
    %768 = vset.pattern.permute.xlu0 4
    %769 = vperm.xlu0 %768, %v213
    %v770 = vpop.permute.xlu0 %769
    %772 = vset.pattern.permute.xlu0 4
    %773 = vperm.xlu0 %772, %v214
    %v774 = vpop.permute.xlu0 %773
    %776 = vset.pattern.permute.xlu0 4
    %777 = vperm.xlu0 %776, %v215
    %v778 = vpop.permute.xlu0 %777
    %780 = vset.pattern.permute.xlu0 4
    %781 = vperm.xlu0 %780, %v216
    %v782 = vpop.permute.xlu0 %781
    %784 = vset.pattern.permute.xlu0 4
    %785 = vperm.xlu0 %784, %v217
    %v786 = vpop.permute.xlu0 %785
    %788 = vset.pattern.permute.xlu0 4
    %789 = vperm.xlu0 %788, %v218
    %v790 = vpop.permute.xlu0 %789
    %792 = vset.pattern.permute.xlu0 4
    %793 = vperm.xlu0 %792, %v219
    %v794 = vpop.permute.xlu0 %793
    %v796 = vlaneseq
    %v797 = vshrl.u32 %v796, 7
    %v798 = vsub.s32 4, %v797
    %v799 = vrot.slane %v180, %v798
    %vm800 = vcmp.le.f32.partialorder %v799, %v734
    %vm801 = vcmp.le.f32.partialorder %v799, %v738
    %vm802 = vcmp.le.f32.partialorder %v799, %v742
    %vm803 = vcmp.le.f32.partialorder %v799, %v746
    %vm804 = vcmp.le.f32.partialorder %v799, %v750
    %vm805 = vcmp.le.f32.partialorder %v799, %v754
    %vm806 = vcmp.le.f32.partialorder %v799, %v758
    %vm807 = vcmp.le.f32.partialorder %v799, %v762
    %vm808 = vcmp.le.f32.partialorder %v799, %v766
    %vm809 = vcmp.le.f32.partialorder %v799, %v770
    %vm810 = vcmp.le.f32.partialorder %v799, %v774
    %vm811 = vcmp.le.f32.partialorder %v799, %v778
    %vm812 = vcmp.le.f32.partialorder %v799, %v782
    %vm813 = vcmp.le.f32.partialorder %v799, %v786
    %vm814 = vcmp.le.f32.partialorder %v799, %v790
    %vm815 = vcmp.le.f32.partialorder %v799, %v794
    %v816 = vsel %vm800, 1, 0
    %v817 = vsel %vm801, 1, 0
    %v818 = vsel %vm802, 1, 0
    %v819 = vsel %vm803, 1, 0
    %v820 = vsel %vm804, 1, 0
    %v821 = vsel %vm805, 1, 0
    %v822 = vsel %vm806, 1, 0
    %v823 = vsel %vm807, 1, 0
    %v824 = vsel %vm808, 1, 0
    %v825 = vsel %vm809, 1, 0
    %v826 = vsel %vm810, 1, 0
    %v827 = vsel %vm811, 1, 0
    %v828 = vsel %vm812, 1, 0
    %v829 = vsel %vm813, 1, 0
    %v830 = vsel %vm814, 1, 0
    %v831 = vsel %vm815, 1, 0
    %v832 = vcvt.s32.f32 %v816
    %v833 = vcvt.s32.f32 %v817
    %v834 = vcvt.s32.f32 %v818
    %v835 = vcvt.s32.f32 %v819
    %v836 = vcvt.s32.f32 %v820
    %v837 = vcvt.s32.f32 %v821
    %v838 = vcvt.s32.f32 %v822
    %v839 = vcvt.s32.f32 %v823
    %v840 = vcvt.s32.f32 %v824
    %v841 = vcvt.s32.f32 %v825
    %v842 = vcvt.s32.f32 %v826
    %v843 = vcvt.s32.f32 %v827
    %v844 = vcvt.s32.f32 %v828
    %v845 = vcvt.s32.f32 %v829
    %v846 = vcvt.s32.f32 %v830
    %v847 = vcvt.s32.f32 %v831
    %v848 = vpack.c.bf16 %v833, %v832
    %v849 = vpack.c.bf16 %v835, %v834
    %v850 = vpack.c.bf16 %v837, %v836
    %v851 = vpack.c.bf16 %v839, %v838
    %v852 = vpack.c.bf16 %v841, %v840
    %v853 = vpack.c.bf16 %v843, %v842
    %v854 = vpack.c.bf16 %v845, %v844
    %v855 = vpack.c.bf16 %v847, %v846
    %856 = vset.pattern.permute.xlu0 5
    %857 = vperm.xlu0 %856, %v204
    %v858 = vpop.permute.xlu0 %857
    %860 = vset.pattern.permute.xlu0 5
    %861 = vperm.xlu0 %860, %v205
    %v862 = vpop.permute.xlu0 %861
    %864 = vset.pattern.permute.xlu0 5
    %865 = vperm.xlu0 %864, %v206
    %v866 = vpop.permute.xlu0 %865
    %868 = vset.pattern.permute.xlu0 5
    %869 = vperm.xlu0 %868, %v207
    %v870 = vpop.permute.xlu0 %869
    %872 = vset.pattern.permute.xlu0 5
    %873 = vperm.xlu0 %872, %v208
    %v874 = vpop.permute.xlu0 %873
    %876 = vset.pattern.permute.xlu0 5
    %877 = vperm.xlu0 %876, %v209
    %v878 = vpop.permute.xlu0 %877
    %880 = vset.pattern.permute.xlu0 5
    %881 = vperm.xlu0 %880, %v210
    %v882 = vpop.permute.xlu0 %881
    %884 = vset.pattern.permute.xlu0 5
    %885 = vperm.xlu0 %884, %v211
    %v886 = vpop.permute.xlu0 %885
    %888 = vset.pattern.permute.xlu0 5
    %889 = vperm.xlu0 %888, %v212
    %v890 = vpop.permute.xlu0 %889
    %892 = vset.pattern.permute.xlu0 5
    %893 = vperm.xlu0 %892, %v213
    %v894 = vpop.permute.xlu0 %893
    %896 = vset.pattern.permute.xlu0 5
    %897 = vperm.xlu0 %896, %v214
    %v898 = vpop.permute.xlu0 %897
    %900 = vset.pattern.permute.xlu0 5
    %901 = vperm.xlu0 %900, %v215
    %v902 = vpop.permute.xlu0 %901
    %904 = vset.pattern.permute.xlu0 5
    %905 = vperm.xlu0 %904, %v216
    %v906 = vpop.permute.xlu0 %905
    %908 = vset.pattern.permute.xlu0 5
    %909 = vperm.xlu0 %908, %v217
    %v910 = vpop.permute.xlu0 %909
    %912 = vset.pattern.permute.xlu0 5
    %913 = vperm.xlu0 %912, %v218
    %v914 = vpop.permute.xlu0 %913
    %916 = vset.pattern.permute.xlu0 5
    %917 = vperm.xlu0 %916, %v219
    %v918 = vpop.permute.xlu0 %917
    %v920 = vlaneseq
    %v921 = vshrl.u32 %v920, 7
    %v922 = vsub.s32 5, %v921
    %v923 = vrot.slane %v180, %v922
    %vm924 = vcmp.le.f32.partialorder %v923, %v858
    %vm925 = vcmp.le.f32.partialorder %v923, %v862
    %vm926 = vcmp.le.f32.partialorder %v923, %v866
    %vm927 = vcmp.le.f32.partialorder %v923, %v870
    %vm928 = vcmp.le.f32.partialorder %v923, %v874
    %vm929 = vcmp.le.f32.partialorder %v923, %v878
    %vm930 = vcmp.le.f32.partialorder %v923, %v882
    %vm931 = vcmp.le.f32.partialorder %v923, %v886
    %vm932 = vcmp.le.f32.partialorder %v923, %v890
    %vm933 = vcmp.le.f32.partialorder %v923, %v894
    %vm934 = vcmp.le.f32.partialorder %v923, %v898
    %vm935 = vcmp.le.f32.partialorder %v923, %v902
    %vm936 = vcmp.le.f32.partialorder %v923, %v906
    %vm937 = vcmp.le.f32.partialorder %v923, %v910
    %vm938 = vcmp.le.f32.partialorder %v923, %v914
    %vm939 = vcmp.le.f32.partialorder %v923, %v918
    %v940 = vsel %vm924, 1, 0
    %v941 = vsel %vm925, 1, 0
    %v942 = vsel %vm926, 1, 0
    %v943 = vsel %vm927, 1, 0
    %v944 = vsel %vm928, 1, 0
    %v945 = vsel %vm929, 1, 0
    %v946 = vsel %vm930, 1, 0
    %v947 = vsel %vm931, 1, 0
    %v948 = vsel %vm932, 1, 0
    %v949 = vsel %vm933, 1, 0
    %v950 = vsel %vm934, 1, 0
    %v951 = vsel %vm935, 1, 0
    %v952 = vsel %vm936, 1, 0
    %v953 = vsel %vm937, 1, 0
    %v954 = vsel %vm938, 1, 0
    %v955 = vsel %vm939, 1, 0
    %v956 = vcvt.s32.f32 %v940
    %v957 = vcvt.s32.f32 %v941
    %v958 = vcvt.s32.f32 %v942
    %v959 = vcvt.s32.f32 %v943
    %v960 = vcvt.s32.f32 %v944
    %v961 = vcvt.s32.f32 %v945
    %v962 = vcvt.s32.f32 %v946
    %v963 = vcvt.s32.f32 %v947
    %v964 = vcvt.s32.f32 %v948
    %v965 = vcvt.s32.f32 %v949
    %v966 = vcvt.s32.f32 %v950
    %v967 = vcvt.s32.f32 %v951
    %v968 = vcvt.s32.f32 %v952
    %v969 = vcvt.s32.f32 %v953
    %v970 = vcvt.s32.f32 %v954
    %v971 = vcvt.s32.f32 %v955
    %v972 = vpack.c.bf16 %v957, %v956
    %v973 = vpack.c.bf16 %v959, %v958
    %v974 = vpack.c.bf16 %v961, %v960
    %v975 = vpack.c.bf16 %v963, %v962
    %v976 = vpack.c.bf16 %v965, %v964
    %v977 = vpack.c.bf16 %v967, %v966
    %v978 = vpack.c.bf16 %v969, %v968
    %v979 = vpack.c.bf16 %v971, %v970
    %980 = vset.pattern.permute.xlu0 6
    %981 = vperm.xlu0 %980, %v204
    %v982 = vpop.permute.xlu0 %981
    %984 = vset.pattern.permute.xlu0 6
    %985 = vperm.xlu0 %984, %v205
    %v986 = vpop.permute.xlu0 %985
    %988 = vset.pattern.permute.xlu0 6
    %989 = vperm.xlu0 %988, %v206
    %v990 = vpop.permute.xlu0 %989
    %992 = vset.pattern.permute.xlu0 6
    %993 = vperm.xlu0 %992, %v207
    %v994 = vpop.permute.xlu0 %993
    %996 = vset.pattern.permute.xlu0 6
    %997 = vperm.xlu0 %996, %v208
    %v998 = vpop.permute.xlu0 %997
    %1000 = vset.pattern.permute.xlu0 6
    %1001 = vperm.xlu0 %1000, %v209
    %v1002 = vpop.permute.xlu0 %1001
    %1004 = vset.pattern.permute.xlu0 6
    %1005 = vperm.xlu0 %1004, %v210
    %v1006 = vpop.permute.xlu0 %1005
    %1008 = vset.pattern.permute.xlu0 6
    %1009 = vperm.xlu0 %1008, %v211
    %v1010 = vpop.permute.xlu0 %1009
    %1012 = vset.pattern.permute.xlu0 6
    %1013 = vperm.xlu0 %1012, %v212
    %v1014 = vpop.permute.xlu0 %1013
    %1016 = vset.pattern.permute.xlu0 6
    %1017 = vperm.xlu0 %1016, %v213
    %v1018 = vpop.permute.xlu0 %1017
    %1020 = vset.pattern.permute.xlu0 6
    %1021 = vperm.xlu0 %1020, %v214
    %v1022 = vpop.permute.xlu0 %1021
    %1024 = vset.pattern.permute.xlu0 6
    %1025 = vperm.xlu0 %1024, %v215
    %v1026 = vpop.permute.xlu0 %1025
    %1028 = vset.pattern.permute.xlu0 6
    %1029 = vperm.xlu0 %1028, %v216
    %v1030 = vpop.permute.xlu0 %1029
    %1032 = vset.pattern.permute.xlu0 6
    %1033 = vperm.xlu0 %1032, %v217
    %v1034 = vpop.permute.xlu0 %1033
    %1036 = vset.pattern.permute.xlu0 6
    %1037 = vperm.xlu0 %1036, %v218
    %v1038 = vpop.permute.xlu0 %1037
    %1040 = vset.pattern.permute.xlu0 6
    %1041 = vperm.xlu0 %1040, %v219
    %v1042 = vpop.permute.xlu0 %1041
    %v1044 = vlaneseq
    %v1045 = vshrl.u32 %v1044, 7
    %v1046 = vsub.s32 6, %v1045
    %v1047 = vrot.slane %v180, %v1046
    %vm1048 = vcmp.le.f32.partialorder %v1047, %v982
    %vm1049 = vcmp.le.f32.partialorder %v1047, %v986
    %vm1050 = vcmp.le.f32.partialorder %v1047, %v990
    %vm1051 = vcmp.le.f32.partialorder %v1047, %v994
    %vm1052 = vcmp.le.f32.partialorder %v1047, %v998
    %vm1053 = vcmp.le.f32.partialorder %v1047, %v1002
    %vm1054 = vcmp.le.f32.partialorder %v1047, %v1006
    %vm1055 = vcmp.le.f32.partialorder %v1047, %v1010
    %vm1056 = vcmp.le.f32.partialorder %v1047, %v1014
    %vm1057 = vcmp.le.f32.partialorder %v1047, %v1018
    %vm1058 = vcmp.le.f32.partialorder %v1047, %v1022
    %vm1059 = vcmp.le.f32.partialorder %v1047, %v1026
    %vm1060 = vcmp.le.f32.partialorder %v1047, %v1030
    %vm1061 = vcmp.le.f32.partialorder %v1047, %v1034
    %vm1062 = vcmp.le.f32.partialorder %v1047, %v1038
    %vm1063 = vcmp.le.f32.partialorder %v1047, %v1042
    %v1064 = vsel %vm1048, 1, 0
    %v1065 = vsel %vm1049, 1, 0
    %v1066 = vsel %vm1050, 1, 0
    %v1067 = vsel %vm1051, 1, 0
    %v1068 = vsel %vm1052, 1, 0
    %v1069 = vsel %vm1053, 1, 0
    %v1070 = vsel %vm1054, 1, 0
    %v1071 = vsel %vm1055, 1, 0
    %v1072 = vsel %vm1056, 1, 0
    %v1073 = vsel %vm1057, 1, 0
    %v1074 = vsel %vm1058, 1, 0
    %v1075 = vsel %vm1059, 1, 0
    %v1076 = vsel %vm1060, 1, 0
    %v1077 = vsel %vm1061, 1, 0
    %v1078 = vsel %vm1062, 1, 0
    %v1079 = vsel %vm1063, 1, 0
    %v1080 = vcvt.s32.f32 %v1064
    %v1081 = vcvt.s32.f32 %v1065
    %v1082 = vcvt.s32.f32 %v1066
    %v1083 = vcvt.s32.f32 %v1067
    %v1084 = vcvt.s32.f32 %v1068
    %v1085 = vcvt.s32.f32 %v1069
    %v1086 = vcvt.s32.f32 %v1070
    %v1087 = vcvt.s32.f32 %v1071
    %v1088 = vcvt.s32.f32 %v1072
    %v1089 = vcvt.s32.f32 %v1073
    %v1090 = vcvt.s32.f32 %v1074
    %v1091 = vcvt.s32.f32 %v1075
    %v1092 = vcvt.s32.f32 %v1076
    %v1093 = vcvt.s32.f32 %v1077
    %v1094 = vcvt.s32.f32 %v1078
    %v1095 = vcvt.s32.f32 %v1079
    %v1096 = vpack.c.bf16 %v1081, %v1080
    %v1097 = vpack.c.bf16 %v1083, %v1082
    %v1098 = vpack.c.bf16 %v1085, %v1084
    %v1099 = vpack.c.bf16 %v1087, %v1086
    %v1100 = vpack.c.bf16 %v1089, %v1088
    %v1101 = vpack.c.bf16 %v1091, %v1090
    %v1102 = vpack.c.bf16 %v1093, %v1092
    %v1103 = vpack.c.bf16 %v1095, %v1094
    %1104 = vset.pattern.permute.xlu0 7
    %1105 = vperm.xlu0 %1104, %v204
    %v1106 = vpop.permute.xlu0 %1105
    %1108 = vset.pattern.permute.xlu0 7
    %1109 = vperm.xlu0 %1108, %v205
    %v1110 = vpop.permute.xlu0 %1109
    %1112 = vset.pattern.permute.xlu0 7
    %1113 = vperm.xlu0 %1112, %v206
    %v1114 = vpop.permute.xlu0 %1113
    %1116 = vset.pattern.permute.xlu0 7
    %1117 = vperm.xlu0 %1116, %v207
    %v1118 = vpop.permute.xlu0 %1117
    %1120 = vset.pattern.permute.xlu0 7
    %1121 = vperm.xlu0 %1120, %v208
    %v1122 = vpop.permute.xlu0 %1121
    %1124 = vset.pattern.permute.xlu0 7
    %1125 = vperm.xlu0 %1124, %v209
    %v1126 = vpop.permute.xlu0 %1125
    %1128 = vset.pattern.permute.xlu0 7
    %1129 = vperm.xlu0 %1128, %v210
    %v1130 = vpop.permute.xlu0 %1129
    %1132 = vset.pattern.permute.xlu0 7
    %1133 = vperm.xlu0 %1132, %v211
    %v1134 = vpop.permute.xlu0 %1133
    %1136 = vset.pattern.permute.xlu0 7
    %1137 = vperm.xlu0 %1136, %v212
    %v1138 = vpop.permute.xlu0 %1137
    %1140 = vset.pattern.permute.xlu0 7
    %1141 = vperm.xlu0 %1140, %v213
    %v1142 = vpop.permute.xlu0 %1141
    %1144 = vset.pattern.permute.xlu0 7
    %1145 = vperm.xlu0 %1144, %v214
    %v1146 = vpop.permute.xlu0 %1145
    %1148 = vset.pattern.permute.xlu0 7
    %1149 = vperm.xlu0 %1148, %v215
    %v1150 = vpop.permute.xlu0 %1149
    %1152 = vset.pattern.permute.xlu0 7
    %1153 = vperm.xlu0 %1152, %v216
    %v1154 = vpop.permute.xlu0 %1153
    %1156 = vset.pattern.permute.xlu0 7
    %1157 = vperm.xlu0 %1156, %v217
    %v1158 = vpop.permute.xlu0 %1157
    %1160 = vset.pattern.permute.xlu0 7
    %1161 = vperm.xlu0 %1160, %v218
    %v1162 = vpop.permute.xlu0 %1161
    %1164 = vset.pattern.permute.xlu0 7
    %1165 = vperm.xlu0 %1164, %v219
    %v1166 = vpop.permute.xlu0 %1165
    %v1168 = vlaneseq
    %v1169 = vshrl.u32 %v1168, 7
    %v1170 = vsub.s32 7, %v1169
    %v1171 = vrot.slane %v180, %v1170
    %vm1172 = vcmp.le.f32.partialorder %v1171, %v1106
    %vm1173 = vcmp.le.f32.partialorder %v1171, %v1110
    %vm1174 = vcmp.le.f32.partialorder %v1171, %v1114
    %vm1175 = vcmp.le.f32.partialorder %v1171, %v1118
    %vm1176 = vcmp.le.f32.partialorder %v1171, %v1122
    %vm1177 = vcmp.le.f32.partialorder %v1171, %v1126
    %vm1178 = vcmp.le.f32.partialorder %v1171, %v1130
    %vm1179 = vcmp.le.f32.partialorder %v1171, %v1134
    %vm1180 = vcmp.le.f32.partialorder %v1171, %v1138
    %vm1181 = vcmp.le.f32.partialorder %v1171, %v1142
    %vm1182 = vcmp.le.f32.partialorder %v1171, %v1146
    %vm1183 = vcmp.le.f32.partialorder %v1171, %v1150
    %vm1184 = vcmp.le.f32.partialorder %v1171, %v1154
    %vm1185 = vcmp.le.f32.partialorder %v1171, %v1158
    %vm1186 = vcmp.le.f32.partialorder %v1171, %v1162
    %vm1187 = vcmp.le.f32.partialorder %v1171, %v1166
    %v1188 = vsel %vm1172, 1, 0
    %v1189 = vsel %vm1173, 1, 0
    %v1190 = vsel %vm1174, 1, 0
    %v1191 = vsel %vm1175, 1, 0
    %v1192 = vsel %vm1176, 1, 0
    %v1193 = vsel %vm1177, 1, 0
    %v1194 = vsel %vm1178, 1, 0
    %v1195 = vsel %vm1179, 1, 0
    %v1196 = vsel %vm1180, 1, 0
    %v1197 = vsel %vm1181, 1, 0
    %v1198 = vsel %vm1182, 1, 0
    %v1199 = vsel %vm1183, 1, 0
    %v1200 = vsel %vm1184, 1, 0
    %v1201 = vsel %vm1185, 1, 0
    %v1202 = vsel %vm1186, 1, 0
    %v1203 = vsel %vm1187, 1, 0
    %v1204 = vcvt.s32.f32 %v1188
    %v1205 = vcvt.s32.f32 %v1189
    %v1206 = vcvt.s32.f32 %v1190
    %v1207 = vcvt.s32.f32 %v1191
    %v1208 = vcvt.s32.f32 %v1192
    %v1209 = vcvt.s32.f32 %v1193
    %v1210 = vcvt.s32.f32 %v1194
    %v1211 = vcvt.s32.f32 %v1195
    %v1212 = vcvt.s32.f32 %v1196
    %v1213 = vcvt.s32.f32 %v1197
    %v1214 = vcvt.s32.f32 %v1198
    %v1215 = vcvt.s32.f32 %v1199
    %v1216 = vcvt.s32.f32 %v1200
    %v1217 = vcvt.s32.f32 %v1201
    %v1218 = vcvt.s32.f32 %v1202
    %v1219 = vcvt.s32.f32 %v1203
    %v1220 = vpack.c.bf16 %v1205, %v1204
    %v1221 = vpack.c.bf16 %v1207, %v1206
    %v1222 = vpack.c.bf16 %v1209, %v1208
    %v1223 = vpack.c.bf16 %v1211, %v1210
    %v1224 = vpack.c.bf16 %v1213, %v1212
    %v1225 = vpack.c.bf16 %v1215, %v1214
    %v1226 = vpack.c.bf16 %v1217, %v1216
    %v1227 = vpack.c.bf16 %v1219, %v1218
    %v1244 = vunpack.c.l.b16 %v70
    %v1245 = vunpack.c.l.b16 %v71
    %v1246 = vunpack.c.l.b16 %v72
    %v1247 = vunpack.c.l.b16 %v73
    %v1248 = vunpack.c.l.b16 %v74
    %v1249 = vunpack.c.l.b16 %v75
    %v1250 = vunpack.c.l.b16 %v76
    %v1251 = vunpack.c.l.b16 %v77
    %v1252 = vunpack.c.l.b16 %v78
    %v1253 = vunpack.c.l.b16 %v79
    %v1254 = vunpack.c.l.b16 %v80
    %v1255 = vunpack.c.l.b16 %v81
    %v1256 = vunpack.c.l.b16 %v82
    %v1257 = vunpack.c.l.b16 %v83
    %v1258 = vunpack.c.l.b16 %v84
    %v1259 = vunpack.c.l.b16 %v85
    %v1260 = vpack.c.b16 %v1245, %v1244
    %v1261 = vpack.c.b16 %v1247, %v1246
    %v1262 = vpack.c.b16 %v1249, %v1248
    %v1263 = vpack.c.b16 %v1251, %v1250
    %v1264 = vpack.c.b16 %v1253, %v1252
    %v1265 = vpack.c.b16 %v1255, %v1254
    %v1266 = vpack.c.b16 %v1257, %v1256
    %v1267 = vpack.c.b16 %v1259, %v1258
    %1276 = vmatprep.subr.bf16.mxu0 0
    %1277 = vmatpush1.bf16.msra.mxu0 %v1260
    %1278 = vmatprep.subr.bf16.mxu0 0
    %1279 = vmatpush1.bf16.msra.mxu0 %v1261
    %1280 = vmatprep.subr.bf16.mxu0 0
    %1281 = vmatpush1.bf16.msra.mxu0 %v1262
    %1282 = vmatprep.subr.bf16.mxu0 0
    %1283 = vmatpush1.bf16.msra.mxu0 %v1263
    %1284 = vmatprep.subr.bf16.mxu0 0
    %1285 = vmatpush1.bf16.msra.mxu0 %v1264
    %1286 = vmatprep.subr.bf16.mxu0 0
    %1287 = vmatpush1.bf16.msra.mxu0 %v1265
    %1288 = vmatprep.subr.bf16.mxu0 0
    %1289 = vmatpush1.bf16.msra.mxu0 %v1266
    %1290 = vmatprep.subr.bf16.mxu0 0
    %1291 = vmatpush1.bf16.msra.mxu0 %v1267
    %1292 = vmatprep.subr.bf16.mxu0 0
    %1293 = vmatpush1.bf16.msra.mxu0 0
    %1294 = vmatprep.subr.bf16.mxu0 0
    %1295 = vmatpush1.bf16.msra.mxu0 0
    %1296 = vmatprep.subr.bf16.mxu0 0
    %1297 = vmatpush1.bf16.msra.mxu0 0
    %1298 = vmatprep.subr.bf16.mxu0 0
    %1299 = vmatpush1.bf16.msra.mxu0 0
    %1300 = vmatprep.subr.bf16.mxu0 0
    %1301 = vmatpush1.bf16.msra.mxu0 0
    %1302 = vmatprep.subr.bf16.mxu0 0
    %1303 = vmatpush1.bf16.msra.mxu0 0
    %1304 = vmatprep.subr.bf16.mxu0 0
    %1305 = vmatpush1.bf16.msra.mxu0 0
    %1306 = vmatprep.subr.bf16.mxu0 0
    %1307 = vmatpush1.bf16.msra.mxu0 0
    %1308 = vmatprep.mubr.bf16.mxu0 0
    %1309 = vmatmul.mubr.bf16.gmra.mrb[0].mxu0 %v352
    %v1310 = vpop.f32.mrb[0].mxu0
    %v1311 = vadd.f32 0.0, %v1310
    %v1312 = vpop.f32.mrb[0].mxu0
    %v1313 = vpop.f32.mrb[0].mxu0
    %v1314 = vadd.f32 0.0, %v1313
    %v1315 = vpop.f32.mrb[0].mxu0
    %1316 = vmatprep.mubr.bf16.mxu0 0
    %1317 = vmatmul.mubr.bf16.gmra.mrb[0].mxu0 %v353
    %v1318 = vpop.f32.mrb[0].mxu0
    %v1319 = vadd.f32 0.0, %v1318
    %v1320 = vpop.f32.mrb[0].mxu0
    %v1321 = vpop.f32.mrb[0].mxu0
    %v1322 = vadd.f32 0.0, %v1321
    %v1323 = vpop.f32.mrb[0].mxu0
    %1324 = vmatprep.mubr.bf16.mxu0 0
    %1325 = vmatmul.mubr.bf16.gmra.mrb[0].mxu0 %v354
    %v1326 = vpop.f32.mrb[0].mxu0
    %v1327 = vadd.f32 0.0, %v1326
    %v1328 = vpop.f32.mrb[0].mxu0
    %v1329 = vpop.f32.mrb[0].mxu0
    %v1330 = vadd.f32 0.0, %v1329
    %v1331 = vpop.f32.mrb[0].mxu0
    %1332 = vmatprep.mubr.bf16.mxu0 0
    %1333 = vmatmul.mubr.bf16.gmra.mrb[0].mxu0 %v355
    %v1334 = vpop.f32.mrb[0].mxu0
    %v1335 = vadd.f32 0.0, %v1334
    %v1336 = vpop.f32.mrb[0].mxu0
    %v1337 = vpop.f32.mrb[0].mxu0
    %v1338 = vadd.f32 0.0, %v1337
    %v1339 = vpop.f32.mrb[0].mxu0
    %1340 = vmatprep.mubr.bf16.mxu0 0
    %1341 = vmatmul.mubr.bf16.gmra.mrb[0].mxu0 %v356
    %v1342 = vpop.f32.mrb[0].mxu0
    %v1343 = vadd.f32 0.0, %v1342
    %v1344 = vpop.f32.mrb[0].mxu0
    %v1345 = vpop.f32.mrb[0].mxu0
    %v1346 = vadd.f32 0.0, %v1345
    %v1347 = vpop.f32.mrb[0].mxu0
    %1348 = vmatprep.mubr.bf16.mxu0 0
    %1349 = vmatmul.mubr.bf16.gmra.mrb[0].mxu0 %v357
    %v1350 = vpop.f32.mrb[0].mxu0
    %v1351 = vadd.f32 0.0, %v1350
    %v1352 = vpop.f32.mrb[0].mxu0
    %v1353 = vpop.f32.mrb[0].mxu0
    %v1354 = vadd.f32 0.0, %v1353
    %v1355 = vpop.f32.mrb[0].mxu0
    %1356 = vmatprep.mubr.bf16.mxu0 0
    %1357 = vmatmul.mubr.bf16.gmra.mrb[0].mxu0 %v358
    %v1358 = vpop.f32.mrb[0].mxu0
    %v1359 = vadd.f32 0.0, %v1358
    %v1360 = vpop.f32.mrb[0].mxu0
    %v1361 = vpop.f32.mrb[0].mxu0
    %v1362 = vadd.f32 0.0, %v1361
    %v1363 = vpop.f32.mrb[0].mxu0
    %1364 = vmatprep.mubr.bf16.mxu0 0
    %1365 = vmatmul.mubr.bf16.gmra.mrb[0].mxu0 %v359
    %v1366 = vpop.f32.mrb[0].mxu0
    %v1367 = vadd.f32 0.0, %v1366
    %v1368 = vpop.f32.mrb[0].mxu0
    %v1369 = vpop.f32.mrb[0].mxu0
    %v1370 = vadd.f32 0.0, %v1369
    %v1371 = vpop.f32.mrb[0].mxu0
    %1372 = vmatprep.mubr.bf16.mxu0 0
    %1373 = vmatmul.mubr.bf16.gmra.mrb[0].mxu0 %v476
    %v1374 = vpop.f32.mrb[0].mxu0
    %v1375 = vadd.f32 0.0, %v1374
    %v1376 = vpop.f32.mrb[0].mxu0
    %v1377 = vpop.f32.mrb[0].mxu0
    %v1378 = vadd.f32 0.0, %v1377
    %v1379 = vpop.f32.mrb[0].mxu0
    %1380 = vmatprep.mubr.bf16.mxu0 0
    %1381 = vmatmul.mubr.bf16.gmra.mrb[0].mxu0 %v477
    %v1382 = vpop.f32.mrb[0].mxu0
    %v1383 = vadd.f32 0.0, %v1382
    %v1384 = vpop.f32.mrb[0].mxu0
    %v1385 = vpop.f32.mrb[0].mxu0
    %v1386 = vadd.f32 0.0, %v1385
    %v1387 = vpop.f32.mrb[0].mxu0
    %1388 = vmatprep.mubr.bf16.mxu0 0
    %1389 = vmatmul.mubr.bf16.gmra.mrb[0].mxu0 %v478
    %v1390 = vpop.f32.mrb[0].mxu0
    %v1391 = vadd.f32 0.0, %v1390
    %v1392 = vpop.f32.mrb[0].mxu0
    %v1393 = vpop.f32.mrb[0].mxu0
    %v1394 = vadd.f32 0.0, %v1393
    %v1395 = vpop.f32.mrb[0].mxu0
    %1396 = vmatprep.mubr.bf16.mxu0 0
    %1397 = vmatmul.mubr.bf16.gmra.mrb[0].mxu0 %v479
    %v1398 = vpop.f32.mrb[0].mxu0
    %v1399 = vadd.f32 0.0, %v1398
    %v1400 = vpop.f32.mrb[0].mxu0
    %v1401 = vpop.f32.mrb[0].mxu0
    %v1402 = vadd.f32 0.0, %v1401
    %v1403 = vpop.f32.mrb[0].mxu0
    %1404 = vmatprep.mubr.bf16.mxu0 0
    %1405 = vmatmul.mubr.bf16.gmra.mrb[0].mxu0 %v480
    %v1406 = vpop.f32.mrb[0].mxu0
    %v1407 = vadd.f32 0.0, %v1406
    %v1408 = vpop.f32.mrb[0].mxu0
    %v1409 = vpop.f32.mrb[0].mxu0
    %v1410 = vadd.f32 0.0, %v1409
    %v1411 = vpop.f32.mrb[0].mxu0
    %1412 = vmatprep.mubr.bf16.mxu0 0
    %1413 = vmatmul.mubr.bf16.gmra.mrb[0].mxu0 %v481
    %v1414 = vpop.f32.mrb[0].mxu0
    %v1415 = vadd.f32 0.0, %v1414
    %v1416 = vpop.f32.mrb[0].mxu0
    %v1417 = vpop.f32.mrb[0].mxu0
    %v1418 = vadd.f32 0.0, %v1417
    %v1419 = vpop.f32.mrb[0].mxu0
    %1420 = vmatprep.mubr.bf16.mxu0 0
    %1421 = vmatmul.mubr.bf16.gmra.mrb[0].mxu0 %v482
    %v1422 = vpop.f32.mrb[0].mxu0
    %v1423 = vadd.f32 0.0, %v1422
    %v1424 = vpop.f32.mrb[0].mxu0
    %v1425 = vpop.f32.mrb[0].mxu0
    %v1426 = vadd.f32 0.0, %v1425
    %v1427 = vpop.f32.mrb[0].mxu0
    %1428 = vmatprep.mubr.bf16.mxu0 0
    %1429 = vmatmul.mubr.bf16.gmra.mrb[0].mxu0 %v483
    %v1430 = vpop.f32.mrb[0].mxu0
    %v1431 = vadd.f32 0.0, %v1430
    %v1432 = vpop.f32.mrb[0].mxu0
    %v1433 = vpop.f32.mrb[0].mxu0
    %v1434 = vadd.f32 0.0, %v1433
    %v1435 = vpop.f32.mrb[0].mxu0
    %1436 = vmatprep.mubr.bf16.mxu0 0
    %1437 = vmatmul.mubr.bf16.gmra.mrb[0].mxu0 %v600
    %v1438 = vpop.f32.mrb[0].mxu0
    %v1439 = vadd.f32 0.0, %v1438
    %v1440 = vpop.f32.mrb[0].mxu0
    %v1441 = vpop.f32.mrb[0].mxu0
    %v1442 = vadd.f32 0.0, %v1441
    %v1443 = vpop.f32.mrb[0].mxu0
    %1444 = vmatprep.mubr.bf16.mxu0 0
    %1445 = vmatmul.mubr.bf16.gmra.mrb[0].mxu0 %v601
    %v1446 = vpop.f32.mrb[0].mxu0
    %v1447 = vadd.f32 0.0, %v1446
    %v1448 = vpop.f32.mrb[0].mxu0
    %v1449 = vpop.f32.mrb[0].mxu0
    %v1450 = vadd.f32 0.0, %v1449
    %v1451 = vpop.f32.mrb[0].mxu0
    %1452 = vmatprep.mubr.bf16.mxu0 0
    %1453 = vmatmul.mubr.bf16.gmra.mrb[0].mxu0 %v602
    %v1454 = vpop.f32.mrb[0].mxu0
    %v1455 = vadd.f32 0.0, %v1454
    %v1456 = vpop.f32.mrb[0].mxu0
    %v1457 = vpop.f32.mrb[0].mxu0
    %v1458 = vadd.f32 0.0, %v1457
    %v1459 = vpop.f32.mrb[0].mxu0
    %1460 = vmatprep.mubr.bf16.mxu0 0
    %1461 = vmatmul.mubr.bf16.gmra.mrb[0].mxu0 %v603
    %v1462 = vpop.f32.mrb[0].mxu0
    %v1463 = vadd.f32 0.0, %v1462
    %v1464 = vpop.f32.mrb[0].mxu0
    %v1465 = vpop.f32.mrb[0].mxu0
    %v1466 = vadd.f32 0.0, %v1465
    %v1467 = vpop.f32.mrb[0].mxu0
    %1468 = vmatprep.mubr.bf16.mxu0 0
    %1469 = vmatmul.mubr.bf16.gmra.mrb[0].mxu0 %v604
    %v1470 = vpop.f32.mrb[0].mxu0
    %v1471 = vadd.f32 0.0, %v1470
    %v1472 = vpop.f32.mrb[0].mxu0
    %v1473 = vpop.f32.mrb[0].mxu0
    %v1474 = vadd.f32 0.0, %v1473
    %v1475 = vpop.f32.mrb[0].mxu0
    %1476 = vmatprep.mubr.bf16.mxu0 0
    %1477 = vmatmul.mubr.bf16.gmra.mrb[0].mxu0 %v605
    %v1478 = vpop.f32.mrb[0].mxu0
    %v1479 = vadd.f32 0.0, %v1478
    %v1480 = vpop.f32.mrb[0].mxu0
    %v1481 = vpop.f32.mrb[0].mxu0
    %v1482 = vadd.f32 0.0, %v1481
    %v1483 = vpop.f32.mrb[0].mxu0
    %1484 = vmatprep.mubr.bf16.mxu0 0
    %1485 = vmatmul.mubr.bf16.gmra.mrb[0].mxu0 %v606
    %v1486 = vpop.f32.mrb[0].mxu0
    %v1487 = vadd.f32 0.0, %v1486
    %v1488 = vpop.f32.mrb[0].mxu0
    %v1489 = vpop.f32.mrb[0].mxu0
    %v1490 = vadd.f32 0.0, %v1489
    %v1491 = vpop.f32.mrb[0].mxu0
    %1492 = vmatprep.mubr.bf16.mxu0 0
    %1493 = vmatmul.mubr.bf16.gmra.mrb[0].mxu0 %v607
    %v1494 = vpop.f32.mrb[0].mxu0
    %v1495 = vadd.f32 0.0, %v1494
    %v1496 = vpop.f32.mrb[0].mxu0
    %v1497 = vpop.f32.mrb[0].mxu0
    %v1498 = vadd.f32 0.0, %v1497
    %v1499 = vpop.f32.mrb[0].mxu0
    %1500 = vmatprep.mubr.bf16.mxu0 0
    %1501 = vmatmul.mubr.bf16.gmra.mrb[0].mxu0 %v724
    %v1502 = vpop.f32.mrb[0].mxu0
    %v1503 = vadd.f32 0.0, %v1502
    %v1504 = vpop.f32.mrb[0].mxu0
    %v1505 = vpop.f32.mrb[0].mxu0
    %v1506 = vadd.f32 0.0, %v1505
    %v1507 = vpop.f32.mrb[0].mxu0
    %1508 = vmatprep.mubr.bf16.mxu0 0
    %1509 = vmatmul.mubr.bf16.gmra.mrb[0].mxu0 %v725
    %v1510 = vpop.f32.mrb[0].mxu0
    %v1511 = vadd.f32 0.0, %v1510
    %v1512 = vpop.f32.mrb[0].mxu0
    %v1513 = vpop.f32.mrb[0].mxu0
    %v1514 = vadd.f32 0.0, %v1513
    %v1515 = vpop.f32.mrb[0].mxu0
    %1516 = vmatprep.mubr.bf16.mxu0 0
    %1517 = vmatmul.mubr.bf16.gmra.mrb[0].mxu0 %v726
    %v1518 = vpop.f32.mrb[0].mxu0
    %v1519 = vadd.f32 0.0, %v1518
    %v1520 = vpop.f32.mrb[0].mxu0
    %v1521 = vpop.f32.mrb[0].mxu0
    %v1522 = vadd.f32 0.0, %v1521
    %v1523 = vpop.f32.mrb[0].mxu0
    %1524 = vmatprep.mubr.bf16.mxu0 0
    %1525 = vmatmul.mubr.bf16.gmra.mrb[0].mxu0 %v727
    %v1526 = vpop.f32.mrb[0].mxu0
    %v1527 = vadd.f32 0.0, %v1526
    %v1528 = vpop.f32.mrb[0].mxu0
    %v1529 = vpop.f32.mrb[0].mxu0
    %v1530 = vadd.f32 0.0, %v1529
    %v1531 = vpop.f32.mrb[0].mxu0
    %1532 = vmatprep.mubr.bf16.mxu0 0
    %1533 = vmatmul.mubr.bf16.gmra.mrb[0].mxu0 %v728
    %v1534 = vpop.f32.mrb[0].mxu0
    %v1535 = vadd.f32 0.0, %v1534
    %v1536 = vpop.f32.mrb[0].mxu0
    %v1537 = vpop.f32.mrb[0].mxu0
    %v1538 = vadd.f32 0.0, %v1537
    %v1539 = vpop.f32.mrb[0].mxu0
    %1540 = vmatprep.mubr.bf16.mxu0 0
    %1541 = vmatmul.mubr.bf16.gmra.mrb[0].mxu0 %v729
    %v1542 = vpop.f32.mrb[0].mxu0
    %v1543 = vadd.f32 0.0, %v1542
    %v1544 = vpop.f32.mrb[0].mxu0
    %v1545 = vpop.f32.mrb[0].mxu0
    %v1546 = vadd.f32 0.0, %v1545
    %v1547 = vpop.f32.mrb[0].mxu0
    %1548 = vmatprep.mubr.bf16.mxu0 0
    %1549 = vmatmul.mubr.bf16.gmra.mrb[0].mxu0 %v730
    %v1550 = vpop.f32.mrb[0].mxu0
    %v1551 = vadd.f32 0.0, %v1550
    %v1552 = vpop.f32.mrb[0].mxu0
    %v1553 = vpop.f32.mrb[0].mxu0
    %v1554 = vadd.f32 0.0, %v1553
    %v1555 = vpop.f32.mrb[0].mxu0
    %1556 = vmatprep.mubr.bf16.mxu0 0
    %1557 = vmatmul.mubr.bf16.gmra.mrb[0].mxu0 %v731
    %v1558 = vpop.f32.mrb[0].mxu0
    %v1559 = vadd.f32 0.0, %v1558
    %v1560 = vpop.f32.mrb[0].mxu0
    %v1561 = vpop.f32.mrb[0].mxu0
    %v1562 = vadd.f32 0.0, %v1561
    %v1563 = vpop.f32.mrb[0].mxu0
    %1564 = vmatprep.mubr.bf16.mxu0 0
    %1565 = vmatmul.mubr.bf16.gmra.mrb[0].mxu0 %v848
    %v1566 = vpop.f32.mrb[0].mxu0
    %v1567 = vadd.f32 0.0, %v1566
    %v1568 = vpop.f32.mrb[0].mxu0
    %v1569 = vpop.f32.mrb[0].mxu0
    %v1570 = vadd.f32 0.0, %v1569
    %v1571 = vpop.f32.mrb[0].mxu0
    %1572 = vmatprep.mubr.bf16.mxu0 0
    %1573 = vmatmul.mubr.bf16.gmra.mrb[0].mxu0 %v849
    %v1574 = vpop.f32.mrb[0].mxu0
    %v1575 = vadd.f32 0.0, %v1574
    %v1576 = vpop.f32.mrb[0].mxu0
    %v1577 = vpop.f32.mrb[0].mxu0
    %v1578 = vadd.f32 0.0, %v1577
    %v1579 = vpop.f32.mrb[0].mxu0
    %1580 = vmatprep.mubr.bf16.mxu0 0
    %1581 = vmatmul.mubr.bf16.gmra.mrb[0].mxu0 %v850
    %v1582 = vpop.f32.mrb[0].mxu0
    %v1583 = vadd.f32 0.0, %v1582
    %v1584 = vpop.f32.mrb[0].mxu0
    %v1585 = vpop.f32.mrb[0].mxu0
    %v1586 = vadd.f32 0.0, %v1585
    %v1587 = vpop.f32.mrb[0].mxu0
    %1588 = vmatprep.mubr.bf16.mxu0 0
    %1589 = vmatmul.mubr.bf16.gmra.mrb[0].mxu0 %v851
    %v1590 = vpop.f32.mrb[0].mxu0
    %v1591 = vadd.f32 0.0, %v1590
    %v1592 = vpop.f32.mrb[0].mxu0
    %v1593 = vpop.f32.mrb[0].mxu0
    %v1594 = vadd.f32 0.0, %v1593
    %v1595 = vpop.f32.mrb[0].mxu0
    %1596 = vmatprep.mubr.bf16.mxu0 0
    %1597 = vmatmul.mubr.bf16.gmra.mrb[0].mxu0 %v852
    %v1598 = vpop.f32.mrb[0].mxu0
    %v1599 = vadd.f32 0.0, %v1598
    %v1600 = vpop.f32.mrb[0].mxu0
    %v1601 = vpop.f32.mrb[0].mxu0
    %v1602 = vadd.f32 0.0, %v1601
    %v1603 = vpop.f32.mrb[0].mxu0
    %1604 = vmatprep.mubr.bf16.mxu0 0
    %1605 = vmatmul.mubr.bf16.gmra.mrb[0].mxu0 %v853
    %v1606 = vpop.f32.mrb[0].mxu0
    %v1607 = vadd.f32 0.0, %v1606
    %v1608 = vpop.f32.mrb[0].mxu0
    %v1609 = vpop.f32.mrb[0].mxu0
    %v1610 = vadd.f32 0.0, %v1609
    %v1611 = vpop.f32.mrb[0].mxu0
    %1612 = vmatprep.mubr.bf16.mxu0 0
    %1613 = vmatmul.mubr.bf16.gmra.mrb[0].mxu0 %v854
    %v1614 = vpop.f32.mrb[0].mxu0
    %v1615 = vadd.f32 0.0, %v1614
    %v1616 = vpop.f32.mrb[0].mxu0
    %v1617 = vpop.f32.mrb[0].mxu0
    %v1618 = vadd.f32 0.0, %v1617
    %v1619 = vpop.f32.mrb[0].mxu0
    %1620 = vmatprep.mubr.bf16.mxu0 0
    %1621 = vmatmul.mubr.bf16.gmra.mrb[0].mxu0 %v855
    %v1622 = vpop.f32.mrb[0].mxu0
    %v1623 = vadd.f32 0.0, %v1622
    %v1624 = vpop.f32.mrb[0].mxu0
    %v1625 = vpop.f32.mrb[0].mxu0
    %v1626 = vadd.f32 0.0, %v1625
    %v1627 = vpop.f32.mrb[0].mxu0
    %1628 = vmatprep.mubr.bf16.mxu0 0
    %1629 = vmatmul.mubr.bf16.gmra.mrb[0].mxu0 %v972
    %v1630 = vpop.f32.mrb[0].mxu0
    %v1631 = vadd.f32 0.0, %v1630
    %v1632 = vpop.f32.mrb[0].mxu0
    %v1633 = vpop.f32.mrb[0].mxu0
    %v1634 = vadd.f32 0.0, %v1633
    %v1635 = vpop.f32.mrb[0].mxu0
    %1636 = vmatprep.mubr.bf16.mxu0 0
    %1637 = vmatmul.mubr.bf16.gmra.mrb[0].mxu0 %v973
    %v1638 = vpop.f32.mrb[0].mxu0
    %v1639 = vadd.f32 0.0, %v1638
    %v1640 = vpop.f32.mrb[0].mxu0
    %v1641 = vpop.f32.mrb[0].mxu0
    %v1642 = vadd.f32 0.0, %v1641
    %v1643 = vpop.f32.mrb[0].mxu0
    %1644 = vmatprep.mubr.bf16.mxu0 0
    %1645 = vmatmul.mubr.bf16.gmra.mrb[0].mxu0 %v974
    %v1646 = vpop.f32.mrb[0].mxu0
    %v1647 = vadd.f32 0.0, %v1646
    %v1648 = vpop.f32.mrb[0].mxu0
    %v1649 = vpop.f32.mrb[0].mxu0
    %v1650 = vadd.f32 0.0, %v1649
    %v1651 = vpop.f32.mrb[0].mxu0
    %1652 = vmatprep.mubr.bf16.mxu0 0
    %1653 = vmatmul.mubr.bf16.gmra.mrb[0].mxu0 %v975
    %v1654 = vpop.f32.mrb[0].mxu0
    %v1655 = vadd.f32 0.0, %v1654
    %v1656 = vpop.f32.mrb[0].mxu0
    %v1657 = vpop.f32.mrb[0].mxu0
    %v1658 = vadd.f32 0.0, %v1657
    %v1659 = vpop.f32.mrb[0].mxu0
    %1660 = vmatprep.mubr.bf16.mxu0 0
    %1661 = vmatmul.mubr.bf16.gmra.mrb[0].mxu0 %v976
    %v1662 = vpop.f32.mrb[0].mxu0
    %v1663 = vadd.f32 0.0, %v1662
    %v1664 = vpop.f32.mrb[0].mxu0
    %v1665 = vpop.f32.mrb[0].mxu0
    %v1666 = vadd.f32 0.0, %v1665
    %v1667 = vpop.f32.mrb[0].mxu0
    %1668 = vmatprep.mubr.bf16.mxu0 0
    %1669 = vmatmul.mubr.bf16.gmra.mrb[0].mxu0 %v977
    %v1670 = vpop.f32.mrb[0].mxu0
    %v1671 = vadd.f32 0.0, %v1670
    %v1672 = vpop.f32.mrb[0].mxu0
    %v1673 = vpop.f32.mrb[0].mxu0
    %v1674 = vadd.f32 0.0, %v1673
    %v1675 = vpop.f32.mrb[0].mxu0
    %1676 = vmatprep.mubr.bf16.mxu0 0
    %1677 = vmatmul.mubr.bf16.gmra.mrb[0].mxu0 %v978
    %v1678 = vpop.f32.mrb[0].mxu0
    %v1679 = vadd.f32 0.0, %v1678
    %v1680 = vpop.f32.mrb[0].mxu0
    %v1681 = vpop.f32.mrb[0].mxu0
    %v1682 = vadd.f32 0.0, %v1681
    %v1683 = vpop.f32.mrb[0].mxu0
    %1684 = vmatprep.mubr.bf16.mxu0 0
    %1685 = vmatmul.mubr.bf16.gmra.mrb[0].mxu0 %v979
    %v1686 = vpop.f32.mrb[0].mxu0
    %v1687 = vadd.f32 0.0, %v1686
    %v1688 = vpop.f32.mrb[0].mxu0
    %v1689 = vpop.f32.mrb[0].mxu0
    %v1690 = vadd.f32 0.0, %v1689
    %v1691 = vpop.f32.mrb[0].mxu0
    %1692 = vmatprep.mubr.bf16.mxu0 0
    %1693 = vmatmul.mubr.bf16.gmra.mrb[0].mxu0 %v1096
    %v1694 = vpop.f32.mrb[0].mxu0
    %v1695 = vadd.f32 0.0, %v1694
    %v1696 = vpop.f32.mrb[0].mxu0
    %v1697 = vpop.f32.mrb[0].mxu0
    %v1698 = vadd.f32 0.0, %v1697
    %v1699 = vpop.f32.mrb[0].mxu0
    %1700 = vmatprep.mubr.bf16.mxu0 0
    %1701 = vmatmul.mubr.bf16.gmra.mrb[0].mxu0 %v1097
    %v1702 = vpop.f32.mrb[0].mxu0
    %v1703 = vadd.f32 0.0, %v1702
    %v1704 = vpop.f32.mrb[0].mxu0
    %v1705 = vpop.f32.mrb[0].mxu0
    %v1706 = vadd.f32 0.0, %v1705
    %v1707 = vpop.f32.mrb[0].mxu0
    %1708 = vmatprep.mubr.bf16.mxu0 0
    %1709 = vmatmul.mubr.bf16.gmra.mrb[0].mxu0 %v1098
    %v1710 = vpop.f32.mrb[0].mxu0
    %v1711 = vadd.f32 0.0, %v1710
    %v1712 = vpop.f32.mrb[0].mxu0
    %v1713 = vpop.f32.mrb[0].mxu0
    %v1714 = vadd.f32 0.0, %v1713
    %v1715 = vpop.f32.mrb[0].mxu0
    %1716 = vmatprep.mubr.bf16.mxu0 0
    %1717 = vmatmul.mubr.bf16.gmra.mrb[0].mxu0 %v1099
    %v1718 = vpop.f32.mrb[0].mxu0
    %v1719 = vadd.f32 0.0, %v1718
    %v1720 = vpop.f32.mrb[0].mxu0
    %v1721 = vpop.f32.mrb[0].mxu0
    %v1722 = vadd.f32 0.0, %v1721
    %v1723 = vpop.f32.mrb[0].mxu0
    %1724 = vmatprep.mubr.bf16.mxu0 0
    %1725 = vmatmul.mubr.bf16.gmra.mrb[0].mxu0 %v1100
    %v1726 = vpop.f32.mrb[0].mxu0
    %v1727 = vadd.f32 0.0, %v1726
    %v1728 = vpop.f32.mrb[0].mxu0
    %v1729 = vpop.f32.mrb[0].mxu0
    %v1730 = vadd.f32 0.0, %v1729
    %v1731 = vpop.f32.mrb[0].mxu0
    %1732 = vmatprep.mubr.bf16.mxu0 0
    %1733 = vmatmul.mubr.bf16.gmra.mrb[0].mxu0 %v1101
    %v1734 = vpop.f32.mrb[0].mxu0
    %v1735 = vadd.f32 0.0, %v1734
    %v1736 = vpop.f32.mrb[0].mxu0
    %v1737 = vpop.f32.mrb[0].mxu0
    %v1738 = vadd.f32 0.0, %v1737
    %v1739 = vpop.f32.mrb[0].mxu0
    %1740 = vmatprep.mubr.bf16.mxu0 0
    %1741 = vmatmul.mubr.bf16.gmra.mrb[0].mxu0 %v1102
    %v1742 = vpop.f32.mrb[0].mxu0
    %v1743 = vadd.f32 0.0, %v1742
    %v1744 = vpop.f32.mrb[0].mxu0
    %v1745 = vpop.f32.mrb[0].mxu0
    %v1746 = vadd.f32 0.0, %v1745
    %v1747 = vpop.f32.mrb[0].mxu0
    %1748 = vmatprep.mubr.bf16.mxu0 0
    %1749 = vmatmul.mubr.bf16.gmra.mrb[0].mxu0 %v1103
    %v1750 = vpop.f32.mrb[0].mxu0
    %v1751 = vadd.f32 0.0, %v1750
    %v1752 = vpop.f32.mrb[0].mxu0
    %v1753 = vpop.f32.mrb[0].mxu0
    %v1754 = vadd.f32 0.0, %v1753
    %v1755 = vpop.f32.mrb[0].mxu0
    %1756 = vmatprep.mubr.bf16.mxu0 0
    %1757 = vmatmul.mubr.bf16.gmra.mrb[0].mxu0 %v1220
    %v1758 = vpop.f32.mrb[0].mxu0
    %v1759 = vadd.f32 0.0, %v1758
    %v1760 = vpop.f32.mrb[0].mxu0
    %v1761 = vpop.f32.mrb[0].mxu0
    %v1762 = vadd.f32 0.0, %v1761
    %v1763 = vpop.f32.mrb[0].mxu0
    %1764 = vmatprep.mubr.bf16.mxu0 0
    %1765 = vmatmul.mubr.bf16.gmra.mrb[0].mxu0 %v1221
    %v1766 = vpop.f32.mrb[0].mxu0
    %v1767 = vadd.f32 0.0, %v1766
    %v1768 = vpop.f32.mrb[0].mxu0
    %v1769 = vpop.f32.mrb[0].mxu0
    %v1770 = vadd.f32 0.0, %v1769
    %v1771 = vpop.f32.mrb[0].mxu0
    %1772 = vmatprep.mubr.bf16.mxu0 0
    %1773 = vmatmul.mubr.bf16.gmra.mrb[0].mxu0 %v1222
    %v1774 = vpop.f32.mrb[0].mxu0
    %v1775 = vadd.f32 0.0, %v1774
    %v1776 = vpop.f32.mrb[0].mxu0
    %v1777 = vpop.f32.mrb[0].mxu0
    %v1778 = vadd.f32 0.0, %v1777
    %v1779 = vpop.f32.mrb[0].mxu0
    %1780 = vmatprep.mubr.bf16.mxu0 0
    %1781 = vmatmul.mubr.bf16.gmra.mrb[0].mxu0 %v1223
    %v1782 = vpop.f32.mrb[0].mxu0
    %v1783 = vadd.f32 0.0, %v1782
    %v1784 = vpop.f32.mrb[0].mxu0
    %v1785 = vpop.f32.mrb[0].mxu0
    %v1786 = vadd.f32 0.0, %v1785
    %v1787 = vpop.f32.mrb[0].mxu0
    %1788 = vmatprep.mubr.bf16.mxu0 0
    %1789 = vmatmul.mubr.bf16.gmra.mrb[0].mxu0 %v1224
    %v1790 = vpop.f32.mrb[0].mxu0
    %v1791 = vadd.f32 0.0, %v1790
    %v1792 = vpop.f32.mrb[0].mxu0
    %v1793 = vpop.f32.mrb[0].mxu0
    %v1794 = vadd.f32 0.0, %v1793
    %v1795 = vpop.f32.mrb[0].mxu0
    %1796 = vmatprep.mubr.bf16.mxu0 0
    %1797 = vmatmul.mubr.bf16.gmra.mrb[0].mxu0 %v1225
    %v1798 = vpop.f32.mrb[0].mxu0
    %v1799 = vadd.f32 0.0, %v1798
    %v1800 = vpop.f32.mrb[0].mxu0
    %v1801 = vpop.f32.mrb[0].mxu0
    %v1802 = vadd.f32 0.0, %v1801
    %v1803 = vpop.f32.mrb[0].mxu0
    %1804 = vmatprep.mubr.bf16.mxu0 0
    %1805 = vmatmul.mubr.bf16.gmra.mrb[0].mxu0 %v1226
    %v1806 = vpop.f32.mrb[0].mxu0
    %v1807 = vadd.f32 0.0, %v1806
    %v1808 = vpop.f32.mrb[0].mxu0
    %v1809 = vpop.f32.mrb[0].mxu0
    %v1810 = vadd.f32 0.0, %v1809
    %v1811 = vpop.f32.mrb[0].mxu0
    %1812 = vmatprep.mubr.bf16.mxu0 0
    %1813 = vmatmul.mubr.bf16.gmra.mrb[0].mxu0 %v1227
    %v1814 = vpop.f32.mrb[0].mxu0
    %v1815 = vadd.f32 0.0, %v1814
    %v1816 = vpop.f32.mrb[0].mxu0
    %v1817 = vpop.f32.mrb[0].mxu0
    %v1818 = vadd.f32 0.0, %v1817
    %v1819 = vpop.f32.mrb[0].mxu0
    %1820 = vdwg.mxu0
    %v1822 = vlaneseq
    %v1823 = vshrl.u32 %v1822, 7
    %v1824 = vsub.s32 0, %v1823
    %v1825 = vrot.slane %v87, %v1824
    %vm1827 = vcmp.ge.f32.partialorder %v1311, %v1825
    %vm1828 = vcmp.ge.f32.partialorder %v1314, %v1825
    %vm1829 = vcmp.ge.f32.partialorder %v1319, %v1825
    %vm1830 = vcmp.ge.f32.partialorder %v1322, %v1825
    %vm1831 = vcmp.ge.f32.partialorder %v1327, %v1825
    %vm1832 = vcmp.ge.f32.partialorder %v1330, %v1825
    %vm1833 = vcmp.ge.f32.partialorder %v1335, %v1825
    %vm1834 = vcmp.ge.f32.partialorder %v1338, %v1825
    %vm1835 = vcmp.ge.f32.partialorder %v1343, %v1825
    %vm1836 = vcmp.ge.f32.partialorder %v1346, %v1825
    %vm1837 = vcmp.ge.f32.partialorder %v1351, %v1825
    %vm1838 = vcmp.ge.f32.partialorder %v1354, %v1825
    %vm1839 = vcmp.ge.f32.partialorder %v1359, %v1825
    %vm1840 = vcmp.ge.f32.partialorder %v1362, %v1825
    %vm1841 = vcmp.ge.f32.partialorder %v1367, %v1825
    %vm1842 = vcmp.ge.f32.partialorder %v1370, %v1825
    %v1843 = vsel %vm1827, %v223, inf
    %v1844 = vsel %vm1828, %v228, inf
    %v1845 = vsel %vm1829, %v233, inf
    %v1846 = vsel %vm1830, %v238, inf
    %v1847 = vsel %vm1831, %v243, inf
    %v1848 = vsel %vm1832, %v248, inf
    %v1849 = vsel %vm1833, %v253, inf
    %v1850 = vsel %vm1834, %v258, inf
    %v1851 = vsel %vm1835, %v263, inf
    %v1852 = vsel %vm1836, %v268, inf
    %v1853 = vsel %vm1837, %v273, inf
    %v1854 = vsel %vm1838, %v278, inf
    %v1855 = vsel %vm1839, %v283, inf
    %v1856 = vsel %vm1840, %v288, inf
    %v1857 = vsel %vm1841, %v293, inf
    %v1858 = vsel %vm1842, %v298, inf
    %v1859 = vmin.f32 %v1843, %v1847
    %v1860 = vmin.f32 %v1844, %v1848
    %v1861 = vmin.f32 %v1845, %v1849
    %v1862 = vmin.f32 %v1846, %v1850
    %v1863 = vmin.f32 %v1859, %v1851
    %v1864 = vmin.f32 %v1860, %v1852
    %v1865 = vmin.f32 %v1861, %v1853
    %v1866 = vmin.f32 %v1862, %v1854
    %v1867 = vmin.f32 %v1863, %v1855
    %v1868 = vmin.f32 %v1864, %v1856
    %v1869 = vmin.f32 %v1865, %v1857
    %v1870 = vmin.f32 %v1866, %v1858
    %v1871 = vmin.f32 %v1867, %v1868
    %v1872 = vmin.f32 %v1869, %v1870
    %v1873 = vmin.f32 %v1871, %v1872
    %v1874 = vrot.slane %v1873, 4
    %v1875 = vmin.f32 %v1873, %v1874
    %v1876 = vrot.slane %v1875, 2
    %v1877 = vmin.f32 %v1875, %v1876
    %v1878 = vrot.slane %v1877, 1
    %v1879 = vmin.f32 %v1877, %v1878
    %v1880 = vmul.f32 %v1879, %v86
    %v1881 = vmax.f32 %v1880, 0.0
    %vm1882 = vcmp.ge.f32.partialorder %v1375, %v1825
    %vm1883 = vcmp.ge.f32.partialorder %v1378, %v1825
    %vm1884 = vcmp.ge.f32.partialorder %v1383, %v1825
    %vm1885 = vcmp.ge.f32.partialorder %v1386, %v1825
    %vm1886 = vcmp.ge.f32.partialorder %v1391, %v1825
    %vm1887 = vcmp.ge.f32.partialorder %v1394, %v1825
    %vm1888 = vcmp.ge.f32.partialorder %v1399, %v1825
    %vm1889 = vcmp.ge.f32.partialorder %v1402, %v1825
    %vm1890 = vcmp.ge.f32.partialorder %v1407, %v1825
    %vm1891 = vcmp.ge.f32.partialorder %v1410, %v1825
    %vm1892 = vcmp.ge.f32.partialorder %v1415, %v1825
    %vm1893 = vcmp.ge.f32.partialorder %v1418, %v1825
    %vm1894 = vcmp.ge.f32.partialorder %v1423, %v1825
    %vm1895 = vcmp.ge.f32.partialorder %v1426, %v1825
    %vm1896 = vcmp.ge.f32.partialorder %v1431, %v1825
    %vm1897 = vcmp.ge.f32.partialorder %v1434, %v1825
    %v1898 = vsel %vm1882, %v362, inf
    %v1899 = vsel %vm1883, %v366, inf
    %v1900 = vsel %vm1884, %v370, inf
    %v1901 = vsel %vm1885, %v374, inf
    %v1902 = vsel %vm1886, %v378, inf
    %v1903 = vsel %vm1887, %v382, inf
    %v1904 = vsel %vm1888, %v386, inf
    %v1905 = vsel %vm1889, %v390, inf
    %v1906 = vsel %vm1890, %v394, inf
    %v1907 = vsel %vm1891, %v398, inf
    %v1908 = vsel %vm1892, %v402, inf
    %v1909 = vsel %vm1893, %v406, inf
    %v1910 = vsel %vm1894, %v410, inf
    %v1911 = vsel %vm1895, %v414, inf
    %v1912 = vsel %vm1896, %v418, inf
    %v1913 = vsel %vm1897, %v422, inf
    %v1914 = vmin.f32 %v1898, %v1902
    %v1915 = vmin.f32 %v1899, %v1903
    %v1916 = vmin.f32 %v1900, %v1904
    %v1917 = vmin.f32 %v1901, %v1905
    %v1918 = vmin.f32 %v1914, %v1906
    %v1919 = vmin.f32 %v1915, %v1907
    %v1920 = vmin.f32 %v1916, %v1908
    %v1921 = vmin.f32 %v1917, %v1909
    %v1922 = vmin.f32 %v1918, %v1910
    %v1923 = vmin.f32 %v1919, %v1911
    %v1924 = vmin.f32 %v1920, %v1912
    %v1925 = vmin.f32 %v1921, %v1913
    %v1926 = vmin.f32 %v1922, %v1923
    %v1927 = vmin.f32 %v1924, %v1925
    %v1928 = vmin.f32 %v1926, %v1927
    %v1929 = vrot.slane %v1928, 4
    %v1930 = vmin.f32 %v1928, %v1929
    %v1931 = vrot.slane %v1930, 2
    %v1932 = vmin.f32 %v1930, %v1931
    %v1933 = vrot.slane %v1932, 1
    %v1934 = vmin.f32 %v1932, %v1933
    %v1935 = vmul.f32 %v1934, %v86
    %v1936 = vmax.f32 %v1935, 0.0
    %vm1937 = vcmp.ge.f32.partialorder %v1439, %v1825
    %vm1938 = vcmp.ge.f32.partialorder %v1442, %v1825
    %vm1939 = vcmp.ge.f32.partialorder %v1447, %v1825
    %vm1940 = vcmp.ge.f32.partialorder %v1450, %v1825
    %vm1941 = vcmp.ge.f32.partialorder %v1455, %v1825
    %vm1942 = vcmp.ge.f32.partialorder %v1458, %v1825
    %vm1943 = vcmp.ge.f32.partialorder %v1463, %v1825
    %vm1944 = vcmp.ge.f32.partialorder %v1466, %v1825
    %vm1945 = vcmp.ge.f32.partialorder %v1471, %v1825
    %vm1946 = vcmp.ge.f32.partialorder %v1474, %v1825
    %vm1947 = vcmp.ge.f32.partialorder %v1479, %v1825
    %vm1948 = vcmp.ge.f32.partialorder %v1482, %v1825
    %vm1949 = vcmp.ge.f32.partialorder %v1487, %v1825
    %vm1950 = vcmp.ge.f32.partialorder %v1490, %v1825
    %vm1951 = vcmp.ge.f32.partialorder %v1495, %v1825
    %vm1952 = vcmp.ge.f32.partialorder %v1498, %v1825
    %v1953 = vsel %vm1937, %v486, inf
    %v1954 = vsel %vm1938, %v490, inf
    %v1955 = vsel %vm1939, %v494, inf
    %v1956 = vsel %vm1940, %v498, inf
    %v1957 = vsel %vm1941, %v502, inf
    %v1958 = vsel %vm1942, %v506, inf
    %v1959 = vsel %vm1943, %v510, inf
    %v1960 = vsel %vm1944, %v514, inf
    %v1961 = vsel %vm1945, %v518, inf
    %v1962 = vsel %vm1946, %v522, inf
    %v1963 = vsel %vm1947, %v526, inf
    %v1964 = vsel %vm1948, %v530, inf
    %v1965 = vsel %vm1949, %v534, inf
    %v1966 = vsel %vm1950, %v538, inf
    %v1967 = vsel %vm1951, %v542, inf
    %v1968 = vsel %vm1952, %v546, inf
    %v1969 = vmin.f32 %v1953, %v1957
    %v1970 = vmin.f32 %v1954, %v1958
    %v1971 = vmin.f32 %v1955, %v1959
    %v1972 = vmin.f32 %v1956, %v1960
    %v1973 = vmin.f32 %v1969, %v1961
    %v1974 = vmin.f32 %v1970, %v1962
    %v1975 = vmin.f32 %v1971, %v1963
    %v1976 = vmin.f32 %v1972, %v1964
    %v1977 = vmin.f32 %v1973, %v1965
    %v1978 = vmin.f32 %v1974, %v1966
    %v1979 = vmin.f32 %v1975, %v1967
    %v1980 = vmin.f32 %v1976, %v1968
    %v1981 = vmin.f32 %v1977, %v1978
    %v1982 = vmin.f32 %v1979, %v1980
    %v1983 = vmin.f32 %v1981, %v1982
    %v1984 = vrot.slane %v1983, 4
    %v1985 = vmin.f32 %v1983, %v1984
    %v1986 = vrot.slane %v1985, 2
    %v1987 = vmin.f32 %v1985, %v1986
    %v1988 = vrot.slane %v1987, 1
    %v1989 = vmin.f32 %v1987, %v1988
    %v1990 = vmul.f32 %v1989, %v86
    %v1991 = vmax.f32 %v1990, 0.0
    %vm1992 = vcmp.ge.f32.partialorder %v1503, %v1825
    %vm1993 = vcmp.ge.f32.partialorder %v1506, %v1825
    %vm1994 = vcmp.ge.f32.partialorder %v1511, %v1825
    %vm1995 = vcmp.ge.f32.partialorder %v1514, %v1825
    %vm1996 = vcmp.ge.f32.partialorder %v1519, %v1825
    %vm1997 = vcmp.ge.f32.partialorder %v1522, %v1825
    %vm1998 = vcmp.ge.f32.partialorder %v1527, %v1825
    %vm1999 = vcmp.ge.f32.partialorder %v1530, %v1825
    %vm2000 = vcmp.ge.f32.partialorder %v1535, %v1825
    %vm2001 = vcmp.ge.f32.partialorder %v1538, %v1825
    %vm2002 = vcmp.ge.f32.partialorder %v1543, %v1825
    %vm2003 = vcmp.ge.f32.partialorder %v1546, %v1825
    %vm2004 = vcmp.ge.f32.partialorder %v1551, %v1825
    %vm2005 = vcmp.ge.f32.partialorder %v1554, %v1825
    %vm2006 = vcmp.ge.f32.partialorder %v1559, %v1825
    %vm2007 = vcmp.ge.f32.partialorder %v1562, %v1825
    %v2008 = vsel %vm1992, %v610, inf
    %v2009 = vsel %vm1993, %v614, inf
    %v2010 = vsel %vm1994, %v618, inf
    %v2011 = vsel %vm1995, %v622, inf
    %v2012 = vsel %vm1996, %v626, inf
    %v2013 = vsel %vm1997, %v630, inf
    %v2014 = vsel %vm1998, %v634, inf
    %v2015 = vsel %vm1999, %v638, inf
    %v2016 = vsel %vm2000, %v642, inf
    %v2017 = vsel %vm2001, %v646, inf
    %v2018 = vsel %vm2002, %v650, inf
    %v2019 = vsel %vm2003, %v654, inf
    %v2020 = vsel %vm2004, %v658, inf
    %v2021 = vsel %vm2005, %v662, inf
    %v2022 = vsel %vm2006, %v666, inf
    %v2023 = vsel %vm2007, %v670, inf
    %v2024 = vmin.f32 %v2008, %v2012
    %v2025 = vmin.f32 %v2009, %v2013
    %v2026 = vmin.f32 %v2010, %v2014
    %v2027 = vmin.f32 %v2011, %v2015
    %v2028 = vmin.f32 %v2024, %v2016
    %v2029 = vmin.f32 %v2025, %v2017
    %v2030 = vmin.f32 %v2026, %v2018
    %v2031 = vmin.f32 %v2027, %v2019
    %v2032 = vmin.f32 %v2028, %v2020
    %v2033 = vmin.f32 %v2029, %v2021
    %v2034 = vmin.f32 %v2030, %v2022
    %v2035 = vmin.f32 %v2031, %v2023
    %v2036 = vmin.f32 %v2032, %v2033
    %v2037 = vmin.f32 %v2034, %v2035
    %v2038 = vmin.f32 %v2036, %v2037
    %v2039 = vrot.slane %v2038, 4
    %v2040 = vmin.f32 %v2038, %v2039
    %v2041 = vrot.slane %v2040, 2
    %v2042 = vmin.f32 %v2040, %v2041
    %v2043 = vrot.slane %v2042, 1
    %v2044 = vmin.f32 %v2042, %v2043
    %v2045 = vmul.f32 %v2044, %v86
    %v2046 = vmax.f32 %v2045, 0.0
    %vm2047 = vcmp.ge.f32.partialorder %v1567, %v1825
    %vm2048 = vcmp.ge.f32.partialorder %v1570, %v1825
    %vm2049 = vcmp.ge.f32.partialorder %v1575, %v1825
    %vm2050 = vcmp.ge.f32.partialorder %v1578, %v1825
    %vm2051 = vcmp.ge.f32.partialorder %v1583, %v1825
    %vm2052 = vcmp.ge.f32.partialorder %v1586, %v1825
    %vm2053 = vcmp.ge.f32.partialorder %v1591, %v1825
    %vm2054 = vcmp.ge.f32.partialorder %v1594, %v1825
    %vm2055 = vcmp.ge.f32.partialorder %v1599, %v1825
    %vm2056 = vcmp.ge.f32.partialorder %v1602, %v1825
    %vm2057 = vcmp.ge.f32.partialorder %v1607, %v1825
    %vm2058 = vcmp.ge.f32.partialorder %v1610, %v1825
    %vm2059 = vcmp.ge.f32.partialorder %v1615, %v1825
    %vm2060 = vcmp.ge.f32.partialorder %v1618, %v1825
    %vm2061 = vcmp.ge.f32.partialorder %v1623, %v1825
    %vm2062 = vcmp.ge.f32.partialorder %v1626, %v1825
    %v2063 = vsel %vm2047, %v734, inf
    %v2064 = vsel %vm2048, %v738, inf
    %v2065 = vsel %vm2049, %v742, inf
    %v2066 = vsel %vm2050, %v746, inf
    %v2067 = vsel %vm2051, %v750, inf
    %v2068 = vsel %vm2052, %v754, inf
    %v2069 = vsel %vm2053, %v758, inf
    %v2070 = vsel %vm2054, %v762, inf
    %v2071 = vsel %vm2055, %v766, inf
    %v2072 = vsel %vm2056, %v770, inf
    %v2073 = vsel %vm2057, %v774, inf
    %v2074 = vsel %vm2058, %v778, inf
    %v2075 = vsel %vm2059, %v782, inf
    %v2076 = vsel %vm2060, %v786, inf
    %v2077 = vsel %vm2061, %v790, inf
    %v2078 = vsel %vm2062, %v794, inf
    %v2079 = vmin.f32 %v2063, %v2067
    %v2080 = vmin.f32 %v2064, %v2068
    %v2081 = vmin.f32 %v2065, %v2069
    %v2082 = vmin.f32 %v2066, %v2070
    %v2083 = vmin.f32 %v2079, %v2071
    %v2084 = vmin.f32 %v2080, %v2072
    %v2085 = vmin.f32 %v2081, %v2073
    %v2086 = vmin.f32 %v2082, %v2074
    %v2087 = vmin.f32 %v2083, %v2075
    %v2088 = vmin.f32 %v2084, %v2076
    %v2089 = vmin.f32 %v2085, %v2077
    %v2090 = vmin.f32 %v2086, %v2078
    %v2091 = vmin.f32 %v2087, %v2088
    %v2092 = vmin.f32 %v2089, %v2090
    %v2093 = vmin.f32 %v2091, %v2092
    %v2094 = vrot.slane %v2093, 4
    %v2095 = vmin.f32 %v2093, %v2094
    %v2096 = vrot.slane %v2095, 2
    %v2097 = vmin.f32 %v2095, %v2096
    %v2098 = vrot.slane %v2097, 1
    %v2099 = vmin.f32 %v2097, %v2098
    %v2100 = vmul.f32 %v2099, %v86
    %v2101 = vmax.f32 %v2100, 0.0
    %vm2102 = vcmp.ge.f32.partialorder %v1631, %v1825
    %vm2103 = vcmp.ge.f32.partialorder %v1634, %v1825
    %vm2104 = vcmp.ge.f32.partialorder %v1639, %v1825
    %vm2105 = vcmp.ge.f32.partialorder %v1642, %v1825
    %vm2106 = vcmp.ge.f32.partialorder %v1647, %v1825
    %vm2107 = vcmp.ge.f32.partialorder %v1650, %v1825
    %vm2108 = vcmp.ge.f32.partialorder %v1655, %v1825
    %vm2109 = vcmp.ge.f32.partialorder %v1658, %v1825
    %vm2110 = vcmp.ge.f32.partialorder %v1663, %v1825
    %vm2111 = vcmp.ge.f32.partialorder %v1666, %v1825
    %vm2112 = vcmp.ge.f32.partialorder %v1671, %v1825
    %vm2113 = vcmp.ge.f32.partialorder %v1674, %v1825
    %vm2114 = vcmp.ge.f32.partialorder %v1679, %v1825
    %vm2115 = vcmp.ge.f32.partialorder %v1682, %v1825
    %vm2116 = vcmp.ge.f32.partialorder %v1687, %v1825
    %vm2117 = vcmp.ge.f32.partialorder %v1690, %v1825
    %v2118 = vsel %vm2102, %v858, inf
    %v2119 = vsel %vm2103, %v862, inf
    %v2120 = vsel %vm2104, %v866, inf
    %v2121 = vsel %vm2105, %v870, inf
    %v2122 = vsel %vm2106, %v874, inf
    %v2123 = vsel %vm2107, %v878, inf
    %v2124 = vsel %vm2108, %v882, inf
    %v2125 = vsel %vm2109, %v886, inf
    %v2126 = vsel %vm2110, %v890, inf
    %v2127 = vsel %vm2111, %v894, inf
    %v2128 = vsel %vm2112, %v898, inf
    %v2129 = vsel %vm2113, %v902, inf
    %v2130 = vsel %vm2114, %v906, inf
    %v2131 = vsel %vm2115, %v910, inf
    %v2132 = vsel %vm2116, %v914, inf
    %v2133 = vsel %vm2117, %v918, inf
    %v2134 = vmin.f32 %v2118, %v2122
    %v2135 = vmin.f32 %v2119, %v2123
    %v2136 = vmin.f32 %v2120, %v2124
    %v2137 = vmin.f32 %v2121, %v2125
    %v2138 = vmin.f32 %v2134, %v2126
    %v2139 = vmin.f32 %v2135, %v2127
    %v2140 = vmin.f32 %v2136, %v2128
    %v2141 = vmin.f32 %v2137, %v2129
    %v2142 = vmin.f32 %v2138, %v2130
    %v2143 = vmin.f32 %v2139, %v2131
    %v2144 = vmin.f32 %v2140, %v2132
    %v2145 = vmin.f32 %v2141, %v2133
    %v2146 = vmin.f32 %v2142, %v2143
    %v2147 = vmin.f32 %v2144, %v2145
    %v2148 = vmin.f32 %v2146, %v2147
    %v2149 = vrot.slane %v2148, 4
    %v2150 = vmin.f32 %v2148, %v2149
    %v2151 = vrot.slane %v2150, 2
    %v2152 = vmin.f32 %v2150, %v2151
    %v2153 = vrot.slane %v2152, 1
    %v2154 = vmin.f32 %v2152, %v2153
    %v2155 = vmul.f32 %v2154, %v86
    %v2156 = vmax.f32 %v2155, 0.0
    %vm2157 = vcmp.ge.f32.partialorder %v1695, %v1825
    %vm2158 = vcmp.ge.f32.partialorder %v1698, %v1825
    %vm2159 = vcmp.ge.f32.partialorder %v1703, %v1825
    %vm2160 = vcmp.ge.f32.partialorder %v1706, %v1825
    %vm2161 = vcmp.ge.f32.partialorder %v1711, %v1825
    %vm2162 = vcmp.ge.f32.partialorder %v1714, %v1825
    %vm2163 = vcmp.ge.f32.partialorder %v1719, %v1825
    %vm2164 = vcmp.ge.f32.partialorder %v1722, %v1825
    %vm2165 = vcmp.ge.f32.partialorder %v1727, %v1825
    %vm2166 = vcmp.ge.f32.partialorder %v1730, %v1825
    %vm2167 = vcmp.ge.f32.partialorder %v1735, %v1825
    %vm2168 = vcmp.ge.f32.partialorder %v1738, %v1825
    %vm2169 = vcmp.ge.f32.partialorder %v1743, %v1825
    %vm2170 = vcmp.ge.f32.partialorder %v1746, %v1825
    %vm2171 = vcmp.ge.f32.partialorder %v1751, %v1825
    %vm2172 = vcmp.ge.f32.partialorder %v1754, %v1825
    %v2173 = vsel %vm2157, %v982, inf
    %v2174 = vsel %vm2158, %v986, inf
    %v2175 = vsel %vm2159, %v990, inf
    %v2176 = vsel %vm2160, %v994, inf
    %v2177 = vsel %vm2161, %v998, inf
    %v2178 = vsel %vm2162, %v1002, inf
    %v2179 = vsel %vm2163, %v1006, inf
    %v2180 = vsel %vm2164, %v1010, inf
    %v2181 = vsel %vm2165, %v1014, inf
    %v2182 = vsel %vm2166, %v1018, inf
    %v2183 = vsel %vm2167, %v1022, inf
    %v2184 = vsel %vm2168, %v1026, inf
    %v2185 = vsel %vm2169, %v1030, inf
    %v2186 = vsel %vm2170, %v1034, inf
    %v2187 = vsel %vm2171, %v1038, inf
    %v2188 = vsel %vm2172, %v1042, inf
    %v2189 = vmin.f32 %v2173, %v2177
    %v2190 = vmin.f32 %v2174, %v2178
    %v2191 = vmin.f32 %v2175, %v2179
    %v2192 = vmin.f32 %v2176, %v2180
    %v2193 = vmin.f32 %v2189, %v2181
    %v2194 = vmin.f32 %v2190, %v2182
    %v2195 = vmin.f32 %v2191, %v2183
    %v2196 = vmin.f32 %v2192, %v2184
    %v2197 = vmin.f32 %v2193, %v2185
    %v2198 = vmin.f32 %v2194, %v2186
    %v2199 = vmin.f32 %v2195, %v2187
    %v2200 = vmin.f32 %v2196, %v2188
    %v2201 = vmin.f32 %v2197, %v2198
    %v2202 = vmin.f32 %v2199, %v2200
    %v2203 = vmin.f32 %v2201, %v2202
    %v2204 = vrot.slane %v2203, 4
    %v2205 = vmin.f32 %v2203, %v2204
    %v2206 = vrot.slane %v2205, 2
    %v2207 = vmin.f32 %v2205, %v2206
    %v2208 = vrot.slane %v2207, 1
    %v2209 = vmin.f32 %v2207, %v2208
    %v2210 = vmul.f32 %v2209, %v86
    %v2211 = vmax.f32 %v2210, 0.0
    %vm2212 = vcmp.ge.f32.partialorder %v1759, %v1825
    %vm2213 = vcmp.ge.f32.partialorder %v1762, %v1825
    %vm2214 = vcmp.ge.f32.partialorder %v1767, %v1825
    %vm2215 = vcmp.ge.f32.partialorder %v1770, %v1825
    %vm2216 = vcmp.ge.f32.partialorder %v1775, %v1825
    %vm2217 = vcmp.ge.f32.partialorder %v1778, %v1825
    %vm2218 = vcmp.ge.f32.partialorder %v1783, %v1825
    %vm2219 = vcmp.ge.f32.partialorder %v1786, %v1825
    %vm2220 = vcmp.ge.f32.partialorder %v1791, %v1825
    %vm2221 = vcmp.ge.f32.partialorder %v1794, %v1825
    %vm2222 = vcmp.ge.f32.partialorder %v1799, %v1825
    %vm2223 = vcmp.ge.f32.partialorder %v1802, %v1825
    %vm2224 = vcmp.ge.f32.partialorder %v1807, %v1825
    %vm2225 = vcmp.ge.f32.partialorder %v1810, %v1825
    %vm2226 = vcmp.ge.f32.partialorder %v1815, %v1825
    %vm2227 = vcmp.ge.f32.partialorder %v1818, %v1825
    %v2228 = vsel %vm2212, %v1106, inf
    %v2229 = vsel %vm2213, %v1110, inf
    %v2230 = vsel %vm2214, %v1114, inf
    %v2231 = vsel %vm2215, %v1118, inf
    %v2232 = vsel %vm2216, %v1122, inf
    %v2233 = vsel %vm2217, %v1126, inf
    %v2234 = vsel %vm2218, %v1130, inf
    %v2235 = vsel %vm2219, %v1134, inf
    %v2236 = vsel %vm2220, %v1138, inf
    %v2237 = vsel %vm2221, %v1142, inf
    %v2238 = vsel %vm2222, %v1146, inf
    %v2239 = vsel %vm2223, %v1150, inf
    %v2240 = vsel %vm2224, %v1154, inf
    %v2241 = vsel %vm2225, %v1158, inf
    %v2242 = vsel %vm2226, %v1162, inf
    %v2243 = vsel %vm2227, %v1166, inf
    %v2244 = vmin.f32 %v2228, %v2232
    %v2245 = vmin.f32 %v2229, %v2233
    %v2246 = vmin.f32 %v2230, %v2234
    %v2247 = vmin.f32 %v2231, %v2235
    %v2248 = vmin.f32 %v2244, %v2236
    %v2249 = vmin.f32 %v2245, %v2237
    %v2250 = vmin.f32 %v2246, %v2238
    %v2251 = vmin.f32 %v2247, %v2239
    %v2252 = vmin.f32 %v2248, %v2240
    %v2253 = vmin.f32 %v2249, %v2241
    %v2254 = vmin.f32 %v2250, %v2242
    %v2255 = vmin.f32 %v2251, %v2243
    %v2256 = vmin.f32 %v2252, %v2253
    %v2257 = vmin.f32 %v2254, %v2255
    %v2258 = vmin.f32 %v2256, %v2257
    %v2259 = vrot.slane %v2258, 4
    %v2260 = vmin.f32 %v2258, %v2259
    %v2261 = vrot.slane %v2260, 2
    %v2262 = vmin.f32 %v2260, %v2261
    %v2263 = vrot.slane %v2262, 1
    %v2264 = vmin.f32 %v2262, %v2263
    %v2265 = vmul.f32 %v2264, %v86
    %v2266 = vmax.f32 %v2265, 0.0
    %2267 = vset.pattern.permute.xlu0 8
    %2268 = vperm.xlu0 %2267, %v204
    %v2269 = vpop.permute.xlu0 %2268
    %2271 = vset.pattern.permute.xlu0 8
    %2272 = vperm.xlu0 %2271, %v205
    %v2273 = vpop.permute.xlu0 %2272
    %2275 = vset.pattern.permute.xlu0 8
    %2276 = vperm.xlu0 %2275, %v206
    %v2277 = vpop.permute.xlu0 %2276
    %2279 = vset.pattern.permute.xlu0 8
    %2280 = vperm.xlu0 %2279, %v207
    %v2281 = vpop.permute.xlu0 %2280
    %2283 = vset.pattern.permute.xlu0 8
    %2284 = vperm.xlu0 %2283, %v208
    %v2285 = vpop.permute.xlu0 %2284
    %2287 = vset.pattern.permute.xlu0 8
    %2288 = vperm.xlu0 %2287, %v209
    %v2289 = vpop.permute.xlu0 %2288
    %2291 = vset.pattern.permute.xlu0 8
    %2292 = vperm.xlu0 %2291, %v210
    %v2293 = vpop.permute.xlu0 %2292
    %2295 = vset.pattern.permute.xlu0 8
    %2296 = vperm.xlu0 %2295, %v211
    %v2297 = vpop.permute.xlu0 %2296
    %2299 = vset.pattern.permute.xlu0 8
    %2300 = vperm.xlu0 %2299, %v212
    %v2301 = vpop.permute.xlu0 %2300
    %2303 = vset.pattern.permute.xlu0 8
    %2304 = vperm.xlu0 %2303, %v213
    %v2305 = vpop.permute.xlu0 %2304
    %2307 = vset.pattern.permute.xlu0 8
    %2308 = vperm.xlu0 %2307, %v214
    %v2309 = vpop.permute.xlu0 %2308
    %2311 = vset.pattern.permute.xlu0 8
    %2312 = vperm.xlu0 %2311, %v215
    %v2313 = vpop.permute.xlu0 %2312
    %2315 = vset.pattern.permute.xlu0 8
    %2316 = vperm.xlu0 %2315, %v216
    %v2317 = vpop.permute.xlu0 %2316
    %2319 = vset.pattern.permute.xlu0 8
    %2320 = vperm.xlu0 %2319, %v217
    %v2321 = vpop.permute.xlu0 %2320
    %2323 = vset.pattern.permute.xlu0 8
    %2324 = vperm.xlu0 %2323, %v218
    %v2325 = vpop.permute.xlu0 %2324
    %2327 = vset.pattern.permute.xlu0 8
    %2328 = vperm.xlu0 %2327, %v219
    %v2329 = vpop.permute.xlu0 %2328
    %v2331 = vlaneseq
    %v2332 = vshrl.u32 %v2331, 7
    %v2333 = vsub.s32 0, %v2332
    %v2334 = vrot.slane %v185, %v2333
    %vm2335 = vcmp.le.f32.partialorder %v2334, %v2269
    %vm2336 = vcmp.le.f32.partialorder %v2334, %v2273
    %vm2337 = vcmp.le.f32.partialorder %v2334, %v2277
    %vm2338 = vcmp.le.f32.partialorder %v2334, %v2281
    %vm2339 = vcmp.le.f32.partialorder %v2334, %v2285
    %vm2340 = vcmp.le.f32.partialorder %v2334, %v2289
    %vm2341 = vcmp.le.f32.partialorder %v2334, %v2293
    %vm2342 = vcmp.le.f32.partialorder %v2334, %v2297
    %vm2343 = vcmp.le.f32.partialorder %v2334, %v2301
    %vm2344 = vcmp.le.f32.partialorder %v2334, %v2305
    %vm2345 = vcmp.le.f32.partialorder %v2334, %v2309
    %vm2346 = vcmp.le.f32.partialorder %v2334, %v2313
    %vm2347 = vcmp.le.f32.partialorder %v2334, %v2317
    %vm2348 = vcmp.le.f32.partialorder %v2334, %v2321
    %vm2349 = vcmp.le.f32.partialorder %v2334, %v2325
    %vm2350 = vcmp.le.f32.partialorder %v2334, %v2329
    %v2351 = vsel %vm2335, 1, 0
    %v2352 = vsel %vm2336, 1, 0
    %v2353 = vsel %vm2337, 1, 0
    %v2354 = vsel %vm2338, 1, 0
    %v2355 = vsel %vm2339, 1, 0
    %v2356 = vsel %vm2340, 1, 0
    %v2357 = vsel %vm2341, 1, 0
    %v2358 = vsel %vm2342, 1, 0
    %v2359 = vsel %vm2343, 1, 0
    %v2360 = vsel %vm2344, 1, 0
    %v2361 = vsel %vm2345, 1, 0
    %v2362 = vsel %vm2346, 1, 0
    %v2363 = vsel %vm2347, 1, 0
    %v2364 = vsel %vm2348, 1, 0
    %v2365 = vsel %vm2349, 1, 0
    %v2366 = vsel %vm2350, 1, 0
    %v2367 = vcvt.s32.f32 %v2351
    %v2368 = vcvt.s32.f32 %v2352
    %v2369 = vcvt.s32.f32 %v2353
    %v2370 = vcvt.s32.f32 %v2354
    %v2371 = vcvt.s32.f32 %v2355
    %v2372 = vcvt.s32.f32 %v2356
    %v2373 = vcvt.s32.f32 %v2357
    %v2374 = vcvt.s32.f32 %v2358
    %v2375 = vcvt.s32.f32 %v2359
    %v2376 = vcvt.s32.f32 %v2360
    %v2377 = vcvt.s32.f32 %v2361
    %v2378 = vcvt.s32.f32 %v2362
    %v2379 = vcvt.s32.f32 %v2363
    %v2380 = vcvt.s32.f32 %v2364
    %v2381 = vcvt.s32.f32 %v2365
    %v2382 = vcvt.s32.f32 %v2366
    %v2383 = vpack.c.bf16 %v2368, %v2367
    %v2384 = vpack.c.bf16 %v2370, %v2369
    %v2385 = vpack.c.bf16 %v2372, %v2371
    %v2386 = vpack.c.bf16 %v2374, %v2373
    %v2387 = vpack.c.bf16 %v2376, %v2375
    %v2388 = vpack.c.bf16 %v2378, %v2377
    %v2389 = vpack.c.bf16 %v2380, %v2379
    %v2390 = vpack.c.bf16 %v2382, %v2381
    %2391 = vset.pattern.permute.xlu0 9
    %2392 = vperm.xlu0 %2391, %v204
    %v2393 = vpop.permute.xlu0 %2392
    %2395 = vset.pattern.permute.xlu0 9
    %2396 = vperm.xlu0 %2395, %v205
    %v2397 = vpop.permute.xlu0 %2396
    %2399 = vset.pattern.permute.xlu0 9
    %2400 = vperm.xlu0 %2399, %v206
    %v2401 = vpop.permute.xlu0 %2400
    %2403 = vset.pattern.permute.xlu0 9
    %2404 = vperm.xlu0 %2403, %v207
    %v2405 = vpop.permute.xlu0 %2404
    %2407 = vset.pattern.permute.xlu0 9
    %2408 = vperm.xlu0 %2407, %v208
    %v2409 = vpop.permute.xlu0 %2408
    %2411 = vset.pattern.permute.xlu0 9
    %2412 = vperm.xlu0 %2411, %v209
    %v2413 = vpop.permute.xlu0 %2412
    %2415 = vset.pattern.permute.xlu0 9
    %2416 = vperm.xlu0 %2415, %v210
    %v2417 = vpop.permute.xlu0 %2416
    %2419 = vset.pattern.permute.xlu0 9
    %2420 = vperm.xlu0 %2419, %v211
    %v2421 = vpop.permute.xlu0 %2420
    %2423 = vset.pattern.permute.xlu0 9
    %2424 = vperm.xlu0 %2423, %v212
    %v2425 = vpop.permute.xlu0 %2424
    %2427 = vset.pattern.permute.xlu0 9
    %2428 = vperm.xlu0 %2427, %v213
    %v2429 = vpop.permute.xlu0 %2428
    %2431 = vset.pattern.permute.xlu0 9
    %2432 = vperm.xlu0 %2431, %v214
    %v2433 = vpop.permute.xlu0 %2432
    %2435 = vset.pattern.permute.xlu0 9
    %2436 = vperm.xlu0 %2435, %v215
    %v2437 = vpop.permute.xlu0 %2436
    %2439 = vset.pattern.permute.xlu0 9
    %2440 = vperm.xlu0 %2439, %v216
    %v2441 = vpop.permute.xlu0 %2440
    %2443 = vset.pattern.permute.xlu0 9
    %2444 = vperm.xlu0 %2443, %v217
    %v2445 = vpop.permute.xlu0 %2444
    %2447 = vset.pattern.permute.xlu0 9
    %2448 = vperm.xlu0 %2447, %v218
    %v2449 = vpop.permute.xlu0 %2448
    %2451 = vset.pattern.permute.xlu0 9
    %2452 = vperm.xlu0 %2451, %v219
    %v2453 = vpop.permute.xlu0 %2452
    %v2455 = vlaneseq
    %v2456 = vshrl.u32 %v2455, 7
    %v2457 = vsub.s32 1, %v2456
    %v2458 = vrot.slane %v185, %v2457
    %vm2459 = vcmp.le.f32.partialorder %v2458, %v2393
    %vm2460 = vcmp.le.f32.partialorder %v2458, %v2397
    %vm2461 = vcmp.le.f32.partialorder %v2458, %v2401
    %vm2462 = vcmp.le.f32.partialorder %v2458, %v2405
    %vm2463 = vcmp.le.f32.partialorder %v2458, %v2409
    %vm2464 = vcmp.le.f32.partialorder %v2458, %v2413
    %vm2465 = vcmp.le.f32.partialorder %v2458, %v2417
    %vm2466 = vcmp.le.f32.partialorder %v2458, %v2421
    %vm2467 = vcmp.le.f32.partialorder %v2458, %v2425
    %vm2468 = vcmp.le.f32.partialorder %v2458, %v2429
    %vm2469 = vcmp.le.f32.partialorder %v2458, %v2433
    %vm2470 = vcmp.le.f32.partialorder %v2458, %v2437
    %vm2471 = vcmp.le.f32.partialorder %v2458, %v2441
    %vm2472 = vcmp.le.f32.partialorder %v2458, %v2445
    %vm2473 = vcmp.le.f32.partialorder %v2458, %v2449
    %vm2474 = vcmp.le.f32.partialorder %v2458, %v2453
    %v2475 = vsel %vm2459, 1, 0
    %v2476 = vsel %vm2460, 1, 0
    %v2477 = vsel %vm2461, 1, 0
    %v2478 = vsel %vm2462, 1, 0
    %v2479 = vsel %vm2463, 1, 0
    %v2480 = vsel %vm2464, 1, 0
    %v2481 = vsel %vm2465, 1, 0
    %v2482 = vsel %vm2466, 1, 0
    %v2483 = vsel %vm2467, 1, 0
    %v2484 = vsel %vm2468, 1, 0
    %v2485 = vsel %vm2469, 1, 0
    %v2486 = vsel %vm2470, 1, 0
    %v2487 = vsel %vm2471, 1, 0
    %v2488 = vsel %vm2472, 1, 0
    %v2489 = vsel %vm2473, 1, 0
    %v2490 = vsel %vm2474, 1, 0
    %v2491 = vcvt.s32.f32 %v2475
    %v2492 = vcvt.s32.f32 %v2476
    %v2493 = vcvt.s32.f32 %v2477
    %v2494 = vcvt.s32.f32 %v2478
    %v2495 = vcvt.s32.f32 %v2479
    %v2496 = vcvt.s32.f32 %v2480
    %v2497 = vcvt.s32.f32 %v2481
    %v2498 = vcvt.s32.f32 %v2482
    %v2499 = vcvt.s32.f32 %v2483
    %v2500 = vcvt.s32.f32 %v2484
    %v2501 = vcvt.s32.f32 %v2485
    %v2502 = vcvt.s32.f32 %v2486
    %v2503 = vcvt.s32.f32 %v2487
    %v2504 = vcvt.s32.f32 %v2488
    %v2505 = vcvt.s32.f32 %v2489
    %v2506 = vcvt.s32.f32 %v2490
    %v2507 = vpack.c.bf16 %v2492, %v2491
    %v2508 = vpack.c.bf16 %v2494, %v2493
    %v2509 = vpack.c.bf16 %v2496, %v2495
    %v2510 = vpack.c.bf16 %v2498, %v2497
    %v2511 = vpack.c.bf16 %v2500, %v2499
    %v2512 = vpack.c.bf16 %v2502, %v2501
    %v2513 = vpack.c.bf16 %v2504, %v2503
    %v2514 = vpack.c.bf16 %v2506, %v2505
    %2515 = vset.pattern.permute.xlu0 10
    %2516 = vperm.xlu0 %2515, %v204
    %v2517 = vpop.permute.xlu0 %2516
    %2519 = vset.pattern.permute.xlu0 10
    %2520 = vperm.xlu0 %2519, %v205
    %v2521 = vpop.permute.xlu0 %2520
    %2523 = vset.pattern.permute.xlu0 10
    %2524 = vperm.xlu0 %2523, %v206
    %v2525 = vpop.permute.xlu0 %2524
    %2527 = vset.pattern.permute.xlu0 10
    %2528 = vperm.xlu0 %2527, %v207
    %v2529 = vpop.permute.xlu0 %2528
    %2531 = vset.pattern.permute.xlu0 10
    %2532 = vperm.xlu0 %2531, %v208
    %v2533 = vpop.permute.xlu0 %2532
    %2535 = vset.pattern.permute.xlu0 10
    %2536 = vperm.xlu0 %2535, %v209
    %v2537 = vpop.permute.xlu0 %2536
    %2539 = vset.pattern.permute.xlu0 10
    %2540 = vperm.xlu0 %2539, %v210
    %v2541 = vpop.permute.xlu0 %2540
    %2543 = vset.pattern.permute.xlu0 10
    %2544 = vperm.xlu0 %2543, %v211
    %v2545 = vpop.permute.xlu0 %2544
    %2547 = vset.pattern.permute.xlu0 10
    %2548 = vperm.xlu0 %2547, %v212
    %v2549 = vpop.permute.xlu0 %2548
    %2551 = vset.pattern.permute.xlu0 10
    %2552 = vperm.xlu0 %2551, %v213
    %v2553 = vpop.permute.xlu0 %2552
    %2555 = vset.pattern.permute.xlu0 10
    %2556 = vperm.xlu0 %2555, %v214
    %v2557 = vpop.permute.xlu0 %2556
    %2559 = vset.pattern.permute.xlu0 10
    %2560 = vperm.xlu0 %2559, %v215
    %v2561 = vpop.permute.xlu0 %2560
    %2563 = vset.pattern.permute.xlu0 10
    %2564 = vperm.xlu0 %2563, %v216
    %v2565 = vpop.permute.xlu0 %2564
    %2567 = vset.pattern.permute.xlu0 10
    %2568 = vperm.xlu0 %2567, %v217
    %v2569 = vpop.permute.xlu0 %2568
    %2571 = vset.pattern.permute.xlu0 10
    %2572 = vperm.xlu0 %2571, %v218
    %v2573 = vpop.permute.xlu0 %2572
    %2575 = vset.pattern.permute.xlu0 10
    %2576 = vperm.xlu0 %2575, %v219
    %v2577 = vpop.permute.xlu0 %2576
    %v2579 = vlaneseq
    %v2580 = vshrl.u32 %v2579, 7
    %v2581 = vsub.s32 2, %v2580
    %v2582 = vrot.slane %v185, %v2581
    %vm2583 = vcmp.le.f32.partialorder %v2582, %v2517
    %vm2584 = vcmp.le.f32.partialorder %v2582, %v2521
    %vm2585 = vcmp.le.f32.partialorder %v2582, %v2525
    %vm2586 = vcmp.le.f32.partialorder %v2582, %v2529
    %vm2587 = vcmp.le.f32.partialorder %v2582, %v2533
    %vm2588 = vcmp.le.f32.partialorder %v2582, %v2537
    %vm2589 = vcmp.le.f32.partialorder %v2582, %v2541
    %vm2590 = vcmp.le.f32.partialorder %v2582, %v2545
    %vm2591 = vcmp.le.f32.partialorder %v2582, %v2549
    %vm2592 = vcmp.le.f32.partialorder %v2582, %v2553
    %vm2593 = vcmp.le.f32.partialorder %v2582, %v2557
    %vm2594 = vcmp.le.f32.partialorder %v2582, %v2561
    %vm2595 = vcmp.le.f32.partialorder %v2582, %v2565
    %vm2596 = vcmp.le.f32.partialorder %v2582, %v2569
    %vm2597 = vcmp.le.f32.partialorder %v2582, %v2573
    %vm2598 = vcmp.le.f32.partialorder %v2582, %v2577
    %v2599 = vsel %vm2583, 1, 0
    %v2600 = vsel %vm2584, 1, 0
    %v2601 = vsel %vm2585, 1, 0
    %v2602 = vsel %vm2586, 1, 0
    %v2603 = vsel %vm2587, 1, 0
    %v2604 = vsel %vm2588, 1, 0
    %v2605 = vsel %vm2589, 1, 0
    %v2606 = vsel %vm2590, 1, 0
    %v2607 = vsel %vm2591, 1, 0
    %v2608 = vsel %vm2592, 1, 0
    %v2609 = vsel %vm2593, 1, 0
    %v2610 = vsel %vm2594, 1, 0
    %v2611 = vsel %vm2595, 1, 0
    %v2612 = vsel %vm2596, 1, 0
    %v2613 = vsel %vm2597, 1, 0
    %v2614 = vsel %vm2598, 1, 0
    %v2615 = vcvt.s32.f32 %v2599
    %v2616 = vcvt.s32.f32 %v2600
    %v2617 = vcvt.s32.f32 %v2601
    %v2618 = vcvt.s32.f32 %v2602
    %v2619 = vcvt.s32.f32 %v2603
    %v2620 = vcvt.s32.f32 %v2604
    %v2621 = vcvt.s32.f32 %v2605
    %v2622 = vcvt.s32.f32 %v2606
    %v2623 = vcvt.s32.f32 %v2607
    %v2624 = vcvt.s32.f32 %v2608
    %v2625 = vcvt.s32.f32 %v2609
    %v2626 = vcvt.s32.f32 %v2610
    %v2627 = vcvt.s32.f32 %v2611
    %v2628 = vcvt.s32.f32 %v2612
    %v2629 = vcvt.s32.f32 %v2613
    %v2630 = vcvt.s32.f32 %v2614
    %v2631 = vpack.c.bf16 %v2616, %v2615
    %v2632 = vpack.c.bf16 %v2618, %v2617
    %v2633 = vpack.c.bf16 %v2620, %v2619
    %v2634 = vpack.c.bf16 %v2622, %v2621
    %v2635 = vpack.c.bf16 %v2624, %v2623
    %v2636 = vpack.c.bf16 %v2626, %v2625
    %v2637 = vpack.c.bf16 %v2628, %v2627
    %v2638 = vpack.c.bf16 %v2630, %v2629
    %2639 = vset.pattern.permute.xlu0 11
    %2640 = vperm.xlu0 %2639, %v204
    %v2641 = vpop.permute.xlu0 %2640
    %2643 = vset.pattern.permute.xlu0 11
    %2644 = vperm.xlu0 %2643, %v205
    %v2645 = vpop.permute.xlu0 %2644
    %2647 = vset.pattern.permute.xlu0 11
    %2648 = vperm.xlu0 %2647, %v206
    %v2649 = vpop.permute.xlu0 %2648
    %2651 = vset.pattern.permute.xlu0 11
    %2652 = vperm.xlu0 %2651, %v207
    %v2653 = vpop.permute.xlu0 %2652
    %2655 = vset.pattern.permute.xlu0 11
    %2656 = vperm.xlu0 %2655, %v208
    %v2657 = vpop.permute.xlu0 %2656
    %2659 = vset.pattern.permute.xlu0 11
    %2660 = vperm.xlu0 %2659, %v209
    %v2661 = vpop.permute.xlu0 %2660
    %2663 = vset.pattern.permute.xlu0 11
    %2664 = vperm.xlu0 %2663, %v210
    %v2665 = vpop.permute.xlu0 %2664
    %2667 = vset.pattern.permute.xlu0 11
    %2668 = vperm.xlu0 %2667, %v211
    %v2669 = vpop.permute.xlu0 %2668
    %2671 = vset.pattern.permute.xlu0 11
    %2672 = vperm.xlu0 %2671, %v212
    %v2673 = vpop.permute.xlu0 %2672
    %2675 = vset.pattern.permute.xlu0 11
    %2676 = vperm.xlu0 %2675, %v213
    %v2677 = vpop.permute.xlu0 %2676
    %2679 = vset.pattern.permute.xlu0 11
    %2680 = vperm.xlu0 %2679, %v214
    %v2681 = vpop.permute.xlu0 %2680
    %2683 = vset.pattern.permute.xlu0 11
    %2684 = vperm.xlu0 %2683, %v215
    %v2685 = vpop.permute.xlu0 %2684
    %2687 = vset.pattern.permute.xlu0 11
    %2688 = vperm.xlu0 %2687, %v216
    %v2689 = vpop.permute.xlu0 %2688
    %2691 = vset.pattern.permute.xlu0 11
    %2692 = vperm.xlu0 %2691, %v217
    %v2693 = vpop.permute.xlu0 %2692
    %2695 = vset.pattern.permute.xlu0 11
    %2696 = vperm.xlu0 %2695, %v218
    %v2697 = vpop.permute.xlu0 %2696
    %2699 = vset.pattern.permute.xlu0 11
    %2700 = vperm.xlu0 %2699, %v219
    %v2701 = vpop.permute.xlu0 %2700
    %v2703 = vlaneseq
    %v2704 = vshrl.u32 %v2703, 7
    %v2705 = vsub.s32 3, %v2704
    %v2706 = vrot.slane %v185, %v2705
    %vm2707 = vcmp.le.f32.partialorder %v2706, %v2641
    %vm2708 = vcmp.le.f32.partialorder %v2706, %v2645
    %vm2709 = vcmp.le.f32.partialorder %v2706, %v2649
    %vm2710 = vcmp.le.f32.partialorder %v2706, %v2653
    %vm2711 = vcmp.le.f32.partialorder %v2706, %v2657
    %vm2712 = vcmp.le.f32.partialorder %v2706, %v2661
    %vm2713 = vcmp.le.f32.partialorder %v2706, %v2665
    %vm2714 = vcmp.le.f32.partialorder %v2706, %v2669
    %vm2715 = vcmp.le.f32.partialorder %v2706, %v2673
    %vm2716 = vcmp.le.f32.partialorder %v2706, %v2677
    %vm2717 = vcmp.le.f32.partialorder %v2706, %v2681
    %vm2718 = vcmp.le.f32.partialorder %v2706, %v2685
    %vm2719 = vcmp.le.f32.partialorder %v2706, %v2689
    %vm2720 = vcmp.le.f32.partialorder %v2706, %v2693
    %vm2721 = vcmp.le.f32.partialorder %v2706, %v2697
    %vm2722 = vcmp.le.f32.partialorder %v2706, %v2701
    %v2723 = vsel %vm2707, 1, 0
    %v2724 = vsel %vm2708, 1, 0
    %v2725 = vsel %vm2709, 1, 0
    %v2726 = vsel %vm2710, 1, 0
    %v2727 = vsel %vm2711, 1, 0
    %v2728 = vsel %vm2712, 1, 0
    %v2729 = vsel %vm2713, 1, 0
    %v2730 = vsel %vm2714, 1, 0
    %v2731 = vsel %vm2715, 1, 0
    %v2732 = vsel %vm2716, 1, 0
    %v2733 = vsel %vm2717, 1, 0
    %v2734 = vsel %vm2718, 1, 0
    %v2735 = vsel %vm2719, 1, 0
    %v2736 = vsel %vm2720, 1, 0
    %v2737 = vsel %vm2721, 1, 0
    %v2738 = vsel %vm2722, 1, 0
    %v2739 = vcvt.s32.f32 %v2723
    %v2740 = vcvt.s32.f32 %v2724
    %v2741 = vcvt.s32.f32 %v2725
    %v2742 = vcvt.s32.f32 %v2726
    %v2743 = vcvt.s32.f32 %v2727
    %v2744 = vcvt.s32.f32 %v2728
    %v2745 = vcvt.s32.f32 %v2729
    %v2746 = vcvt.s32.f32 %v2730
    %v2747 = vcvt.s32.f32 %v2731
    %v2748 = vcvt.s32.f32 %v2732
    %v2749 = vcvt.s32.f32 %v2733
    %v2750 = vcvt.s32.f32 %v2734
    %v2751 = vcvt.s32.f32 %v2735
    %v2752 = vcvt.s32.f32 %v2736
    %v2753 = vcvt.s32.f32 %v2737
    %v2754 = vcvt.s32.f32 %v2738
    %v2755 = vpack.c.bf16 %v2740, %v2739
    %v2756 = vpack.c.bf16 %v2742, %v2741
    %v2757 = vpack.c.bf16 %v2744, %v2743
    %v2758 = vpack.c.bf16 %v2746, %v2745
    %v2759 = vpack.c.bf16 %v2748, %v2747
    %v2760 = vpack.c.bf16 %v2750, %v2749
    %v2761 = vpack.c.bf16 %v2752, %v2751
    %v2762 = vpack.c.bf16 %v2754, %v2753
    %2763 = vset.pattern.permute.xlu0 12
    %2764 = vperm.xlu0 %2763, %v204
    %v2765 = vpop.permute.xlu0 %2764
    %2767 = vset.pattern.permute.xlu0 12
    %2768 = vperm.xlu0 %2767, %v205
    %v2769 = vpop.permute.xlu0 %2768
    %2771 = vset.pattern.permute.xlu0 12
    %2772 = vperm.xlu0 %2771, %v206
    %v2773 = vpop.permute.xlu0 %2772
    %2775 = vset.pattern.permute.xlu0 12
    %2776 = vperm.xlu0 %2775, %v207
    %v2777 = vpop.permute.xlu0 %2776
    %2779 = vset.pattern.permute.xlu0 12
    %2780 = vperm.xlu0 %2779, %v208
    %v2781 = vpop.permute.xlu0 %2780
    %2783 = vset.pattern.permute.xlu0 12
    %2784 = vperm.xlu0 %2783, %v209
    %v2785 = vpop.permute.xlu0 %2784
    %2787 = vset.pattern.permute.xlu0 12
    %2788 = vperm.xlu0 %2787, %v210
    %v2789 = vpop.permute.xlu0 %2788
    %2791 = vset.pattern.permute.xlu0 12
    %2792 = vperm.xlu0 %2791, %v211
    %v2793 = vpop.permute.xlu0 %2792
    %2795 = vset.pattern.permute.xlu0 12
    %2796 = vperm.xlu0 %2795, %v212
    %v2797 = vpop.permute.xlu0 %2796
    %2799 = vset.pattern.permute.xlu0 12
    %2800 = vperm.xlu0 %2799, %v213
    %v2801 = vpop.permute.xlu0 %2800
    %2803 = vset.pattern.permute.xlu0 12
    %2804 = vperm.xlu0 %2803, %v214
    %v2805 = vpop.permute.xlu0 %2804
    %2807 = vset.pattern.permute.xlu0 12
    %2808 = vperm.xlu0 %2807, %v215
    %v2809 = vpop.permute.xlu0 %2808
    %2811 = vset.pattern.permute.xlu0 12
    %2812 = vperm.xlu0 %2811, %v216
    %v2813 = vpop.permute.xlu0 %2812
    %2815 = vset.pattern.permute.xlu0 12
    %2816 = vperm.xlu0 %2815, %v217
    %v2817 = vpop.permute.xlu0 %2816
    %2819 = vset.pattern.permute.xlu0 12
    %2820 = vperm.xlu0 %2819, %v218
    %v2821 = vpop.permute.xlu0 %2820
    %2823 = vset.pattern.permute.xlu0 12
    %2824 = vperm.xlu0 %2823, %v219
    %v2825 = vpop.permute.xlu0 %2824
    %v2827 = vlaneseq
    %v2828 = vshrl.u32 %v2827, 7
    %v2829 = vsub.s32 4, %v2828
    %v2830 = vrot.slane %v185, %v2829
    %vm2831 = vcmp.le.f32.partialorder %v2830, %v2765
    %vm2832 = vcmp.le.f32.partialorder %v2830, %v2769
    %vm2833 = vcmp.le.f32.partialorder %v2830, %v2773
    %vm2834 = vcmp.le.f32.partialorder %v2830, %v2777
    %vm2835 = vcmp.le.f32.partialorder %v2830, %v2781
    %vm2836 = vcmp.le.f32.partialorder %v2830, %v2785
    %vm2837 = vcmp.le.f32.partialorder %v2830, %v2789
    %vm2838 = vcmp.le.f32.partialorder %v2830, %v2793
    %vm2839 = vcmp.le.f32.partialorder %v2830, %v2797
    %vm2840 = vcmp.le.f32.partialorder %v2830, %v2801
    %vm2841 = vcmp.le.f32.partialorder %v2830, %v2805
    %vm2842 = vcmp.le.f32.partialorder %v2830, %v2809
    %vm2843 = vcmp.le.f32.partialorder %v2830, %v2813
    %vm2844 = vcmp.le.f32.partialorder %v2830, %v2817
    %vm2845 = vcmp.le.f32.partialorder %v2830, %v2821
    %vm2846 = vcmp.le.f32.partialorder %v2830, %v2825
    %v2847 = vsel %vm2831, 1, 0
    %v2848 = vsel %vm2832, 1, 0
    %v2849 = vsel %vm2833, 1, 0
    %v2850 = vsel %vm2834, 1, 0
    %v2851 = vsel %vm2835, 1, 0
    %v2852 = vsel %vm2836, 1, 0
    %v2853 = vsel %vm2837, 1, 0
    %v2854 = vsel %vm2838, 1, 0
    %v2855 = vsel %vm2839, 1, 0
    %v2856 = vsel %vm2840, 1, 0
    %v2857 = vsel %vm2841, 1, 0
    %v2858 = vsel %vm2842, 1, 0
    %v2859 = vsel %vm2843, 1, 0
    %v2860 = vsel %vm2844, 1, 0
    %v2861 = vsel %vm2845, 1, 0
    %v2862 = vsel %vm2846, 1, 0
    %v2863 = vcvt.s32.f32 %v2847
    %v2864 = vcvt.s32.f32 %v2848
    %v2865 = vcvt.s32.f32 %v2849
    %v2866 = vcvt.s32.f32 %v2850
    %v2867 = vcvt.s32.f32 %v2851
    %v2868 = vcvt.s32.f32 %v2852
    %v2869 = vcvt.s32.f32 %v2853
    %v2870 = vcvt.s32.f32 %v2854
    %v2871 = vcvt.s32.f32 %v2855
    %v2872 = vcvt.s32.f32 %v2856
    %v2873 = vcvt.s32.f32 %v2857
    %v2874 = vcvt.s32.f32 %v2858
    %v2875 = vcvt.s32.f32 %v2859
    %v2876 = vcvt.s32.f32 %v2860
    %v2877 = vcvt.s32.f32 %v2861
    %v2878 = vcvt.s32.f32 %v2862
    %v2879 = vpack.c.bf16 %v2864, %v2863
    %v2880 = vpack.c.bf16 %v2866, %v2865
    %v2881 = vpack.c.bf16 %v2868, %v2867
    %v2882 = vpack.c.bf16 %v2870, %v2869
    %v2883 = vpack.c.bf16 %v2872, %v2871
    %v2884 = vpack.c.bf16 %v2874, %v2873
    %v2885 = vpack.c.bf16 %v2876, %v2875
    %v2886 = vpack.c.bf16 %v2878, %v2877
    %2887 = vset.pattern.permute.xlu0 13
    %2888 = vperm.xlu0 %2887, %v204
    %v2889 = vpop.permute.xlu0 %2888
    %2891 = vset.pattern.permute.xlu0 13
    %2892 = vperm.xlu0 %2891, %v205
    %v2893 = vpop.permute.xlu0 %2892
    %2895 = vset.pattern.permute.xlu0 13
    %2896 = vperm.xlu0 %2895, %v206
    %v2897 = vpop.permute.xlu0 %2896
    %2899 = vset.pattern.permute.xlu0 13
    %2900 = vperm.xlu0 %2899, %v207
    %v2901 = vpop.permute.xlu0 %2900
    %2903 = vset.pattern.permute.xlu0 13
    %2904 = vperm.xlu0 %2903, %v208
    %v2905 = vpop.permute.xlu0 %2904
    %2907 = vset.pattern.permute.xlu0 13
    %2908 = vperm.xlu0 %2907, %v209
    %v2909 = vpop.permute.xlu0 %2908
    %2911 = vset.pattern.permute.xlu0 13
    %2912 = vperm.xlu0 %2911, %v210
    %v2913 = vpop.permute.xlu0 %2912
    %2915 = vset.pattern.permute.xlu0 13
    %2916 = vperm.xlu0 %2915, %v211
    %v2917 = vpop.permute.xlu0 %2916
    %2919 = vset.pattern.permute.xlu0 13
    %2920 = vperm.xlu0 %2919, %v212
    %v2921 = vpop.permute.xlu0 %2920
    %2923 = vset.pattern.permute.xlu0 13
    %2924 = vperm.xlu0 %2923, %v213
    %v2925 = vpop.permute.xlu0 %2924
    %2927 = vset.pattern.permute.xlu0 13
    %2928 = vperm.xlu0 %2927, %v214
    %v2929 = vpop.permute.xlu0 %2928
    %2931 = vset.pattern.permute.xlu0 13
    %2932 = vperm.xlu0 %2931, %v215
    %v2933 = vpop.permute.xlu0 %2932
    %2935 = vset.pattern.permute.xlu0 13
    %2936 = vperm.xlu0 %2935, %v216
    %v2937 = vpop.permute.xlu0 %2936
    %2939 = vset.pattern.permute.xlu0 13
    %2940 = vperm.xlu0 %2939, %v217
    %v2941 = vpop.permute.xlu0 %2940
    %2943 = vset.pattern.permute.xlu0 13
    %2944 = vperm.xlu0 %2943, %v218
    %v2945 = vpop.permute.xlu0 %2944
    %2947 = vset.pattern.permute.xlu0 13
    %2948 = vperm.xlu0 %2947, %v219
    %v2949 = vpop.permute.xlu0 %2948
    %v2951 = vlaneseq
    %v2952 = vshrl.u32 %v2951, 7
    %v2953 = vsub.s32 5, %v2952
    %v2954 = vrot.slane %v185, %v2953
    %vm2955 = vcmp.le.f32.partialorder %v2954, %v2889
    %vm2956 = vcmp.le.f32.partialorder %v2954, %v2893
    %vm2957 = vcmp.le.f32.partialorder %v2954, %v2897
    %vm2958 = vcmp.le.f32.partialorder %v2954, %v2901
    %vm2959 = vcmp.le.f32.partialorder %v2954, %v2905
    %vm2960 = vcmp.le.f32.partialorder %v2954, %v2909
    %vm2961 = vcmp.le.f32.partialorder %v2954, %v2913
    %vm2962 = vcmp.le.f32.partialorder %v2954, %v2917
    %vm2963 = vcmp.le.f32.partialorder %v2954, %v2921
    %vm2964 = vcmp.le.f32.partialorder %v2954, %v2925
    %vm2965 = vcmp.le.f32.partialorder %v2954, %v2929
    %vm2966 = vcmp.le.f32.partialorder %v2954, %v2933
    %vm2967 = vcmp.le.f32.partialorder %v2954, %v2937
    %vm2968 = vcmp.le.f32.partialorder %v2954, %v2941
    %vm2969 = vcmp.le.f32.partialorder %v2954, %v2945
    %vm2970 = vcmp.le.f32.partialorder %v2954, %v2949
    %v2971 = vsel %vm2955, 1, 0
    %v2972 = vsel %vm2956, 1, 0
    %v2973 = vsel %vm2957, 1, 0
    %v2974 = vsel %vm2958, 1, 0
    %v2975 = vsel %vm2959, 1, 0
    %v2976 = vsel %vm2960, 1, 0
    %v2977 = vsel %vm2961, 1, 0
    %v2978 = vsel %vm2962, 1, 0
    %v2979 = vsel %vm2963, 1, 0
    %v2980 = vsel %vm2964, 1, 0
    %v2981 = vsel %vm2965, 1, 0
    %v2982 = vsel %vm2966, 1, 0
    %v2983 = vsel %vm2967, 1, 0
    %v2984 = vsel %vm2968, 1, 0
    %v2985 = vsel %vm2969, 1, 0
    %v2986 = vsel %vm2970, 1, 0
    %v2987 = vcvt.s32.f32 %v2971
    %v2988 = vcvt.s32.f32 %v2972
    %v2989 = vcvt.s32.f32 %v2973
    %v2990 = vcvt.s32.f32 %v2974
    %v2991 = vcvt.s32.f32 %v2975
    %v2992 = vcvt.s32.f32 %v2976
    %v2993 = vcvt.s32.f32 %v2977
    %v2994 = vcvt.s32.f32 %v2978
    %v2995 = vcvt.s32.f32 %v2979
    %v2996 = vcvt.s32.f32 %v2980
    %v2997 = vcvt.s32.f32 %v2981
    %v2998 = vcvt.s32.f32 %v2982
    %v2999 = vcvt.s32.f32 %v2983
    %v3000 = vcvt.s32.f32 %v2984
    %v3001 = vcvt.s32.f32 %v2985
    %v3002 = vcvt.s32.f32 %v2986
    %v3003 = vpack.c.bf16 %v2988, %v2987
    %v3004 = vpack.c.bf16 %v2990, %v2989
    %v3005 = vpack.c.bf16 %v2992, %v2991
    %v3006 = vpack.c.bf16 %v2994, %v2993
    %v3007 = vpack.c.bf16 %v2996, %v2995
    %v3008 = vpack.c.bf16 %v2998, %v2997
    %v3009 = vpack.c.bf16 %v3000, %v2999
    %v3010 = vpack.c.bf16 %v3002, %v3001
    %3011 = vset.pattern.permute.xlu0 14
    %3012 = vperm.xlu0 %3011, %v204
    %v3013 = vpop.permute.xlu0 %3012
    %3015 = vset.pattern.permute.xlu0 14
    %3016 = vperm.xlu0 %3015, %v205
    %v3017 = vpop.permute.xlu0 %3016
    %3019 = vset.pattern.permute.xlu0 14
    %3020 = vperm.xlu0 %3019, %v206
    %v3021 = vpop.permute.xlu0 %3020
    %3023 = vset.pattern.permute.xlu0 14
    %3024 = vperm.xlu0 %3023, %v207
    %v3025 = vpop.permute.xlu0 %3024
    %3027 = vset.pattern.permute.xlu0 14
    %3028 = vperm.xlu0 %3027, %v208
    %v3029 = vpop.permute.xlu0 %3028
    %3031 = vset.pattern.permute.xlu0 14
    %3032 = vperm.xlu0 %3031, %v209
    %v3033 = vpop.permute.xlu0 %3032
    %3035 = vset.pattern.permute.xlu0 14
    %3036 = vperm.xlu0 %3035, %v210
    %v3037 = vpop.permute.xlu0 %3036
    %3039 = vset.pattern.permute.xlu0 14
    %3040 = vperm.xlu0 %3039, %v211
    %v3041 = vpop.permute.xlu0 %3040
    %3043 = vset.pattern.permute.xlu0 14
    %3044 = vperm.xlu0 %3043, %v212
    %v3045 = vpop.permute.xlu0 %3044
    %3047 = vset.pattern.permute.xlu0 14
    %3048 = vperm.xlu0 %3047, %v213
    %v3049 = vpop.permute.xlu0 %3048
    %3051 = vset.pattern.permute.xlu0 14
    %3052 = vperm.xlu0 %3051, %v214
    %v3053 = vpop.permute.xlu0 %3052
    %3055 = vset.pattern.permute.xlu0 14
    %3056 = vperm.xlu0 %3055, %v215
    %v3057 = vpop.permute.xlu0 %3056
    %3059 = vset.pattern.permute.xlu0 14
    %3060 = vperm.xlu0 %3059, %v216
    %v3061 = vpop.permute.xlu0 %3060
    %3063 = vset.pattern.permute.xlu0 14
    %3064 = vperm.xlu0 %3063, %v217
    %v3065 = vpop.permute.xlu0 %3064
    %3067 = vset.pattern.permute.xlu0 14
    %3068 = vperm.xlu0 %3067, %v218
    %v3069 = vpop.permute.xlu0 %3068
    %3071 = vset.pattern.permute.xlu0 14
    %3072 = vperm.xlu0 %3071, %v219
    %v3073 = vpop.permute.xlu0 %3072
    %v3075 = vlaneseq
    %v3076 = vshrl.u32 %v3075, 7
    %v3077 = vsub.s32 6, %v3076
    %v3078 = vrot.slane %v185, %v3077
    %vm3079 = vcmp.le.f32.partialorder %v3078, %v3013
    %vm3080 = vcmp.le.f32.partialorder %v3078, %v3017
    %vm3081 = vcmp.le.f32.partialorder %v3078, %v3021
    %vm3082 = vcmp.le.f32.partialorder %v3078, %v3025
    %vm3083 = vcmp.le.f32.partialorder %v3078, %v3029
    %vm3084 = vcmp.le.f32.partialorder %v3078, %v3033
    %vm3085 = vcmp.le.f32.partialorder %v3078, %v3037
    %vm3086 = vcmp.le.f32.partialorder %v3078, %v3041
    %vm3087 = vcmp.le.f32.partialorder %v3078, %v3045
    %vm3088 = vcmp.le.f32.partialorder %v3078, %v3049
    %vm3089 = vcmp.le.f32.partialorder %v3078, %v3053
    %vm3090 = vcmp.le.f32.partialorder %v3078, %v3057
    %vm3091 = vcmp.le.f32.partialorder %v3078, %v3061
    %vm3092 = vcmp.le.f32.partialorder %v3078, %v3065
    %vm3093 = vcmp.le.f32.partialorder %v3078, %v3069
    %vm3094 = vcmp.le.f32.partialorder %v3078, %v3073
    %v3095 = vsel %vm3079, 1, 0
    %v3096 = vsel %vm3080, 1, 0
    %v3097 = vsel %vm3081, 1, 0
    %v3098 = vsel %vm3082, 1, 0
    %v3099 = vsel %vm3083, 1, 0
    %v3100 = vsel %vm3084, 1, 0
    %v3101 = vsel %vm3085, 1, 0
    %v3102 = vsel %vm3086, 1, 0
    %v3103 = vsel %vm3087, 1, 0
    %v3104 = vsel %vm3088, 1, 0
    %v3105 = vsel %vm3089, 1, 0
    %v3106 = vsel %vm3090, 1, 0
    %v3107 = vsel %vm3091, 1, 0
    %v3108 = vsel %vm3092, 1, 0
    %v3109 = vsel %vm3093, 1, 0
    %v3110 = vsel %vm3094, 1, 0
    %v3111 = vcvt.s32.f32 %v3095
    %v3112 = vcvt.s32.f32 %v3096
    %v3113 = vcvt.s32.f32 %v3097
    %v3114 = vcvt.s32.f32 %v3098
    %v3115 = vcvt.s32.f32 %v3099
    %v3116 = vcvt.s32.f32 %v3100
    %v3117 = vcvt.s32.f32 %v3101
    %v3118 = vcvt.s32.f32 %v3102
    %v3119 = vcvt.s32.f32 %v3103
    %v3120 = vcvt.s32.f32 %v3104
    %v3121 = vcvt.s32.f32 %v3105
    %v3122 = vcvt.s32.f32 %v3106
    %v3123 = vcvt.s32.f32 %v3107
    %v3124 = vcvt.s32.f32 %v3108
    %v3125 = vcvt.s32.f32 %v3109
    %v3126 = vcvt.s32.f32 %v3110
    %v3127 = vpack.c.bf16 %v3112, %v3111
    %v3128 = vpack.c.bf16 %v3114, %v3113
    %v3129 = vpack.c.bf16 %v3116, %v3115
    %v3130 = vpack.c.bf16 %v3118, %v3117
    %v3131 = vpack.c.bf16 %v3120, %v3119
    %v3132 = vpack.c.bf16 %v3122, %v3121
    %v3133 = vpack.c.bf16 %v3124, %v3123
    %v3134 = vpack.c.bf16 %v3126, %v3125
    %3135 = vset.pattern.permute.xlu0 15
    %3136 = vperm.xlu0 %3135, %v204
    %v3137 = vpop.permute.xlu0 %3136
    %3139 = vset.pattern.permute.xlu0 15
    %3140 = vperm.xlu0 %3139, %v205
    %v3141 = vpop.permute.xlu0 %3140
    %3143 = vset.pattern.permute.xlu0 15
    %3144 = vperm.xlu0 %3143, %v206
    %v3145 = vpop.permute.xlu0 %3144
    %3147 = vset.pattern.permute.xlu0 15
    %3148 = vperm.xlu0 %3147, %v207
    %v3149 = vpop.permute.xlu0 %3148
    %3151 = vset.pattern.permute.xlu0 15
    %3152 = vperm.xlu0 %3151, %v208
    %v3153 = vpop.permute.xlu0 %3152
    %3155 = vset.pattern.permute.xlu0 15
    %3156 = vperm.xlu0 %3155, %v209
    %v3157 = vpop.permute.xlu0 %3156
    %3159 = vset.pattern.permute.xlu0 15
    %3160 = vperm.xlu0 %3159, %v210
    %v3161 = vpop.permute.xlu0 %3160
    %3163 = vset.pattern.permute.xlu0 15
    %3164 = vperm.xlu0 %3163, %v211
    %v3165 = vpop.permute.xlu0 %3164
    %3167 = vset.pattern.permute.xlu0 15
    %3168 = vperm.xlu0 %3167, %v212
    %v3169 = vpop.permute.xlu0 %3168
    %3171 = vset.pattern.permute.xlu0 15
    %3172 = vperm.xlu0 %3171, %v213
    %v3173 = vpop.permute.xlu0 %3172
    %3175 = vset.pattern.permute.xlu0 15
    %3176 = vperm.xlu0 %3175, %v214
    %v3177 = vpop.permute.xlu0 %3176
    %3179 = vset.pattern.permute.xlu0 15
    %3180 = vperm.xlu0 %3179, %v215
    %v3181 = vpop.permute.xlu0 %3180
    %3183 = vset.pattern.permute.xlu0 15
    %3184 = vperm.xlu0 %3183, %v216
    %v3185 = vpop.permute.xlu0 %3184
    %3187 = vset.pattern.permute.xlu0 15
    %3188 = vperm.xlu0 %3187, %v217
    %v3189 = vpop.permute.xlu0 %3188
    %3191 = vset.pattern.permute.xlu0 15
    %3192 = vperm.xlu0 %3191, %v218
    %v3193 = vpop.permute.xlu0 %3192
    %3195 = vset.pattern.permute.xlu0 15
    %3196 = vperm.xlu0 %3195, %v219
    %v3197 = vpop.permute.xlu0 %3196
    %v3199 = vlaneseq
    %v3200 = vshrl.u32 %v3199, 7
    %v3201 = vsub.s32 7, %v3200
    %v3202 = vrot.slane %v185, %v3201
    %vm3203 = vcmp.le.f32.partialorder %v3202, %v3137
    %vm3204 = vcmp.le.f32.partialorder %v3202, %v3141
    %vm3205 = vcmp.le.f32.partialorder %v3202, %v3145
    %vm3206 = vcmp.le.f32.partialorder %v3202, %v3149
    %vm3207 = vcmp.le.f32.partialorder %v3202, %v3153
    %vm3208 = vcmp.le.f32.partialorder %v3202, %v3157
    %vm3209 = vcmp.le.f32.partialorder %v3202, %v3161
    %vm3210 = vcmp.le.f32.partialorder %v3202, %v3165
    %vm3211 = vcmp.le.f32.partialorder %v3202, %v3169
    %vm3212 = vcmp.le.f32.partialorder %v3202, %v3173
    %vm3213 = vcmp.le.f32.partialorder %v3202, %v3177
    %vm3214 = vcmp.le.f32.partialorder %v3202, %v3181
    %vm3215 = vcmp.le.f32.partialorder %v3202, %v3185
    %vm3216 = vcmp.le.f32.partialorder %v3202, %v3189
    %vm3217 = vcmp.le.f32.partialorder %v3202, %v3193
    %vm3218 = vcmp.le.f32.partialorder %v3202, %v3197
    %v3219 = vsel %vm3203, 1, 0
    %v3220 = vsel %vm3204, 1, 0
    %v3221 = vsel %vm3205, 1, 0
    %v3222 = vsel %vm3206, 1, 0
    %v3223 = vsel %vm3207, 1, 0
    %v3224 = vsel %vm3208, 1, 0
    %v3225 = vsel %vm3209, 1, 0
    %v3226 = vsel %vm3210, 1, 0
    %v3227 = vsel %vm3211, 1, 0
    %v3228 = vsel %vm3212, 1, 0
    %v3229 = vsel %vm3213, 1, 0
    %v3230 = vsel %vm3214, 1, 0
    %v3231 = vsel %vm3215, 1, 0
    %v3232 = vsel %vm3216, 1, 0
    %v3233 = vsel %vm3217, 1, 0
    %v3234 = vsel %vm3218, 1, 0
    %v3235 = vcvt.s32.f32 %v3219
    %v3236 = vcvt.s32.f32 %v3220
    %v3237 = vcvt.s32.f32 %v3221
    %v3238 = vcvt.s32.f32 %v3222
    %v3239 = vcvt.s32.f32 %v3223
    %v3240 = vcvt.s32.f32 %v3224
    %v3241 = vcvt.s32.f32 %v3225
    %v3242 = vcvt.s32.f32 %v3226
    %v3243 = vcvt.s32.f32 %v3227
    %v3244 = vcvt.s32.f32 %v3228
    %v3245 = vcvt.s32.f32 %v3229
    %v3246 = vcvt.s32.f32 %v3230
    %v3247 = vcvt.s32.f32 %v3231
    %v3248 = vcvt.s32.f32 %v3232
    %v3249 = vcvt.s32.f32 %v3233
    %v3250 = vcvt.s32.f32 %v3234
    %v3251 = vpack.c.bf16 %v3236, %v3235
    %v3252 = vpack.c.bf16 %v3238, %v3237
    %v3253 = vpack.c.bf16 %v3240, %v3239
    %v3254 = vpack.c.bf16 %v3242, %v3241
    %v3255 = vpack.c.bf16 %v3244, %v3243
    %v3256 = vpack.c.bf16 %v3246, %v3245
    %v3257 = vpack.c.bf16 %v3248, %v3247
    %v3258 = vpack.c.bf16 %v3250, %v3249
    %3259 = vmatprep.subr.bf16.mxu0 0
    %3260 = vmatpush1.bf16.msra.mxu0 %v1260
    %3261 = vmatprep.subr.bf16.mxu0 0
    %3262 = vmatpush1.bf16.msra.mxu0 %v1261
    %3263 = vmatprep.subr.bf16.mxu0 0
    %3264 = vmatpush1.bf16.msra.mxu0 %v1262
    %3265 = vmatprep.subr.bf16.mxu0 0
    %3266 = vmatpush1.bf16.msra.mxu0 %v1263
    %3267 = vmatprep.subr.bf16.mxu0 0
    %3268 = vmatpush1.bf16.msra.mxu0 %v1264
    %3269 = vmatprep.subr.bf16.mxu0 0
    %3270 = vmatpush1.bf16.msra.mxu0 %v1265
    %3271 = vmatprep.subr.bf16.mxu0 0
    %3272 = vmatpush1.bf16.msra.mxu0 %v1266
    %3273 = vmatprep.subr.bf16.mxu0 0
    %3274 = vmatpush1.bf16.msra.mxu0 %v1267
    %3275 = vmatprep.subr.bf16.mxu0 0
    %3276 = vmatpush1.bf16.msra.mxu0 0
    %3277 = vmatprep.subr.bf16.mxu0 0
    %3278 = vmatpush1.bf16.msra.mxu0 0
    %3279 = vmatprep.subr.bf16.mxu0 0
    %3280 = vmatpush1.bf16.msra.mxu0 0
    %3281 = vmatprep.subr.bf16.mxu0 0
    %3282 = vmatpush1.bf16.msra.mxu0 0
    %3283 = vmatprep.subr.bf16.mxu0 0
    %3284 = vmatpush1.bf16.msra.mxu0 0
    %3285 = vmatprep.subr.bf16.mxu0 0
    %3286 = vmatpush1.bf16.msra.mxu0 0
    %3287 = vmatprep.subr.bf16.mxu0 0
    %3288 = vmatpush1.bf16.msra.mxu0 0
    %3289 = vmatprep.subr.bf16.mxu0 0
    %3290 = vmatpush1.bf16.msra.mxu0 0
    %3291 = vmatprep.mubr.bf16.mxu0 0
    %3292 = vmatmul.mubr.bf16.gmra.mrb[0].mxu0 %v2383
    %v3293 = vpop.f32.mrb[0].mxu0
    %v3294 = vadd.f32 0.0, %v3293
    %v3295 = vpop.f32.mrb[0].mxu0
    %v3296 = vpop.f32.mrb[0].mxu0
    %v3297 = vadd.f32 0.0, %v3296
    %v3298 = vpop.f32.mrb[0].mxu0
    %3299 = vmatprep.mubr.bf16.mxu0 0
    %3300 = vmatmul.mubr.bf16.gmra.mrb[0].mxu0 %v2384
    %v3301 = vpop.f32.mrb[0].mxu0
    %v3302 = vadd.f32 0.0, %v3301
    %v3303 = vpop.f32.mrb[0].mxu0
    %v3304 = vpop.f32.mrb[0].mxu0
    %v3305 = vadd.f32 0.0, %v3304
    %v3306 = vpop.f32.mrb[0].mxu0
    %3307 = vmatprep.mubr.bf16.mxu0 0
    %3308 = vmatmul.mubr.bf16.gmra.mrb[0].mxu0 %v2385
    %v3309 = vpop.f32.mrb[0].mxu0
    %v3310 = vadd.f32 0.0, %v3309
    %v3311 = vpop.f32.mrb[0].mxu0
    %v3312 = vpop.f32.mrb[0].mxu0
    %v3313 = vadd.f32 0.0, %v3312
    %v3314 = vpop.f32.mrb[0].mxu0
    %3315 = vmatprep.mubr.bf16.mxu0 0
    %3316 = vmatmul.mubr.bf16.gmra.mrb[0].mxu0 %v2386
    %v3317 = vpop.f32.mrb[0].mxu0
    %v3318 = vadd.f32 0.0, %v3317
    %v3319 = vpop.f32.mrb[0].mxu0
    %v3320 = vpop.f32.mrb[0].mxu0
    %v3321 = vadd.f32 0.0, %v3320
    %v3322 = vpop.f32.mrb[0].mxu0
    %3323 = vmatprep.mubr.bf16.mxu0 0
    %3324 = vmatmul.mubr.bf16.gmra.mrb[0].mxu0 %v2387
    %v3325 = vpop.f32.mrb[0].mxu0
    %v3326 = vadd.f32 0.0, %v3325
    %v3327 = vpop.f32.mrb[0].mxu0
    %v3328 = vpop.f32.mrb[0].mxu0
    %v3329 = vadd.f32 0.0, %v3328
    %v3330 = vpop.f32.mrb[0].mxu0
    %3331 = vmatprep.mubr.bf16.mxu0 0
    %3332 = vmatmul.mubr.bf16.gmra.mrb[0].mxu0 %v2388
    %v3333 = vpop.f32.mrb[0].mxu0
    %v3334 = vadd.f32 0.0, %v3333
    %v3335 = vpop.f32.mrb[0].mxu0
    %v3336 = vpop.f32.mrb[0].mxu0
    %v3337 = vadd.f32 0.0, %v3336
    %v3338 = vpop.f32.mrb[0].mxu0
    %3339 = vmatprep.mubr.bf16.mxu0 0
    %3340 = vmatmul.mubr.bf16.gmra.mrb[0].mxu0 %v2389
    %v3341 = vpop.f32.mrb[0].mxu0
    %v3342 = vadd.f32 0.0, %v3341
    %v3343 = vpop.f32.mrb[0].mxu0
    %v3344 = vpop.f32.mrb[0].mxu0
    %v3345 = vadd.f32 0.0, %v3344
    %v3346 = vpop.f32.mrb[0].mxu0
    %3347 = vmatprep.mubr.bf16.mxu0 0
    %3348 = vmatmul.mubr.bf16.gmra.mrb[0].mxu0 %v2390
    %v3349 = vpop.f32.mrb[0].mxu0
    %v3350 = vadd.f32 0.0, %v3349
    %v3351 = vpop.f32.mrb[0].mxu0
    %v3352 = vpop.f32.mrb[0].mxu0
    %v3353 = vadd.f32 0.0, %v3352
    %v3354 = vpop.f32.mrb[0].mxu0
    %3355 = vmatprep.mubr.bf16.mxu0 0
    %3356 = vmatmul.mubr.bf16.gmra.mrb[0].mxu0 %v2507
    %v3357 = vpop.f32.mrb[0].mxu0
    %v3358 = vadd.f32 0.0, %v3357
    %v3359 = vpop.f32.mrb[0].mxu0
    %v3360 = vpop.f32.mrb[0].mxu0
    %v3361 = vadd.f32 0.0, %v3360
    %v3362 = vpop.f32.mrb[0].mxu0
    %3363 = vmatprep.mubr.bf16.mxu0 0
    %3364 = vmatmul.mubr.bf16.gmra.mrb[0].mxu0 %v2508
    %v3365 = vpop.f32.mrb[0].mxu0
    %v3366 = vadd.f32 0.0, %v3365
    %v3367 = vpop.f32.mrb[0].mxu0
    %v3368 = vpop.f32.mrb[0].mxu0
    %v3369 = vadd.f32 0.0, %v3368
    %v3370 = vpop.f32.mrb[0].mxu0
    %3371 = vmatprep.mubr.bf16.mxu0 0
    %3372 = vmatmul.mubr.bf16.gmra.mrb[0].mxu0 %v2509
    %v3373 = vpop.f32.mrb[0].mxu0
    %v3374 = vadd.f32 0.0, %v3373
    %v3375 = vpop.f32.mrb[0].mxu0
    %v3376 = vpop.f32.mrb[0].mxu0
    %v3377 = vadd.f32 0.0, %v3376
    %v3378 = vpop.f32.mrb[0].mxu0
    %3379 = vmatprep.mubr.bf16.mxu0 0
    %3380 = vmatmul.mubr.bf16.gmra.mrb[0].mxu0 %v2510
    %v3381 = vpop.f32.mrb[0].mxu0
    %v3382 = vadd.f32 0.0, %v3381
    %v3383 = vpop.f32.mrb[0].mxu0
    %v3384 = vpop.f32.mrb[0].mxu0
    %v3385 = vadd.f32 0.0, %v3384
    %v3386 = vpop.f32.mrb[0].mxu0
    %3387 = vmatprep.mubr.bf16.mxu0 0
    %3388 = vmatmul.mubr.bf16.gmra.mrb[0].mxu0 %v2511
    %v3389 = vpop.f32.mrb[0].mxu0
    %v3390 = vadd.f32 0.0, %v3389
    %v3391 = vpop.f32.mrb[0].mxu0
    %v3392 = vpop.f32.mrb[0].mxu0
    %v3393 = vadd.f32 0.0, %v3392
    %v3394 = vpop.f32.mrb[0].mxu0
    %3395 = vmatprep.mubr.bf16.mxu0 0
    %3396 = vmatmul.mubr.bf16.gmra.mrb[0].mxu0 %v2512
    %v3397 = vpop.f32.mrb[0].mxu0
    %v3398 = vadd.f32 0.0, %v3397
    %v3399 = vpop.f32.mrb[0].mxu0
    %v3400 = vpop.f32.mrb[0].mxu0
    %v3401 = vadd.f32 0.0, %v3400
    %v3402 = vpop.f32.mrb[0].mxu0
    %3403 = vmatprep.mubr.bf16.mxu0 0
    %3404 = vmatmul.mubr.bf16.gmra.mrb[0].mxu0 %v2513
    %v3405 = vpop.f32.mrb[0].mxu0
    %v3406 = vadd.f32 0.0, %v3405
    %v3407 = vpop.f32.mrb[0].mxu0
    %v3408 = vpop.f32.mrb[0].mxu0
    %v3409 = vadd.f32 0.0, %v3408
    %v3410 = vpop.f32.mrb[0].mxu0
    %3411 = vmatprep.mubr.bf16.mxu0 0
    %3412 = vmatmul.mubr.bf16.gmra.mrb[0].mxu0 %v2514
    %v3413 = vpop.f32.mrb[0].mxu0
    %v3414 = vadd.f32 0.0, %v3413
    %v3415 = vpop.f32.mrb[0].mxu0
    %v3416 = vpop.f32.mrb[0].mxu0
    %v3417 = vadd.f32 0.0, %v3416
    %v3418 = vpop.f32.mrb[0].mxu0
    %3419 = vmatprep.mubr.bf16.mxu0 0
    %3420 = vmatmul.mubr.bf16.gmra.mrb[0].mxu0 %v2631
    %v3421 = vpop.f32.mrb[0].mxu0
    %v3422 = vadd.f32 0.0, %v3421
    %v3423 = vpop.f32.mrb[0].mxu0
    %v3424 = vpop.f32.mrb[0].mxu0
    %v3425 = vadd.f32 0.0, %v3424
    %v3426 = vpop.f32.mrb[0].mxu0
    %3427 = vmatprep.mubr.bf16.mxu0 0
    %3428 = vmatmul.mubr.bf16.gmra.mrb[0].mxu0 %v2632
    %v3429 = vpop.f32.mrb[0].mxu0
    %v3430 = vadd.f32 0.0, %v3429
    %v3431 = vpop.f32.mrb[0].mxu0
    %v3432 = vpop.f32.mrb[0].mxu0
    %v3433 = vadd.f32 0.0, %v3432
    %v3434 = vpop.f32.mrb[0].mxu0
    %3435 = vmatprep.mubr.bf16.mxu0 0
    %3436 = vmatmul.mubr.bf16.gmra.mrb[0].mxu0 %v2633
    %v3437 = vpop.f32.mrb[0].mxu0
    %v3438 = vadd.f32 0.0, %v3437
    %v3439 = vpop.f32.mrb[0].mxu0
    %v3440 = vpop.f32.mrb[0].mxu0
    %v3441 = vadd.f32 0.0, %v3440
    %v3442 = vpop.f32.mrb[0].mxu0
    %3443 = vmatprep.mubr.bf16.mxu0 0
    %3444 = vmatmul.mubr.bf16.gmra.mrb[0].mxu0 %v2634
    %v3445 = vpop.f32.mrb[0].mxu0
    %v3446 = vadd.f32 0.0, %v3445
    %v3447 = vpop.f32.mrb[0].mxu0
    %v3448 = vpop.f32.mrb[0].mxu0
    %v3449 = vadd.f32 0.0, %v3448
    %v3450 = vpop.f32.mrb[0].mxu0
    %3451 = vmatprep.mubr.bf16.mxu0 0
    %3452 = vmatmul.mubr.bf16.gmra.mrb[0].mxu0 %v2635
    %v3453 = vpop.f32.mrb[0].mxu0
    %v3454 = vadd.f32 0.0, %v3453
    %v3455 = vpop.f32.mrb[0].mxu0
    %v3456 = vpop.f32.mrb[0].mxu0
    %v3457 = vadd.f32 0.0, %v3456
    %v3458 = vpop.f32.mrb[0].mxu0
    %3459 = vmatprep.mubr.bf16.mxu0 0
    %3460 = vmatmul.mubr.bf16.gmra.mrb[0].mxu0 %v2636
    %v3461 = vpop.f32.mrb[0].mxu0
    %v3462 = vadd.f32 0.0, %v3461
    %v3463 = vpop.f32.mrb[0].mxu0
    %v3464 = vpop.f32.mrb[0].mxu0
    %v3465 = vadd.f32 0.0, %v3464
    %v3466 = vpop.f32.mrb[0].mxu0
    %3467 = vmatprep.mubr.bf16.mxu0 0
    %3468 = vmatmul.mubr.bf16.gmra.mrb[0].mxu0 %v2637
    %v3469 = vpop.f32.mrb[0].mxu0
    %v3470 = vadd.f32 0.0, %v3469
    %v3471 = vpop.f32.mrb[0].mxu0
    %v3472 = vpop.f32.mrb[0].mxu0
    %v3473 = vadd.f32 0.0, %v3472
    %v3474 = vpop.f32.mrb[0].mxu0
    %3475 = vmatprep.mubr.bf16.mxu0 0
    %3476 = vmatmul.mubr.bf16.gmra.mrb[0].mxu0 %v2638
    %v3477 = vpop.f32.mrb[0].mxu0
    %v3478 = vadd.f32 0.0, %v3477
    %v3479 = vpop.f32.mrb[0].mxu0
    %v3480 = vpop.f32.mrb[0].mxu0
    %v3481 = vadd.f32 0.0, %v3480
    %v3482 = vpop.f32.mrb[0].mxu0
    %3483 = vmatprep.mubr.bf16.mxu0 0
    %3484 = vmatmul.mubr.bf16.gmra.mrb[0].mxu0 %v2755
    %v3485 = vpop.f32.mrb[0].mxu0
    %v3486 = vadd.f32 0.0, %v3485
    %v3487 = vpop.f32.mrb[0].mxu0
    %v3488 = vpop.f32.mrb[0].mxu0
    %v3489 = vadd.f32 0.0, %v3488
    %v3490 = vpop.f32.mrb[0].mxu0
    %3491 = vmatprep.mubr.bf16.mxu0 0
    %3492 = vmatmul.mubr.bf16.gmra.mrb[0].mxu0 %v2756
    %v3493 = vpop.f32.mrb[0].mxu0
    %v3494 = vadd.f32 0.0, %v3493
    %v3495 = vpop.f32.mrb[0].mxu0
    %v3496 = vpop.f32.mrb[0].mxu0
    %v3497 = vadd.f32 0.0, %v3496
    %v3498 = vpop.f32.mrb[0].mxu0
    %3499 = vmatprep.mubr.bf16.mxu0 0
    %3500 = vmatmul.mubr.bf16.gmra.mrb[0].mxu0 %v2757
    %v3501 = vpop.f32.mrb[0].mxu0
    %v3502 = vadd.f32 0.0, %v3501
    %v3503 = vpop.f32.mrb[0].mxu0
    %v3504 = vpop.f32.mrb[0].mxu0
    %v3505 = vadd.f32 0.0, %v3504
    %v3506 = vpop.f32.mrb[0].mxu0
    %3507 = vmatprep.mubr.bf16.mxu0 0
    %3508 = vmatmul.mubr.bf16.gmra.mrb[0].mxu0 %v2758
    %v3509 = vpop.f32.mrb[0].mxu0
    %v3510 = vadd.f32 0.0, %v3509
    %v3511 = vpop.f32.mrb[0].mxu0
    %v3512 = vpop.f32.mrb[0].mxu0
    %v3513 = vadd.f32 0.0, %v3512
    %v3514 = vpop.f32.mrb[0].mxu0
    %3515 = vmatprep.mubr.bf16.mxu0 0
    %3516 = vmatmul.mubr.bf16.gmra.mrb[0].mxu0 %v2759
    %v3517 = vpop.f32.mrb[0].mxu0
    %v3518 = vadd.f32 0.0, %v3517
    %v3519 = vpop.f32.mrb[0].mxu0
    %v3520 = vpop.f32.mrb[0].mxu0
    %v3521 = vadd.f32 0.0, %v3520
    %v3522 = vpop.f32.mrb[0].mxu0
    %3523 = vmatprep.mubr.bf16.mxu0 0
    %3524 = vmatmul.mubr.bf16.gmra.mrb[0].mxu0 %v2760
    %v3525 = vpop.f32.mrb[0].mxu0
    %v3526 = vadd.f32 0.0, %v3525
    %v3527 = vpop.f32.mrb[0].mxu0
    %v3528 = vpop.f32.mrb[0].mxu0
    %v3529 = vadd.f32 0.0, %v3528
    %v3530 = vpop.f32.mrb[0].mxu0
    %3531 = vmatprep.mubr.bf16.mxu0 0
    %3532 = vmatmul.mubr.bf16.gmra.mrb[0].mxu0 %v2761
    %v3533 = vpop.f32.mrb[0].mxu0
    %v3534 = vadd.f32 0.0, %v3533
    %v3535 = vpop.f32.mrb[0].mxu0
    %v3536 = vpop.f32.mrb[0].mxu0
    %v3537 = vadd.f32 0.0, %v3536
    %v3538 = vpop.f32.mrb[0].mxu0
    %3539 = vmatprep.mubr.bf16.mxu0 0
    %3540 = vmatmul.mubr.bf16.gmra.mrb[0].mxu0 %v2762
    %v3541 = vpop.f32.mrb[0].mxu0
    %v3542 = vadd.f32 0.0, %v3541
    %v3543 = vpop.f32.mrb[0].mxu0
    %v3544 = vpop.f32.mrb[0].mxu0
    %v3545 = vadd.f32 0.0, %v3544
    %v3546 = vpop.f32.mrb[0].mxu0
    %3547 = vmatprep.mubr.bf16.mxu0 0
    %3548 = vmatmul.mubr.bf16.gmra.mrb[0].mxu0 %v2879
    %v3549 = vpop.f32.mrb[0].mxu0
    %v3550 = vadd.f32 0.0, %v3549
    %v3551 = vpop.f32.mrb[0].mxu0
    %v3552 = vpop.f32.mrb[0].mxu0
    %v3553 = vadd.f32 0.0, %v3552
    %v3554 = vpop.f32.mrb[0].mxu0
    %3555 = vmatprep.mubr.bf16.mxu0 0
    %3556 = vmatmul.mubr.bf16.gmra.mrb[0].mxu0 %v2880
    %v3557 = vpop.f32.mrb[0].mxu0
    %v3558 = vadd.f32 0.0, %v3557
    %v3559 = vpop.f32.mrb[0].mxu0
    %v3560 = vpop.f32.mrb[0].mxu0
    %v3561 = vadd.f32 0.0, %v3560
    %v3562 = vpop.f32.mrb[0].mxu0
    %3563 = vmatprep.mubr.bf16.mxu0 0
    %3564 = vmatmul.mubr.bf16.gmra.mrb[0].mxu0 %v2881
    %v3565 = vpop.f32.mrb[0].mxu0
    %v3566 = vadd.f32 0.0, %v3565
    %v3567 = vpop.f32.mrb[0].mxu0
    %v3568 = vpop.f32.mrb[0].mxu0
    %v3569 = vadd.f32 0.0, %v3568
    %v3570 = vpop.f32.mrb[0].mxu0
    %3571 = vmatprep.mubr.bf16.mxu0 0
    %3572 = vmatmul.mubr.bf16.gmra.mrb[0].mxu0 %v2882
    %v3573 = vpop.f32.mrb[0].mxu0
    %v3574 = vadd.f32 0.0, %v3573
    %v3575 = vpop.f32.mrb[0].mxu0
    %v3576 = vpop.f32.mrb[0].mxu0
    %v3577 = vadd.f32 0.0, %v3576
    %v3578 = vpop.f32.mrb[0].mxu0
    %3579 = vmatprep.mubr.bf16.mxu0 0
    %3580 = vmatmul.mubr.bf16.gmra.mrb[0].mxu0 %v2883
    %v3581 = vpop.f32.mrb[0].mxu0
    %v3582 = vadd.f32 0.0, %v3581
    %v3583 = vpop.f32.mrb[0].mxu0
    %v3584 = vpop.f32.mrb[0].mxu0
    %v3585 = vadd.f32 0.0, %v3584
    %v3586 = vpop.f32.mrb[0].mxu0
    %3587 = vmatprep.mubr.bf16.mxu0 0
    %3588 = vmatmul.mubr.bf16.gmra.mrb[0].mxu0 %v2884
    %v3589 = vpop.f32.mrb[0].mxu0
    %v3590 = vadd.f32 0.0, %v3589
    %v3591 = vpop.f32.mrb[0].mxu0
    %v3592 = vpop.f32.mrb[0].mxu0
    %v3593 = vadd.f32 0.0, %v3592
    %v3594 = vpop.f32.mrb[0].mxu0
    %3595 = vmatprep.mubr.bf16.mxu0 0
    %3596 = vmatmul.mubr.bf16.gmra.mrb[0].mxu0 %v2885
    %v3597 = vpop.f32.mrb[0].mxu0
    %v3598 = vadd.f32 0.0, %v3597
    %v3599 = vpop.f32.mrb[0].mxu0
    %v3600 = vpop.f32.mrb[0].mxu0
    %v3601 = vadd.f32 0.0, %v3600
    %v3602 = vpop.f32.mrb[0].mxu0
    %3603 = vmatprep.mubr.bf16.mxu0 0
    %3604 = vmatmul.mubr.bf16.gmra.mrb[0].mxu0 %v2886
    %v3605 = vpop.f32.mrb[0].mxu0
    %v3606 = vadd.f32 0.0, %v3605
    %v3607 = vpop.f32.mrb[0].mxu0
    %v3608 = vpop.f32.mrb[0].mxu0
    %v3609 = vadd.f32 0.0, %v3608
    %v3610 = vpop.f32.mrb[0].mxu0
    %3611 = vmatprep.mubr.bf16.mxu0 0
    %3612 = vmatmul.mubr.bf16.gmra.mrb[0].mxu0 %v3003
    %v3613 = vpop.f32.mrb[0].mxu0
    %v3614 = vadd.f32 0.0, %v3613
    %v3615 = vpop.f32.mrb[0].mxu0
    %v3616 = vpop.f32.mrb[0].mxu0
    %v3617 = vadd.f32 0.0, %v3616
    %v3618 = vpop.f32.mrb[0].mxu0
    %3619 = vmatprep.mubr.bf16.mxu0 0
    %3620 = vmatmul.mubr.bf16.gmra.mrb[0].mxu0 %v3004
    %v3621 = vpop.f32.mrb[0].mxu0
    %v3622 = vadd.f32 0.0, %v3621
    %v3623 = vpop.f32.mrb[0].mxu0
    %v3624 = vpop.f32.mrb[0].mxu0
    %v3625 = vadd.f32 0.0, %v3624
    %v3626 = vpop.f32.mrb[0].mxu0
    %3627 = vmatprep.mubr.bf16.mxu0 0
    %3628 = vmatmul.mubr.bf16.gmra.mrb[0].mxu0 %v3005
    %v3629 = vpop.f32.mrb[0].mxu0
    %v3630 = vadd.f32 0.0, %v3629
    %v3631 = vpop.f32.mrb[0].mxu0
    %v3632 = vpop.f32.mrb[0].mxu0
    %v3633 = vadd.f32 0.0, %v3632
    %v3634 = vpop.f32.mrb[0].mxu0
    %3635 = vmatprep.mubr.bf16.mxu0 0
    %3636 = vmatmul.mubr.bf16.gmra.mrb[0].mxu0 %v3006
    %v3637 = vpop.f32.mrb[0].mxu0
    %v3638 = vadd.f32 0.0, %v3637
    %v3639 = vpop.f32.mrb[0].mxu0
    %v3640 = vpop.f32.mrb[0].mxu0
    %v3641 = vadd.f32 0.0, %v3640
    %v3642 = vpop.f32.mrb[0].mxu0
    %3643 = vmatprep.mubr.bf16.mxu0 0
    %3644 = vmatmul.mubr.bf16.gmra.mrb[0].mxu0 %v3007
    %v3645 = vpop.f32.mrb[0].mxu0
    %v3646 = vadd.f32 0.0, %v3645
    %v3647 = vpop.f32.mrb[0].mxu0
    %v3648 = vpop.f32.mrb[0].mxu0
    %v3649 = vadd.f32 0.0, %v3648
    %v3650 = vpop.f32.mrb[0].mxu0
    %3651 = vmatprep.mubr.bf16.mxu0 0
    %3652 = vmatmul.mubr.bf16.gmra.mrb[0].mxu0 %v3008
    %v3653 = vpop.f32.mrb[0].mxu0
    %v3654 = vadd.f32 0.0, %v3653
    %v3655 = vpop.f32.mrb[0].mxu0
    %v3656 = vpop.f32.mrb[0].mxu0
    %v3657 = vadd.f32 0.0, %v3656
    %v3658 = vpop.f32.mrb[0].mxu0
    %3659 = vmatprep.mubr.bf16.mxu0 0
    %3660 = vmatmul.mubr.bf16.gmra.mrb[0].mxu0 %v3009
    %v3661 = vpop.f32.mrb[0].mxu0
    %v3662 = vadd.f32 0.0, %v3661
    %v3663 = vpop.f32.mrb[0].mxu0
    %v3664 = vpop.f32.mrb[0].mxu0
    %v3665 = vadd.f32 0.0, %v3664
    %v3666 = vpop.f32.mrb[0].mxu0
    %3667 = vmatprep.mubr.bf16.mxu0 0
    %3668 = vmatmul.mubr.bf16.gmra.mrb[0].mxu0 %v3010
    %v3669 = vpop.f32.mrb[0].mxu0
    %v3670 = vadd.f32 0.0, %v3669
    %v3671 = vpop.f32.mrb[0].mxu0
    %v3672 = vpop.f32.mrb[0].mxu0
    %v3673 = vadd.f32 0.0, %v3672
    %v3674 = vpop.f32.mrb[0].mxu0
    %3675 = vmatprep.mubr.bf16.mxu0 0
    %3676 = vmatmul.mubr.bf16.gmra.mrb[0].mxu0 %v3127
    %v3677 = vpop.f32.mrb[0].mxu0
    %v3678 = vadd.f32 0.0, %v3677
    %v3679 = vpop.f32.mrb[0].mxu0
    %v3680 = vpop.f32.mrb[0].mxu0
    %v3681 = vadd.f32 0.0, %v3680
    %v3682 = vpop.f32.mrb[0].mxu0
    %3683 = vmatprep.mubr.bf16.mxu0 0
    %3684 = vmatmul.mubr.bf16.gmra.mrb[0].mxu0 %v3128
    %v3685 = vpop.f32.mrb[0].mxu0
    %v3686 = vadd.f32 0.0, %v3685
    %v3687 = vpop.f32.mrb[0].mxu0
    %v3688 = vpop.f32.mrb[0].mxu0
    %v3689 = vadd.f32 0.0, %v3688
    %v3690 = vpop.f32.mrb[0].mxu0
    %3691 = vmatprep.mubr.bf16.mxu0 0
    %3692 = vmatmul.mubr.bf16.gmra.mrb[0].mxu0 %v3129
    %v3693 = vpop.f32.mrb[0].mxu0
    %v3694 = vadd.f32 0.0, %v3693
    %v3695 = vpop.f32.mrb[0].mxu0
    %v3696 = vpop.f32.mrb[0].mxu0
    %v3697 = vadd.f32 0.0, %v3696
    %v3698 = vpop.f32.mrb[0].mxu0
    %3699 = vmatprep.mubr.bf16.mxu0 0
    %3700 = vmatmul.mubr.bf16.gmra.mrb[0].mxu0 %v3130
    %v3701 = vpop.f32.mrb[0].mxu0
    %v3702 = vadd.f32 0.0, %v3701
    %v3703 = vpop.f32.mrb[0].mxu0
    %v3704 = vpop.f32.mrb[0].mxu0
    %v3705 = vadd.f32 0.0, %v3704
    %v3706 = vpop.f32.mrb[0].mxu0
    %3707 = vmatprep.mubr.bf16.mxu0 0
    %3708 = vmatmul.mubr.bf16.gmra.mrb[0].mxu0 %v3131
    %v3709 = vpop.f32.mrb[0].mxu0
    %v3710 = vadd.f32 0.0, %v3709
    %v3711 = vpop.f32.mrb[0].mxu0
    %v3712 = vpop.f32.mrb[0].mxu0
    %v3713 = vadd.f32 0.0, %v3712
    %v3714 = vpop.f32.mrb[0].mxu0
    %3715 = vmatprep.mubr.bf16.mxu0 0
    %3716 = vmatmul.mubr.bf16.gmra.mrb[0].mxu0 %v3132
    %v3717 = vpop.f32.mrb[0].mxu0
    %v3718 = vadd.f32 0.0, %v3717
    %v3719 = vpop.f32.mrb[0].mxu0
    %v3720 = vpop.f32.mrb[0].mxu0
    %v3721 = vadd.f32 0.0, %v3720
    %v3722 = vpop.f32.mrb[0].mxu0
    %3723 = vmatprep.mubr.bf16.mxu0 0
    %3724 = vmatmul.mubr.bf16.gmra.mrb[0].mxu0 %v3133
    %v3725 = vpop.f32.mrb[0].mxu0
    %v3726 = vadd.f32 0.0, %v3725
    %v3727 = vpop.f32.mrb[0].mxu0
    %v3728 = vpop.f32.mrb[0].mxu0
    %v3729 = vadd.f32 0.0, %v3728
    %v3730 = vpop.f32.mrb[0].mxu0
    %3731 = vmatprep.mubr.bf16.mxu0 0
    %3732 = vmatmul.mubr.bf16.gmra.mrb[0].mxu0 %v3134
    %v3733 = vpop.f32.mrb[0].mxu0
    %v3734 = vadd.f32 0.0, %v3733
    %v3735 = vpop.f32.mrb[0].mxu0
    %v3736 = vpop.f32.mrb[0].mxu0
    %v3737 = vadd.f32 0.0, %v3736
    %v3738 = vpop.f32.mrb[0].mxu0
    %3739 = vmatprep.mubr.bf16.mxu0 0
    %3740 = vmatmul.mubr.bf16.gmra.mrb[0].mxu0 %v3251
    %v3741 = vpop.f32.mrb[0].mxu0
    %v3742 = vadd.f32 0.0, %v3741
    %v3743 = vpop.f32.mrb[0].mxu0
    %v3744 = vpop.f32.mrb[0].mxu0
    %v3745 = vadd.f32 0.0, %v3744
    %v3746 = vpop.f32.mrb[0].mxu0
    %3747 = vmatprep.mubr.bf16.mxu0 0
    %3748 = vmatmul.mubr.bf16.gmra.mrb[0].mxu0 %v3252
    %v3749 = vpop.f32.mrb[0].mxu0
    %v3750 = vadd.f32 0.0, %v3749
    %v3751 = vpop.f32.mrb[0].mxu0
    %v3752 = vpop.f32.mrb[0].mxu0
    %v3753 = vadd.f32 0.0, %v3752
    %v3754 = vpop.f32.mrb[0].mxu0
    %3755 = vmatprep.mubr.bf16.mxu0 0
    %3756 = vmatmul.mubr.bf16.gmra.mrb[0].mxu0 %v3253
    %v3757 = vpop.f32.mrb[0].mxu0
    %v3758 = vadd.f32 0.0, %v3757
    %v3759 = vpop.f32.mrb[0].mxu0
    %v3760 = vpop.f32.mrb[0].mxu0
    %v3761 = vadd.f32 0.0, %v3760
    %v3762 = vpop.f32.mrb[0].mxu0
    %3763 = vmatprep.mubr.bf16.mxu0 0
    %3764 = vmatmul.mubr.bf16.gmra.mrb[0].mxu0 %v3254
    %v3765 = vpop.f32.mrb[0].mxu0
    %v3766 = vadd.f32 0.0, %v3765
    %v3767 = vpop.f32.mrb[0].mxu0
    %v3768 = vpop.f32.mrb[0].mxu0
    %v3769 = vadd.f32 0.0, %v3768
    %v3770 = vpop.f32.mrb[0].mxu0
    %3771 = vmatprep.mubr.bf16.mxu0 0
    %3772 = vmatmul.mubr.bf16.gmra.mrb[0].mxu0 %v3255
    %v3773 = vpop.f32.mrb[0].mxu0
    %v3774 = vadd.f32 0.0, %v3773
    %v3775 = vpop.f32.mrb[0].mxu0
    %v3776 = vpop.f32.mrb[0].mxu0
    %v3777 = vadd.f32 0.0, %v3776
    %v3778 = vpop.f32.mrb[0].mxu0
    %3779 = vmatprep.mubr.bf16.mxu0 0
    %3780 = vmatmul.mubr.bf16.gmra.mrb[0].mxu0 %v3256
    %v3781 = vpop.f32.mrb[0].mxu0
    %v3782 = vadd.f32 0.0, %v3781
    %v3783 = vpop.f32.mrb[0].mxu0
    %v3784 = vpop.f32.mrb[0].mxu0
    %v3785 = vadd.f32 0.0, %v3784
    %v3786 = vpop.f32.mrb[0].mxu0
    %3787 = vmatprep.mubr.bf16.mxu0 0
    %3788 = vmatmul.mubr.bf16.gmra.mrb[0].mxu0 %v3257
    %v3789 = vpop.f32.mrb[0].mxu0
    %v3790 = vadd.f32 0.0, %v3789
    %v3791 = vpop.f32.mrb[0].mxu0
    %v3792 = vpop.f32.mrb[0].mxu0
    %v3793 = vadd.f32 0.0, %v3792
    %v3794 = vpop.f32.mrb[0].mxu0
    %3795 = vmatprep.mubr.bf16.mxu0 0
    %3796 = vmatmul.mubr.bf16.gmra.mrb[0].mxu0 %v3258
    %v3797 = vpop.f32.mrb[0].mxu0
    %v3798 = vadd.f32 0.0, %v3797
    %v3799 = vpop.f32.mrb[0].mxu0
    %v3800 = vpop.f32.mrb[0].mxu0
    %v3801 = vadd.f32 0.0, %v3800
    %v3802 = vpop.f32.mrb[0].mxu0
    %3803 = vdwg.mxu0
    %vm3804 = vcmp.ge.f32.partialorder %v3294, %v1825
    %vm3805 = vcmp.ge.f32.partialorder %v3297, %v1825
    %vm3806 = vcmp.ge.f32.partialorder %v3302, %v1825
    %vm3807 = vcmp.ge.f32.partialorder %v3305, %v1825
    %vm3808 = vcmp.ge.f32.partialorder %v3310, %v1825
    %vm3809 = vcmp.ge.f32.partialorder %v3313, %v1825
    %vm3810 = vcmp.ge.f32.partialorder %v3318, %v1825
    %vm3811 = vcmp.ge.f32.partialorder %v3321, %v1825
    %vm3812 = vcmp.ge.f32.partialorder %v3326, %v1825
    %vm3813 = vcmp.ge.f32.partialorder %v3329, %v1825
    %vm3814 = vcmp.ge.f32.partialorder %v3334, %v1825
    %vm3815 = vcmp.ge.f32.partialorder %v3337, %v1825
    %vm3816 = vcmp.ge.f32.partialorder %v3342, %v1825
    %vm3817 = vcmp.ge.f32.partialorder %v3345, %v1825
    %vm3818 = vcmp.ge.f32.partialorder %v3350, %v1825
    %vm3819 = vcmp.ge.f32.partialorder %v3353, %v1825
    %v3820 = vsel %vm3804, %v2269, inf
    %v3821 = vsel %vm3805, %v2273, inf
    %v3822 = vsel %vm3806, %v2277, inf
    %v3823 = vsel %vm3807, %v2281, inf
    %v3824 = vsel %vm3808, %v2285, inf
    %v3825 = vsel %vm3809, %v2289, inf
    %v3826 = vsel %vm3810, %v2293, inf
    %v3827 = vsel %vm3811, %v2297, inf
    %v3828 = vsel %vm3812, %v2301, inf
    %v3829 = vsel %vm3813, %v2305, inf
    %v3830 = vsel %vm3814, %v2309, inf
    %v3831 = vsel %vm3815, %v2313, inf
    %v3832 = vsel %vm3816, %v2317, inf
    %v3833 = vsel %vm3817, %v2321, inf
    %v3834 = vsel %vm3818, %v2325, inf
    %v3835 = vsel %vm3819, %v2329, inf
    %v3836 = vmin.f32 %v3820, %v3824
    %v3837 = vmin.f32 %v3821, %v3825
    %v3838 = vmin.f32 %v3822, %v3826
    %v3839 = vmin.f32 %v3823, %v3827
    %v3840 = vmin.f32 %v3836, %v3828
    %v3841 = vmin.f32 %v3837, %v3829
    %v3842 = vmin.f32 %v3838, %v3830
    %v3843 = vmin.f32 %v3839, %v3831
    %v3844 = vmin.f32 %v3840, %v3832
    %v3845 = vmin.f32 %v3841, %v3833
    %v3846 = vmin.f32 %v3842, %v3834
    %v3847 = vmin.f32 %v3843, %v3835
    %v3848 = vmin.f32 %v3844, %v3845
    %v3849 = vmin.f32 %v3846, %v3847
    %v3850 = vmin.f32 %v3848, %v3849
    %v3851 = vrot.slane %v3850, 4
    %v3852 = vmin.f32 %v3850, %v3851
    %v3853 = vrot.slane %v3852, 2
    %v3854 = vmin.f32 %v3852, %v3853
    %v3855 = vrot.slane %v3854, 1
    %v3856 = vmin.f32 %v3854, %v3855
    %v3857 = vmul.f32 %v3856, %v86
    %v3858 = vmax.f32 %v3857, 0.0
    %vm3859 = vcmp.ge.f32.partialorder %v3358, %v1825
    %vm3860 = vcmp.ge.f32.partialorder %v3361, %v1825
    %vm3861 = vcmp.ge.f32.partialorder %v3366, %v1825
    %vm3862 = vcmp.ge.f32.partialorder %v3369, %v1825
    %vm3863 = vcmp.ge.f32.partialorder %v3374, %v1825
    %vm3864 = vcmp.ge.f32.partialorder %v3377, %v1825
    %vm3865 = vcmp.ge.f32.partialorder %v3382, %v1825
    %vm3866 = vcmp.ge.f32.partialorder %v3385, %v1825
    %vm3867 = vcmp.ge.f32.partialorder %v3390, %v1825
    %vm3868 = vcmp.ge.f32.partialorder %v3393, %v1825
    %vm3869 = vcmp.ge.f32.partialorder %v3398, %v1825
    %vm3870 = vcmp.ge.f32.partialorder %v3401, %v1825
    %vm3871 = vcmp.ge.f32.partialorder %v3406, %v1825
    %vm3872 = vcmp.ge.f32.partialorder %v3409, %v1825
    %vm3873 = vcmp.ge.f32.partialorder %v3414, %v1825
    %vm3874 = vcmp.ge.f32.partialorder %v3417, %v1825
    %v3875 = vsel %vm3859, %v2393, inf
    %v3876 = vsel %vm3860, %v2397, inf
    %v3877 = vsel %vm3861, %v2401, inf
    %v3878 = vsel %vm3862, %v2405, inf
    %v3879 = vsel %vm3863, %v2409, inf
    %v3880 = vsel %vm3864, %v2413, inf
    %v3881 = vsel %vm3865, %v2417, inf
    %v3882 = vsel %vm3866, %v2421, inf
    %v3883 = vsel %vm3867, %v2425, inf
    %v3884 = vsel %vm3868, %v2429, inf
    %v3885 = vsel %vm3869, %v2433, inf
    %v3886 = vsel %vm3870, %v2437, inf
    %v3887 = vsel %vm3871, %v2441, inf
    %v3888 = vsel %vm3872, %v2445, inf
    %v3889 = vsel %vm3873, %v2449, inf
    %v3890 = vsel %vm3874, %v2453, inf
    %v3891 = vmin.f32 %v3875, %v3879
    %v3892 = vmin.f32 %v3876, %v3880
    %v3893 = vmin.f32 %v3877, %v3881
    %v3894 = vmin.f32 %v3878, %v3882
    %v3895 = vmin.f32 %v3891, %v3883
    %v3896 = vmin.f32 %v3892, %v3884
    %v3897 = vmin.f32 %v3893, %v3885
    %v3898 = vmin.f32 %v3894, %v3886
    %v3899 = vmin.f32 %v3895, %v3887
    %v3900 = vmin.f32 %v3896, %v3888
    %v3901 = vmin.f32 %v3897, %v3889
    %v3902 = vmin.f32 %v3898, %v3890
    %v3903 = vmin.f32 %v3899, %v3900
    %v3904 = vmin.f32 %v3901, %v3902
    %v3905 = vmin.f32 %v3903, %v3904
    %v3906 = vrot.slane %v3905, 4
    %v3907 = vmin.f32 %v3905, %v3906
    %v3908 = vrot.slane %v3907, 2
    %v3909 = vmin.f32 %v3907, %v3908
    %v3910 = vrot.slane %v3909, 1
    %v3911 = vmin.f32 %v3909, %v3910
    %v3912 = vmul.f32 %v3911, %v86
    %v3913 = vmax.f32 %v3912, 0.0
    %vm3914 = vcmp.ge.f32.partialorder %v3422, %v1825
    %vm3915 = vcmp.ge.f32.partialorder %v3425, %v1825
    %vm3916 = vcmp.ge.f32.partialorder %v3430, %v1825
    %vm3917 = vcmp.ge.f32.partialorder %v3433, %v1825
    %vm3918 = vcmp.ge.f32.partialorder %v3438, %v1825
    %vm3919 = vcmp.ge.f32.partialorder %v3441, %v1825
    %vm3920 = vcmp.ge.f32.partialorder %v3446, %v1825
    %vm3921 = vcmp.ge.f32.partialorder %v3449, %v1825
    %vm3922 = vcmp.ge.f32.partialorder %v3454, %v1825
    %vm3923 = vcmp.ge.f32.partialorder %v3457, %v1825
    %vm3924 = vcmp.ge.f32.partialorder %v3462, %v1825
    %vm3925 = vcmp.ge.f32.partialorder %v3465, %v1825
    %vm3926 = vcmp.ge.f32.partialorder %v3470, %v1825
    %vm3927 = vcmp.ge.f32.partialorder %v3473, %v1825
    %vm3928 = vcmp.ge.f32.partialorder %v3478, %v1825
    %vm3929 = vcmp.ge.f32.partialorder %v3481, %v1825
    %v3930 = vsel %vm3914, %v2517, inf
    %v3931 = vsel %vm3915, %v2521, inf
    %v3932 = vsel %vm3916, %v2525, inf
    %v3933 = vsel %vm3917, %v2529, inf
    %v3934 = vsel %vm3918, %v2533, inf
    %v3935 = vsel %vm3919, %v2537, inf
    %v3936 = vsel %vm3920, %v2541, inf
    %v3937 = vsel %vm3921, %v2545, inf
    %v3938 = vsel %vm3922, %v2549, inf
    %v3939 = vsel %vm3923, %v2553, inf
    %v3940 = vsel %vm3924, %v2557, inf
    %v3941 = vsel %vm3925, %v2561, inf
    %v3942 = vsel %vm3926, %v2565, inf
    %v3943 = vsel %vm3927, %v2569, inf
    %v3944 = vsel %vm3928, %v2573, inf
    %v3945 = vsel %vm3929, %v2577, inf
    %v3946 = vmin.f32 %v3930, %v3934
    %v3947 = vmin.f32 %v3931, %v3935
    %v3948 = vmin.f32 %v3932, %v3936
    %v3949 = vmin.f32 %v3933, %v3937
    %v3950 = vmin.f32 %v3946, %v3938
    %v3951 = vmin.f32 %v3947, %v3939
    %v3952 = vmin.f32 %v3948, %v3940
    %v3953 = vmin.f32 %v3949, %v3941
    %v3954 = vmin.f32 %v3950, %v3942
    %v3955 = vmin.f32 %v3951, %v3943
    %v3956 = vmin.f32 %v3952, %v3944
    %v3957 = vmin.f32 %v3953, %v3945
    %v3958 = vmin.f32 %v3954, %v3955
    %v3959 = vmin.f32 %v3956, %v3957
    %v3960 = vmin.f32 %v3958, %v3959
    %v3961 = vrot.slane %v3960, 4
    %v3962 = vmin.f32 %v3960, %v3961
    %v3963 = vrot.slane %v3962, 2
    %v3964 = vmin.f32 %v3962, %v3963
    %v3965 = vrot.slane %v3964, 1
    %v3966 = vmin.f32 %v3964, %v3965
    %v3967 = vmul.f32 %v3966, %v86
    %v3968 = vmax.f32 %v3967, 0.0
    %vm3969 = vcmp.ge.f32.partialorder %v3486, %v1825
    %vm3970 = vcmp.ge.f32.partialorder %v3489, %v1825
    %vm3971 = vcmp.ge.f32.partialorder %v3494, %v1825
    %vm3972 = vcmp.ge.f32.partialorder %v3497, %v1825
    %vm3973 = vcmp.ge.f32.partialorder %v3502, %v1825
    %vm3974 = vcmp.ge.f32.partialorder %v3505, %v1825
    %vm3975 = vcmp.ge.f32.partialorder %v3510, %v1825
    %vm3976 = vcmp.ge.f32.partialorder %v3513, %v1825
    %vm3977 = vcmp.ge.f32.partialorder %v3518, %v1825
    %vm3978 = vcmp.ge.f32.partialorder %v3521, %v1825
    %vm3979 = vcmp.ge.f32.partialorder %v3526, %v1825
    %vm3980 = vcmp.ge.f32.partialorder %v3529, %v1825
    %vm3981 = vcmp.ge.f32.partialorder %v3534, %v1825
    %vm3982 = vcmp.ge.f32.partialorder %v3537, %v1825
    %vm3983 = vcmp.ge.f32.partialorder %v3542, %v1825
    %vm3984 = vcmp.ge.f32.partialorder %v3545, %v1825
    %v3985 = vsel %vm3969, %v2641, inf
    %v3986 = vsel %vm3970, %v2645, inf
    %v3987 = vsel %vm3971, %v2649, inf
    %v3988 = vsel %vm3972, %v2653, inf
    %v3989 = vsel %vm3973, %v2657, inf
    %v3990 = vsel %vm3974, %v2661, inf
    %v3991 = vsel %vm3975, %v2665, inf
    %v3992 = vsel %vm3976, %v2669, inf
    %v3993 = vsel %vm3977, %v2673, inf
    %v3994 = vsel %vm3978, %v2677, inf
    %v3995 = vsel %vm3979, %v2681, inf
    %v3996 = vsel %vm3980, %v2685, inf
    %v3997 = vsel %vm3981, %v2689, inf
    %v3998 = vsel %vm3982, %v2693, inf
    %v3999 = vsel %vm3983, %v2697, inf
    %v4000 = vsel %vm3984, %v2701, inf
    %v4001 = vmin.f32 %v3985, %v3989
    %v4002 = vmin.f32 %v3986, %v3990
    %v4003 = vmin.f32 %v3987, %v3991
    %v4004 = vmin.f32 %v3988, %v3992
    %v4005 = vmin.f32 %v4001, %v3993
    %v4006 = vmin.f32 %v4002, %v3994
    %v4007 = vmin.f32 %v4003, %v3995
    %v4008 = vmin.f32 %v4004, %v3996
    %v4009 = vmin.f32 %v4005, %v3997
    %v4010 = vmin.f32 %v4006, %v3998
    %v4011 = vmin.f32 %v4007, %v3999
    %v4012 = vmin.f32 %v4008, %v4000
    %v4013 = vmin.f32 %v4009, %v4010
    %v4014 = vmin.f32 %v4011, %v4012
    %v4015 = vmin.f32 %v4013, %v4014
    %v4016 = vrot.slane %v4015, 4
    %v4017 = vmin.f32 %v4015, %v4016
    %v4018 = vrot.slane %v4017, 2
    %v4019 = vmin.f32 %v4017, %v4018
    %v4020 = vrot.slane %v4019, 1
    %v4021 = vmin.f32 %v4019, %v4020
    %v4022 = vmul.f32 %v4021, %v86
    %v4023 = vmax.f32 %v4022, 0.0
    %vm4024 = vcmp.ge.f32.partialorder %v3550, %v1825
    %vm4025 = vcmp.ge.f32.partialorder %v3553, %v1825
    %vm4026 = vcmp.ge.f32.partialorder %v3558, %v1825
    %vm4027 = vcmp.ge.f32.partialorder %v3561, %v1825
    %vm4028 = vcmp.ge.f32.partialorder %v3566, %v1825
    %vm4029 = vcmp.ge.f32.partialorder %v3569, %v1825
    %vm4030 = vcmp.ge.f32.partialorder %v3574, %v1825
    %vm4031 = vcmp.ge.f32.partialorder %v3577, %v1825
    %vm4032 = vcmp.ge.f32.partialorder %v3582, %v1825
    %vm4033 = vcmp.ge.f32.partialorder %v3585, %v1825
    %vm4034 = vcmp.ge.f32.partialorder %v3590, %v1825
    %vm4035 = vcmp.ge.f32.partialorder %v3593, %v1825
    %vm4036 = vcmp.ge.f32.partialorder %v3598, %v1825
    %vm4037 = vcmp.ge.f32.partialorder %v3601, %v1825
    %vm4038 = vcmp.ge.f32.partialorder %v3606, %v1825
    %vm4039 = vcmp.ge.f32.partialorder %v3609, %v1825
    %v4040 = vsel %vm4024, %v2765, inf
    %v4041 = vsel %vm4025, %v2769, inf
    %v4042 = vsel %vm4026, %v2773, inf
    %v4043 = vsel %vm4027, %v2777, inf
    %v4044 = vsel %vm4028, %v2781, inf
    %v4045 = vsel %vm4029, %v2785, inf
    %v4046 = vsel %vm4030, %v2789, inf
    %v4047 = vsel %vm4031, %v2793, inf
    %v4048 = vsel %vm4032, %v2797, inf
    %v4049 = vsel %vm4033, %v2801, inf
    %v4050 = vsel %vm4034, %v2805, inf
    %v4051 = vsel %vm4035, %v2809, inf
    %v4052 = vsel %vm4036, %v2813, inf
    %v4053 = vsel %vm4037, %v2817, inf
    %v4054 = vsel %vm4038, %v2821, inf
    %v4055 = vsel %vm4039, %v2825, inf
    %v4056 = vmin.f32 %v4040, %v4044
    %v4057 = vmin.f32 %v4041, %v4045
    %v4058 = vmin.f32 %v4042, %v4046
    %v4059 = vmin.f32 %v4043, %v4047
    %v4060 = vmin.f32 %v4056, %v4048
    %v4061 = vmin.f32 %v4057, %v4049
    %v4062 = vmin.f32 %v4058, %v4050
    %v4063 = vmin.f32 %v4059, %v4051
    %v4064 = vmin.f32 %v4060, %v4052
    %v4065 = vmin.f32 %v4061, %v4053
    %v4066 = vmin.f32 %v4062, %v4054
    %v4067 = vmin.f32 %v4063, %v4055
    %v4068 = vmin.f32 %v4064, %v4065
    %v4069 = vmin.f32 %v4066, %v4067
    %v4070 = vmin.f32 %v4068, %v4069
    %v4071 = vrot.slane %v4070, 4
    %v4072 = vmin.f32 %v4070, %v4071
    %v4073 = vrot.slane %v4072, 2
    %v4074 = vmin.f32 %v4072, %v4073
    %v4075 = vrot.slane %v4074, 1
    %v4076 = vmin.f32 %v4074, %v4075
    %v4077 = vmul.f32 %v4076, %v86
    %v4078 = vmax.f32 %v4077, 0.0
    %vm4079 = vcmp.ge.f32.partialorder %v3614, %v1825
    %vm4080 = vcmp.ge.f32.partialorder %v3617, %v1825
    %vm4081 = vcmp.ge.f32.partialorder %v3622, %v1825
    %vm4082 = vcmp.ge.f32.partialorder %v3625, %v1825
    %vm4083 = vcmp.ge.f32.partialorder %v3630, %v1825
    %vm4084 = vcmp.ge.f32.partialorder %v3633, %v1825
    %vm4085 = vcmp.ge.f32.partialorder %v3638, %v1825
    %vm4086 = vcmp.ge.f32.partialorder %v3641, %v1825
    %vm4087 = vcmp.ge.f32.partialorder %v3646, %v1825
    %vm4088 = vcmp.ge.f32.partialorder %v3649, %v1825
    %vm4089 = vcmp.ge.f32.partialorder %v3654, %v1825
    %vm4090 = vcmp.ge.f32.partialorder %v3657, %v1825
    %vm4091 = vcmp.ge.f32.partialorder %v3662, %v1825
    %vm4092 = vcmp.ge.f32.partialorder %v3665, %v1825
    %vm4093 = vcmp.ge.f32.partialorder %v3670, %v1825
    %vm4094 = vcmp.ge.f32.partialorder %v3673, %v1825
    %v4095 = vsel %vm4079, %v2889, inf
    %v4096 = vsel %vm4080, %v2893, inf
    %v4097 = vsel %vm4081, %v2897, inf
    %v4098 = vsel %vm4082, %v2901, inf
    %v4099 = vsel %vm4083, %v2905, inf
    %v4100 = vsel %vm4084, %v2909, inf
    %v4101 = vsel %vm4085, %v2913, inf
    %v4102 = vsel %vm4086, %v2917, inf
    %v4103 = vsel %vm4087, %v2921, inf
    %v4104 = vsel %vm4088, %v2925, inf
    %v4105 = vsel %vm4089, %v2929, inf
    %v4106 = vsel %vm4090, %v2933, inf
    %v4107 = vsel %vm4091, %v2937, inf
    %v4108 = vsel %vm4092, %v2941, inf
    %v4109 = vsel %vm4093, %v2945, inf
    %v4110 = vsel %vm4094, %v2949, inf
    %v4111 = vmin.f32 %v4095, %v4099
    %v4112 = vmin.f32 %v4096, %v4100
    %v4113 = vmin.f32 %v4097, %v4101
    %v4114 = vmin.f32 %v4098, %v4102
    %v4115 = vmin.f32 %v4111, %v4103
    %v4116 = vmin.f32 %v4112, %v4104
    %v4117 = vmin.f32 %v4113, %v4105
    %v4118 = vmin.f32 %v4114, %v4106
    %v4119 = vmin.f32 %v4115, %v4107
    %v4120 = vmin.f32 %v4116, %v4108
    %v4121 = vmin.f32 %v4117, %v4109
    %v4122 = vmin.f32 %v4118, %v4110
    %v4123 = vmin.f32 %v4119, %v4120
    %v4124 = vmin.f32 %v4121, %v4122
    %v4125 = vmin.f32 %v4123, %v4124
    %v4126 = vrot.slane %v4125, 4
    %v4127 = vmin.f32 %v4125, %v4126
    %v4128 = vrot.slane %v4127, 2
    %v4129 = vmin.f32 %v4127, %v4128
    %v4130 = vrot.slane %v4129, 1
    %v4131 = vmin.f32 %v4129, %v4130
    %v4132 = vmul.f32 %v4131, %v86
    %v4133 = vmax.f32 %v4132, 0.0
    %vm4134 = vcmp.ge.f32.partialorder %v3678, %v1825
    %vm4135 = vcmp.ge.f32.partialorder %v3681, %v1825
    %vm4136 = vcmp.ge.f32.partialorder %v3686, %v1825
    %vm4137 = vcmp.ge.f32.partialorder %v3689, %v1825
    %vm4138 = vcmp.ge.f32.partialorder %v3694, %v1825
    %vm4139 = vcmp.ge.f32.partialorder %v3697, %v1825
    %vm4140 = vcmp.ge.f32.partialorder %v3702, %v1825
    %vm4141 = vcmp.ge.f32.partialorder %v3705, %v1825
    %vm4142 = vcmp.ge.f32.partialorder %v3710, %v1825
    %vm4143 = vcmp.ge.f32.partialorder %v3713, %v1825
    %vm4144 = vcmp.ge.f32.partialorder %v3718, %v1825
    %vm4145 = vcmp.ge.f32.partialorder %v3721, %v1825
    %vm4146 = vcmp.ge.f32.partialorder %v3726, %v1825
    %vm4147 = vcmp.ge.f32.partialorder %v3729, %v1825
    %vm4148 = vcmp.ge.f32.partialorder %v3734, %v1825
    %vm4149 = vcmp.ge.f32.partialorder %v3737, %v1825
    %v4150 = vsel %vm4134, %v3013, inf
    %v4151 = vsel %vm4135, %v3017, inf
    %v4152 = vsel %vm4136, %v3021, inf
    %v4153 = vsel %vm4137, %v3025, inf
    %v4154 = vsel %vm4138, %v3029, inf
    %v4155 = vsel %vm4139, %v3033, inf
    %v4156 = vsel %vm4140, %v3037, inf
    %v4157 = vsel %vm4141, %v3041, inf
    %v4158 = vsel %vm4142, %v3045, inf
    %v4159 = vsel %vm4143, %v3049, inf
    %v4160 = vsel %vm4144, %v3053, inf
    %v4161 = vsel %vm4145, %v3057, inf
    %v4162 = vsel %vm4146, %v3061, inf
    %v4163 = vsel %vm4147, %v3065, inf
    %v4164 = vsel %vm4148, %v3069, inf
    %v4165 = vsel %vm4149, %v3073, inf
    %v4166 = vmin.f32 %v4150, %v4154
    %v4167 = vmin.f32 %v4151, %v4155
    %v4168 = vmin.f32 %v4152, %v4156
    %v4169 = vmin.f32 %v4153, %v4157
    %v4170 = vmin.f32 %v4166, %v4158
    %v4171 = vmin.f32 %v4167, %v4159
    %v4172 = vmin.f32 %v4168, %v4160
    %v4173 = vmin.f32 %v4169, %v4161
    %v4174 = vmin.f32 %v4170, %v4162
    %v4175 = vmin.f32 %v4171, %v4163
    %v4176 = vmin.f32 %v4172, %v4164
    %v4177 = vmin.f32 %v4173, %v4165
    %v4178 = vmin.f32 %v4174, %v4175
    %v4179 = vmin.f32 %v4176, %v4177
    %v4180 = vmin.f32 %v4178, %v4179
    %v4181 = vrot.slane %v4180, 4
    %v4182 = vmin.f32 %v4180, %v4181
    %v4183 = vrot.slane %v4182, 2
    %v4184 = vmin.f32 %v4182, %v4183
    %v4185 = vrot.slane %v4184, 1
    %v4186 = vmin.f32 %v4184, %v4185
    %v4187 = vmul.f32 %v4186, %v86
    %v4188 = vmax.f32 %v4187, 0.0
    %vm4189 = vcmp.ge.f32.partialorder %v3742, %v1825
    %vm4190 = vcmp.ge.f32.partialorder %v3745, %v1825
    %vm4191 = vcmp.ge.f32.partialorder %v3750, %v1825
    %vm4192 = vcmp.ge.f32.partialorder %v3753, %v1825
    %vm4193 = vcmp.ge.f32.partialorder %v3758, %v1825
    %vm4194 = vcmp.ge.f32.partialorder %v3761, %v1825
    %vm4195 = vcmp.ge.f32.partialorder %v3766, %v1825
    %vm4196 = vcmp.ge.f32.partialorder %v3769, %v1825
    %vm4197 = vcmp.ge.f32.partialorder %v3774, %v1825
    %vm4198 = vcmp.ge.f32.partialorder %v3777, %v1825
    %vm4199 = vcmp.ge.f32.partialorder %v3782, %v1825
    %vm4200 = vcmp.ge.f32.partialorder %v3785, %v1825
    %vm4201 = vcmp.ge.f32.partialorder %v3790, %v1825
    %vm4202 = vcmp.ge.f32.partialorder %v3793, %v1825
    %vm4203 = vcmp.ge.f32.partialorder %v3798, %v1825
    %vm4204 = vcmp.ge.f32.partialorder %v3801, %v1825
    %v4205 = vsel %vm4189, %v3137, inf
    %v4206 = vsel %vm4190, %v3141, inf
    %v4207 = vsel %vm4191, %v3145, inf
    %v4208 = vsel %vm4192, %v3149, inf
    %v4209 = vsel %vm4193, %v3153, inf
    %v4210 = vsel %vm4194, %v3157, inf
    %v4211 = vsel %vm4195, %v3161, inf
    %v4212 = vsel %vm4196, %v3165, inf
    %v4213 = vsel %vm4197, %v3169, inf
    %v4214 = vsel %vm4198, %v3173, inf
    %v4215 = vsel %vm4199, %v3177, inf
    %v4216 = vsel %vm4200, %v3181, inf
    %v4217 = vsel %vm4201, %v3185, inf
    %v4218 = vsel %vm4202, %v3189, inf
    %v4219 = vsel %vm4203, %v3193, inf
    %v4220 = vsel %vm4204, %v3197, inf
    %v4221 = vmin.f32 %v4205, %v4209
    %v4222 = vmin.f32 %v4206, %v4210
    %v4223 = vmin.f32 %v4207, %v4211
    %v4224 = vmin.f32 %v4208, %v4212
    %v4225 = vmin.f32 %v4221, %v4213
    %v4226 = vmin.f32 %v4222, %v4214
    %v4227 = vmin.f32 %v4223, %v4215
    %v4228 = vmin.f32 %v4224, %v4216
    %v4229 = vmin.f32 %v4225, %v4217
    %v4230 = vmin.f32 %v4226, %v4218
    %v4231 = vmin.f32 %v4227, %v4219
    %v4232 = vmin.f32 %v4228, %v4220
    %v4233 = vmin.f32 %v4229, %v4230
    %v4234 = vmin.f32 %v4231, %v4232
    %v4235 = vmin.f32 %v4233, %v4234
    %v4236 = vrot.slane %v4235, 4
    %v4237 = vmin.f32 %v4235, %v4236
    %v4238 = vrot.slane %v4237, 2
    %v4239 = vmin.f32 %v4237, %v4238
    %v4240 = vrot.slane %v4239, 1
    %v4241 = vmin.f32 %v4239, %v4240
    %v4242 = vmul.f32 %v4241, %v86
    %v4243 = vmax.f32 %v4242, 0.0
    %v4245 = vrot.slane %v1936, 7
    %v4248 = vrot.slane %v1991, 6
    %v4251 = vrot.slane %v2046, 5
    %v4254 = vrot.slane %v2101, 4
    %v4257 = vrot.slane %v2156, 3
    %v4260 = vrot.slane %v2211, 2
    %v4263 = vrot.slane %v2266, 1
    %v4266 = vrot.slane %v3913, 7
    %v4269 = vrot.slane %v3968, 6
    %v4272 = vrot.slane %v4023, 5
    %v4275 = vrot.slane %v4078, 4
    %v4278 = vrot.slane %v4133, 3
    %v4281 = vrot.slane %v4188, 2
    %v4284 = vrot.slane %v4243, 1
    %vm4286 = vcmask 1040384
    %v4287 = vsel %vm4286, %v1881, %v4245
    %vm4288 = vcmask 1041408
    %v4289 = vsel %vm4288, %v4287, %v4248
    %vm4290 = vcmask 1042432
    %v4291 = vsel %vm4290, %v4289, %v4251
    %vm4292 = vcmask 1043456
    %v4293 = vsel %vm4292, %v4291, %v4254
    %vm4294 = vcmask 1044480
    %v4295 = vsel %vm4294, %v4293, %v4257
    %vm4296 = vcmask 1045504
    %v4297 = vsel %vm4296, %v4295, %v4260
    %vm4298 = vcmask 1046528
    %v4299 = vsel %vm4298, %v4297, %v4263
    %v4300 = vsel %vm4286, %v3858, %v4266
    %v4301 = vsel %vm4288, %v4300, %v4269
    %v4302 = vsel %vm4290, %v4301, %v4272
    %v4303 = vsel %vm4292, %v4302, %v4275
    %v4304 = vsel %vm4294, %v4303, %v4278
    %v4305 = vsel %vm4296, %v4304, %v4281
    %v4306 = vsel %vm4298, %v4305, %v4284
    %v4307 = vld [vmem:[%s6] sm:$0xff]
    %v4308 = vld [vmem:[%s7] sm:$0xff]
    %4310 = vset.pattern.permute.xlu0 0
    %4311 = vperm.xlu0 %4310, %v4308
    %v4312 = vpop.permute.xlu0 %4311
    %vm4314 = vcmask 130048
    %v4316 = vsel %vm4314, %v4307, 0
    %4318 = vmatprep.subr.mxu0 0.0
    %4319 = vmatpush1.msra.mxu0 %v4299
    %4320 = vmatprep.subr.mxu0 0.0
    %4321 = vmatpush1.msra.mxu0 %v4306
    %4322 = vmatprep.subr.mxu0 0.0
    %4323 = vmatpush1.msra.mxu0 0.0
    %4324 = vmatprep.subr.mxu0 0.0
    %4325 = vmatpush1.msra.mxu0 0.0
    %4326 = vmatprep.subr.mxu0 0.0
    %4327 = vmatpush1.msra.mxu0 0.0
    %4328 = vmatprep.subr.mxu0 0.0
    %4329 = vmatpush1.msra.mxu0 0.0
    %4330 = vmatprep.subr.mxu0 0.0
    %4331 = vmatpush1.msra.mxu0 0.0
    %4332 = vmatprep.subr.mxu0 0.0
    %4333 = vmatpush1.msra.mxu0 0.0
    %4334 = vmatprep.subr.mxu0 0.0
    %4335 = vmatpush1.msra.mxu0 0.0
    %4336 = vmatprep.subr.mxu0 0.0
    %4337 = vmatpush1.msra.mxu0 0.0
    %4338 = vmatprep.subr.mxu0 0.0
    %4339 = vmatpush1.msra.mxu0 0.0
    %4340 = vmatprep.subr.mxu0 0.0
    %4341 = vmatpush1.msra.mxu0 0.0
    %4342 = vmatprep.subr.mxu0 0.0
    %4343 = vmatpush1.msra.mxu0 0.0
    %4344 = vmatprep.subr.mxu0 0.0
    %4345 = vmatpush1.msra.mxu0 0.0
    %4346 = vmatprep.subr.mxu0 0.0
    %4347 = vmatpush1.msra.mxu0 0.0
    %4348 = vmatprep.subr.mxu0 0.0
    %4349 = vmatpush1.msra.mxu0 0.0
    %4350 = vmatprep.subr.mxu0 0.0
    %4351 = vmatpush1.msra.mxu0 0.0
    %4352 = vmatprep.subr.mxu0 0.0
    %4353 = vmatpush1.msra.mxu0 0.0
    %4354 = vmatprep.subr.mxu0 0.0
    %4355 = vmatpush1.msra.mxu0 0.0
    %4356 = vmatprep.subr.mxu0 0.0
    %4357 = vmatpush1.msra.mxu0 0.0
    %4358 = vmatprep.subr.mxu0 0.0
    %4359 = vmatpush1.msra.mxu0 0.0
    %4360 = vmatprep.subr.mxu0 0.0
    %4361 = vmatpush1.msra.mxu0 0.0
    %4362 = vmatprep.subr.mxu0 0.0
    %4363 = vmatpush1.msra.mxu0 0.0
    %4364 = vmatprep.subr.mxu0 0.0
    %4365 = vmatpush1.msra.mxu0 0.0
    %4366 = vmatprep.subr.mxu0 0.0
    %4367 = vmatpush1.msra.mxu0 0.0
    %4368 = vmatprep.subr.mxu0 0.0
    %4369 = vmatpush1.msra.mxu0 0.0
    %4370 = vmatprep.subr.mxu0 0.0
    %4371 = vmatpush1.msra.mxu0 0.0
    %4372 = vmatprep.subr.mxu0 0.0
    %4373 = vmatpush1.msra.mxu0 0.0
    %4374 = vmatprep.subr.mxu0 0.0
    %4375 = vmatpush1.msra.mxu0 0.0
    %4376 = vmatprep.subr.mxu0 0.0
    %4377 = vmatpush1.msra.mxu0 0.0
    %4378 = vmatprep.subr.mxu0 0.0
    %4379 = vmatpush1.msra.mxu0 0.0
    %4380 = vmatprep.subr.mxu0 0.0
    %4381 = vmatpush1.msra.mxu0 0.0
    %4382 = vmatprep.mubr.f32.mxu0 0.0
    %4383 = vmatmul.mubr.f32.gmra.mrb[0].mxu0 %v4316
    %v4384 = vpop.f32.mrb[0].mxu0
    %v4385 = vadd.f32 %v4312, %v4384
    %v4386 = vpop.f32.mrb[0].mxu0
    %4387 = vdwg.mxu0
    %4388 = vxpose.xlu0.b32.start [1/16] %v4385, 128
    %4389 = vxpose.xlu0.b32.cont [2/16] 0.0, 128
    %4390 = vxpose.xlu0.b32.cont [3/16] 0.0, 128
    %4391 = vxpose.xlu0.b32.cont [4/16] 0.0, 128
    %4392 = vxpose.xlu0.b32.cont [5/16] 0.0, 128
    %4393 = vxpose.xlu0.b32.cont [6/16] 0.0, 128
    %4394 = vxpose.xlu0.b32.cont [7/16] 0.0, 128
    %4395 = vxpose.xlu0.b32.cont [8/16] 0.0, 128
    %4396 = vxpose.xlu0.b32.cont [9/16] 0.0, 128
    %4397 = vxpose.xlu0.b32.cont [10/16] 0.0, 128
    %4398 = vxpose.xlu0.b32.cont [11/16] 0.0, 128
    %4399 = vxpose.xlu0.b32.cont [12/16] 0.0, 128
    %4400 = vxpose.xlu0.b32.cont [13/16] 0.0, 128
    %4401 = vxpose.xlu0.b32.cont [14/16] 0.0, 128
    %4402 = vxpose.xlu0.b32.cont [15/16] 0.0, 128
    %4403 = vxpose.xlu0.b32.end [16/16] 0.0, 128
    %v4404 = vpop.trf.xlu0
    %v4405 = vpop.trf.xlu0
    %v4406 = vpop.trf.xlu0
    %v4407 = vpop.trf.xlu0
    %v4408 = vpop.trf.xlu0
    %v4409 = vpop.trf.xlu0
    %v4410 = vpop.trf.xlu0
    %v4411 = vpop.trf.xlu0
    %v4412 = vpop.trf.xlu0
    %v4413 = vpop.trf.xlu0
    %v4414 = vpop.trf.xlu0
    %v4415 = vpop.trf.xlu0
    %v4416 = vpop.trf.xlu0
    %v4417 = vpop.trf.xlu0
    %v4418 = vpop.trf.xlu0
    %v4419 = vpop.trf.xlu0
    %4421 = vset.pattern.permute.xlu0 0
    %4422 = vperm.xlu0 %4421, %v4404
    %v4423 = vpop.permute.xlu0 %4422
    %4426 = vset.pattern.permute.xlu0 0
    %4427 = vperm.xlu0 %4426, %v4405
    %v4428 = vpop.permute.xlu0 %4427
    %4431 = vset.pattern.permute.xlu0 0
    %4432 = vperm.xlu0 %4431, %v4406
    %v4433 = vpop.permute.xlu0 %4432
    %4436 = vset.pattern.permute.xlu0 0
    %4437 = vperm.xlu0 %4436, %v4407
    %v4438 = vpop.permute.xlu0 %4437
    %4441 = vset.pattern.permute.xlu0 0
    %4442 = vperm.xlu0 %4441, %v4408
    %v4443 = vpop.permute.xlu0 %4442
    %4446 = vset.pattern.permute.xlu0 0
    %4447 = vperm.xlu0 %4446, %v4409
    %v4448 = vpop.permute.xlu0 %4447
    %4451 = vset.pattern.permute.xlu0 0
    %4452 = vperm.xlu0 %4451, %v4410
    %v4453 = vpop.permute.xlu0 %4452
    %4456 = vset.pattern.permute.xlu0 0
    %4457 = vperm.xlu0 %4456, %v4411
    %v4458 = vpop.permute.xlu0 %4457
    %4461 = vset.pattern.permute.xlu0 0
    %4462 = vperm.xlu0 %4461, %v4412
    %v4463 = vpop.permute.xlu0 %4462
    %4466 = vset.pattern.permute.xlu0 0
    %4467 = vperm.xlu0 %4466, %v4413
    %v4468 = vpop.permute.xlu0 %4467
    %4471 = vset.pattern.permute.xlu0 0
    %4472 = vperm.xlu0 %4471, %v4414
    %v4473 = vpop.permute.xlu0 %4472
    %4476 = vset.pattern.permute.xlu0 0
    %4477 = vperm.xlu0 %4476, %v4415
    %v4478 = vpop.permute.xlu0 %4477
    %4481 = vset.pattern.permute.xlu0 0
    %4482 = vperm.xlu0 %4481, %v4416
    %v4483 = vpop.permute.xlu0 %4482
    %4486 = vset.pattern.permute.xlu0 0
    %4487 = vperm.xlu0 %4486, %v4417
    %v4488 = vpop.permute.xlu0 %4487
    %4491 = vset.pattern.permute.xlu0 0
    %4492 = vperm.xlu0 %4491, %v4418
    %v4493 = vpop.permute.xlu0 %4492
    %4496 = vset.pattern.permute.xlu0 0
    %4497 = vperm.xlu0 %4496, %v4419
    %v4498 = vpop.permute.xlu0 %4497
    %v4500 = vlaneseq
    %v4501 = vshrl.u32 %v4500, 7
    %v4502 = vsub.s32 0, %v4501
    %v4503 = vrot.slane %v4385, %v4502
    %vm4504 = vcmp.le.f32.partialorder %v4503, %v4423
    %vm4505 = vcmp.le.f32.partialorder %v4503, %v4428
    %vm4506 = vcmp.le.f32.partialorder %v4503, %v4433
    %vm4507 = vcmp.le.f32.partialorder %v4503, %v4438
    %vm4508 = vcmp.le.f32.partialorder %v4503, %v4443
    %vm4509 = vcmp.le.f32.partialorder %v4503, %v4448
    %vm4510 = vcmp.le.f32.partialorder %v4503, %v4453
    %vm4511 = vcmp.le.f32.partialorder %v4503, %v4458
    %vm4512 = vcmp.le.f32.partialorder %v4503, %v4463
    %vm4513 = vcmp.le.f32.partialorder %v4503, %v4468
    %vm4514 = vcmp.le.f32.partialorder %v4503, %v4473
    %vm4515 = vcmp.le.f32.partialorder %v4503, %v4478
    %vm4516 = vcmp.le.f32.partialorder %v4503, %v4483
    %vm4517 = vcmp.le.f32.partialorder %v4503, %v4488
    %vm4518 = vcmp.le.f32.partialorder %v4503, %v4493
    %vm4519 = vcmp.le.f32.partialorder %v4503, %v4498
    %v4520 = vsel %vm4504, 1, 0
    %v4521 = vsel %vm4505, 1, 0
    %v4522 = vsel %vm4506, 1, 0
    %v4523 = vsel %vm4507, 1, 0
    %v4524 = vsel %vm4508, 1, 0
    %v4525 = vsel %vm4509, 1, 0
    %v4526 = vsel %vm4510, 1, 0
    %v4527 = vsel %vm4511, 1, 0
    %v4528 = vsel %vm4512, 1, 0
    %v4529 = vsel %vm4513, 1, 0
    %v4530 = vsel %vm4514, 1, 0
    %v4531 = vsel %vm4515, 1, 0
    %v4532 = vsel %vm4516, 1, 0
    %v4533 = vsel %vm4517, 1, 0
    %v4534 = vsel %vm4518, 1, 0
    %v4535 = vsel %vm4519, 1, 0
    %v4536 = vcvt.s32.f32 %v4520
    %v4537 = vcvt.s32.f32 %v4521
    %v4538 = vcvt.s32.f32 %v4522
    %v4539 = vcvt.s32.f32 %v4523
    %v4540 = vcvt.s32.f32 %v4524
    %v4541 = vcvt.s32.f32 %v4525
    %v4542 = vcvt.s32.f32 %v4526
    %v4543 = vcvt.s32.f32 %v4527
    %v4544 = vcvt.s32.f32 %v4528
    %v4545 = vcvt.s32.f32 %v4529
    %v4546 = vcvt.s32.f32 %v4530
    %v4547 = vcvt.s32.f32 %v4531
    %v4548 = vcvt.s32.f32 %v4532
    %v4549 = vcvt.s32.f32 %v4533
    %v4550 = vcvt.s32.f32 %v4534
    %v4551 = vcvt.s32.f32 %v4535
    %v4552 = vpack.c.bf16 %v4537, %v4536
    %v4553 = vpack.c.bf16 %v4539, %v4538
    %v4554 = vpack.c.bf16 %v4541, %v4540
    %v4555 = vpack.c.bf16 %v4543, %v4542
    %v4556 = vpack.c.bf16 %v4545, %v4544
    %v4557 = vpack.c.bf16 %v4547, %v4546
    %v4558 = vpack.c.bf16 %v4549, %v4548
    %v4559 = vpack.c.bf16 %v4551, %v4550
    %4560 = vset.pattern.permute.xlu0 1
    %4561 = vperm.xlu0 %4560, %v4404
    %v4562 = vpop.permute.xlu0 %4561
    %4564 = vset.pattern.permute.xlu0 1
    %4565 = vperm.xlu0 %4564, %v4405
    %v4566 = vpop.permute.xlu0 %4565
    %4568 = vset.pattern.permute.xlu0 1
    %4569 = vperm.xlu0 %4568, %v4406
    %v4570 = vpop.permute.xlu0 %4569
    %4572 = vset.pattern.permute.xlu0 1
    %4573 = vperm.xlu0 %4572, %v4407
    %v4574 = vpop.permute.xlu0 %4573
    %4576 = vset.pattern.permute.xlu0 1
    %4577 = vperm.xlu0 %4576, %v4408
    %v4578 = vpop.permute.xlu0 %4577
    %4580 = vset.pattern.permute.xlu0 1
    %4581 = vperm.xlu0 %4580, %v4409
    %v4582 = vpop.permute.xlu0 %4581
    %4584 = vset.pattern.permute.xlu0 1
    %4585 = vperm.xlu0 %4584, %v4410
    %v4586 = vpop.permute.xlu0 %4585
    %4588 = vset.pattern.permute.xlu0 1
    %4589 = vperm.xlu0 %4588, %v4411
    %v4590 = vpop.permute.xlu0 %4589
    %4592 = vset.pattern.permute.xlu0 1
    %4593 = vperm.xlu0 %4592, %v4412
    %v4594 = vpop.permute.xlu0 %4593
    %4596 = vset.pattern.permute.xlu0 1
    %4597 = vperm.xlu0 %4596, %v4413
    %v4598 = vpop.permute.xlu0 %4597
    %4600 = vset.pattern.permute.xlu0 1
    %4601 = vperm.xlu0 %4600, %v4414
    %v4602 = vpop.permute.xlu0 %4601
    %4604 = vset.pattern.permute.xlu0 1
    %4605 = vperm.xlu0 %4604, %v4415
    %v4606 = vpop.permute.xlu0 %4605
    %4608 = vset.pattern.permute.xlu0 1
    %4609 = vperm.xlu0 %4608, %v4416
    %v4610 = vpop.permute.xlu0 %4609
    %4612 = vset.pattern.permute.xlu0 1
    %4613 = vperm.xlu0 %4612, %v4417
    %v4614 = vpop.permute.xlu0 %4613
    %4616 = vset.pattern.permute.xlu0 1
    %4617 = vperm.xlu0 %4616, %v4418
    %v4618 = vpop.permute.xlu0 %4617
    %4620 = vset.pattern.permute.xlu0 1
    %4621 = vperm.xlu0 %4620, %v4419
    %v4622 = vpop.permute.xlu0 %4621
    %v4624 = vlaneseq
    %v4625 = vshrl.u32 %v4624, 7
    %v4626 = vsub.s32 1, %v4625
    %v4627 = vrot.slane %v4385, %v4626
    %vm4628 = vcmp.le.f32.partialorder %v4627, %v4562
    %vm4629 = vcmp.le.f32.partialorder %v4627, %v4566
    %vm4630 = vcmp.le.f32.partialorder %v4627, %v4570
    %vm4631 = vcmp.le.f32.partialorder %v4627, %v4574
    %vm4632 = vcmp.le.f32.partialorder %v4627, %v4578
    %vm4633 = vcmp.le.f32.partialorder %v4627, %v4582
    %vm4634 = vcmp.le.f32.partialorder %v4627, %v4586
    %vm4635 = vcmp.le.f32.partialorder %v4627, %v4590
    %vm4636 = vcmp.le.f32.partialorder %v4627, %v4594
    %vm4637 = vcmp.le.f32.partialorder %v4627, %v4598
    %vm4638 = vcmp.le.f32.partialorder %v4627, %v4602
    %vm4639 = vcmp.le.f32.partialorder %v4627, %v4606
    %vm4640 = vcmp.le.f32.partialorder %v4627, %v4610
    %vm4641 = vcmp.le.f32.partialorder %v4627, %v4614
    %vm4642 = vcmp.le.f32.partialorder %v4627, %v4618
    %vm4643 = vcmp.le.f32.partialorder %v4627, %v4622
    %v4644 = vsel %vm4628, 1, 0
    %v4645 = vsel %vm4629, 1, 0
    %v4646 = vsel %vm4630, 1, 0
    %v4647 = vsel %vm4631, 1, 0
    %v4648 = vsel %vm4632, 1, 0
    %v4649 = vsel %vm4633, 1, 0
    %v4650 = vsel %vm4634, 1, 0
    %v4651 = vsel %vm4635, 1, 0
    %v4652 = vsel %vm4636, 1, 0
    %v4653 = vsel %vm4637, 1, 0
    %v4654 = vsel %vm4638, 1, 0
    %v4655 = vsel %vm4639, 1, 0
    %v4656 = vsel %vm4640, 1, 0
    %v4657 = vsel %vm4641, 1, 0
    %v4658 = vsel %vm4642, 1, 0
    %v4659 = vsel %vm4643, 1, 0
    %v4660 = vcvt.s32.f32 %v4644
    %v4661 = vcvt.s32.f32 %v4645
    %v4662 = vcvt.s32.f32 %v4646
    %v4663 = vcvt.s32.f32 %v4647
    %v4664 = vcvt.s32.f32 %v4648
    %v4665 = vcvt.s32.f32 %v4649
    %v4666 = vcvt.s32.f32 %v4650
    %v4667 = vcvt.s32.f32 %v4651
    %v4668 = vcvt.s32.f32 %v4652
    %v4669 = vcvt.s32.f32 %v4653
    %v4670 = vcvt.s32.f32 %v4654
    %v4671 = vcvt.s32.f32 %v4655
    %v4672 = vcvt.s32.f32 %v4656
    %v4673 = vcvt.s32.f32 %v4657
    %v4674 = vcvt.s32.f32 %v4658
    %v4675 = vcvt.s32.f32 %v4659
    %v4676 = vpack.c.bf16 %v4661, %v4660
    %v4677 = vpack.c.bf16 %v4663, %v4662
    %v4678 = vpack.c.bf16 %v4665, %v4664
    %v4679 = vpack.c.bf16 %v4667, %v4666
    %v4680 = vpack.c.bf16 %v4669, %v4668
    %v4681 = vpack.c.bf16 %v4671, %v4670
    %v4682 = vpack.c.bf16 %v4673, %v4672
    %v4683 = vpack.c.bf16 %v4675, %v4674
    %4684 = vset.pattern.permute.xlu0 2
    %4685 = vperm.xlu0 %4684, %v4404
    %v4686 = vpop.permute.xlu0 %4685
    %4688 = vset.pattern.permute.xlu0 2
    %4689 = vperm.xlu0 %4688, %v4405
    %v4690 = vpop.permute.xlu0 %4689
    %4692 = vset.pattern.permute.xlu0 2
    %4693 = vperm.xlu0 %4692, %v4406
    %v4694 = vpop.permute.xlu0 %4693
    %4696 = vset.pattern.permute.xlu0 2
    %4697 = vperm.xlu0 %4696, %v4407
    %v4698 = vpop.permute.xlu0 %4697
    %4700 = vset.pattern.permute.xlu0 2
    %4701 = vperm.xlu0 %4700, %v4408
    %v4702 = vpop.permute.xlu0 %4701
    %4704 = vset.pattern.permute.xlu0 2
    %4705 = vperm.xlu0 %4704, %v4409
    %v4706 = vpop.permute.xlu0 %4705
    %4708 = vset.pattern.permute.xlu0 2
    %4709 = vperm.xlu0 %4708, %v4410
    %v4710 = vpop.permute.xlu0 %4709
    %4712 = vset.pattern.permute.xlu0 2
    %4713 = vperm.xlu0 %4712, %v4411
    %v4714 = vpop.permute.xlu0 %4713
    %4716 = vset.pattern.permute.xlu0 2
    %4717 = vperm.xlu0 %4716, %v4412
    %v4718 = vpop.permute.xlu0 %4717
    %4720 = vset.pattern.permute.xlu0 2
    %4721 = vperm.xlu0 %4720, %v4413
    %v4722 = vpop.permute.xlu0 %4721
    %4724 = vset.pattern.permute.xlu0 2
    %4725 = vperm.xlu0 %4724, %v4414
    %v4726 = vpop.permute.xlu0 %4725
    %4728 = vset.pattern.permute.xlu0 2
    %4729 = vperm.xlu0 %4728, %v4415
    %v4730 = vpop.permute.xlu0 %4729
    %4732 = vset.pattern.permute.xlu0 2
    %4733 = vperm.xlu0 %4732, %v4416
    %v4734 = vpop.permute.xlu0 %4733
    %4736 = vset.pattern.permute.xlu0 2
    %4737 = vperm.xlu0 %4736, %v4417
    %v4738 = vpop.permute.xlu0 %4737
    %4740 = vset.pattern.permute.xlu0 2
    %4741 = vperm.xlu0 %4740, %v4418
    %v4742 = vpop.permute.xlu0 %4741
    %4744 = vset.pattern.permute.xlu0 2
    %4745 = vperm.xlu0 %4744, %v4419
    %v4746 = vpop.permute.xlu0 %4745
    %v4748 = vlaneseq
    %v4749 = vshrl.u32 %v4748, 7
    %v4750 = vsub.s32 2, %v4749
    %v4751 = vrot.slane %v4385, %v4750
    %vm4752 = vcmp.le.f32.partialorder %v4751, %v4686
    %vm4753 = vcmp.le.f32.partialorder %v4751, %v4690
    %vm4754 = vcmp.le.f32.partialorder %v4751, %v4694
    %vm4755 = vcmp.le.f32.partialorder %v4751, %v4698
    %vm4756 = vcmp.le.f32.partialorder %v4751, %v4702
    %vm4757 = vcmp.le.f32.partialorder %v4751, %v4706
    %vm4758 = vcmp.le.f32.partialorder %v4751, %v4710
    %vm4759 = vcmp.le.f32.partialorder %v4751, %v4714
    %vm4760 = vcmp.le.f32.partialorder %v4751, %v4718
    %vm4761 = vcmp.le.f32.partialorder %v4751, %v4722
    %vm4762 = vcmp.le.f32.partialorder %v4751, %v4726
    %vm4763 = vcmp.le.f32.partialorder %v4751, %v4730
    %vm4764 = vcmp.le.f32.partialorder %v4751, %v4734
    %vm4765 = vcmp.le.f32.partialorder %v4751, %v4738
    %vm4766 = vcmp.le.f32.partialorder %v4751, %v4742
    %vm4767 = vcmp.le.f32.partialorder %v4751, %v4746
    %v4768 = vsel %vm4752, 1, 0
    %v4769 = vsel %vm4753, 1, 0
    %v4770 = vsel %vm4754, 1, 0
    %v4771 = vsel %vm4755, 1, 0
    %v4772 = vsel %vm4756, 1, 0
    %v4773 = vsel %vm4757, 1, 0
    %v4774 = vsel %vm4758, 1, 0
    %v4775 = vsel %vm4759, 1, 0
    %v4776 = vsel %vm4760, 1, 0
    %v4777 = vsel %vm4761, 1, 0
    %v4778 = vsel %vm4762, 1, 0
    %v4779 = vsel %vm4763, 1, 0
    %v4780 = vsel %vm4764, 1, 0
    %v4781 = vsel %vm4765, 1, 0
    %v4782 = vsel %vm4766, 1, 0
    %v4783 = vsel %vm4767, 1, 0
    %v4784 = vcvt.s32.f32 %v4768
    %v4785 = vcvt.s32.f32 %v4769
    %v4786 = vcvt.s32.f32 %v4770
    %v4787 = vcvt.s32.f32 %v4771
    %v4788 = vcvt.s32.f32 %v4772
    %v4789 = vcvt.s32.f32 %v4773
    %v4790 = vcvt.s32.f32 %v4774
    %v4791 = vcvt.s32.f32 %v4775
    %v4792 = vcvt.s32.f32 %v4776
    %v4793 = vcvt.s32.f32 %v4777
    %v4794 = vcvt.s32.f32 %v4778
    %v4795 = vcvt.s32.f32 %v4779
    %v4796 = vcvt.s32.f32 %v4780
    %v4797 = vcvt.s32.f32 %v4781
    %v4798 = vcvt.s32.f32 %v4782
    %v4799 = vcvt.s32.f32 %v4783
    %v4800 = vpack.c.bf16 %v4785, %v4784
    %v4801 = vpack.c.bf16 %v4787, %v4786
    %v4802 = vpack.c.bf16 %v4789, %v4788
    %v4803 = vpack.c.bf16 %v4791, %v4790
    %v4804 = vpack.c.bf16 %v4793, %v4792
    %v4805 = vpack.c.bf16 %v4795, %v4794
    %v4806 = vpack.c.bf16 %v4797, %v4796
    %v4807 = vpack.c.bf16 %v4799, %v4798
    %4808 = vset.pattern.permute.xlu0 3
    %4809 = vperm.xlu0 %4808, %v4404
    %v4810 = vpop.permute.xlu0 %4809
    %4812 = vset.pattern.permute.xlu0 3
    %4813 = vperm.xlu0 %4812, %v4405
    %v4814 = vpop.permute.xlu0 %4813
    %4816 = vset.pattern.permute.xlu0 3
    %4817 = vperm.xlu0 %4816, %v4406
    %v4818 = vpop.permute.xlu0 %4817
    %4820 = vset.pattern.permute.xlu0 3
    %4821 = vperm.xlu0 %4820, %v4407
    %v4822 = vpop.permute.xlu0 %4821
    %4824 = vset.pattern.permute.xlu0 3
    %4825 = vperm.xlu0 %4824, %v4408
    %v4826 = vpop.permute.xlu0 %4825
    %4828 = vset.pattern.permute.xlu0 3
    %4829 = vperm.xlu0 %4828, %v4409
    %v4830 = vpop.permute.xlu0 %4829
    %4832 = vset.pattern.permute.xlu0 3
    %4833 = vperm.xlu0 %4832, %v4410
    %v4834 = vpop.permute.xlu0 %4833
    %4836 = vset.pattern.permute.xlu0 3
    %4837 = vperm.xlu0 %4836, %v4411
    %v4838 = vpop.permute.xlu0 %4837
    %4840 = vset.pattern.permute.xlu0 3
    %4841 = vperm.xlu0 %4840, %v4412
    %v4842 = vpop.permute.xlu0 %4841
    %4844 = vset.pattern.permute.xlu0 3
    %4845 = vperm.xlu0 %4844, %v4413
    %v4846 = vpop.permute.xlu0 %4845
    %4848 = vset.pattern.permute.xlu0 3
    %4849 = vperm.xlu0 %4848, %v4414
    %v4850 = vpop.permute.xlu0 %4849
    %4852 = vset.pattern.permute.xlu0 3
    %4853 = vperm.xlu0 %4852, %v4415
    %v4854 = vpop.permute.xlu0 %4853
    %4856 = vset.pattern.permute.xlu0 3
    %4857 = vperm.xlu0 %4856, %v4416
    %v4858 = vpop.permute.xlu0 %4857
    %4860 = vset.pattern.permute.xlu0 3
    %4861 = vperm.xlu0 %4860, %v4417
    %v4862 = vpop.permute.xlu0 %4861
    %4864 = vset.pattern.permute.xlu0 3
    %4865 = vperm.xlu0 %4864, %v4418
    %v4866 = vpop.permute.xlu0 %4865
    %4868 = vset.pattern.permute.xlu0 3
    %4869 = vperm.xlu0 %4868, %v4419
    %v4870 = vpop.permute.xlu0 %4869
    %v4872 = vlaneseq
    %v4873 = vshrl.u32 %v4872, 7
    %v4874 = vsub.s32 3, %v4873
    %v4875 = vrot.slane %v4385, %v4874
    %vm4876 = vcmp.le.f32.partialorder %v4875, %v4810
    %vm4877 = vcmp.le.f32.partialorder %v4875, %v4814
    %vm4878 = vcmp.le.f32.partialorder %v4875, %v4818
    %vm4879 = vcmp.le.f32.partialorder %v4875, %v4822
    %vm4880 = vcmp.le.f32.partialorder %v4875, %v4826
    %vm4881 = vcmp.le.f32.partialorder %v4875, %v4830
    %vm4882 = vcmp.le.f32.partialorder %v4875, %v4834
    %vm4883 = vcmp.le.f32.partialorder %v4875, %v4838
    %vm4884 = vcmp.le.f32.partialorder %v4875, %v4842
    %vm4885 = vcmp.le.f32.partialorder %v4875, %v4846
    %vm4886 = vcmp.le.f32.partialorder %v4875, %v4850
    %vm4887 = vcmp.le.f32.partialorder %v4875, %v4854
    %vm4888 = vcmp.le.f32.partialorder %v4875, %v4858
    %vm4889 = vcmp.le.f32.partialorder %v4875, %v4862
    %vm4890 = vcmp.le.f32.partialorder %v4875, %v4866
    %vm4891 = vcmp.le.f32.partialorder %v4875, %v4870
    %v4892 = vsel %vm4876, 1, 0
    %v4893 = vsel %vm4877, 1, 0
    %v4894 = vsel %vm4878, 1, 0
    %v4895 = vsel %vm4879, 1, 0
    %v4896 = vsel %vm4880, 1, 0
    %v4897 = vsel %vm4881, 1, 0
    %v4898 = vsel %vm4882, 1, 0
    %v4899 = vsel %vm4883, 1, 0
    %v4900 = vsel %vm4884, 1, 0
    %v4901 = vsel %vm4885, 1, 0
    %v4902 = vsel %vm4886, 1, 0
    %v4903 = vsel %vm4887, 1, 0
    %v4904 = vsel %vm4888, 1, 0
    %v4905 = vsel %vm4889, 1, 0
    %v4906 = vsel %vm4890, 1, 0
    %v4907 = vsel %vm4891, 1, 0
    %v4908 = vcvt.s32.f32 %v4892
    %v4909 = vcvt.s32.f32 %v4893
    %v4910 = vcvt.s32.f32 %v4894
    %v4911 = vcvt.s32.f32 %v4895
    %v4912 = vcvt.s32.f32 %v4896
    %v4913 = vcvt.s32.f32 %v4897
    %v4914 = vcvt.s32.f32 %v4898
    %v4915 = vcvt.s32.f32 %v4899
    %v4916 = vcvt.s32.f32 %v4900
    %v4917 = vcvt.s32.f32 %v4901
    %v4918 = vcvt.s32.f32 %v4902
    %v4919 = vcvt.s32.f32 %v4903
    %v4920 = vcvt.s32.f32 %v4904
    %v4921 = vcvt.s32.f32 %v4905
    %v4922 = vcvt.s32.f32 %v4906
    %v4923 = vcvt.s32.f32 %v4907
    %v4924 = vpack.c.bf16 %v4909, %v4908
    %v4925 = vpack.c.bf16 %v4911, %v4910
    %v4926 = vpack.c.bf16 %v4913, %v4912
    %v4927 = vpack.c.bf16 %v4915, %v4914
    %v4928 = vpack.c.bf16 %v4917, %v4916
    %v4929 = vpack.c.bf16 %v4919, %v4918
    %v4930 = vpack.c.bf16 %v4921, %v4920
    %v4931 = vpack.c.bf16 %v4923, %v4922
    %4932 = vset.pattern.permute.xlu0 4
    %4933 = vperm.xlu0 %4932, %v4404
    %v4934 = vpop.permute.xlu0 %4933
    %4936 = vset.pattern.permute.xlu0 4
    %4937 = vperm.xlu0 %4936, %v4405
    %v4938 = vpop.permute.xlu0 %4937
    %4940 = vset.pattern.permute.xlu0 4
    %4941 = vperm.xlu0 %4940, %v4406
    %v4942 = vpop.permute.xlu0 %4941
    %4944 = vset.pattern.permute.xlu0 4
    %4945 = vperm.xlu0 %4944, %v4407
    %v4946 = vpop.permute.xlu0 %4945
    %4948 = vset.pattern.permute.xlu0 4
    %4949 = vperm.xlu0 %4948, %v4408
    %v4950 = vpop.permute.xlu0 %4949
    %4952 = vset.pattern.permute.xlu0 4
    %4953 = vperm.xlu0 %4952, %v4409
    %v4954 = vpop.permute.xlu0 %4953
    %4956 = vset.pattern.permute.xlu0 4
    %4957 = vperm.xlu0 %4956, %v4410
    %v4958 = vpop.permute.xlu0 %4957
    %4960 = vset.pattern.permute.xlu0 4
    %4961 = vperm.xlu0 %4960, %v4411
    %v4962 = vpop.permute.xlu0 %4961
    %4964 = vset.pattern.permute.xlu0 4
    %4965 = vperm.xlu0 %4964, %v4412
    %v4966 = vpop.permute.xlu0 %4965
    %4968 = vset.pattern.permute.xlu0 4
    %4969 = vperm.xlu0 %4968, %v4413
    %v4970 = vpop.permute.xlu0 %4969
    %4972 = vset.pattern.permute.xlu0 4
    %4973 = vperm.xlu0 %4972, %v4414
    %v4974 = vpop.permute.xlu0 %4973
    %4976 = vset.pattern.permute.xlu0 4
    %4977 = vperm.xlu0 %4976, %v4415
    %v4978 = vpop.permute.xlu0 %4977
    %4980 = vset.pattern.permute.xlu0 4
    %4981 = vperm.xlu0 %4980, %v4416
    %v4982 = vpop.permute.xlu0 %4981
    %4984 = vset.pattern.permute.xlu0 4
    %4985 = vperm.xlu0 %4984, %v4417
    %v4986 = vpop.permute.xlu0 %4985
    %4988 = vset.pattern.permute.xlu0 4
    %4989 = vperm.xlu0 %4988, %v4418
    %v4990 = vpop.permute.xlu0 %4989
    %4992 = vset.pattern.permute.xlu0 4
    %4993 = vperm.xlu0 %4992, %v4419
    %v4994 = vpop.permute.xlu0 %4993
    %v4996 = vlaneseq
    %v4997 = vshrl.u32 %v4996, 7
    %v4998 = vsub.s32 4, %v4997
    %v4999 = vrot.slane %v4385, %v4998
    %vm5000 = vcmp.le.f32.partialorder %v4999, %v4934
    %vm5001 = vcmp.le.f32.partialorder %v4999, %v4938
    %vm5002 = vcmp.le.f32.partialorder %v4999, %v4942
    %vm5003 = vcmp.le.f32.partialorder %v4999, %v4946
    %vm5004 = vcmp.le.f32.partialorder %v4999, %v4950
    %vm5005 = vcmp.le.f32.partialorder %v4999, %v4954
    %vm5006 = vcmp.le.f32.partialorder %v4999, %v4958
    %vm5007 = vcmp.le.f32.partialorder %v4999, %v4962
    %vm5008 = vcmp.le.f32.partialorder %v4999, %v4966
    %vm5009 = vcmp.le.f32.partialorder %v4999, %v4970
    %vm5010 = vcmp.le.f32.partialorder %v4999, %v4974
    %vm5011 = vcmp.le.f32.partialorder %v4999, %v4978
    %vm5012 = vcmp.le.f32.partialorder %v4999, %v4982
    %vm5013 = vcmp.le.f32.partialorder %v4999, %v4986
    %vm5014 = vcmp.le.f32.partialorder %v4999, %v4990
    %vm5015 = vcmp.le.f32.partialorder %v4999, %v4994
    %v5016 = vsel %vm5000, 1, 0
    %v5017 = vsel %vm5001, 1, 0
    %v5018 = vsel %vm5002, 1, 0
    %v5019 = vsel %vm5003, 1, 0
    %v5020 = vsel %vm5004, 1, 0
    %v5021 = vsel %vm5005, 1, 0
    %v5022 = vsel %vm5006, 1, 0
    %v5023 = vsel %vm5007, 1, 0
    %v5024 = vsel %vm5008, 1, 0
    %v5025 = vsel %vm5009, 1, 0
    %v5026 = vsel %vm5010, 1, 0
    %v5027 = vsel %vm5011, 1, 0
    %v5028 = vsel %vm5012, 1, 0
    %v5029 = vsel %vm5013, 1, 0
    %v5030 = vsel %vm5014, 1, 0
    %v5031 = vsel %vm5015, 1, 0
    %v5032 = vcvt.s32.f32 %v5016
    %v5033 = vcvt.s32.f32 %v5017
    %v5034 = vcvt.s32.f32 %v5018
    %v5035 = vcvt.s32.f32 %v5019
    %v5036 = vcvt.s32.f32 %v5020
    %v5037 = vcvt.s32.f32 %v5021
    %v5038 = vcvt.s32.f32 %v5022
    %v5039 = vcvt.s32.f32 %v5023
    %v5040 = vcvt.s32.f32 %v5024
    %v5041 = vcvt.s32.f32 %v5025
    %v5042 = vcvt.s32.f32 %v5026
    %v5043 = vcvt.s32.f32 %v5027
    %v5044 = vcvt.s32.f32 %v5028
    %v5045 = vcvt.s32.f32 %v5029
    %v5046 = vcvt.s32.f32 %v5030
    %v5047 = vcvt.s32.f32 %v5031
    %v5048 = vpack.c.bf16 %v5033, %v5032
    %v5049 = vpack.c.bf16 %v5035, %v5034
    %v5050 = vpack.c.bf16 %v5037, %v5036
    %v5051 = vpack.c.bf16 %v5039, %v5038
    %v5052 = vpack.c.bf16 %v5041, %v5040
    %v5053 = vpack.c.bf16 %v5043, %v5042
    %v5054 = vpack.c.bf16 %v5045, %v5044
    %v5055 = vpack.c.bf16 %v5047, %v5046
    %5056 = vset.pattern.permute.xlu0 5
    %5057 = vperm.xlu0 %5056, %v4404
    %v5058 = vpop.permute.xlu0 %5057
    %5060 = vset.pattern.permute.xlu0 5
    %5061 = vperm.xlu0 %5060, %v4405
    %v5062 = vpop.permute.xlu0 %5061
    %5064 = vset.pattern.permute.xlu0 5
    %5065 = vperm.xlu0 %5064, %v4406
    %v5066 = vpop.permute.xlu0 %5065
    %5068 = vset.pattern.permute.xlu0 5
    %5069 = vperm.xlu0 %5068, %v4407
    %v5070 = vpop.permute.xlu0 %5069
    %5072 = vset.pattern.permute.xlu0 5
    %5073 = vperm.xlu0 %5072, %v4408
    %v5074 = vpop.permute.xlu0 %5073
    %5076 = vset.pattern.permute.xlu0 5
    %5077 = vperm.xlu0 %5076, %v4409
    %v5078 = vpop.permute.xlu0 %5077
    %5080 = vset.pattern.permute.xlu0 5
    %5081 = vperm.xlu0 %5080, %v4410
    %v5082 = vpop.permute.xlu0 %5081
    %5084 = vset.pattern.permute.xlu0 5
    %5085 = vperm.xlu0 %5084, %v4411
    %v5086 = vpop.permute.xlu0 %5085
    %5088 = vset.pattern.permute.xlu0 5
    %5089 = vperm.xlu0 %5088, %v4412
    %v5090 = vpop.permute.xlu0 %5089
    %5092 = vset.pattern.permute.xlu0 5
    %5093 = vperm.xlu0 %5092, %v4413
    %v5094 = vpop.permute.xlu0 %5093
    %5096 = vset.pattern.permute.xlu0 5
    %5097 = vperm.xlu0 %5096, %v4414
    %v5098 = vpop.permute.xlu0 %5097
    %5100 = vset.pattern.permute.xlu0 5
    %5101 = vperm.xlu0 %5100, %v4415
    %v5102 = vpop.permute.xlu0 %5101
    %5104 = vset.pattern.permute.xlu0 5
    %5105 = vperm.xlu0 %5104, %v4416
    %v5106 = vpop.permute.xlu0 %5105
    %5108 = vset.pattern.permute.xlu0 5
    %5109 = vperm.xlu0 %5108, %v4417
    %v5110 = vpop.permute.xlu0 %5109
    %5112 = vset.pattern.permute.xlu0 5
    %5113 = vperm.xlu0 %5112, %v4418
    %v5114 = vpop.permute.xlu0 %5113
    %5116 = vset.pattern.permute.xlu0 5
    %5117 = vperm.xlu0 %5116, %v4419
    %v5118 = vpop.permute.xlu0 %5117
    %v5120 = vlaneseq
    %v5121 = vshrl.u32 %v5120, 7
    %v5122 = vsub.s32 5, %v5121
    %v5123 = vrot.slane %v4385, %v5122
    %vm5124 = vcmp.le.f32.partialorder %v5123, %v5058
    %vm5125 = vcmp.le.f32.partialorder %v5123, %v5062
    %vm5126 = vcmp.le.f32.partialorder %v5123, %v5066
    %vm5127 = vcmp.le.f32.partialorder %v5123, %v5070
    %vm5128 = vcmp.le.f32.partialorder %v5123, %v5074
    %vm5129 = vcmp.le.f32.partialorder %v5123, %v5078
    %vm5130 = vcmp.le.f32.partialorder %v5123, %v5082
    %vm5131 = vcmp.le.f32.partialorder %v5123, %v5086
    %vm5132 = vcmp.le.f32.partialorder %v5123, %v5090
    %vm5133 = vcmp.le.f32.partialorder %v5123, %v5094
    %vm5134 = vcmp.le.f32.partialorder %v5123, %v5098
    %vm5135 = vcmp.le.f32.partialorder %v5123, %v5102
    %vm5136 = vcmp.le.f32.partialorder %v5123, %v5106
    %vm5137 = vcmp.le.f32.partialorder %v5123, %v5110
    %vm5138 = vcmp.le.f32.partialorder %v5123, %v5114
    %vm5139 = vcmp.le.f32.partialorder %v5123, %v5118
    %v5140 = vsel %vm5124, 1, 0
    %v5141 = vsel %vm5125, 1, 0
    %v5142 = vsel %vm5126, 1, 0
    %v5143 = vsel %vm5127, 1, 0
    %v5144 = vsel %vm5128, 1, 0
    %v5145 = vsel %vm5129, 1, 0
    %v5146 = vsel %vm5130, 1, 0
    %v5147 = vsel %vm5131, 1, 0
    %v5148 = vsel %vm5132, 1, 0
    %v5149 = vsel %vm5133, 1, 0
    %v5150 = vsel %vm5134, 1, 0
    %v5151 = vsel %vm5135, 1, 0
    %v5152 = vsel %vm5136, 1, 0
    %v5153 = vsel %vm5137, 1, 0
    %v5154 = vsel %vm5138, 1, 0
    %v5155 = vsel %vm5139, 1, 0
    %v5156 = vcvt.s32.f32 %v5140
    %v5157 = vcvt.s32.f32 %v5141
    %v5158 = vcvt.s32.f32 %v5142
    %v5159 = vcvt.s32.f32 %v5143
    %v5160 = vcvt.s32.f32 %v5144
    %v5161 = vcvt.s32.f32 %v5145
    %v5162 = vcvt.s32.f32 %v5146
    %v5163 = vcvt.s32.f32 %v5147
    %v5164 = vcvt.s32.f32 %v5148
    %v5165 = vcvt.s32.f32 %v5149
    %v5166 = vcvt.s32.f32 %v5150
    %v5167 = vcvt.s32.f32 %v5151
    %v5168 = vcvt.s32.f32 %v5152
    %v5169 = vcvt.s32.f32 %v5153
    %v5170 = vcvt.s32.f32 %v5154
    %v5171 = vcvt.s32.f32 %v5155
    %v5172 = vpack.c.bf16 %v5157, %v5156
    %v5173 = vpack.c.bf16 %v5159, %v5158
    %v5174 = vpack.c.bf16 %v5161, %v5160
    %v5175 = vpack.c.bf16 %v5163, %v5162
    %v5176 = vpack.c.bf16 %v5165, %v5164
    %v5177 = vpack.c.bf16 %v5167, %v5166
    %v5178 = vpack.c.bf16 %v5169, %v5168
    %v5179 = vpack.c.bf16 %v5171, %v5170
    %5180 = vset.pattern.permute.xlu0 6
    %5181 = vperm.xlu0 %5180, %v4404
    %v5182 = vpop.permute.xlu0 %5181
    %5184 = vset.pattern.permute.xlu0 6
    %5185 = vperm.xlu0 %5184, %v4405
    %v5186 = vpop.permute.xlu0 %5185
    %5188 = vset.pattern.permute.xlu0 6
    %5189 = vperm.xlu0 %5188, %v4406
    %v5190 = vpop.permute.xlu0 %5189
    %5192 = vset.pattern.permute.xlu0 6
    %5193 = vperm.xlu0 %5192, %v4407
    %v5194 = vpop.permute.xlu0 %5193
    %5196 = vset.pattern.permute.xlu0 6
    %5197 = vperm.xlu0 %5196, %v4408
    %v5198 = vpop.permute.xlu0 %5197
    %5200 = vset.pattern.permute.xlu0 6
    %5201 = vperm.xlu0 %5200, %v4409
    %v5202 = vpop.permute.xlu0 %5201
    %5204 = vset.pattern.permute.xlu0 6
    %5205 = vperm.xlu0 %5204, %v4410
    %v5206 = vpop.permute.xlu0 %5205
    %5208 = vset.pattern.permute.xlu0 6
    %5209 = vperm.xlu0 %5208, %v4411
    %v5210 = vpop.permute.xlu0 %5209
    %5212 = vset.pattern.permute.xlu0 6
    %5213 = vperm.xlu0 %5212, %v4412
    %v5214 = vpop.permute.xlu0 %5213
    %5216 = vset.pattern.permute.xlu0 6
    %5217 = vperm.xlu0 %5216, %v4413
    %v5218 = vpop.permute.xlu0 %5217
    %5220 = vset.pattern.permute.xlu0 6
    %5221 = vperm.xlu0 %5220, %v4414
    %v5222 = vpop.permute.xlu0 %5221
    %5224 = vset.pattern.permute.xlu0 6
    %5225 = vperm.xlu0 %5224, %v4415
    %v5226 = vpop.permute.xlu0 %5225
    %5228 = vset.pattern.permute.xlu0 6
    %5229 = vperm.xlu0 %5228, %v4416
    %v5230 = vpop.permute.xlu0 %5229
    %5232 = vset.pattern.permute.xlu0 6
    %5233 = vperm.xlu0 %5232, %v4417
    %v5234 = vpop.permute.xlu0 %5233
    %5236 = vset.pattern.permute.xlu0 6
    %5237 = vperm.xlu0 %5236, %v4418
    %v5238 = vpop.permute.xlu0 %5237
    %5240 = vset.pattern.permute.xlu0 6
    %5241 = vperm.xlu0 %5240, %v4419
    %v5242 = vpop.permute.xlu0 %5241
    %v5244 = vlaneseq
    %v5245 = vshrl.u32 %v5244, 7
    %v5246 = vsub.s32 6, %v5245
    %v5247 = vrot.slane %v4385, %v5246
    %vm5248 = vcmp.le.f32.partialorder %v5247, %v5182
    %vm5249 = vcmp.le.f32.partialorder %v5247, %v5186
    %vm5250 = vcmp.le.f32.partialorder %v5247, %v5190
    %vm5251 = vcmp.le.f32.partialorder %v5247, %v5194
    %vm5252 = vcmp.le.f32.partialorder %v5247, %v5198
    %vm5253 = vcmp.le.f32.partialorder %v5247, %v5202
    %vm5254 = vcmp.le.f32.partialorder %v5247, %v5206
    %vm5255 = vcmp.le.f32.partialorder %v5247, %v5210
    %vm5256 = vcmp.le.f32.partialorder %v5247, %v5214
    %vm5257 = vcmp.le.f32.partialorder %v5247, %v5218
    %vm5258 = vcmp.le.f32.partialorder %v5247, %v5222
    %vm5259 = vcmp.le.f32.partialorder %v5247, %v5226
    %vm5260 = vcmp.le.f32.partialorder %v5247, %v5230
    %vm5261 = vcmp.le.f32.partialorder %v5247, %v5234
    %vm5262 = vcmp.le.f32.partialorder %v5247, %v5238
    %vm5263 = vcmp.le.f32.partialorder %v5247, %v5242
    %v5264 = vsel %vm5248, 1, 0
    %v5265 = vsel %vm5249, 1, 0
    %v5266 = vsel %vm5250, 1, 0
    %v5267 = vsel %vm5251, 1, 0
    %v5268 = vsel %vm5252, 1, 0
    %v5269 = vsel %vm5253, 1, 0
    %v5270 = vsel %vm5254, 1, 0
    %v5271 = vsel %vm5255, 1, 0
    %v5272 = vsel %vm5256, 1, 0
    %v5273 = vsel %vm5257, 1, 0
    %v5274 = vsel %vm5258, 1, 0
    %v5275 = vsel %vm5259, 1, 0
    %v5276 = vsel %vm5260, 1, 0
    %v5277 = vsel %vm5261, 1, 0
    %v5278 = vsel %vm5262, 1, 0
    %v5279 = vsel %vm5263, 1, 0
    %v5280 = vcvt.s32.f32 %v5264
    %v5281 = vcvt.s32.f32 %v5265
    %v5282 = vcvt.s32.f32 %v5266
    %v5283 = vcvt.s32.f32 %v5267
    %v5284 = vcvt.s32.f32 %v5268
    %v5285 = vcvt.s32.f32 %v5269
    %v5286 = vcvt.s32.f32 %v5270
    %v5287 = vcvt.s32.f32 %v5271
    %v5288 = vcvt.s32.f32 %v5272
    %v5289 = vcvt.s32.f32 %v5273
    %v5290 = vcvt.s32.f32 %v5274
    %v5291 = vcvt.s32.f32 %v5275
    %v5292 = vcvt.s32.f32 %v5276
    %v5293 = vcvt.s32.f32 %v5277
    %v5294 = vcvt.s32.f32 %v5278
    %v5295 = vcvt.s32.f32 %v5279
    %v5296 = vpack.c.bf16 %v5281, %v5280
    %v5297 = vpack.c.bf16 %v5283, %v5282
    %v5298 = vpack.c.bf16 %v5285, %v5284
    %v5299 = vpack.c.bf16 %v5287, %v5286
    %v5300 = vpack.c.bf16 %v5289, %v5288
    %v5301 = vpack.c.bf16 %v5291, %v5290
    %v5302 = vpack.c.bf16 %v5293, %v5292
    %v5303 = vpack.c.bf16 %v5295, %v5294
    %5304 = vset.pattern.permute.xlu0 7
    %5305 = vperm.xlu0 %5304, %v4404
    %v5306 = vpop.permute.xlu0 %5305
    %5308 = vset.pattern.permute.xlu0 7
    %5309 = vperm.xlu0 %5308, %v4405
    %v5310 = vpop.permute.xlu0 %5309
    %5312 = vset.pattern.permute.xlu0 7
    %5313 = vperm.xlu0 %5312, %v4406
    %v5314 = vpop.permute.xlu0 %5313
    %5316 = vset.pattern.permute.xlu0 7
    %5317 = vperm.xlu0 %5316, %v4407
    %v5318 = vpop.permute.xlu0 %5317
    %5320 = vset.pattern.permute.xlu0 7
    %5321 = vperm.xlu0 %5320, %v4408
    %v5322 = vpop.permute.xlu0 %5321
    %5324 = vset.pattern.permute.xlu0 7
    %5325 = vperm.xlu0 %5324, %v4409
    %v5326 = vpop.permute.xlu0 %5325
    %5328 = vset.pattern.permute.xlu0 7
    %5329 = vperm.xlu0 %5328, %v4410
    %v5330 = vpop.permute.xlu0 %5329
    %5332 = vset.pattern.permute.xlu0 7
    %5333 = vperm.xlu0 %5332, %v4411
    %v5334 = vpop.permute.xlu0 %5333
    %5336 = vset.pattern.permute.xlu0 7
    %5337 = vperm.xlu0 %5336, %v4412
    %v5338 = vpop.permute.xlu0 %5337
    %5340 = vset.pattern.permute.xlu0 7
    %5341 = vperm.xlu0 %5340, %v4413
    %v5342 = vpop.permute.xlu0 %5341
    %5344 = vset.pattern.permute.xlu0 7
    %5345 = vperm.xlu0 %5344, %v4414
    %v5346 = vpop.permute.xlu0 %5345
    %5348 = vset.pattern.permute.xlu0 7
    %5349 = vperm.xlu0 %5348, %v4415
    %v5350 = vpop.permute.xlu0 %5349
    %5352 = vset.pattern.permute.xlu0 7
    %5353 = vperm.xlu0 %5352, %v4416
    %v5354 = vpop.permute.xlu0 %5353
    %5356 = vset.pattern.permute.xlu0 7
    %5357 = vperm.xlu0 %5356, %v4417
    %v5358 = vpop.permute.xlu0 %5357
    %5360 = vset.pattern.permute.xlu0 7
    %5361 = vperm.xlu0 %5360, %v4418
    %v5362 = vpop.permute.xlu0 %5361
    %5364 = vset.pattern.permute.xlu0 7
    %5365 = vperm.xlu0 %5364, %v4419
    %v5366 = vpop.permute.xlu0 %5365
    %v5368 = vlaneseq
    %v5369 = vshrl.u32 %v5368, 7
    %v5370 = vsub.s32 7, %v5369
    %v5371 = vrot.slane %v4385, %v5370
    %vm5372 = vcmp.le.f32.partialorder %v5371, %v5306
    %vm5373 = vcmp.le.f32.partialorder %v5371, %v5310
    %vm5374 = vcmp.le.f32.partialorder %v5371, %v5314
    %vm5375 = vcmp.le.f32.partialorder %v5371, %v5318
    %vm5376 = vcmp.le.f32.partialorder %v5371, %v5322
    %vm5377 = vcmp.le.f32.partialorder %v5371, %v5326
    %vm5378 = vcmp.le.f32.partialorder %v5371, %v5330
    %vm5379 = vcmp.le.f32.partialorder %v5371, %v5334
    %vm5380 = vcmp.le.f32.partialorder %v5371, %v5338
    %vm5381 = vcmp.le.f32.partialorder %v5371, %v5342
    %vm5382 = vcmp.le.f32.partialorder %v5371, %v5346
    %vm5383 = vcmp.le.f32.partialorder %v5371, %v5350
    %vm5384 = vcmp.le.f32.partialorder %v5371, %v5354
    %vm5385 = vcmp.le.f32.partialorder %v5371, %v5358
    %vm5386 = vcmp.le.f32.partialorder %v5371, %v5362
    %vm5387 = vcmp.le.f32.partialorder %v5371, %v5366
    %v5388 = vsel %vm5372, 1, 0
    %v5389 = vsel %vm5373, 1, 0
    %v5390 = vsel %vm5374, 1, 0
    %v5391 = vsel %vm5375, 1, 0
    %v5392 = vsel %vm5376, 1, 0
    %v5393 = vsel %vm5377, 1, 0
    %v5394 = vsel %vm5378, 1, 0
    %v5395 = vsel %vm5379, 1, 0
    %v5396 = vsel %vm5380, 1, 0
    %v5397 = vsel %vm5381, 1, 0
    %v5398 = vsel %vm5382, 1, 0
    %v5399 = vsel %vm5383, 1, 0
    %v5400 = vsel %vm5384, 1, 0
    %v5401 = vsel %vm5385, 1, 0
    %v5402 = vsel %vm5386, 1, 0
    %v5403 = vsel %vm5387, 1, 0
    %v5404 = vcvt.s32.f32 %v5388
    %v5405 = vcvt.s32.f32 %v5389
    %v5406 = vcvt.s32.f32 %v5390
    %v5407 = vcvt.s32.f32 %v5391
    %v5408 = vcvt.s32.f32 %v5392
    %v5409 = vcvt.s32.f32 %v5393
    %v5410 = vcvt.s32.f32 %v5394
    %v5411 = vcvt.s32.f32 %v5395
    %v5412 = vcvt.s32.f32 %v5396
    %v5413 = vcvt.s32.f32 %v5397
    %v5414 = vcvt.s32.f32 %v5398
    %v5415 = vcvt.s32.f32 %v5399
    %v5416 = vcvt.s32.f32 %v5400
    %v5417 = vcvt.s32.f32 %v5401
    %v5418 = vcvt.s32.f32 %v5402
    %v5419 = vcvt.s32.f32 %v5403
    %v5420 = vpack.c.bf16 %v5405, %v5404
    %v5421 = vpack.c.bf16 %v5407, %v5406
    %v5422 = vpack.c.bf16 %v5409, %v5408
    %v5423 = vpack.c.bf16 %v5411, %v5410
    %v5424 = vpack.c.bf16 %v5413, %v5412
    %v5425 = vpack.c.bf16 %v5415, %v5414
    %v5426 = vpack.c.bf16 %v5417, %v5416
    %v5427 = vpack.c.bf16 %v5419, %v5418
    %5428 = vmatprep.subr.bf16.mxu0 0
    %5429 = vmatpush1.bf16.msra.mxu0 %v1260
    %5430 = vmatprep.subr.bf16.mxu0 0
    %5431 = vmatpush1.bf16.msra.mxu0 %v1261
    %5432 = vmatprep.subr.bf16.mxu0 0
    %5433 = vmatpush1.bf16.msra.mxu0 %v1262
    %5434 = vmatprep.subr.bf16.mxu0 0
    %5435 = vmatpush1.bf16.msra.mxu0 %v1263
    %5436 = vmatprep.subr.bf16.mxu0 0
    %5437 = vmatpush1.bf16.msra.mxu0 %v1264
    %5438 = vmatprep.subr.bf16.mxu0 0
    %5439 = vmatpush1.bf16.msra.mxu0 %v1265
    %5440 = vmatprep.subr.bf16.mxu0 0
    %5441 = vmatpush1.bf16.msra.mxu0 %v1266
    %5442 = vmatprep.subr.bf16.mxu0 0
    %5443 = vmatpush1.bf16.msra.mxu0 %v1267
    %5444 = vmatprep.subr.bf16.mxu0 0
    %5445 = vmatpush1.bf16.msra.mxu0 0
    %5446 = vmatprep.subr.bf16.mxu0 0
    %5447 = vmatpush1.bf16.msra.mxu0 0
    %5448 = vmatprep.subr.bf16.mxu0 0
    %5449 = vmatpush1.bf16.msra.mxu0 0
    %5450 = vmatprep.subr.bf16.mxu0 0
    %5451 = vmatpush1.bf16.msra.mxu0 0
    %5452 = vmatprep.subr.bf16.mxu0 0
    %5453 = vmatpush1.bf16.msra.mxu0 0
    %5454 = vmatprep.subr.bf16.mxu0 0
    %5455 = vmatpush1.bf16.msra.mxu0 0
    %5456 = vmatprep.subr.bf16.mxu0 0
    %5457 = vmatpush1.bf16.msra.mxu0 0
    %5458 = vmatprep.subr.bf16.mxu0 0
    %5459 = vmatpush1.bf16.msra.mxu0 0
    %5460 = vmatprep.mubr.bf16.mxu0 0
    %5461 = vmatmul.mubr.bf16.gmra.mrb[0].mxu0 %v4552
    %v5462 = vpop.f32.mrb[0].mxu0
    %v5463 = vadd.f32 0.0, %v5462
    %v5464 = vpop.f32.mrb[0].mxu0
    %v5465 = vpop.f32.mrb[0].mxu0
    %v5466 = vadd.f32 0.0, %v5465
    %v5467 = vpop.f32.mrb[0].mxu0
    %5468 = vmatprep.mubr.bf16.mxu0 0
    %5469 = vmatmul.mubr.bf16.gmra.mrb[0].mxu0 %v4553
    %v5470 = vpop.f32.mrb[0].mxu0
    %v5471 = vadd.f32 0.0, %v5470
    %v5472 = vpop.f32.mrb[0].mxu0
    %v5473 = vpop.f32.mrb[0].mxu0
    %v5474 = vadd.f32 0.0, %v5473
    %v5475 = vpop.f32.mrb[0].mxu0
    %5476 = vmatprep.mubr.bf16.mxu0 0
    %5477 = vmatmul.mubr.bf16.gmra.mrb[0].mxu0 %v4554
    %v5478 = vpop.f32.mrb[0].mxu0
    %v5479 = vadd.f32 0.0, %v5478
    %v5480 = vpop.f32.mrb[0].mxu0
    %v5481 = vpop.f32.mrb[0].mxu0
    %v5482 = vadd.f32 0.0, %v5481
    %v5483 = vpop.f32.mrb[0].mxu0
    %5484 = vmatprep.mubr.bf16.mxu0 0
    %5485 = vmatmul.mubr.bf16.gmra.mrb[0].mxu0 %v4555
    %v5486 = vpop.f32.mrb[0].mxu0
    %v5487 = vadd.f32 0.0, %v5486
    %v5488 = vpop.f32.mrb[0].mxu0
    %v5489 = vpop.f32.mrb[0].mxu0
    %v5490 = vadd.f32 0.0, %v5489
    %v5491 = vpop.f32.mrb[0].mxu0
    %5492 = vmatprep.mubr.bf16.mxu0 0
    %5493 = vmatmul.mubr.bf16.gmra.mrb[0].mxu0 %v4556
    %v5494 = vpop.f32.mrb[0].mxu0
    %v5495 = vadd.f32 0.0, %v5494
    %v5496 = vpop.f32.mrb[0].mxu0
    %v5497 = vpop.f32.mrb[0].mxu0
    %v5498 = vadd.f32 0.0, %v5497
    %v5499 = vpop.f32.mrb[0].mxu0
    %5500 = vmatprep.mubr.bf16.mxu0 0
    %5501 = vmatmul.mubr.bf16.gmra.mrb[0].mxu0 %v4557
    %v5502 = vpop.f32.mrb[0].mxu0
    %v5503 = vadd.f32 0.0, %v5502
    %v5504 = vpop.f32.mrb[0].mxu0
    %v5505 = vpop.f32.mrb[0].mxu0
    %v5506 = vadd.f32 0.0, %v5505
    %v5507 = vpop.f32.mrb[0].mxu0
    %5508 = vmatprep.mubr.bf16.mxu0 0
    %5509 = vmatmul.mubr.bf16.gmra.mrb[0].mxu0 %v4558
    %v5510 = vpop.f32.mrb[0].mxu0
    %v5511 = vadd.f32 0.0, %v5510
    %v5512 = vpop.f32.mrb[0].mxu0
    %v5513 = vpop.f32.mrb[0].mxu0
    %v5514 = vadd.f32 0.0, %v5513
    %v5515 = vpop.f32.mrb[0].mxu0
    %5516 = vmatprep.mubr.bf16.mxu0 0
    %5517 = vmatmul.mubr.bf16.gmra.mrb[0].mxu0 %v4559
    %v5518 = vpop.f32.mrb[0].mxu0
    %v5519 = vadd.f32 0.0, %v5518
    %v5520 = vpop.f32.mrb[0].mxu0
    %v5521 = vpop.f32.mrb[0].mxu0
    %v5522 = vadd.f32 0.0, %v5521
    %v5523 = vpop.f32.mrb[0].mxu0
    %5524 = vmatprep.mubr.bf16.mxu0 0
    %5525 = vmatmul.mubr.bf16.gmra.mrb[0].mxu0 %v4676
    %v5526 = vpop.f32.mrb[0].mxu0
    %v5527 = vadd.f32 0.0, %v5526
    %v5528 = vpop.f32.mrb[0].mxu0
    %v5529 = vpop.f32.mrb[0].mxu0
    %v5530 = vadd.f32 0.0, %v5529
    %v5531 = vpop.f32.mrb[0].mxu0
    %5532 = vmatprep.mubr.bf16.mxu0 0
    %5533 = vmatmul.mubr.bf16.gmra.mrb[0].mxu0 %v4677
    %v5534 = vpop.f32.mrb[0].mxu0
    %v5535 = vadd.f32 0.0, %v5534
    %v5536 = vpop.f32.mrb[0].mxu0
    %v5537 = vpop.f32.mrb[0].mxu0
    %v5538 = vadd.f32 0.0, %v5537
    %v5539 = vpop.f32.mrb[0].mxu0
    %5540 = vmatprep.mubr.bf16.mxu0 0
    %5541 = vmatmul.mubr.bf16.gmra.mrb[0].mxu0 %v4678
    %v5542 = vpop.f32.mrb[0].mxu0
    %v5543 = vadd.f32 0.0, %v5542
    %v5544 = vpop.f32.mrb[0].mxu0
    %v5545 = vpop.f32.mrb[0].mxu0
    %v5546 = vadd.f32 0.0, %v5545
    %v5547 = vpop.f32.mrb[0].mxu0
    %5548 = vmatprep.mubr.bf16.mxu0 0
    %5549 = vmatmul.mubr.bf16.gmra.mrb[0].mxu0 %v4679
    %v5550 = vpop.f32.mrb[0].mxu0
    %v5551 = vadd.f32 0.0, %v5550
    %v5552 = vpop.f32.mrb[0].mxu0
    %v5553 = vpop.f32.mrb[0].mxu0
    %v5554 = vadd.f32 0.0, %v5553
    %v5555 = vpop.f32.mrb[0].mxu0
    %5556 = vmatprep.mubr.bf16.mxu0 0
    %5557 = vmatmul.mubr.bf16.gmra.mrb[0].mxu0 %v4680
    %v5558 = vpop.f32.mrb[0].mxu0
    %v5559 = vadd.f32 0.0, %v5558
    %v5560 = vpop.f32.mrb[0].mxu0
    %v5561 = vpop.f32.mrb[0].mxu0
    %v5562 = vadd.f32 0.0, %v5561
    %v5563 = vpop.f32.mrb[0].mxu0
    %5564 = vmatprep.mubr.bf16.mxu0 0
    %5565 = vmatmul.mubr.bf16.gmra.mrb[0].mxu0 %v4681
    %v5566 = vpop.f32.mrb[0].mxu0
    %v5567 = vadd.f32 0.0, %v5566
    %v5568 = vpop.f32.mrb[0].mxu0
    %v5569 = vpop.f32.mrb[0].mxu0
    %v5570 = vadd.f32 0.0, %v5569
    %v5571 = vpop.f32.mrb[0].mxu0
    %5572 = vmatprep.mubr.bf16.mxu0 0
    %5573 = vmatmul.mubr.bf16.gmra.mrb[0].mxu0 %v4682
    %v5574 = vpop.f32.mrb[0].mxu0
    %v5575 = vadd.f32 0.0, %v5574
    %v5576 = vpop.f32.mrb[0].mxu0
    %v5577 = vpop.f32.mrb[0].mxu0
    %v5578 = vadd.f32 0.0, %v5577
    %v5579 = vpop.f32.mrb[0].mxu0
    %5580 = vmatprep.mubr.bf16.mxu0 0
    %5581 = vmatmul.mubr.bf16.gmra.mrb[0].mxu0 %v4683
    %v5582 = vpop.f32.mrb[0].mxu0
    %v5583 = vadd.f32 0.0, %v5582
    %v5584 = vpop.f32.mrb[0].mxu0
    %v5585 = vpop.f32.mrb[0].mxu0
    %v5586 = vadd.f32 0.0, %v5585
    %v5587 = vpop.f32.mrb[0].mxu0
    %5588 = vmatprep.mubr.bf16.mxu0 0
    %5589 = vmatmul.mubr.bf16.gmra.mrb[0].mxu0 %v4800
    %v5590 = vpop.f32.mrb[0].mxu0
    %v5591 = vadd.f32 0.0, %v5590
    %v5592 = vpop.f32.mrb[0].mxu0
    %v5593 = vpop.f32.mrb[0].mxu0
    %v5594 = vadd.f32 0.0, %v5593
    %v5595 = vpop.f32.mrb[0].mxu0
    %5596 = vmatprep.mubr.bf16.mxu0 0
    %5597 = vmatmul.mubr.bf16.gmra.mrb[0].mxu0 %v4801
    %v5598 = vpop.f32.mrb[0].mxu0
    %v5599 = vadd.f32 0.0, %v5598
    %v5600 = vpop.f32.mrb[0].mxu0
    %v5601 = vpop.f32.mrb[0].mxu0
    %v5602 = vadd.f32 0.0, %v5601
    %v5603 = vpop.f32.mrb[0].mxu0
    %5604 = vmatprep.mubr.bf16.mxu0 0
    %5605 = vmatmul.mubr.bf16.gmra.mrb[0].mxu0 %v4802
    %v5606 = vpop.f32.mrb[0].mxu0
    %v5607 = vadd.f32 0.0, %v5606
    %v5608 = vpop.f32.mrb[0].mxu0
    %v5609 = vpop.f32.mrb[0].mxu0
    %v5610 = vadd.f32 0.0, %v5609
    %v5611 = vpop.f32.mrb[0].mxu0
    %5612 = vmatprep.mubr.bf16.mxu0 0
    %5613 = vmatmul.mubr.bf16.gmra.mrb[0].mxu0 %v4803
    %v5614 = vpop.f32.mrb[0].mxu0
    %v5615 = vadd.f32 0.0, %v5614
    %v5616 = vpop.f32.mrb[0].mxu0
    %v5617 = vpop.f32.mrb[0].mxu0
    %v5618 = vadd.f32 0.0, %v5617
    %v5619 = vpop.f32.mrb[0].mxu0
    %5620 = vmatprep.mubr.bf16.mxu0 0
    %5621 = vmatmul.mubr.bf16.gmra.mrb[0].mxu0 %v4804
    %v5622 = vpop.f32.mrb[0].mxu0
    %v5623 = vadd.f32 0.0, %v5622
    %v5624 = vpop.f32.mrb[0].mxu0
    %v5625 = vpop.f32.mrb[0].mxu0
    %v5626 = vadd.f32 0.0, %v5625
    %v5627 = vpop.f32.mrb[0].mxu0
    %5628 = vmatprep.mubr.bf16.mxu0 0
    %5629 = vmatmul.mubr.bf16.gmra.mrb[0].mxu0 %v4805
    %v5630 = vpop.f32.mrb[0].mxu0
    %v5631 = vadd.f32 0.0, %v5630
    %v5632 = vpop.f32.mrb[0].mxu0
    %v5633 = vpop.f32.mrb[0].mxu0
    %v5634 = vadd.f32 0.0, %v5633
    %v5635 = vpop.f32.mrb[0].mxu0
    %5636 = vmatprep.mubr.bf16.mxu0 0
    %5637 = vmatmul.mubr.bf16.gmra.mrb[0].mxu0 %v4806
    %v5638 = vpop.f32.mrb[0].mxu0
    %v5639 = vadd.f32 0.0, %v5638
    %v5640 = vpop.f32.mrb[0].mxu0
    %v5641 = vpop.f32.mrb[0].mxu0
    %v5642 = vadd.f32 0.0, %v5641
    %v5643 = vpop.f32.mrb[0].mxu0
    %5644 = vmatprep.mubr.bf16.mxu0 0
    %5645 = vmatmul.mubr.bf16.gmra.mrb[0].mxu0 %v4807
    %v5646 = vpop.f32.mrb[0].mxu0
    %v5647 = vadd.f32 0.0, %v5646
    %v5648 = vpop.f32.mrb[0].mxu0
    %v5649 = vpop.f32.mrb[0].mxu0
    %v5650 = vadd.f32 0.0, %v5649
    %v5651 = vpop.f32.mrb[0].mxu0
    %5652 = vmatprep.mubr.bf16.mxu0 0
    %5653 = vmatmul.mubr.bf16.gmra.mrb[0].mxu0 %v4924
    %v5654 = vpop.f32.mrb[0].mxu0
    %v5655 = vadd.f32 0.0, %v5654
    %v5656 = vpop.f32.mrb[0].mxu0
    %v5657 = vpop.f32.mrb[0].mxu0
    %v5658 = vadd.f32 0.0, %v5657
    %v5659 = vpop.f32.mrb[0].mxu0
    %5660 = vmatprep.mubr.bf16.mxu0 0
    %5661 = vmatmul.mubr.bf16.gmra.mrb[0].mxu0 %v4925
    %v5662 = vpop.f32.mrb[0].mxu0
    %v5663 = vadd.f32 0.0, %v5662
    %v5664 = vpop.f32.mrb[0].mxu0
    %v5665 = vpop.f32.mrb[0].mxu0
    %v5666 = vadd.f32 0.0, %v5665
    %v5667 = vpop.f32.mrb[0].mxu0
    %5668 = vmatprep.mubr.bf16.mxu0 0
    %5669 = vmatmul.mubr.bf16.gmra.mrb[0].mxu0 %v4926
    %v5670 = vpop.f32.mrb[0].mxu0
    %v5671 = vadd.f32 0.0, %v5670
    %v5672 = vpop.f32.mrb[0].mxu0
    %v5673 = vpop.f32.mrb[0].mxu0
    %v5674 = vadd.f32 0.0, %v5673
    %v5675 = vpop.f32.mrb[0].mxu0
    %5676 = vmatprep.mubr.bf16.mxu0 0
    %5677 = vmatmul.mubr.bf16.gmra.mrb[0].mxu0 %v4927
    %v5678 = vpop.f32.mrb[0].mxu0
    %v5679 = vadd.f32 0.0, %v5678
    %v5680 = vpop.f32.mrb[0].mxu0
    %v5681 = vpop.f32.mrb[0].mxu0
    %v5682 = vadd.f32 0.0, %v5681
    %v5683 = vpop.f32.mrb[0].mxu0
    %5684 = vmatprep.mubr.bf16.mxu0 0
    %5685 = vmatmul.mubr.bf16.gmra.mrb[0].mxu0 %v4928
    %v5686 = vpop.f32.mrb[0].mxu0
    %v5687 = vadd.f32 0.0, %v5686
    %v5688 = vpop.f32.mrb[0].mxu0
    %v5689 = vpop.f32.mrb[0].mxu0
    %v5690 = vadd.f32 0.0, %v5689
    %v5691 = vpop.f32.mrb[0].mxu0
    %5692 = vmatprep.mubr.bf16.mxu0 0
    %5693 = vmatmul.mubr.bf16.gmra.mrb[0].mxu0 %v4929
    %v5694 = vpop.f32.mrb[0].mxu0
    %v5695 = vadd.f32 0.0, %v5694
    %v5696 = vpop.f32.mrb[0].mxu0
    %v5697 = vpop.f32.mrb[0].mxu0
    %v5698 = vadd.f32 0.0, %v5697
    %v5699 = vpop.f32.mrb[0].mxu0
    %5700 = vmatprep.mubr.bf16.mxu0 0
    %5701 = vmatmul.mubr.bf16.gmra.mrb[0].mxu0 %v4930
    %v5702 = vpop.f32.mrb[0].mxu0
    %v5703 = vadd.f32 0.0, %v5702
    %v5704 = vpop.f32.mrb[0].mxu0
    %v5705 = vpop.f32.mrb[0].mxu0
    %v5706 = vadd.f32 0.0, %v5705
    %v5707 = vpop.f32.mrb[0].mxu0
    %5708 = vmatprep.mubr.bf16.mxu0 0
    %5709 = vmatmul.mubr.bf16.gmra.mrb[0].mxu0 %v4931
    %v5710 = vpop.f32.mrb[0].mxu0
    %v5711 = vadd.f32 0.0, %v5710
    %v5712 = vpop.f32.mrb[0].mxu0
    %v5713 = vpop.f32.mrb[0].mxu0
    %v5714 = vadd.f32 0.0, %v5713
    %v5715 = vpop.f32.mrb[0].mxu0
    %5716 = vmatprep.mubr.bf16.mxu0 0
    %5717 = vmatmul.mubr.bf16.gmra.mrb[0].mxu0 %v5048
    %v5718 = vpop.f32.mrb[0].mxu0
    %v5719 = vadd.f32 0.0, %v5718
    %v5720 = vpop.f32.mrb[0].mxu0
    %v5721 = vpop.f32.mrb[0].mxu0
    %v5722 = vadd.f32 0.0, %v5721
    %v5723 = vpop.f32.mrb[0].mxu0
    %5724 = vmatprep.mubr.bf16.mxu0 0
    %5725 = vmatmul.mubr.bf16.gmra.mrb[0].mxu0 %v5049
    %v5726 = vpop.f32.mrb[0].mxu0
    %v5727 = vadd.f32 0.0, %v5726
    %v5728 = vpop.f32.mrb[0].mxu0
    %v5729 = vpop.f32.mrb[0].mxu0
    %v5730 = vadd.f32 0.0, %v5729
    %v5731 = vpop.f32.mrb[0].mxu0
    %5732 = vmatprep.mubr.bf16.mxu0 0
    %5733 = vmatmul.mubr.bf16.gmra.mrb[0].mxu0 %v5050
    %v5734 = vpop.f32.mrb[0].mxu0
    %v5735 = vadd.f32 0.0, %v5734
    %v5736 = vpop.f32.mrb[0].mxu0
    %v5737 = vpop.f32.mrb[0].mxu0
    %v5738 = vadd.f32 0.0, %v5737
    %v5739 = vpop.f32.mrb[0].mxu0
    %5740 = vmatprep.mubr.bf16.mxu0 0
    %5741 = vmatmul.mubr.bf16.gmra.mrb[0].mxu0 %v5051
    %v5742 = vpop.f32.mrb[0].mxu0
    %v5743 = vadd.f32 0.0, %v5742
    %v5744 = vpop.f32.mrb[0].mxu0
    %v5745 = vpop.f32.mrb[0].mxu0
    %v5746 = vadd.f32 0.0, %v5745
    %v5747 = vpop.f32.mrb[0].mxu0
    %5748 = vmatprep.mubr.bf16.mxu0 0
    %5749 = vmatmul.mubr.bf16.gmra.mrb[0].mxu0 %v5052
    %v5750 = vpop.f32.mrb[0].mxu0
    %v5751 = vadd.f32 0.0, %v5750
    %v5752 = vpop.f32.mrb[0].mxu0
    %v5753 = vpop.f32.mrb[0].mxu0
    %v5754 = vadd.f32 0.0, %v5753
    %v5755 = vpop.f32.mrb[0].mxu0
    %5756 = vmatprep.mubr.bf16.mxu0 0
    %5757 = vmatmul.mubr.bf16.gmra.mrb[0].mxu0 %v5053
    %v5758 = vpop.f32.mrb[0].mxu0
    %v5759 = vadd.f32 0.0, %v5758
    %v5760 = vpop.f32.mrb[0].mxu0
    %v5761 = vpop.f32.mrb[0].mxu0
    %v5762 = vadd.f32 0.0, %v5761
    %v5763 = vpop.f32.mrb[0].mxu0
    %5764 = vmatprep.mubr.bf16.mxu0 0
    %5765 = vmatmul.mubr.bf16.gmra.mrb[0].mxu0 %v5054
    %v5766 = vpop.f32.mrb[0].mxu0
    %v5767 = vadd.f32 0.0, %v5766
    %v5768 = vpop.f32.mrb[0].mxu0
    %v5769 = vpop.f32.mrb[0].mxu0
    %v5770 = vadd.f32 0.0, %v5769
    %v5771 = vpop.f32.mrb[0].mxu0
    %5772 = vmatprep.mubr.bf16.mxu0 0
    %5773 = vmatmul.mubr.bf16.gmra.mrb[0].mxu0 %v5055
    %v5774 = vpop.f32.mrb[0].mxu0
    %v5775 = vadd.f32 0.0, %v5774
    %v5776 = vpop.f32.mrb[0].mxu0
    %v5777 = vpop.f32.mrb[0].mxu0
    %v5778 = vadd.f32 0.0, %v5777
    %v5779 = vpop.f32.mrb[0].mxu0
    %5780 = vmatprep.mubr.bf16.mxu0 0
    %5781 = vmatmul.mubr.bf16.gmra.mrb[0].mxu0 %v5172
    %v5782 = vpop.f32.mrb[0].mxu0
    %v5783 = vadd.f32 0.0, %v5782
    %v5784 = vpop.f32.mrb[0].mxu0
    %v5785 = vpop.f32.mrb[0].mxu0
    %v5786 = vadd.f32 0.0, %v5785
    %v5787 = vpop.f32.mrb[0].mxu0
    %5788 = vmatprep.mubr.bf16.mxu0 0
    %5789 = vmatmul.mubr.bf16.gmra.mrb[0].mxu0 %v5173
    %v5790 = vpop.f32.mrb[0].mxu0
    %v5791 = vadd.f32 0.0, %v5790
    %v5792 = vpop.f32.mrb[0].mxu0
    %v5793 = vpop.f32.mrb[0].mxu0
    %v5794 = vadd.f32 0.0, %v5793
    %v5795 = vpop.f32.mrb[0].mxu0
    %5796 = vmatprep.mubr.bf16.mxu0 0
    %5797 = vmatmul.mubr.bf16.gmra.mrb[0].mxu0 %v5174
    %v5798 = vpop.f32.mrb[0].mxu0
    %v5799 = vadd.f32 0.0, %v5798
    %v5800 = vpop.f32.mrb[0].mxu0
    %v5801 = vpop.f32.mrb[0].mxu0
    %v5802 = vadd.f32 0.0, %v5801
    %v5803 = vpop.f32.mrb[0].mxu0
    %5804 = vmatprep.mubr.bf16.mxu0 0
    %5805 = vmatmul.mubr.bf16.gmra.mrb[0].mxu0 %v5175
    %v5806 = vpop.f32.mrb[0].mxu0
    %v5807 = vadd.f32 0.0, %v5806
    %v5808 = vpop.f32.mrb[0].mxu0
    %v5809 = vpop.f32.mrb[0].mxu0
    %v5810 = vadd.f32 0.0, %v5809
    %v5811 = vpop.f32.mrb[0].mxu0
    %5812 = vmatprep.mubr.bf16.mxu0 0
    %5813 = vmatmul.mubr.bf16.gmra.mrb[0].mxu0 %v5176
    %v5814 = vpop.f32.mrb[0].mxu0
    %v5815 = vadd.f32 0.0, %v5814
    %v5816 = vpop.f32.mrb[0].mxu0
    %v5817 = vpop.f32.mrb[0].mxu0
    %v5818 = vadd.f32 0.0, %v5817
    %v5819 = vpop.f32.mrb[0].mxu0
    %5820 = vmatprep.mubr.bf16.mxu0 0
    %5821 = vmatmul.mubr.bf16.gmra.mrb[0].mxu0 %v5177
    %v5822 = vpop.f32.mrb[0].mxu0
    %v5823 = vadd.f32 0.0, %v5822
    %v5824 = vpop.f32.mrb[0].mxu0
    %v5825 = vpop.f32.mrb[0].mxu0
    %v5826 = vadd.f32 0.0, %v5825
    %v5827 = vpop.f32.mrb[0].mxu0
    %5828 = vmatprep.mubr.bf16.mxu0 0
    %5829 = vmatmul.mubr.bf16.gmra.mrb[0].mxu0 %v5178
    %v5830 = vpop.f32.mrb[0].mxu0
    %v5831 = vadd.f32 0.0, %v5830
    %v5832 = vpop.f32.mrb[0].mxu0
    %v5833 = vpop.f32.mrb[0].mxu0
    %v5834 = vadd.f32 0.0, %v5833
    %v5835 = vpop.f32.mrb[0].mxu0
    %5836 = vmatprep.mubr.bf16.mxu0 0
    %5837 = vmatmul.mubr.bf16.gmra.mrb[0].mxu0 %v5179
    %v5838 = vpop.f32.mrb[0].mxu0
    %v5839 = vadd.f32 0.0, %v5838
    %v5840 = vpop.f32.mrb[0].mxu0
    %v5841 = vpop.f32.mrb[0].mxu0
    %v5842 = vadd.f32 0.0, %v5841
    %v5843 = vpop.f32.mrb[0].mxu0
    %5844 = vmatprep.mubr.bf16.mxu0 0
    %5845 = vmatmul.mubr.bf16.gmra.mrb[0].mxu0 %v5296
    %v5846 = vpop.f32.mrb[0].mxu0
    %v5847 = vadd.f32 0.0, %v5846
    %v5848 = vpop.f32.mrb[0].mxu0
    %v5849 = vpop.f32.mrb[0].mxu0
    %v5850 = vadd.f32 0.0, %v5849
    %v5851 = vpop.f32.mrb[0].mxu0
    %5852 = vmatprep.mubr.bf16.mxu0 0
    %5853 = vmatmul.mubr.bf16.gmra.mrb[0].mxu0 %v5297
    %v5854 = vpop.f32.mrb[0].mxu0
    %v5855 = vadd.f32 0.0, %v5854
    %v5856 = vpop.f32.mrb[0].mxu0
    %v5857 = vpop.f32.mrb[0].mxu0
    %v5858 = vadd.f32 0.0, %v5857
    %v5859 = vpop.f32.mrb[0].mxu0
    %5860 = vmatprep.mubr.bf16.mxu0 0
    %5861 = vmatmul.mubr.bf16.gmra.mrb[0].mxu0 %v5298
    %v5862 = vpop.f32.mrb[0].mxu0
    %v5863 = vadd.f32 0.0, %v5862
    %v5864 = vpop.f32.mrb[0].mxu0
    %v5865 = vpop.f32.mrb[0].mxu0
    %v5866 = vadd.f32 0.0, %v5865
    %v5867 = vpop.f32.mrb[0].mxu0
    %5868 = vmatprep.mubr.bf16.mxu0 0
    %5869 = vmatmul.mubr.bf16.gmra.mrb[0].mxu0 %v5299
    %v5870 = vpop.f32.mrb[0].mxu0
    %v5871 = vadd.f32 0.0, %v5870
    %v5872 = vpop.f32.mrb[0].mxu0
    %v5873 = vpop.f32.mrb[0].mxu0
    %v5874 = vadd.f32 0.0, %v5873
    %v5875 = vpop.f32.mrb[0].mxu0
    %5876 = vmatprep.mubr.bf16.mxu0 0
    %5877 = vmatmul.mubr.bf16.gmra.mrb[0].mxu0 %v5300
    %v5878 = vpop.f32.mrb[0].mxu0
    %v5879 = vadd.f32 0.0, %v5878
    %v5880 = vpop.f32.mrb[0].mxu0
    %v5881 = vpop.f32.mrb[0].mxu0
    %v5882 = vadd.f32 0.0, %v5881
    %v5883 = vpop.f32.mrb[0].mxu0
    %5884 = vmatprep.mubr.bf16.mxu0 0
    %5885 = vmatmul.mubr.bf16.gmra.mrb[0].mxu0 %v5301
    %v5886 = vpop.f32.mrb[0].mxu0
    %v5887 = vadd.f32 0.0, %v5886
    %v5888 = vpop.f32.mrb[0].mxu0
    %v5889 = vpop.f32.mrb[0].mxu0
    %v5890 = vadd.f32 0.0, %v5889
    %v5891 = vpop.f32.mrb[0].mxu0
    %5892 = vmatprep.mubr.bf16.mxu0 0
    %5893 = vmatmul.mubr.bf16.gmra.mrb[0].mxu0 %v5302
    %v5894 = vpop.f32.mrb[0].mxu0
    %v5895 = vadd.f32 0.0, %v5894
    %v5896 = vpop.f32.mrb[0].mxu0
    %v5897 = vpop.f32.mrb[0].mxu0
    %v5898 = vadd.f32 0.0, %v5897
    %v5899 = vpop.f32.mrb[0].mxu0
    %5900 = vmatprep.mubr.bf16.mxu0 0
    %5901 = vmatmul.mubr.bf16.gmra.mrb[0].mxu0 %v5303
    %v5902 = vpop.f32.mrb[0].mxu0
    %v5903 = vadd.f32 0.0, %v5902
    %v5904 = vpop.f32.mrb[0].mxu0
    %v5905 = vpop.f32.mrb[0].mxu0
    %v5906 = vadd.f32 0.0, %v5905
    %v5907 = vpop.f32.mrb[0].mxu0
    %5908 = vmatprep.mubr.bf16.mxu0 0
    %5909 = vmatmul.mubr.bf16.gmra.mrb[0].mxu0 %v5420
    %v5910 = vpop.f32.mrb[0].mxu0
    %v5911 = vadd.f32 0.0, %v5910
    %v5912 = vpop.f32.mrb[0].mxu0
    %v5913 = vpop.f32.mrb[0].mxu0
    %v5914 = vadd.f32 0.0, %v5913
    %v5915 = vpop.f32.mrb[0].mxu0
    %5916 = vmatprep.mubr.bf16.mxu0 0
    %5917 = vmatmul.mubr.bf16.gmra.mrb[0].mxu0 %v5421
    %v5918 = vpop.f32.mrb[0].mxu0
    %v5919 = vadd.f32 0.0, %v5918
    %v5920 = vpop.f32.mrb[0].mxu0
    %v5921 = vpop.f32.mrb[0].mxu0
    %v5922 = vadd.f32 0.0, %v5921
    %v5923 = vpop.f32.mrb[0].mxu0
    %5924 = vmatprep.mubr.bf16.mxu0 0
    %5925 = vmatmul.mubr.bf16.gmra.mrb[0].mxu0 %v5422
    %v5926 = vpop.f32.mrb[0].mxu0
    %v5927 = vadd.f32 0.0, %v5926
    %v5928 = vpop.f32.mrb[0].mxu0
    %v5929 = vpop.f32.mrb[0].mxu0
    %v5930 = vadd.f32 0.0, %v5929
    %v5931 = vpop.f32.mrb[0].mxu0
    %5932 = vmatprep.mubr.bf16.mxu0 0
    %5933 = vmatmul.mubr.bf16.gmra.mrb[0].mxu0 %v5423
    %v5934 = vpop.f32.mrb[0].mxu0
    %v5935 = vadd.f32 0.0, %v5934
    %v5936 = vpop.f32.mrb[0].mxu0
    %v5937 = vpop.f32.mrb[0].mxu0
    %v5938 = vadd.f32 0.0, %v5937
    %v5939 = vpop.f32.mrb[0].mxu0
    %5940 = vmatprep.mubr.bf16.mxu0 0
    %5941 = vmatmul.mubr.bf16.gmra.mrb[0].mxu0 %v5424
    %v5942 = vpop.f32.mrb[0].mxu0
    %v5943 = vadd.f32 0.0, %v5942
    %v5944 = vpop.f32.mrb[0].mxu0
    %v5945 = vpop.f32.mrb[0].mxu0
    %v5946 = vadd.f32 0.0, %v5945
    %v5947 = vpop.f32.mrb[0].mxu0
    %5948 = vmatprep.mubr.bf16.mxu0 0
    %5949 = vmatmul.mubr.bf16.gmra.mrb[0].mxu0 %v5425
    %v5950 = vpop.f32.mrb[0].mxu0
    %v5951 = vadd.f32 0.0, %v5950
    %v5952 = vpop.f32.mrb[0].mxu0
    %v5953 = vpop.f32.mrb[0].mxu0
    %v5954 = vadd.f32 0.0, %v5953
    %v5955 = vpop.f32.mrb[0].mxu0
    %5956 = vmatprep.mubr.bf16.mxu0 0
    %5957 = vmatmul.mubr.bf16.gmra.mrb[0].mxu0 %v5426
    %v5958 = vpop.f32.mrb[0].mxu0
    %v5959 = vadd.f32 0.0, %v5958
    %v5960 = vpop.f32.mrb[0].mxu0
    %v5961 = vpop.f32.mrb[0].mxu0
    %v5962 = vadd.f32 0.0, %v5961
    %v5963 = vpop.f32.mrb[0].mxu0
    %5964 = vmatprep.mubr.bf16.mxu0 0
    %5965 = vmatmul.mubr.bf16.gmra.mrb[0].mxu0 %v5427
    %v5966 = vpop.f32.mrb[0].mxu0
    %v5967 = vadd.f32 0.0, %v5966
    %v5968 = vpop.f32.mrb[0].mxu0
    %v5969 = vpop.f32.mrb[0].mxu0
    %v5970 = vadd.f32 0.0, %v5969
    %v5971 = vpop.f32.mrb[0].mxu0
    %5972 = vdwg.mxu0
    %vm5973 = vcmp.ge.f32.partialorder %v5463, %v1825
    %vm5974 = vcmp.ge.f32.partialorder %v5466, %v1825
    %vm5975 = vcmp.ge.f32.partialorder %v5471, %v1825
    %vm5976 = vcmp.ge.f32.partialorder %v5474, %v1825
    %vm5977 = vcmp.ge.f32.partialorder %v5479, %v1825
    %vm5978 = vcmp.ge.f32.partialorder %v5482, %v1825
    %vm5979 = vcmp.ge.f32.partialorder %v5487, %v1825
    %vm5980 = vcmp.ge.f32.partialorder %v5490, %v1825
    %vm5981 = vcmp.ge.f32.partialorder %v5495, %v1825
    %vm5982 = vcmp.ge.f32.partialorder %v5498, %v1825
    %vm5983 = vcmp.ge.f32.partialorder %v5503, %v1825
    %vm5984 = vcmp.ge.f32.partialorder %v5506, %v1825
    %vm5985 = vcmp.ge.f32.partialorder %v5511, %v1825
    %vm5986 = vcmp.ge.f32.partialorder %v5514, %v1825
    %vm5987 = vcmp.ge.f32.partialorder %v5519, %v1825
    %vm5988 = vcmp.ge.f32.partialorder %v5522, %v1825
    %v5989 = vsel %vm5973, %v4423, inf
    %v5990 = vsel %vm5974, %v4428, inf
    %v5991 = vsel %vm5975, %v4433, inf
    %v5992 = vsel %vm5976, %v4438, inf
    %v5993 = vsel %vm5977, %v4443, inf
    %v5994 = vsel %vm5978, %v4448, inf
    %v5995 = vsel %vm5979, %v4453, inf
    %v5996 = vsel %vm5980, %v4458, inf
    %v5997 = vsel %vm5981, %v4463, inf
    %v5998 = vsel %vm5982, %v4468, inf
    %v5999 = vsel %vm5983, %v4473, inf
    %v6000 = vsel %vm5984, %v4478, inf
    %v6001 = vsel %vm5985, %v4483, inf
    %v6002 = vsel %vm5986, %v4488, inf
    %v6003 = vsel %vm5987, %v4493, inf
    %v6004 = vsel %vm5988, %v4498, inf
    %v6005 = vmin.f32 %v5989, %v5993
    %v6006 = vmin.f32 %v5990, %v5994
    %v6007 = vmin.f32 %v5991, %v5995
    %v6008 = vmin.f32 %v5992, %v5996
    %v6009 = vmin.f32 %v6005, %v5997
    %v6010 = vmin.f32 %v6006, %v5998
    %v6011 = vmin.f32 %v6007, %v5999
    %v6012 = vmin.f32 %v6008, %v6000
    %v6013 = vmin.f32 %v6009, %v6001
    %v6014 = vmin.f32 %v6010, %v6002
    %v6015 = vmin.f32 %v6011, %v6003
    %v6016 = vmin.f32 %v6012, %v6004
    %v6017 = vmin.f32 %v6013, %v6014
    %v6018 = vmin.f32 %v6015, %v6016
    %v6019 = vmin.f32 %v6017, %v6018
    %v6020 = vrot.slane %v6019, 4
    %v6021 = vmin.f32 %v6019, %v6020
    %v6022 = vrot.slane %v6021, 2
    %v6023 = vmin.f32 %v6021, %v6022
    %v6024 = vrot.slane %v6023, 1
    %v6025 = vmin.f32 %v6023, %v6024
    %v6026 = vmul.f32 %v6025, %v86
    %vm6027 = vcmp.ge.f32.partialorder %v5527, %v1825
    %vm6028 = vcmp.ge.f32.partialorder %v5530, %v1825
    %vm6029 = vcmp.ge.f32.partialorder %v5535, %v1825
    %vm6030 = vcmp.ge.f32.partialorder %v5538, %v1825
    %vm6031 = vcmp.ge.f32.partialorder %v5543, %v1825
    %vm6032 = vcmp.ge.f32.partialorder %v5546, %v1825
    %vm6033 = vcmp.ge.f32.partialorder %v5551, %v1825
    %vm6034 = vcmp.ge.f32.partialorder %v5554, %v1825
    %vm6035 = vcmp.ge.f32.partialorder %v5559, %v1825
    %vm6036 = vcmp.ge.f32.partialorder %v5562, %v1825
    %vm6037 = vcmp.ge.f32.partialorder %v5567, %v1825
    %vm6038 = vcmp.ge.f32.partialorder %v5570, %v1825
    %vm6039 = vcmp.ge.f32.partialorder %v5575, %v1825
    %vm6040 = vcmp.ge.f32.partialorder %v5578, %v1825
    %vm6041 = vcmp.ge.f32.partialorder %v5583, %v1825
    %vm6042 = vcmp.ge.f32.partialorder %v5586, %v1825
    %v6043 = vsel %vm6027, %v4562, inf
    %v6044 = vsel %vm6028, %v4566, inf
    %v6045 = vsel %vm6029, %v4570, inf
    %v6046 = vsel %vm6030, %v4574, inf
    %v6047 = vsel %vm6031, %v4578, inf
    %v6048 = vsel %vm6032, %v4582, inf
    %v6049 = vsel %vm6033, %v4586, inf
    %v6050 = vsel %vm6034, %v4590, inf
    %v6051 = vsel %vm6035, %v4594, inf
    %v6052 = vsel %vm6036, %v4598, inf
    %v6053 = vsel %vm6037, %v4602, inf
    %v6054 = vsel %vm6038, %v4606, inf
    %v6055 = vsel %vm6039, %v4610, inf
    %v6056 = vsel %vm6040, %v4614, inf
    %v6057 = vsel %vm6041, %v4618, inf
    %v6058 = vsel %vm6042, %v4622, inf
    %v6059 = vmin.f32 %v6043, %v6047
    %v6060 = vmin.f32 %v6044, %v6048
    %v6061 = vmin.f32 %v6045, %v6049
    %v6062 = vmin.f32 %v6046, %v6050
    %v6063 = vmin.f32 %v6059, %v6051
    %v6064 = vmin.f32 %v6060, %v6052
    %v6065 = vmin.f32 %v6061, %v6053
    %v6066 = vmin.f32 %v6062, %v6054
    %v6067 = vmin.f32 %v6063, %v6055
    %v6068 = vmin.f32 %v6064, %v6056
    %v6069 = vmin.f32 %v6065, %v6057
    %v6070 = vmin.f32 %v6066, %v6058
    %v6071 = vmin.f32 %v6067, %v6068
    %v6072 = vmin.f32 %v6069, %v6070
    %v6073 = vmin.f32 %v6071, %v6072
    %v6074 = vrot.slane %v6073, 4
    %v6075 = vmin.f32 %v6073, %v6074
    %v6076 = vrot.slane %v6075, 2
    %v6077 = vmin.f32 %v6075, %v6076
    %v6078 = vrot.slane %v6077, 1
    %v6079 = vmin.f32 %v6077, %v6078
    %v6080 = vmul.f32 %v6079, %v86
    %vm6081 = vcmp.ge.f32.partialorder %v5591, %v1825
    %vm6082 = vcmp.ge.f32.partialorder %v5594, %v1825
    %vm6083 = vcmp.ge.f32.partialorder %v5599, %v1825
    %vm6084 = vcmp.ge.f32.partialorder %v5602, %v1825
    %vm6085 = vcmp.ge.f32.partialorder %v5607, %v1825
    %vm6086 = vcmp.ge.f32.partialorder %v5610, %v1825
    %vm6087 = vcmp.ge.f32.partialorder %v5615, %v1825
    %vm6088 = vcmp.ge.f32.partialorder %v5618, %v1825
    %vm6089 = vcmp.ge.f32.partialorder %v5623, %v1825
    %vm6090 = vcmp.ge.f32.partialorder %v5626, %v1825
    %vm6091 = vcmp.ge.f32.partialorder %v5631, %v1825
    %vm6092 = vcmp.ge.f32.partialorder %v5634, %v1825
    %vm6093 = vcmp.ge.f32.partialorder %v5639, %v1825
    %vm6094 = vcmp.ge.f32.partialorder %v5642, %v1825
    %vm6095 = vcmp.ge.f32.partialorder %v5647, %v1825
    %vm6096 = vcmp.ge.f32.partialorder %v5650, %v1825
    %v6097 = vsel %vm6081, %v4686, inf
    %v6098 = vsel %vm6082, %v4690, inf
    %v6099 = vsel %vm6083, %v4694, inf
    %v6100 = vsel %vm6084, %v4698, inf
    %v6101 = vsel %vm6085, %v4702, inf
    %v6102 = vsel %vm6086, %v4706, inf
    %v6103 = vsel %vm6087, %v4710, inf
    %v6104 = vsel %vm6088, %v4714, inf
    %v6105 = vsel %vm6089, %v4718, inf
    %v6106 = vsel %vm6090, %v4722, inf
    %v6107 = vsel %vm6091, %v4726, inf
    %v6108 = vsel %vm6092, %v4730, inf
    %v6109 = vsel %vm6093, %v4734, inf
    %v6110 = vsel %vm6094, %v4738, inf
    %v6111 = vsel %vm6095, %v4742, inf
    %v6112 = vsel %vm6096, %v4746, inf
    %v6113 = vmin.f32 %v6097, %v6101
    %v6114 = vmin.f32 %v6098, %v6102
    %v6115 = vmin.f32 %v6099, %v6103
    %v6116 = vmin.f32 %v6100, %v6104
    %v6117 = vmin.f32 %v6113, %v6105
    %v6118 = vmin.f32 %v6114, %v6106
    %v6119 = vmin.f32 %v6115, %v6107
    %v6120 = vmin.f32 %v6116, %v6108
    %v6121 = vmin.f32 %v6117, %v6109
    %v6122 = vmin.f32 %v6118, %v6110
    %v6123 = vmin.f32 %v6119, %v6111
    %v6124 = vmin.f32 %v6120, %v6112
    %v6125 = vmin.f32 %v6121, %v6122
    %v6126 = vmin.f32 %v6123, %v6124
    %v6127 = vmin.f32 %v6125, %v6126
    %v6128 = vrot.slane %v6127, 4
    %v6129 = vmin.f32 %v6127, %v6128
    %v6130 = vrot.slane %v6129, 2
    %v6131 = vmin.f32 %v6129, %v6130
    %v6132 = vrot.slane %v6131, 1
    %v6133 = vmin.f32 %v6131, %v6132
    %v6134 = vmul.f32 %v6133, %v86
    %vm6135 = vcmp.ge.f32.partialorder %v5655, %v1825
    %vm6136 = vcmp.ge.f32.partialorder %v5658, %v1825
    %vm6137 = vcmp.ge.f32.partialorder %v5663, %v1825
    %vm6138 = vcmp.ge.f32.partialorder %v5666, %v1825
    %vm6139 = vcmp.ge.f32.partialorder %v5671, %v1825
    %vm6140 = vcmp.ge.f32.partialorder %v5674, %v1825
    %vm6141 = vcmp.ge.f32.partialorder %v5679, %v1825
    %vm6142 = vcmp.ge.f32.partialorder %v5682, %v1825
    %vm6143 = vcmp.ge.f32.partialorder %v5687, %v1825
    %vm6144 = vcmp.ge.f32.partialorder %v5690, %v1825
    %vm6145 = vcmp.ge.f32.partialorder %v5695, %v1825
    %vm6146 = vcmp.ge.f32.partialorder %v5698, %v1825
    %vm6147 = vcmp.ge.f32.partialorder %v5703, %v1825
    %vm6148 = vcmp.ge.f32.partialorder %v5706, %v1825
    %vm6149 = vcmp.ge.f32.partialorder %v5711, %v1825
    %vm6150 = vcmp.ge.f32.partialorder %v5714, %v1825
    %v6151 = vsel %vm6135, %v4810, inf
    %v6152 = vsel %vm6136, %v4814, inf
    %v6153 = vsel %vm6137, %v4818, inf
    %v6154 = vsel %vm6138, %v4822, inf
    %v6155 = vsel %vm6139, %v4826, inf
    %v6156 = vsel %vm6140, %v4830, inf
    %v6157 = vsel %vm6141, %v4834, inf
    %v6158 = vsel %vm6142, %v4838, inf
    %v6159 = vsel %vm6143, %v4842, inf
    %v6160 = vsel %vm6144, %v4846, inf
    %v6161 = vsel %vm6145, %v4850, inf
    %v6162 = vsel %vm6146, %v4854, inf
    %v6163 = vsel %vm6147, %v4858, inf
    %v6164 = vsel %vm6148, %v4862, inf
    %v6165 = vsel %vm6149, %v4866, inf
    %v6166 = vsel %vm6150, %v4870, inf
    %v6167 = vmin.f32 %v6151, %v6155
    %v6168 = vmin.f32 %v6152, %v6156
    %v6169 = vmin.f32 %v6153, %v6157
    %v6170 = vmin.f32 %v6154, %v6158
    %v6171 = vmin.f32 %v6167, %v6159
    %v6172 = vmin.f32 %v6168, %v6160
    %v6173 = vmin.f32 %v6169, %v6161
    %v6174 = vmin.f32 %v6170, %v6162
    %v6175 = vmin.f32 %v6171, %v6163
    %v6176 = vmin.f32 %v6172, %v6164
    %v6177 = vmin.f32 %v6173, %v6165
    %v6178 = vmin.f32 %v6174, %v6166
    %v6179 = vmin.f32 %v6175, %v6176
    %v6180 = vmin.f32 %v6177, %v6178
    %v6181 = vmin.f32 %v6179, %v6180
    %v6182 = vrot.slane %v6181, 4
    %v6183 = vmin.f32 %v6181, %v6182
    %v6184 = vrot.slane %v6183, 2
    %v6185 = vmin.f32 %v6183, %v6184
    %v6186 = vrot.slane %v6185, 1
    %v6187 = vmin.f32 %v6185, %v6186
    %v6188 = vmul.f32 %v6187, %v86
    %vm6189 = vcmp.ge.f32.partialorder %v5719, %v1825
    %vm6190 = vcmp.ge.f32.partialorder %v5722, %v1825
    %vm6191 = vcmp.ge.f32.partialorder %v5727, %v1825
    %vm6192 = vcmp.ge.f32.partialorder %v5730, %v1825
    %vm6193 = vcmp.ge.f32.partialorder %v5735, %v1825
    %vm6194 = vcmp.ge.f32.partialorder %v5738, %v1825
    %vm6195 = vcmp.ge.f32.partialorder %v5743, %v1825
    %vm6196 = vcmp.ge.f32.partialorder %v5746, %v1825
    %vm6197 = vcmp.ge.f32.partialorder %v5751, %v1825
    %vm6198 = vcmp.ge.f32.partialorder %v5754, %v1825
    %vm6199 = vcmp.ge.f32.partialorder %v5759, %v1825
    %vm6200 = vcmp.ge.f32.partialorder %v5762, %v1825
    %vm6201 = vcmp.ge.f32.partialorder %v5767, %v1825
    %vm6202 = vcmp.ge.f32.partialorder %v5770, %v1825
    %vm6203 = vcmp.ge.f32.partialorder %v5775, %v1825
    %vm6204 = vcmp.ge.f32.partialorder %v5778, %v1825
    %v6205 = vsel %vm6189, %v4934, inf
    %v6206 = vsel %vm6190, %v4938, inf
    %v6207 = vsel %vm6191, %v4942, inf
    %v6208 = vsel %vm6192, %v4946, inf
    %v6209 = vsel %vm6193, %v4950, inf
    %v6210 = vsel %vm6194, %v4954, inf
    %v6211 = vsel %vm6195, %v4958, inf
    %v6212 = vsel %vm6196, %v4962, inf
    %v6213 = vsel %vm6197, %v4966, inf
    %v6214 = vsel %vm6198, %v4970, inf
    %v6215 = vsel %vm6199, %v4974, inf
    %v6216 = vsel %vm6200, %v4978, inf
    %v6217 = vsel %vm6201, %v4982, inf
    %v6218 = vsel %vm6202, %v4986, inf
    %v6219 = vsel %vm6203, %v4990, inf
    %v6220 = vsel %vm6204, %v4994, inf
    %v6221 = vmin.f32 %v6205, %v6209
    %v6222 = vmin.f32 %v6206, %v6210
    %v6223 = vmin.f32 %v6207, %v6211
    %v6224 = vmin.f32 %v6208, %v6212
    %v6225 = vmin.f32 %v6221, %v6213
    %v6226 = vmin.f32 %v6222, %v6214
    %v6227 = vmin.f32 %v6223, %v6215
    %v6228 = vmin.f32 %v6224, %v6216
    %v6229 = vmin.f32 %v6225, %v6217
    %v6230 = vmin.f32 %v6226, %v6218
    %v6231 = vmin.f32 %v6227, %v6219
    %v6232 = vmin.f32 %v6228, %v6220
    %v6233 = vmin.f32 %v6229, %v6230
    %v6234 = vmin.f32 %v6231, %v6232
    %v6235 = vmin.f32 %v6233, %v6234
    %v6236 = vrot.slane %v6235, 4
    %v6237 = vmin.f32 %v6235, %v6236
    %v6238 = vrot.slane %v6237, 2
    %v6239 = vmin.f32 %v6237, %v6238
    %v6240 = vrot.slane %v6239, 1
    %v6241 = vmin.f32 %v6239, %v6240
    %v6242 = vmul.f32 %v6241, %v86
    %vm6243 = vcmp.ge.f32.partialorder %v5783, %v1825
    %vm6244 = vcmp.ge.f32.partialorder %v5786, %v1825
    %vm6245 = vcmp.ge.f32.partialorder %v5791, %v1825
    %vm6246 = vcmp.ge.f32.partialorder %v5794, %v1825
    %vm6247 = vcmp.ge.f32.partialorder %v5799, %v1825
    %vm6248 = vcmp.ge.f32.partialorder %v5802, %v1825
    %vm6249 = vcmp.ge.f32.partialorder %v5807, %v1825
    %vm6250 = vcmp.ge.f32.partialorder %v5810, %v1825
    %vm6251 = vcmp.ge.f32.partialorder %v5815, %v1825
    %vm6252 = vcmp.ge.f32.partialorder %v5818, %v1825
    %vm6253 = vcmp.ge.f32.partialorder %v5823, %v1825
    %vm6254 = vcmp.ge.f32.partialorder %v5826, %v1825
    %vm6255 = vcmp.ge.f32.partialorder %v5831, %v1825
    %vm6256 = vcmp.ge.f32.partialorder %v5834, %v1825
    %vm6257 = vcmp.ge.f32.partialorder %v5839, %v1825
    %vm6258 = vcmp.ge.f32.partialorder %v5842, %v1825
    %v6259 = vsel %vm6243, %v5058, inf
    %v6260 = vsel %vm6244, %v5062, inf
    %v6261 = vsel %vm6245, %v5066, inf
    %v6262 = vsel %vm6246, %v5070, inf
    %v6263 = vsel %vm6247, %v5074, inf
    %v6264 = vsel %vm6248, %v5078, inf
    %v6265 = vsel %vm6249, %v5082, inf
    %v6266 = vsel %vm6250, %v5086, inf
    %v6267 = vsel %vm6251, %v5090, inf
    %v6268 = vsel %vm6252, %v5094, inf
    %v6269 = vsel %vm6253, %v5098, inf
    %v6270 = vsel %vm6254, %v5102, inf
    %v6271 = vsel %vm6255, %v5106, inf
    %v6272 = vsel %vm6256, %v5110, inf
    %v6273 = vsel %vm6257, %v5114, inf
    %v6274 = vsel %vm6258, %v5118, inf
    %v6275 = vmin.f32 %v6259, %v6263
    %v6276 = vmin.f32 %v6260, %v6264
    %v6277 = vmin.f32 %v6261, %v6265
    %v6278 = vmin.f32 %v6262, %v6266
    %v6279 = vmin.f32 %v6275, %v6267
    %v6280 = vmin.f32 %v6276, %v6268
    %v6281 = vmin.f32 %v6277, %v6269
    %v6282 = vmin.f32 %v6278, %v6270
    %v6283 = vmin.f32 %v6279, %v6271
    %v6284 = vmin.f32 %v6280, %v6272
    %v6285 = vmin.f32 %v6281, %v6273
    %v6286 = vmin.f32 %v6282, %v6274
    %v6287 = vmin.f32 %v6283, %v6284
    %v6288 = vmin.f32 %v6285, %v6286
    %v6289 = vmin.f32 %v6287, %v6288
    %v6290 = vrot.slane %v6289, 4
    %v6291 = vmin.f32 %v6289, %v6290
    %v6292 = vrot.slane %v6291, 2
    %v6293 = vmin.f32 %v6291, %v6292
    %v6294 = vrot.slane %v6293, 1
    %v6295 = vmin.f32 %v6293, %v6294
    %v6296 = vmul.f32 %v6295, %v86
    %vm6297 = vcmp.ge.f32.partialorder %v5847, %v1825
    %vm6298 = vcmp.ge.f32.partialorder %v5850, %v1825
    %vm6299 = vcmp.ge.f32.partialorder %v5855, %v1825
    %vm6300 = vcmp.ge.f32.partialorder %v5858, %v1825
    %vm6301 = vcmp.ge.f32.partialorder %v5863, %v1825
    %vm6302 = vcmp.ge.f32.partialorder %v5866, %v1825
    %vm6303 = vcmp.ge.f32.partialorder %v5871, %v1825
    %vm6304 = vcmp.ge.f32.partialorder %v5874, %v1825
    %vm6305 = vcmp.ge.f32.partialorder %v5879, %v1825
    %vm6306 = vcmp.ge.f32.partialorder %v5882, %v1825
    %vm6307 = vcmp.ge.f32.partialorder %v5887, %v1825
    %vm6308 = vcmp.ge.f32.partialorder %v5890, %v1825
    %vm6309 = vcmp.ge.f32.partialorder %v5895, %v1825
    %vm6310 = vcmp.ge.f32.partialorder %v5898, %v1825
    %vm6311 = vcmp.ge.f32.partialorder %v5903, %v1825
    %vm6312 = vcmp.ge.f32.partialorder %v5906, %v1825
    %v6313 = vsel %vm6297, %v5182, inf
    %v6314 = vsel %vm6298, %v5186, inf
    %v6315 = vsel %vm6299, %v5190, inf
    %v6316 = vsel %vm6300, %v5194, inf
    %v6317 = vsel %vm6301, %v5198, inf
    %v6318 = vsel %vm6302, %v5202, inf
    %v6319 = vsel %vm6303, %v5206, inf
    %v6320 = vsel %vm6304, %v5210, inf
    %v6321 = vsel %vm6305, %v5214, inf
    %v6322 = vsel %vm6306, %v5218, inf
    %v6323 = vsel %vm6307, %v5222, inf
    %v6324 = vsel %vm6308, %v5226, inf
    %v6325 = vsel %vm6309, %v5230, inf
    %v6326 = vsel %vm6310, %v5234, inf
    %v6327 = vsel %vm6311, %v5238, inf
    %v6328 = vsel %vm6312, %v5242, inf
    %v6329 = vmin.f32 %v6313, %v6317
    %v6330 = vmin.f32 %v6314, %v6318
    %v6331 = vmin.f32 %v6315, %v6319
    %v6332 = vmin.f32 %v6316, %v6320
    %v6333 = vmin.f32 %v6329, %v6321
    %v6334 = vmin.f32 %v6330, %v6322
    %v6335 = vmin.f32 %v6331, %v6323
    %v6336 = vmin.f32 %v6332, %v6324
    %v6337 = vmin.f32 %v6333, %v6325
    %v6338 = vmin.f32 %v6334, %v6326
    %v6339 = vmin.f32 %v6335, %v6327
    %v6340 = vmin.f32 %v6336, %v6328
    %v6341 = vmin.f32 %v6337, %v6338
    %v6342 = vmin.f32 %v6339, %v6340
    %v6343 = vmin.f32 %v6341, %v6342
    %v6344 = vrot.slane %v6343, 4
    %v6345 = vmin.f32 %v6343, %v6344
    %v6346 = vrot.slane %v6345, 2
    %v6347 = vmin.f32 %v6345, %v6346
    %v6348 = vrot.slane %v6347, 1
    %v6349 = vmin.f32 %v6347, %v6348
    %v6350 = vmul.f32 %v6349, %v86
    %vm6351 = vcmp.ge.f32.partialorder %v5911, %v1825
    %vm6352 = vcmp.ge.f32.partialorder %v5914, %v1825
    %vm6353 = vcmp.ge.f32.partialorder %v5919, %v1825
    %vm6354 = vcmp.ge.f32.partialorder %v5922, %v1825
    %vm6355 = vcmp.ge.f32.partialorder %v5927, %v1825
    %vm6356 = vcmp.ge.f32.partialorder %v5930, %v1825
    %vm6357 = vcmp.ge.f32.partialorder %v5935, %v1825
    %vm6358 = vcmp.ge.f32.partialorder %v5938, %v1825
    %vm6359 = vcmp.ge.f32.partialorder %v5943, %v1825
    %vm6360 = vcmp.ge.f32.partialorder %v5946, %v1825
    %vm6361 = vcmp.ge.f32.partialorder %v5951, %v1825
    %vm6362 = vcmp.ge.f32.partialorder %v5954, %v1825
    %vm6363 = vcmp.ge.f32.partialorder %v5959, %v1825
    %vm6364 = vcmp.ge.f32.partialorder %v5962, %v1825
    %vm6365 = vcmp.ge.f32.partialorder %v5967, %v1825
    %vm6366 = vcmp.ge.f32.partialorder %v5970, %v1825
    %v6367 = vsel %vm6351, %v5306, inf
    %v6368 = vsel %vm6352, %v5310, inf
    %v6369 = vsel %vm6353, %v5314, inf
    %v6370 = vsel %vm6354, %v5318, inf
    %v6371 = vsel %vm6355, %v5322, inf
    %v6372 = vsel %vm6356, %v5326, inf
    %v6373 = vsel %vm6357, %v5330, inf
    %v6374 = vsel %vm6358, %v5334, inf
    %v6375 = vsel %vm6359, %v5338, inf
    %v6376 = vsel %vm6360, %v5342, inf
    %v6377 = vsel %vm6361, %v5346, inf
    %v6378 = vsel %vm6362, %v5350, inf
    %v6379 = vsel %vm6363, %v5354, inf
    %v6380 = vsel %vm6364, %v5358, inf
    %v6381 = vsel %vm6365, %v5362, inf
    %v6382 = vsel %vm6366, %v5366, inf
    %v6383 = vmin.f32 %v6367, %v6371
    %v6384 = vmin.f32 %v6368, %v6372
    %v6385 = vmin.f32 %v6369, %v6373
    %v6386 = vmin.f32 %v6370, %v6374
    %v6387 = vmin.f32 %v6383, %v6375
    %v6388 = vmin.f32 %v6384, %v6376
    %v6389 = vmin.f32 %v6385, %v6377
    %v6390 = vmin.f32 %v6386, %v6378
    %v6391 = vmin.f32 %v6387, %v6379
    %v6392 = vmin.f32 %v6388, %v6380
    %v6393 = vmin.f32 %v6389, %v6381
    %v6394 = vmin.f32 %v6390, %v6382
    %v6395 = vmin.f32 %v6391, %v6392
    %v6396 = vmin.f32 %v6393, %v6394
    %v6397 = vmin.f32 %v6395, %v6396
    %v6398 = vrot.slane %v6397, 4
    %v6399 = vmin.f32 %v6397, %v6398
    %v6400 = vrot.slane %v6399, 2
    %v6401 = vmin.f32 %v6399, %v6400
    %v6402 = vrot.slane %v6401, 1
    %v6403 = vmin.f32 %v6401, %v6402
    %v6404 = vmul.f32 %v6403, %v86
    %v6406 = vrot.slane %v6080, 7
    %v6409 = vrot.slane %v6134, 6
    %v6412 = vrot.slane %v6188, 5
    %v6415 = vrot.slane %v6242, 4
    %v6418 = vrot.slane %v6296, 3
    %v6421 = vrot.slane %v6350, 2
    %v6424 = vrot.slane %v6404, 1
    %v6426 = vsel %vm4286, %v6026, %v6406
    %v6427 = vsel %vm4288, %v6426, %v6409
    %v6428 = vsel %vm4290, %v6427, %v6412
    %v6429 = vsel %vm4292, %v6428, %v6415
    %v6430 = vsel %vm4294, %v6429, %v6418
    %v6431 = vsel %vm4296, %v6430, %v6421
    %v6432 = vsel %vm4298, %v6431, %v6424
    %6433 = vst [vmem:[#allocation8] sm:$0xff] %v6432
    // Predicated region
    $region46: #{tpu_custom_call.1} parent=1 // pred_check
      _
    $region47: #{tpu_custom_call.1} parent=1 // pred_check_branch
      %6435 = sbr.rel (0) target = $region49
    $region48: #{tpu_custom_call.1} parent=1 // pred_region
      %s6437 = ssub.s32 128, 128
      %6438 = vsyncadd [#allocation4], %s6437
      %s6440 = sshll.u32 [#allocation8], 4
      %s6441 = int_to_ptr.vmem [resolvable:$true] %s6440
      %6443 = dma.vmem_to_hbm [thread:$0]  %s6441, 128, %s8, [#allocation4]
    $region49: #{tpu_custom_call.1} parent=1 // pred_fallthru
      _
    // Predicated region
    $region50: #{tpu_custom_call.1} parent=1 // pred_check
      _
    $region51: #{tpu_custom_call.1} parent=1 // pred_check_branch
      %6445 = sbr.rel (0) target = $region53
    $region52: #{tpu_custom_call.1} parent=1 // pred_region
      %6446 = dma.done [#allocation4], 128
    $region53: #{tpu_custom_call.1} parent=1 // pred_fallthru
      _
    %6447 = vsyncpa [#allocation3], 1
    %6448 = vsyncpa [#allocation6], 1
    %6449 = vsyncpa [#allocation4], 1

</llo_original>
